<compile_context>
chip_gen: v6e
topology: v6e:2x2x1
jax: 0.10.0
libtpu: 0.0.40
codegen_flags: <defaults>
</compile_context>

<pallas_src>
import math
import functools

import jax
import jax.numpy as jnp
from jax.experimental import pallas as pl
from jax.experimental.pallas import tpu as pltpu


def _scoped_vmem_limit():
    # Budget scoped VMEM against the chip's *physical* VMEM instead of a fixed cap
    # (128 MiB on v5e/v6e -> ~96-100 MiB; 64 MiB on v7x -> ~48 MiB).
    try:
        cap = pltpu.get_tpu_info().vmem_capacity_bytes
    except Exception:
        cap = 64 * 1024 * 1024
    return min(int(cap) * 3 // 4, 100 * 1024 * 1024)


_VMEM_LIMIT = _scoped_vmem_limit()


def _divisor_candidates(dim, extras):
    out = []
    for c in (dim,) + tuple(extras):
        if 0 < c <= dim and dim % c == 0 and c not in out:
            out.append(c)
    return out


def _matmul_tiles(N, K, M, *, x_bytes, has_scratch, has_residual):
    """Largest (tm, tn) whose double-buffered working set fits the VMEM budget.

    Lane width tn is maximised first (lane-dense output stores, wide weight
    blocks); then the row tile, preferring tm == N so the weight stream is
    fetched exactly once and the hoisted LayerNorm runs exactly once.
    """
    budget = max(_VMEM_LIMIT // 2, 8 * 1024 * 1024)

    def vmem_bytes(tm, tn):
        b = 2 * tm * K * x_bytes           # x block, double-buffered
        b += 2 * K * tn * 2                # bf16 weight block, double-buffered
        b += 2 * tm * tn * 4               # output block (f32 upper bound)
        if has_residual:
            b += 2 * tm * tn * 4
        if has_scratch:
            b += tm * K * 2                # hoisted-LN bf16 scratch
        return b

    row_cands = _divisor_candidates(N, (1024, 512, 256, 128, 64, 32, 16, 8))
    col_cands = _divisor_candidates(M, (2048, 1024, 512, 384, 256, 128))
    for tn in col_cands:
        for tm in row_cands:
            if vmem_bytes(tm, tn) <= budget:
                return tm, tn
    return row_cands[-1], col_cands[-1]


# ----------------------------------------------------------------------------
# Pallas kernels
# ----------------------------------------------------------------------------

def _ln_matmul_kernel(x_ref, g_ref, b_ref, w_ref, bias_ref, o_ref, xn_ref, *,
                      quickgelu):
    # x: (tm, K) f32 ; g/b: (1, K) f32 ; w: (K, tn) bf16 ; bias: (1, tn) f32
    # xn_ref: (tm, K) bf16 VMEM scratch holding LayerNorm(x) for the row tile.
    # LayerNorm is computed once per row tile (at j == 0), not per column tile.
    @pl.when(pl.program_id(1) == 0)
    def _():
        x = x_ref[...]
        mean = jnp.mean(x, axis=-1, keepdims=True)
        var = jnp.mean(jnp.square(x - mean), axis=-1, keepdims=True)  # biased, eps=1e-5
        xn = (x - mean) * jax.lax.rsqrt(var + 1e-5)
        xn_ref[...] = (xn * g_ref[...] + b_ref[...]).astype(jnp.bfloat16)

    y = jnp.dot(xn_ref[...], w_ref[...],
                preferred_element_type=jnp.float32) + bias_ref[...]
    if quickgelu:
        y = y * jax.nn.sigmoid(1.702 * y)          # QuickGELU in f32, cast on store
    o_ref[...] = y.astype(o_ref.dtype)


def _matmul_residual_kernel(x_ref, w_ref, bias_ref, res_ref, o_ref):
    # x: (tm, K) bf16/f32 ; w: (K, tn) bf16 ; bias: (1, tn) f32 ; res: (tm, tn) f32
    y = jnp.dot(x_ref[...].astype(jnp.bfloat16), w_ref[...],
                preferred_element_type=jnp.float32)
    o_ref[...] = y + bias_ref[...] + res_ref[...]


def _make_attn_kernel(H, D, lens_s, lens_t, want_ce, L):
    C = H * D

    def kernel(qkv_ref, ow_ref, ob_ref, res_ref, o_ref, *maybe_ce):
        # Per-batch block: qkv (1, L, 3C) bf16, out_w (C, C) bf16, out_b (1, C) f32,
        # res (1, L, C) f32 -> o (1, L, C) f32 = res + attn_out @ out_w + out_b.
        # Initialise the output block with residual + bias; each head's out-proj
        # contribution is accumulated straight into it (lane-dense (L, C) writes,
        # no per-head 64-lane-offset stores and no lane concatenate).
        o_ref[0] = res_ref[0] + ob_ref[...]
        ce_acc = None
        # TODO(synk): key-tiled (flash-style) online softmax + a (B, H) grid for
        # real CLIP sequence lengths; here heads are statically unrolled per batch.
        for h in range(H):                             # static unroll over heads
            q = qkv_ref[0, :, h * D:(h + 1) * D]               # (L, D) bf16
            k = qkv_ref[0, :, C + h * D:C + (h + 1) * D]
            v = qkv_ref[0, :, 2 * C + h * D:2 * C + (h + 1) * D]
            # attention scale already folded into the Q projection weights/bias
            s = jax.lax.dot_general(q, k, (((1,), (1,)), ((), ())),
                                    preferred_element_type=jnp.float32)   # (L, L)
            m = jnp.max(s, axis=-1, keepdims=True)
            e = jnp.exp(s - m)
            z = jnp.sum(e, axis=-1, keepdims=True)
            p = e / z                                  # exact softmax (CE top-k safe)
            o_h = jnp.dot(p.astype(jnp.bfloat16), v,
                          preferred_element_type=jnp.float32)             # (L, D)
            w_h = ow_ref[h * D:(h + 1) * D, :]                            # (D, C)
            o_ref[0] = o_ref[0] + jnp.dot(o_h.astype(jnp.bfloat16), w_h,
                                          preferred_element_type=jnp.float32)
            if want_ce:
                # masked column reduction over template-query rows: stays on the
                # aligned reduce path (no unaligned (lens_t, lens_s) slice).
                rows = jax.lax.broadcasted_iota(jnp.int32, (L, 1), 0)
                tmask = (rows >= lens_s + 1).astype(jnp.float32)
                cols = jnp.sum(p * tmask, axis=0, keepdims=True)          # (1, L)
                ce_acc = cols if ce_acc is None else ce_acc + cols
        if want_ce:
            maybe_ce[0][0] = ce_acc * (1.0 / (H * lens_t))   # mean over heads+queries

    return kernel


# ----------------------------------------------------------------------------
# Pallas wrappers
# ----------------------------------------------------------------------------

def ln_matmul(x, g, b, w, bias, *, quickgelu=False, out_dtype=jnp.float32):
    """LayerNorm(x) @ w + bias (+ QuickGELU). x:(N,K) f32, w:(K,M) bf16."""
    N, K = x.shape
    K2, M = w.shape
    assert K == K2
    tm, tn = _matmul_tiles(N, K, M, x_bytes=4, has_scratch=True, has_residual=False)
    kernel = functools.partial(_ln_matmul_kernel, quickgelu=quickgelu)
    return pl.pallas_call(
        kernel,
        out_shape=jax.ShapeDtypeStruct((N, M), out_dtype),
        grid=(N // tm, M // tn),
        in_specs=[
            pl.BlockSpec((tm, K), lambda i, j: (i, 0)),
            pl.BlockSpec((1, K), lambda i, j: (0, 0)),
            pl.BlockSpec((1, K), lambda i, j: (0, 0)),
            pl.BlockSpec((K, tn), lambda i, j: (0, j)),
            pl.BlockSpec((1, tn), lambda i, j: (0, j)),
        ],
        out_specs=pl.BlockSpec((tm, tn), lambda i, j: (i, j)),
        scratch_shapes=[pltpu.VMEM((tm, K), jnp.bfloat16)],
        compiler_params=pltpu.CompilerParams(
            # j (column tiles) must stay the inner "arbitrary" axis so the
            # hoisted-LN scratch written at j == 0 is valid for j > 0.
            dimension_semantics=("parallel", "arbitrary"),
            vmem_limit_bytes=_VMEM_LIMIT),
    )(x, g.reshape(1, K), b.reshape(1, K), w, bias.reshape(1, M))


def matmul_residual(x, w, bias, residual):
    """x @ w + bias + residual. x:(N,K) bf16/f32, w:(K,M) bf16, residual:(N,M) f32."""
    N, K = x.shape
    K2, M = w.shape
    assert K == K2
    tm, tn = _matmul_tiles(N, K, M, x_bytes=x.dtype.itemsize,
                           has_scratch=False, has_residual=True)
    return pl.pallas_call(
        _matmul_residual_kernel,
        out_shape=jax.ShapeDtypeStruct((N, M), jnp.float32),
        grid=(N // tm, M // tn),
        in_specs=[
            pl.BlockSpec((tm, K), lambda i, j: (i, 0)),
            pl.BlockSpec((K, tn), lambda i, j: (0, j)),
            pl.BlockSpec((1, tn), lambda i, j: (0, j)),
            pl.BlockSpec((tm, tn), lambda i, j: (i, j)),
        ],
        out_specs=pl.BlockSpec((tm, tn), lambda i, j: (i, j)),
        compiler_params=pltpu.CompilerParams(
            dimension_semantics=("parallel", "parallel"),
            vmem_limit_bytes=_VMEM_LIMIT),
    )(x, w, bias.reshape(1, M), residual)


def attn_outproj(qkv, residual, out_w, out_b, heads, lens_t, want_ce):
    """Fused MHA + out-projection + residual.

    qkv: (B, L, 3C) bf16; residual: (B, L, C) f32.
    Returns post-residual tokens (B, L, C) f32 and, if want_ce, (B, lens_s) scores.
    """
    B, L, C3 = qkv.shape
    C = C3 // 3
    D = C // heads
    lens_s = L - lens_t - 1
    kernel = _make_attn_kernel(heads, D, lens_s, lens_t, want_ce, L)
    out_shape = [jax.ShapeDtypeStruct((B, L, C), jnp.float32)]
    out_specs = [pl.BlockSpec((1, L, C), lambda b: (b, 0, 0))]
    if want_ce:
        out_shape.append(jax.ShapeDtypeStruct((B, 1, L), jnp.float32))
        out_specs.append(pl.BlockSpec((1, 1, L), lambda b: (b, 0, 0)))
    res = pl.pallas_call(
        kernel,
        out_shape=tuple(out_shape),
        grid=(B,),
        in_specs=[
            pl.BlockSpec((1, L, C3), lambda b: (b, 0, 0)),
            pl.BlockSpec((C, C), lambda b: (0, 0)),       # out_w resident in VMEM
            pl.BlockSpec((1, C), lambda b: (0, 0)),
            pl.BlockSpec((1, L, C), lambda b: (b, 0, 0)),
        ],
        out_specs=tuple(out_specs),
        compiler_params=pltpu.CompilerParams(
            dimension_semantics=("parallel",),
            vmem_limit_bytes=_VMEM_LIMIT),
    )(qkv, out_w, out_b.reshape(1, C), residual)
    if want_ce:
        return res[0], res[1][:, 0, 1:lens_s + 1]         # (B, lens_s) CE scores
    return res[0], None


# ----------------------------------------------------------------------------
# Model glue (plain JAX)
# ----------------------------------------------------------------------------

def candidate_elimination(ce_scores, tokens, lens_t, keep_ratio):
    """tokens: (B, L, C); ce_scores: (B, lens_s) head/query-averaged attention."""
    lens_s = tokens.shape[1] - lens_t - 1
    lens_keep = math.ceil(keep_ratio * lens_s)
    if lens_keep == lens_s:
        return tokens
    # TODO(synk): lax.top_k tie-breaking may differ from torch.sort(descending=True) on ties.
    _, topk_idx = jax.lax.top_k(ce_scores, lens_keep)
    tokens_cls = tokens[:, :1]
    tokens_s = tokens[:, 1:lens_s + 1]
    tokens_t = tokens[:, lens_s + 1:]
    attentive = jnp.take_along_axis(tokens_s, topk_idx[:, :, None], axis=1)
    # TODO(synk): keep a static 128-padded L + validity mask (and -inf softmax mask)
    # to avoid per-L recompiles and masked stores at scale.
    return jnp.concatenate([tokens_cls, attentive, tokens_t], axis=1)


def block_forward(tokens, p, heads, lens_t, keep_ratio, apply_ce):
    """One ResidualAttentionBlock forward; tokens: (B, L, C) f32."""
    B, L, C = tokens.shape
    x2d = tokens.reshape(B * L, C)

    # LN1 + QKV projection (fused, bf16 output); attention + out-proj + residual
    qkv = ln_matmul(x2d, p["ln1_g"], p["ln1_b"], p["qkv_w"], p["qkv_b"],
                    out_dtype=jnp.bfloat16)
    tokens, ce_scores = attn_outproj(qkv.reshape(B, L, 3 * C), tokens,
                                     p["out_w"], p["out_b"], heads, lens_t, apply_ce)

    if apply_ce:
        tokens = candidate_elimination(ce_scores, tokens, lens_t, keep_ratio)
        B, L, C = tokens.shape
    x2d = tokens.reshape(B * L, C)

    # LN2 + c_fc + QuickGELU (fused, bf16 output), then c_proj + bias + residual
    h = ln_matmul(x2d, p["ln2_g"], p["ln2_b"], p["fc_w"], p["fc_b"],
                  quickgelu=True, out_dtype=jnp.bfloat16)
    x2d = matmul_residual(h, p["proj_w"], p["proj_b"], x2d)
    return x2d.reshape(B, L, C)


def multilevel_transformer(x_lbc, params_list, heads, lens_t, ce_keep_rate,
                           ce_loc, extract_layer):
    # single layout change in/out: (L, B, C) <-> (B, L, C)
    tokens = jnp.transpose(x_lbc, (1, 0, 2))
    for i in range(max(extract_layer) + 1):
        apply_ce = (ce_keep_rate < 1) and (i in ce_loc)
        tokens = block_forward(tokens, params_list[i], heads, lens_t,
                               ce_keep_rate, apply_ce)
    return jnp.transpose(tokens, (1, 0, 2))


# ----------------------------------------------------------------------------
# Deterministic parameter init (synthetic, CLIP ResidualAttentionBlock shapes)
# ----------------------------------------------------------------------------

def init_block_params(key, C, heads):
    ks = jax.random.split(key, 8)
    s = 0.02
    D = C // heads
    scale = D ** -0.5
    qkv_w = s * jax.random.normal(ks[0], (C, 3 * C), jnp.float32)
    qkv_b = s * jax.random.normal(ks[1], (3 * C,), jnp.float32)
    # Fold the attention scale into the Q slice of the QKV projection once.
    qkv_w = qkv_w.at[:, :C].multiply(scale)
    qkv_b = qkv_b.at[:C].multiply(scale)
    # TODO(synk): on v7x, store projection weights as fp8 with per-channel scales.
    return dict(
        ln1_g=jnp.ones((C,), jnp.float32),
        ln1_b=jnp.zeros((C,), jnp.float32),
        qkv_w=qkv_w.astype(jnp.bfloat16),
        qkv_b=qkv_b,
        out_w=(s * jax.random.normal(ks[2], (C, C), jnp.float32)).astype(jnp.bfloat16),
        out_b=s * jax.random.normal(ks[3], (C,), jnp.float32),
        ln2_g=jnp.ones((C,), jnp.float32),
        ln2_b=jnp.zeros((C,), jnp.float32),
        fc_w=(s * jax.random.normal(ks[4], (C, 4 * C), jnp.float32)).astype(jnp.bfloat16),
        fc_b=s * jax.random.normal(ks[5], (4 * C,), jnp.float32),
        proj_w=(s * jax.random.normal(ks[6], (4 * C, C), jnp.float32)).astype(jnp.bfloat16),
        proj_b=s * jax.random.normal(ks[7], (C,), jnp.float32),
    )


# ----------------------------------------------------------------------------
# Demo
# ----------------------------------------------------------------------------

if __name__ == "__main__":
    key = jax.random.PRNGKey(0)

    # Small config consistent with MultiLevel_Transformer (heads = width // 64),
    # with a lane-dense width C = 128.
    C = 128
    heads = C // 64          # 2 heads, head_dim 64
    B = 2
    lens_t = 2               # template tokens
    lens_s = 13              # search tokens
    L = 1 + lens_s + lens_t  # CLS + search + template = 16
    extract_layer = (0, 1, 2)
    ce_loc = (1,)
    ce_keep_rate = 0.7       # prunes search tokens at block 1

    n_blocks = max(extract_layer) + 1
    pkey, xkey = jax.random.split(key)
    params_list = [init_block_params(k, C, heads)
                   for k in jax.random.split(pkey, n_blocks)]
    x = jax.random.normal(xkey, (L, B, C), dtype=jnp.float32)

    @jax.jit
    def run(x, params_list):
        return multilevel_transformer(x, params_list, heads, lens_t,
                                      ce_keep_rate, ce_loc, extract_layer)

    out = jax.block_until_ready(run(x, params_list))

    # After CE at block 1: lens_keep = ceil(0.7*13) = 10 -> L' = 1 + 10 + 2 = 13
    assert out.shape == (1 + math.ceil(ce_keep_rate * lens_s) + lens_t, B, C)
    assert bool(jnp.all(jnp.isfinite(out)))
    print("KERNEL_OK")
</pallas_src>

<mosaic_0001>
module attributes {stable_mosaic.version = 11 : i64} {
  func.func @_ln_matmul_kernel(%arg0: i32, %arg1: i32, %arg2: memref<32x128xf32, #tpu.memory_space<vmem>>, %arg3: memref<1x128xf32, #tpu.memory_space<vmem>>, %arg4: memref<1x128xf32, #tpu.memory_space<vmem>>, %arg5: memref<128x384xbf16, #tpu.memory_space<vmem>>, %arg6: memref<1x384xf32, #tpu.memory_space<vmem>>, %arg7: memref<32x384xbf16, #tpu.memory_space<vmem>>, %arg8: memref<32x128xbf16, #tpu.memory_space<vmem>>) attributes {dimension_semantics = [#tpu.dimension_semantics<parallel>, #tpu.dimension_semantics<arbitrary>], iteration_bounds = array<i64: 1, 1>, scalar_prefetch = 0 : i64, scratch_operands = 1 : i64, tpu.core_type = #tpu.core_type<tc>, window_params = [{transform_indices = @transform_0, window_bounds = array<i64: 32, 128>}, {pipeline_mode = #tpu.pipeline_mode<synchronous>, transform_indices = @transform_1, window_bounds = array<i64: 1, 128>}, {pipeline_mode = #tpu.pipeline_mode<synchronous>, transform_indices = @transform_2, window_bounds = array<i64: 1, 128>}, {transform_indices = @transform_3, window_bounds = array<i64: 128, 384>}, {transform_indices = @transform_4, window_bounds = array<i64: 1, 384>}, {transform_indices = @transform_5, window_bounds = array<i64: 32, 384>}]} {
    %c0_i32 = arith.constant 0 : i32
    %0 = arith.cmpi eq, %arg1, %c0_i32 : i32
    %1 = arith.extui %0 : i1 to i32
    %c0_i32_0 = arith.constant 0 : i32
    %2 = arith.cmpi ne, %1, %c0_i32_0 : i32
    scf.if %2 {
      %c0_8 = arith.constant 0 : index
      %c0_9 = arith.constant 0 : index
      %11 = vector.load %arg2[%c0_8, %c0_9] : memref<32x128xf32, #tpu.memory_space<vmem>>, vector<32x128xf32>
      %cst_10 = arith.constant dense<0.000000e+00> : vector<32xf32>
      %12 = vector.multi_reduction <add>, %11, %cst_10 [1] : vector<32x128xf32> to vector<32xf32>
      %13 = vector.shape_cast %12 : vector<32xf32> to vector<32x1xf32>
      %cst_11 = arith.constant 1.280000e+02 : f32
      %14 = vector.broadcast %cst_11 : f32 to vector<32x1xf32>
      %15 = arith.divf %13, %14 : vector<32x1xf32>
      %16 = vector.broadcast %15 : vector<32x1xf32> to vector<32x128xf32>
      %17 = arith.subf %11, %16 : vector<32x128xf32>
      %18 = arith.mulf %17, %17 : vector<32x128xf32>
      %cst_12 = arith.constant dense<0.000000e+00> : vector<32xf32>
      %19 = vector.multi_reduction <add>, %18, %cst_12 [1] : vector<32x128xf32> to vector<32xf32>
      %20 = vector.shape_cast %19 : vector<32xf32> to vector<32x1xf32>
      %cst_13 = arith.constant 1.280000e+02 : f32
      %21 = vector.broadcast %cst_13 : f32 to vector<32x1xf32>
      %22 = arith.divf %20, %21 : vector<32x1xf32>
      %23 = vector.broadcast %15 : vector<32x1xf32> to vector<32x128xf32>
      %24 = arith.subf %11, %23 : vector<32x128xf32>
      %cst_14 = arith.constant 9.99999974E-6 : f32
      %25 = vector.broadcast %cst_14 : f32 to vector<32x1xf32>
      %26 = arith.addf %22, %25 : vector<32x1xf32>
      %27 = math.rsqrt %26 : vector<32x1xf32>
      %28 = vector.broadcast %27 : vector<32x1xf32> to vector<32x128xf32>
      %29 = arith.mulf %24, %28 : vector<32x128xf32>
      %c0_15 = arith.constant 0 : index
      %c0_16 = arith.constant 0 : index
      %30 = vector.load %arg3[%c0_15, %c0_16] : memref<1x128xf32, #tpu.memory_space<vmem>>, vector<1x128xf32>
      %31 = vector.broadcast %30 : vector<1x128xf32> to vector<32x128xf32>
      %32 = arith.mulf %29, %31 : vector<32x128xf32>
      %c0_17 = arith.constant 0 : index
      %c0_18 = arith.constant 0 : index
      %33 = vector.load %arg4[%c0_17, %c0_18] : memref<1x128xf32, #tpu.memory_space<vmem>>, vector<1x128xf32>
      %34 = vector.broadcast %33 : vector<1x128xf32> to vector<32x128xf32>
      %35 = arith.addf %32, %34 : vector<32x128xf32>
      %36 = arith.truncf %35 : vector<32x128xf32> to vector<32x128xbf16>
      %c0_19 = arith.constant 0 : index
      %c0_20 = arith.constant 0 : index
      %37 = vector.load %arg8[%c0_19, %c0_20] : memref<32x128xbf16, #tpu.memory_space<vmem>>, vector<32x128xbf16>
      tpu.vector_store %arg8[%c0_19, %c0_20], %36 {strides = array<i32>} : memref<32x128xbf16, #tpu.memory_space<vmem>>, vector<32x128xbf16>,
    } else {
    }
    %c0 = arith.constant 0 : index
    %c0_1 = arith.constant 0 : index
    %3 = vector.load %arg8[%c0, %c0_1] : memref<32x128xbf16, #tpu.memory_space<vmem>>, vector<32x128xbf16>
    %c0_2 = arith.constant 0 : index
    %c0_3 = arith.constant 0 : index
    %4 = vector.load %arg5[%c0_2, %c0_3] : memref<128x384xbf16, #tpu.memory_space<vmem>>, vector<128x384xbf16>
    %cst = arith.constant dense<0.000000e+00> : vector<32x384xf32>
    %5 = tpu.matmul %3, %4, %cst {dimension_numbers = #tpu.dot_dimension_numbers<[1], [0], [0], [1], [0, 0, 1, 1], [], []>} : vector<32x128xbf16>, vector<128x384xbf16>, vector<32x384xf32> -> vector<32x384xf32>
    %c0_4 = arith.constant 0 : index
    %c0_5 = arith.constant 0 : index
    %6 = vector.load %arg6[%c0_4, %c0_5] : memref<1x384xf32, #tpu.memory_space<vmem>>, vector<1x384xf32>
    %7 = vector.broadcast %6 : vector<1x384xf32> to vector<32x384xf32>
    %8 = arith.addf %5, %7 : vector<32x384xf32>
    %9 = arith.truncf %8 : vector<32x384xf32> to vector<32x384xbf16>
    %c0_6 = arith.constant 0 : index
    %c0_7 = arith.constant 0 : index
    %10 = vector.load %arg7[%c0_6, %c0_7] : memref<32x384xbf16, #tpu.memory_space<vmem>>, vector<32x384xbf16>
    tpu.vector_store %arg7[%c0_6, %c0_7], %9 {strides = array<i32>} : memref<32x384xbf16, #tpu.memory_space<vmem>>, vector<32x384xbf16>,
    return
  }
  func.func @transform_0(%arg0: i32, %arg1: i32) -> (i32, i32) {
    %c0_i32 = arith.constant 0 : i32
    %c0_i32_0 = arith.constant 0 : i32
    return %arg0, %c0_i32 : i32, i32
  }
  func.func @transform_1(%arg0: i32, %arg1: i32) -> (i32, i32) {
    %c0_i32 = arith.constant 0 : i32
    %c0_i32_0 = arith.constant 0 : i32
    %c0_i32_1 = arith.constant 0 : i32
    return %c0_i32, %c0_i32_0 : i32, i32
  }
  func.func @transform_2(%arg0: i32, %arg1: i32) -> (i32, i32) {
    %c0_i32 = arith.constant 0 : i32
    %c0_i32_0 = arith.constant 0 : i32
    %c0_i32_1 = arith.constant 0 : i32
    return %c0_i32, %c0_i32_0 : i32, i32
  }
  func.func @transform_3(%arg0: i32, %arg1: i32) -> (i32, i32) {
    %c0_i32 = arith.constant 0 : i32
    %c0_i32_0 = arith.constant 0 : i32
    return %c0_i32, %arg1 : i32, i32
  }
  func.func @transform_4(%arg0: i32, %arg1: i32) -> (i32, i32) {
    %c0_i32 = arith.constant 0 : i32
    %c0_i32_0 = arith.constant 0 : i32
    return %c0_i32, %arg1 : i32, i32
  }
  func.func @transform_5(%arg0: i32, %arg1: i32) -> (i32, i32) {
    %c0_i32 = arith.constant 0 : i32
    return %arg0, %arg1 : i32, i32
  }
}

module attributes {stable_mosaic.version = 11 : i64} {
  func.func @kernel(%arg0: i32, %arg1: memref<1x16x384xbf16, #tpu.memory_space<vmem>>, %arg2: memref<128x128xbf16, #tpu.memory_space<vmem>>, %arg3: memref<1x128xf32, #tpu.memory_space<vmem>>, %arg4: memref<1x16x128xf32, #tpu.memory_space<vmem>>, %arg5: memref<1x16x128xf32, #tpu.memory_space<vmem>>) attributes {dimension_semantics = [#tpu.dimension_semantics<parallel>], iteration_bounds = array<i64: 2>, scalar_prefetch = 0 : i64, scratch_operands = 0 : i64, tpu.core_type = #tpu.core_type<tc>, window_params = [{transform_indices = @transform_0, window_bounds = array<i64: 1, 16, 384>}, {pipeline_mode = #tpu.pipeline_mode<synchronous>, transform_indices = @transform_1, window_bounds = array<i64: 128, 128>}, {pipeline_mode = #tpu.pipeline_mode<synchronous>, transform_indices = @transform_2, window_bounds = array<i64: 1, 128>}, {transform_indices = @transform_3, window_bounds = array<i64: 1, 16, 128>}, {transform_indices = @transform_4, window_bounds = array<i64: 1, 16, 128>}]} {
    %c0 = arith.constant 0 : index
    %c0_0 = arith.constant 0 : index
    %c0_1 = arith.constant 0 : index
    %0 = vector.load %arg4[%c0, %c0_0, %c0_1] : memref<1x16x128xf32, #tpu.memory_space<vmem>>, vector<1x16x128xf32>
    %1 = vector.shape_cast %0 : vector<1x16x128xf32> to vector<16x128xf32>
    %c0_2 = arith.constant 0 : index
    %c0_3 = arith.constant 0 : index
    %2 = vector.load %arg3[%c0_2, %c0_3] : memref<1x128xf32, #tpu.memory_space<vmem>>, vector<1x128xf32>
    %3 = vector.broadcast %2 : vector<1x128xf32> to vector<16x128xf32>
    %4 = arith.addf %1, %3 : vector<16x128xf32>
    %c0_4 = arith.constant 0 : index
    %c0_5 = arith.constant 0 : index
    %c0_6 = arith.constant 0 : index
    %5 = vector.load %arg5[%c0_4, %c0_5, %c0_6] : memref<1x16x128xf32, #tpu.memory_space<vmem>>, vector<1x16x128xf32>
    %6 = vector.shape_cast %5 : vector<1x16x128xf32> to vector<16x128xf32>
    %7 = vector.shape_cast %4 : vector<16x128xf32> to vector<1x16x128xf32>
    tpu.vector_store %arg5[%c0_4, %c0_5, %c0_6], %7 {strides = array<i32>} : memref<1x16x128xf32, #tpu.memory_space<vmem>>, vector<1x16x128xf32>,
    %c0_7 = arith.constant 0 : index
    %c0_8 = arith.constant 0 : index
    %c0_9 = arith.constant 0 : index
    %8 = vector.load %arg1[%c0_7, %c0_8, %c0_9] : memref<1x16x384xbf16, #tpu.memory_space<vmem>>, vector<1x16x64xbf16>
    %9 = vector.shape_cast %8 : vector<1x16x64xbf16> to vector<16x64xbf16>
    %c0_10 = arith.constant 0 : index
    %c0_11 = arith.constant 0 : index
    %c128 = arith.constant 128 : index
    %10 = vector.load %arg1[%c0_10, %c0_11, %c128] : memref<1x16x384xbf16, #tpu.memory_space<vmem>>, vector<1x16x64xbf16>
    %11 = vector.shape_cast %10 : vector<1x16x64xbf16> to vector<16x64xbf16>
    %c0_12 = arith.constant 0 : index
    %c0_13 = arith.constant 0 : index
    %c256 = arith.constant 256 : index
    %12 = vector.load %arg1[%c0_12, %c0_13, %c256] : memref<1x16x384xbf16, #tpu.memory_space<vmem>>, vector<1x16x64xbf16>
    %13 = vector.shape_cast %12 : vector<1x16x64xbf16> to vector<16x64xbf16>
    %cst = arith.constant dense<0.000000e+00> : vector<16x16xf32>
    %14 = tpu.matmul %9, %11, %cst {dimension_numbers = #tpu.dot_dimension_numbers<[1], [1], [0], [0], [0, 0, 1, 0], [], []>} : vector<16x64xbf16>, vector<16x64xbf16>, vector<16x16xf32> -> vector<16x16xf32>
    %cst_14 = arith.constant dense<0xFF800000> : vector<16xf32>
    %15 = vector.multi_reduction <maximumf>, %14, %cst_14 [1] : vector<16x16xf32> to vector<16xf32>
    %16 = vector.shape_cast %15 : vector<16xf32> to vector<16x1xf32>
    %17 = vector.broadcast %16 : vector<16x1xf32> to vector<16x16xf32>
    %18 = arith.subf %14, %17 : vector<16x16xf32>
    %19 = math.exp %18 : vector<16x16xf32>
    %cst_15 = arith.constant dense<0.000000e+00> : vector<16xf32>
    %20 = vector.multi_reduction <add>, %19, %cst_15 [1] : vector<16x16xf32> to vector<16xf32>
    %21 = vector.shape_cast %20 : vector<16xf32> to vector<16x1xf32>
    %22 = vector.broadcast %21 : vector<16x1xf32> to vector<16x16xf32>
    %23 = arith.divf %19, %22 : vector<16x16xf32>
    %24 = arith.truncf %23 : vector<16x16xf32> to vector<16x16xbf16>
    %cst_16 = arith.constant dense<0.000000e+00> : vector<16x64xf32>
    %25 = tpu.matmul %24, %13, %cst_16 {dimension_numbers = #tpu.dot_dimension_numbers<[1], [0], [0], [1], [0, 0, 1, 1], [], []>} : vector<16x16xbf16>, vector<16x64xbf16>, vector<16x64xf32> -> vector<16x64xf32>
    %c0_17 = arith.constant 0 : index
    %c0_18 = arith.constant 0 : index
    %26 = vector.load %arg2[%c0_17, %c0_18] : memref<128x128xbf16, #tpu.memory_space<vmem>>, vector<64x128xbf16>
    %c0_19 = arith.constant 0 : index
    %c0_20 = arith.constant 0 : index
    %c0_21 = arith.constant 0 : index
    %27 = vector.load %arg5[%c0_19, %c0_20, %c0_21] : memref<1x16x128xf32, #tpu.memory_space<vmem>>, vector<1x16x128xf32>
    %28 = vector.shape_cast %27 : vector<1x16x128xf32> to vector<16x128xf32>
    %29 = arith.truncf %25 : vector<16x64xf32> to vector<16x64xbf16>
    %cst_22 = arith.constant dense<0.000000e+00> : vector<16x128xf32>
    %30 = tpu.matmul %29, %26, %cst_22 {dimension_numbers = #tpu.dot_dimension_numbers<[1], [0], [0], [1], [0, 0, 1, 1], [], []>} : vector<16x64xbf16>, vector<64x128xbf16>, vector<16x128xf32> -> vector<16x128xf32>
    %31 = arith.addf %28, %30 : vector<16x128xf32>
    %c0_23 = arith.constant 0 : index
    %c0_24 = arith.constant 0 : index
    %c0_25 = arith.constant 0 : index
    %32 = vector.load %arg5[%c0_23, %c0_24, %c0_25] : memref<1x16x128xf32, #tpu.memory_space<vmem>>, vector<1x16x128xf32>
    %33 = vector.shape_cast %32 : vector<1x16x128xf32> to vector<16x128xf32>
    %34 = vector.shape_cast %31 : vector<16x128xf32> to vector<1x16x128xf32>
    tpu.vector_store %arg5[%c0_23, %c0_24, %c0_25], %34 {strides = array<i32>} : memref<1x16x128xf32, #tpu.memory_space<vmem>>, vector<1x16x128xf32>,
    %c0_26 = arith.constant 0 : index
    %c0_27 = arith.constant 0 : index
    %c64 = arith.constant 64 : index
    %35 = vector.load %arg1[%c0_26, %c0_27, %c64] : memref<1x16x384xbf16, #tpu.memory_space<vmem>>, vector<1x16x64xbf16>
    %36 = vector.shape_cast %35 : vector<1x16x64xbf16> to vector<16x64xbf16>
    %c0_28 = arith.constant 0 : index
    %c0_29 = arith.constant 0 : index
    %c192 = arith.constant 192 : index
    %37 = vector.load %arg1[%c0_28, %c0_29, %c192] : memref<1x16x384xbf16, #tpu.memory_space<vmem>>, vector<1x16x64xbf16>
    %38 = vector.shape_cast %37 : vector<1x16x64xbf16> to vector<16x64xbf16>
    %c0_30 = arith.constant 0 : index
    %c0_31 = arith.constant 0 : index
    %c320 = arith.constant 320 : index
    %39 = vector.load %arg1[%c0_30, %c0_31, %c320] : memref<1x16x384xbf16, #tpu.memory_space<vmem>>, vector<1x16x64xbf16>
    %40 = vector.shape_cast %39 : vector<1x16x64xbf16> to vector<16x64xbf16>
    %cst_32 = arith.constant dense<0.000000e+00> : vector<16x16xf32>
    %41 = tpu.matmul %36, %38, %cst_32 {dimension_numbers = #tpu.dot_dimension_numbers<[1], [1], [0], [0], [0, 0, 1, 0], [], []>} : vector<16x64xbf16>, vector<16x64xbf16>, vector<16x16xf32> -> vector<16x16xf32>
    %cst_33 = arith.constant dense<0xFF800000> : vector<16xf32>
    %42 = vector.multi_reduction <maximumf>, %41, %cst_33 [1] : vector<16x16xf32> to vector<16xf32>
    %43 = vector.shape_cast %42 : vector<16xf32> to vector<16x1xf32>
    %44 = vector.broadcast %43 : vector<16x1xf32> to vector<16x16xf32>
    %45 = arith.subf %41, %44 : vector<16x16xf32>
    %46 = math.exp %45 : vector<16x16xf32>
    %cst_34 = arith.constant dense<0.000000e+00> : vector<16xf32>
    %47 = vector.multi_reduction <add>, %46, %cst_34 [1] : vector<16x16xf32> to vector<16xf32>
    %48 = vector.shape_cast %47 : vector<16xf32> to vector<16x1xf32>
    %49 = vector.broadcast %48 : vector<16x1xf32> to vector<16x16xf32>
    %50 = arith.divf %46, %49 : vector<16x16xf32>
    %51 = arith.truncf %50 : vector<16x16xf32> to vector<16x16xbf16>
    %cst_35 = arith.constant dense<0.000000e+00> : vector<16x64xf32>
    %52 = tpu.matmul %51, %40, %cst_35 {dimension_numbers = #tpu.dot_dimension_numbers<[1], [0], [0], [1], [0, 0, 1, 1], [], []>} : vector<16x16xbf16>, vector<16x64xbf16>, vector<16x64xf32> -> vector<16x64xf32>
    %c64_36 = arith.constant 64 : index
    %c0_37 = arith.constant 0 : index
    %53 = vector.load %arg2[%c64_36, %c0_37] : memref<128x128xbf16, #tpu.memory_space<vmem>>, vector<64x128xbf16>
    %c0_38 = arith.constant 0 : index
    %c0_39 = arith.constant 0 : index
    %c0_40 = arith.constant 0 : index
    %54 = vector.load %arg5[%c0_38, %c0_39, %c0_40] : memref<1x16x128xf32, #tpu.memory_space<vmem>>, vector<1x16x128xf32>
    %55 = vector.shape_cast %54 : vector<1x16x128xf32> to vector<16x128xf32>
    %56 = arith.truncf %52 : vector<16x64xf32> to vector<16x64xbf16>
    %cst_41 = arith.constant dense<0.000000e+00> : vector<16x128xf32>
    %57 = tpu.matmul %56, %53, %cst_41 {dimension_numbers = #tpu.dot_dimension_numbers<[1], [0], [0], [1], [0, 0, 1, 1], [], []>} : vector<16x64xbf16>, vector<64x128xbf16>, vector<16x128xf32> -> vector<16x128xf32>
    %58 = arith.addf %55, %57 : vector<16x128xf32>
    %c0_42 = arith.constant 0 : index
    %c0_43 = arith.constant 0 : index
    %c0_44 = arith.constant 0 : index
    %59 = vector.load %arg5[%c0_42, %c0_43, %c0_44] : memref<1x16x128xf32, #tpu.memory_space<vmem>>, vector<1x16x128xf32>
    %60 = vector.shape_cast %59 : vector<1x16x128xf32> to vector<16x128xf32>
    %61 = vector.shape_cast %58 : vector<16x128xf32> to vector<1x16x128xf32>
    tpu.vector_store %arg5[%c0_42, %c0_43, %c0_44], %61 {strides = array<i32>} : memref<1x16x128xf32, #tpu.memory_space<vmem>>, vector<1x16x128xf32>,
    return
  }
  func.func @transform_0(%arg0: i32) -> (i32, i32, i32) {
    %c0_i32 = arith.constant 0 : i32
    %c0_i32_0 = arith.constant 0 : i32
    %c0_i32_1 = arith.constant 0 : i32
    return %arg0, %c0_i32, %c0_i32_0 : i32, i32, i32
  }
  func.func @transform_1(%arg0: i32) -> (i32, i32) {
    %c0_i32 = arith.constant 0 : i32
    %c0_i32_0 = arith.constant 0 : i32
    %c0_i32_1 = arith.constant 0 : i32
    return %c0_i32, %c0_i32_0 : i32, i32
  }
  func.func @transform_2(%arg0: i32) -> (i32, i32) {
    %c0_i32 = arith.constant 0 : i32
    %c0_i32_0 = arith.constant 0 : i32
    %c0_i32_1 = arith.constant 0 : i32
    return %c0_i32, %c0_i32_0 : i32, i32
  }
  func.func @transform_3(%arg0: i32) -> (i32, i32, i32) {
    %c0_i32 = arith.constant 0 : i32
    %c0_i32_0 = arith.constant 0 : i32
    %c0_i32_1 = arith.constant 0 : i32
    return %arg0, %c0_i32, %c0_i32_0 : i32, i32, i32
  }
  func.func @transform_4(%arg0: i32) -> (i32, i32, i32) {
    %c0_i32 = arith.constant 0 : i32
    %c0_i32_0 = arith.constant 0 : i32
    %c0_i32_1 = arith.constant 0 : i32
    return %arg0, %c0_i32, %c0_i32_0 : i32, i32, i32
  }
}

module attributes {stable_mosaic.version = 11 : i64} {
  func.func @_ln_matmul_kernel(%arg0: i32, %arg1: i32, %arg2: memref<32x128xf32, #tpu.memory_space<vmem>>, %arg3: memref<1x128xf32, #tpu.memory_space<vmem>>, %arg4: memref<1x128xf32, #tpu.memory_space<vmem>>, %arg5: memref<128x512xbf16, #tpu.memory_space<vmem>>, %arg6: memref<1x512xf32, #tpu.memory_space<vmem>>, %arg7: memref<32x512xbf16, #tpu.memory_space<vmem>>, %arg8: memref<32x128xbf16, #tpu.memory_space<vmem>>) attributes {dimension_semantics = [#tpu.dimension_semantics<parallel>, #tpu.dimension_semantics<arbitrary>], iteration_bounds = array<i64: 1, 1>, scalar_prefetch = 0 : i64, scratch_operands = 1 : i64, tpu.core_type = #tpu.core_type<tc>, window_params = [{transform_indices = @transform_0, window_bounds = array<i64: 32, 128>}, {pipeline_mode = #tpu.pipeline_mode<synchronous>, transform_indices = @transform_1, window_bounds = array<i64: 1, 128>}, {pipeline_mode = #tpu.pipeline_mode<synchronous>, transform_indices = @transform_2, window_bounds = array<i64: 1, 128>}, {transform_indices = @transform_3, window_bounds = array<i64: 128, 512>}, {transform_indices = @transform_4, window_bounds = array<i64: 1, 512>}, {transform_indices = @transform_5, window_bounds = array<i64: 32, 512>}]} {
    %c0_i32 = arith.constant 0 : i32
    %0 = arith.cmpi eq, %arg1, %c0_i32 : i32
    %1 = arith.extui %0 : i1 to i32
    %c0_i32_0 = arith.constant 0 : i32
    %2 = arith.cmpi ne, %1, %c0_i32_0 : i32
    scf.if %2 {
      %c0_10 = arith.constant 0 : index
      %c0_11 = arith.constant 0 : index
      %19 = vector.load %arg2[%c0_10, %c0_11] : memref<32x128xf32, #tpu.memory_space<vmem>>, vector<32x128xf32>
      %cst_12 = arith.constant dense<0.000000e+00> : vector<32xf32>
      %20 = vector.multi_reduction <add>, %19, %cst_12 [1] : vector<32x128xf32> to vector<32xf32>
      %21 = vector.shape_cast %20 : vector<32xf32> to vector<32x1xf32>
      %cst_13 = arith.constant 1.280000e+02 : f32
      %22 = vector.broadcast %cst_13 : f32 to vector<32x1xf32>
      %23 = arith.divf %21, %22 : vector<32x1xf32>
      %24 = vector.broadcast %23 : vector<32x1xf32> to vector<32x128xf32>
      %25 = arith.subf %19, %24 : vector<32x128xf32>
      %26 = arith.mulf %25, %25 : vector<32x128xf32>
      %cst_14 = arith.constant dense<0.000000e+00> : vector<32xf32>
      %27 = vector.multi_reduction <add>, %26, %cst_14 [1] : vector<32x128xf32> to vector<32xf32>
      %28 = vector.shape_cast %27 : vector<32xf32> to vector<32x1xf32>
      %cst_15 = arith.constant 1.280000e+02 : f32
      %29 = vector.broadcast %cst_15 : f32 to vector<32x1xf32>
      %30 = arith.divf %28, %29 : vector<32x1xf32>
      %31 = vector.broadcast %23 : vector<32x1xf32> to vector<32x128xf32>
      %32 = arith.subf %19, %31 : vector<32x128xf32>
      %cst_16 = arith.constant 9.99999974E-6 : f32
      %33 = vector.broadcast %cst_16 : f32 to vector<32x1xf32>
      %34 = arith.addf %30, %33 : vector<32x1xf32>
      %35 = math.rsqrt %34 : vector<32x1xf32>
      %36 = vector.broadcast %35 : vector<32x1xf32> to vector<32x128xf32>
      %37 = arith.mulf %32, %36 : vector<32x128xf32>
      %c0_17 = arith.constant 0 : index
      %c0_18 = arith.constant 0 : index
      %38 = vector.load %arg3[%c0_17, %c0_18] : memref<1x128xf32, #tpu.memory_space<vmem>>, vector<1x128xf32>
      %39 = vector.broadcast %38 : vector<1x128xf32> to vector<32x128xf32>
      %40 = arith.mulf %37, %39 : vector<32x128xf32>
      %c0_19 = arith.constant 0 : index
      %c0_20 = arith.constant 0 : index
      %41 = vector.load %arg4[%c0_19, %c0_20] : memref<1x128xf32, #tpu.memory_space<vmem>>, vector<1x128xf32>
      %42 = vector.broadcast %41 : vector<1x128xf32> to vector<32x128xf32>
      %43 = arith.addf %40, %42 : vector<32x128xf32>
      %44 = arith.truncf %43 : vector<32x128xf32> to vector<32x128xbf16>
      %c0_21 = arith.constant 0 : index
      %c0_22 = arith.constant 0 : index
      %45 = vector.load %arg8[%c0_21, %c0_22] : memref<32x128xbf16, #tpu.memory_space<vmem>>, vector<32x128xbf16>
      tpu.vector_store %arg8[%c0_21, %c0_22], %44 {strides = array<i32>} : memref<32x128xbf16, #tpu.memory_space<vmem>>, vector<32x128xbf16>,
    } else {
    }
    %c0 = arith.constant 0 : index
    %c0_1 = arith.constant 0 : index
    %3 = vector.load %arg8[%c0, %c0_1] : memref<32x128xbf16, #tpu.memory_space<vmem>>, vector<32x128xbf16>
    %c0_2 = arith.constant 0 : index
    %c0_3 = arith.constant 0 : index
    %4 = vector.load %arg5[%c0_2, %c0_3] : memref<128x512xbf16, #tpu.memory_space<vmem>>, vector<128x512xbf16>
    %cst = arith.constant dense<0.000000e+00> : vector<32x512xf32>
    %5 = tpu.matmul %3, %4, %cst {dimension_numbers = #tpu.dot_dimension_numbers<[1], [0], [0], [1], [0, 0, 1, 1], [], []>} : vector<32x128xbf16>, vector<128x512xbf16>, vector<32x512xf32> -> vector<32x512xf32>
    %c0_4 = arith.constant 0 : index
    %c0_5 = arith.constant 0 : index
    %6 = vector.load %arg6[%c0_4, %c0_5] : memref<1x512xf32, #tpu.memory_space<vmem>>, vector<1x512xf32>
    %7 = vector.broadcast %6 : vector<1x512xf32> to vector<32x512xf32>
    %8 = arith.addf %5, %7 : vector<32x512xf32>
    %cst_6 = arith.constant 1.702000e+00 : f32
    %9 = vector.broadcast %cst_6 : f32 to vector<32x512xf32>
    %10 = arith.mulf %9, %8 : vector<32x512xf32>
    %11 = arith.negf %10 : vector<32x512xf32>
    %12 = math.exp %11 : vector<32x512xf32>
    %cst_7 = arith.constant 1.000000e+00 : f32
    %13 = vector.broadcast %cst_7 : f32 to vector<32x512xf32>
    %14 = arith.addf %13, %12 : vector<32x512xf32>
    %15 = arith.divf %13, %14 : vector<32x512xf32>
    %16 = arith.mulf %8, %15 : vector<32x512xf32>
    %17 = arith.truncf %16 : vector<32x512xf32> to vector<32x512xbf16>
    %c0_8 = arith.constant 0 : index
    %c0_9 = arith.constant 0 : index
    %18 = vector.load %arg7[%c0_8, %c0_9] : memref<32x512xbf16, #tpu.memory_space<vmem>>, vector<32x512xbf16>
    tpu.vector_store %arg7[%c0_8, %c0_9], %17 {strides = array<i32>} : memref<32x512xbf16, #tpu.memory_space<vmem>>, vector<32x512xbf16>,
    return
  }
  func.func @transform_0(%arg0: i32, %arg1: i32) -> (i32, i32) {
    %c0_i32 = arith.constant 0 : i32
    %c0_i32_0 = arith.constant 0 : i32
    return %arg0, %c0_i32 : i32, i32
  }
  func.func @transform_1(%arg0: i32, %arg1: i32) -> (i32, i32) {
    %c0_i32 = arith.constant 0 : i32
    %c0_i32_0 = arith.constant 0 : i32
    %c0_i32_1 = arith.constant 0 : i32
    return %c0_i32, %c0_i32_0 : i32, i32
  }
  func.func @transform_2(%arg0: i32, %arg1: i32) -> (i32, i32) {
    %c0_i32 = arith.constant 0 : i32
    %c0_i32_0 = arith.constant 0 : i32
    %c0_i32_1 = arith.constant 0 : i32
    return %c0_i32, %c0_i32_0 : i32, i32
  }
  func.func @transform_3(%arg0: i32, %arg1: i32) -> (i32, i32) {
    %c0_i32 = arith.constant 0 : i32
    %c0_i32_0 = arith.constant 0 : i32
    return %c0_i32, %arg1 : i32, i32
  }
  func.func @transform_4(%arg0: i32, %arg1: i32) -> (i32, i32) {
    %c0_i32 = arith.constant 0 : i32
    %c0_i32_0 = arith.constant 0 : i32
    return %c0_i32, %arg1 : i32, i32
  }
  func.func @transform_5(%arg0: i32, %arg1: i32) -> (i32, i32) {
    %c0_i32 = arith.constant 0 : i32
    return %arg0, %arg1 : i32, i32
  }
}

module attributes {stable_mosaic.version = 11 : i64} {
  func.func @_matmul_residual_kernel(%arg0: i32, %arg1: i32, %arg2: memref<32x512xbf16, #tpu.memory_space<vmem>>, %arg3: memref<512x128xbf16, #tpu.memory_space<vmem>>, %arg4: memref<1x128xf32, #tpu.memory_space<vmem>>, %arg5: memref<32x128xf32, #tpu.memory_space<vmem>>, %arg6: memref<32x128xf32, #tpu.memory_space<vmem>>) attributes {dimension_semantics = [#tpu.dimension_semantics<parallel>, #tpu.dimension_semantics<parallel>], iteration_bounds = array<i64: 1, 1>, scalar_prefetch = 0 : i64, scratch_operands = 0 : i64, tpu.core_type = #tpu.core_type<tc>, window_params = [{transform_indices = @transform_0, window_bounds = array<i64: 32, 512>}, {transform_indices = @transform_1, window_bounds = array<i64: 512, 128>}, {transform_indices = @transform_2, window_bounds = array<i64: 1, 128>}, {transform_indices = @transform_3, window_bounds = array<i64: 32, 128>}, {transform_indices = @transform_4, window_bounds = array<i64: 32, 128>}]} {
    %c0 = arith.constant 0 : index
    %c0_0 = arith.constant 0 : index
    %0 = vector.load %arg2[%c0, %c0_0] : memref<32x512xbf16, #tpu.memory_space<vmem>>, vector<32x512xbf16>
    %c0_1 = arith.constant 0 : index
    %c0_2 = arith.constant 0 : index
    %1 = vector.load %arg3[%c0_1, %c0_2] : memref<512x128xbf16, #tpu.memory_space<vmem>>, vector<512x128xbf16>
    %cst = arith.constant dense<0.000000e+00> : vector<32x128xf32>
    %2 = tpu.matmul %0, %1, %cst {dimension_numbers = #tpu.dot_dimension_numbers<[1], [0], [0], [1], [0, 0, 1, 1], [], []>} : vector<32x512xbf16>, vector<512x128xbf16>, vector<32x128xf32> -> vector<32x128xf32>
    %c0_3 = arith.constant 0 : index
    %c0_4 = arith.constant 0 : index
    %3 = vector.load %arg4[%c0_3, %c0_4] : memref<1x128xf32, #tpu.memory_space<vmem>>, vector<1x128xf32>
    %4 = vector.broadcast %3 : vector<1x128xf32> to vector<32x128xf32>
    %5 = arith.addf %2, %4 : vector<32x128xf32>
    %c0_5 = arith.constant 0 : index
    %c0_6 = arith.constant 0 : index
    %6 = vector.load %arg5[%c0_5, %c0_6] : memref<32x128xf32, #tpu.memory_space<vmem>>, vector<32x128xf32>
    %7 = arith.addf %5, %6 : vector<32x128xf32>
    %c0_7 = arith.constant 0 : index
    %c0_8 = arith.constant 0 : index
    %8 = vector.load %arg6[%c0_7, %c0_8] : memref<32x128xf32, #tpu.memory_space<vmem>>, vector<32x128xf32>
    tpu.vector_store %arg6[%c0_7, %c0_8], %7 {strides = array<i32>} : memref<32x128xf32, #tpu.memory_space<vmem>>, vector<32x128xf32>,
    return
  }
  func.func @transform_0(%arg0: i32, %arg1: i32) -> (i32, i32) {
    %c0_i32 = arith.constant 0 : i32
    %c0_i32_0 = arith.constant 0 : i32
    return %arg0, %c0_i32 : i32, i32
  }
  func.func @transform_1(%arg0: i32, %arg1: i32) -> (i32, i32) {
    %c0_i32 = arith.constant 0 : i32
    %c0_i32_0 = arith.constant 0 : i32
    return %c0_i32, %arg1 : i32, i32
  }
  func.func @transform_2(%arg0: i32, %arg1: i32) -> (i32, i32) {
    %c0_i32 = arith.constant 0 : i32
    %c0_i32_0 = arith.constant 0 : i32
    return %c0_i32, %arg1 : i32, i32
  }
  func.func @transform_3(%arg0: i32, %arg1: i32) -> (i32, i32) {
    %c0_i32 = arith.constant 0 : i32
    return %arg0, %arg1 : i32, i32
  }
  func.func @transform_4(%arg0: i32, %arg1: i32) -> (i32, i32) {
    %c0_i32 = arith.constant 0 : i32
    return %arg0, %arg1 : i32, i32
  }
}

module attributes {stable_mosaic.version = 11 : i64} {
  func.func @_ln_matmul_kernel(%arg0: i32, %arg1: i32, %arg2: memref<32x128xf32, #tpu.memory_space<vmem>>, %arg3: memref<1x128xf32, #tpu.memory_space<vmem>>, %arg4: memref<1x128xf32, #tpu.memory_space<vmem>>, %arg5: memref<128x384xbf16, #tpu.memory_space<vmem>>, %arg6: memref<1x384xf32, #tpu.memory_space<vmem>>, %arg7: memref<32x384xbf16, #tpu.memory_space<vmem>>, %arg8: memref<32x128xbf16, #tpu.memory_space<vmem>>) attributes {dimension_semantics = [#tpu.dimension_semantics<parallel>, #tpu.dimension_semantics<arbitrary>], iteration_bounds = array<i64: 1, 1>, scalar_prefetch = 0 : i64, scratch_operands = 1 : i64, tpu.core_type = #tpu.core_type<tc>, window_params = [{transform_indices = @transform_0, window_bounds = array<i64: 32, 128>}, {pipeline_mode = #tpu.pipeline_mode<synchronous>, transform_indices = @transform_1, window_bounds = array<i64: 1, 128>}, {pipeline_mode = #tpu.pipeline_mode<synchronous>, transform_indices = @transform_2, window_bounds = array<i64: 1, 128>}, {transform_indices = @transform_3, window_bounds = array<i64: 128, 384>}, {transform_indices = @transform_4, window_bounds = array<i64: 1, 384>}, {transform_indices = @transform_5, window_bounds = array<i64: 32, 384>}]} {
    %c0_i32 = arith.constant 0 : i32
    %0 = arith.cmpi eq, %arg1, %c0_i32 : i32
    %1 = arith.extui %0 : i1 to i32
    %c0_i32_0 = arith.constant 0 : i32
    %2 = arith.cmpi ne, %1, %c0_i32_0 : i32
    scf.if %2 {
      %c0_8 = arith.constant 0 : index
      %c0_9 = arith.constant 0 : index
      %11 = vector.load %arg2[%c0_8, %c0_9] : memref<32x128xf32, #tpu.memory_space<vmem>>, vector<32x128xf32>
      %cst_10 = arith.constant dense<0.000000e+00> : vector<32xf32>
      %12 = vector.multi_reduction <add>, %11, %cst_10 [1] : vector<32x128xf32> to vector<32xf32>
      %13 = vector.shape_cast %12 : vector<32xf32> to vector<32x1xf32>
      %cst_11 = arith.constant 1.280000e+02 : f32
      %14 = vector.broadcast %cst_11 : f32 to vector<32x1xf32>
      %15 = arith.divf %13, %14 : vector<32x1xf32>
      %16 = vector.broadcast %15 : vector<32x1xf32> to vector<32x128xf32>
      %17 = arith.subf %11, %16 : vector<32x128xf32>
      %18 = arith.mulf %17, %17 : vector<32x128xf32>
      %cst_12 = arith.constant dense<0.000000e+00> : vector<32xf32>
      %19 = vector.multi_reduction <add>, %18, %cst_12 [1] : vector<32x128xf32> to vector<32xf32>
      %20 = vector.shape_cast %19 : vector<32xf32> to vector<32x1xf32>
      %cst_13 = arith.constant 1.280000e+02 : f32
      %21 = vector.broadcast %cst_13 : f32 to vector<32x1xf32>
      %22 = arith.divf %20, %21 : vector<32x1xf32>
      %23 = vector.broadcast %15 : vector<32x1xf32> to vector<32x128xf32>
      %24 = arith.subf %11, %23 : vector<32x128xf32>
      %cst_14 = arith.constant 9.99999974E-6 : f32
      %25 = vector.broadcast %cst_14 : f32 to vector<32x1xf32>
      %26 = arith.addf %22, %25 : vector<32x1xf32>
      %27 = math.rsqrt %26 : vector<32x1xf32>
      %28 = vector.broadcast %27 : vector<32x1xf32> to vector<32x128xf32>
      %29 = arith.mulf %24, %28 : vector<32x128xf32>
      %c0_15 = arith.constant 0 : index
      %c0_16 = arith.constant 0 : index
      %30 = vector.load %arg3[%c0_15, %c0_16] : memref<1x128xf32, #tpu.memory_space<vmem>>, vector<1x128xf32>
      %31 = vector.broadcast %30 : vector<1x128xf32> to vector<32x128xf32>
      %32 = arith.mulf %29, %31 : vector<32x128xf32>
      %c0_17 = arith.constant 0 : index
      %c0_18 = arith.constant 0 : index
      %33 = vector.load %arg4[%c0_17, %c0_18] : memref<1x128xf32, #tpu.memory_space<vmem>>, vector<1x128xf32>
      %34 = vector.broadcast %33 : vector<1x128xf32> to vector<32x128xf32>
      %35 = arith.addf %32, %34 : vector<32x128xf32>
      %36 = arith.truncf %35 : vector<32x128xf32> to vector<32x128xbf16>
      %c0_19 = arith.constant 0 : index
      %c0_20 = arith.constant 0 : index
      %37 = vector.load %arg8[%c0_19, %c0_20] : memref<32x128xbf16, #tpu.memory_space<vmem>>, vector<32x128xbf16>
      tpu.vector_store %arg8[%c0_19, %c0_20], %36 {strides = array<i32>} : memref<32x128xbf16, #tpu.memory_space<vmem>>, vector<32x128xbf16>,
    } else {
    }
    %c0 = arith.constant 0 : index
    %c0_1 = arith.constant 0 : index
    %3 = vector.load %arg8[%c0, %c0_1] : memref<32x128xbf16, #tpu.memory_space<vmem>>, vector<32x128xbf16>
    %c0_2 = arith.constant 0 : index
    %c0_3 = arith.constant 0 : index
    %4 = vector.load %arg5[%c0_2, %c0_3] : memref<128x384xbf16, #tpu.memory_space<vmem>>, vector<128x384xbf16>
    %cst = arith.constant dense<0.000000e+00> : vector<32x384xf32>
    %5 = tpu.matmul %3, %4, %cst {dimension_numbers = #tpu.dot_dimension_numbers<[1], [0], [0], [1], [0, 0, 1, 1], [], []>} : vector<32x128xbf16>, vector<128x384xbf16>, vector<32x384xf32> -> vector<32x384xf32>
    %c0_4 = arith.constant 0 : index
    %c0_5 = arith.constant 0 : index
    %6 = vector.load %arg6[%c0_4, %c0_5] : memref<1x384xf32, #tpu.memory_space<vmem>>, vector<1x384xf32>
    %7 = vector.broadcast %6 : vector<1x384xf32> to vector<32x384xf32>
    %8 = arith.addf %5, %7 : vector<32x384xf32>
    %9 = arith.truncf %8 : vector<32x384xf32> to vector<32x384xbf16>
    %c0_6 = arith.constant 0 : index
    %c0_7 = arith.constant 0 : index
    %10 = vector.load %arg7[%c0_6, %c0_7] : memref<32x384xbf16, #tpu.memory_space<vmem>>, vector<32x384xbf16>
    tpu.vector_store %arg7[%c0_6, %c0_7], %9 {strides = array<i32>} : memref<32x384xbf16, #tpu.memory_space<vmem>>, vector<32x384xbf16>,
    return
  }
  func.func @transform_0(%arg0: i32, %arg1: i32) -> (i32, i32) {
    %c0_i32 = arith.constant 0 : i32
    %c0_i32_0 = arith.constant 0 : i32
    return %arg0, %c0_i32 : i32, i32
  }
  func.func @transform_1(%arg0: i32, %arg1: i32) -> (i32, i32) {
    %c0_i32 = arith.constant 0 : i32
    %c0_i32_0 = arith.constant 0 : i32
    %c0_i32_1 = arith.constant 0 : i32
    return %c0_i32, %c0_i32_0 : i32, i32
  }
  func.func @transform_2(%arg0: i32, %arg1: i32) -> (i32, i32) {
    %c0_i32 = arith.constant 0 : i32
    %c0_i32_0 = arith.constant 0 : i32
    %c0_i32_1 = arith.constant 0 : i32
    return %c0_i32, %c0_i32_0 : i32, i32
  }
  func.func @transform_3(%arg0: i32, %arg1: i32) -> (i32, i32) {
    %c0_i32 = arith.constant 0 : i32
    %c0_i32_0 = arith.constant 0 : i32
    return %c0_i32, %arg1 : i32, i32
  }
  func.func @transform_4(%arg0: i32, %arg1: i32) -> (i32, i32) {
    %c0_i32 = arith.constant 0 : i32
    %c0_i32_0 = arith.constant 0 : i32
    return %c0_i32, %arg1 : i32, i32
  }
  func.func @transform_5(%arg0: i32, %arg1: i32) -> (i32, i32) {
    %c0_i32 = arith.constant 0 : i32
    return %arg0, %arg1 : i32, i32
  }
}

module attributes {stable_mosaic.version = 11 : i64} {
  func.func @kernel(%arg0: i32, %arg1: memref<1x16x384xbf16, #tpu.memory_space<vmem>>, %arg2: memref<128x128xbf16, #tpu.memory_space<vmem>>, %arg3: memref<1x128xf32, #tpu.memory_space<vmem>>, %arg4: memref<1x16x128xf32, #tpu.memory_space<vmem>>, %arg5: memref<1x16x128xf32, #tpu.memory_space<vmem>>, %arg6: memref<1x1x16xf32, #tpu.memory_space<vmem>>) attributes {dimension_semantics = [#tpu.dimension_semantics<parallel>], iteration_bounds = array<i64: 2>, scalar_prefetch = 0 : i64, scratch_operands = 0 : i64, tpu.core_type = #tpu.core_type<tc>, window_params = [{transform_indices = @transform_0, window_bounds = array<i64: 1, 16, 384>}, {pipeline_mode = #tpu.pipeline_mode<synchronous>, transform_indices = @transform_1, window_bounds = array<i64: 128, 128>}, {pipeline_mode = #tpu.pipeline_mode<synchronous>, transform_indices = @transform_2, window_bounds = array<i64: 1, 128>}, {transform_indices = @transform_3, window_bounds = array<i64: 1, 16, 128>}, {transform_indices = @transform_4, window_bounds = array<i64: 1, 16, 128>}, {transform_indices = @transform_5, window_bounds = array<i64: 1, 1, 16>}]} {
    %c0 = arith.constant 0 : index
    %c0_0 = arith.constant 0 : index
    %c0_1 = arith.constant 0 : index
    %0 = vector.load %arg4[%c0, %c0_0, %c0_1] : memref<1x16x128xf32, #tpu.memory_space<vmem>>, vector<1x16x128xf32>
    %1 = vector.shape_cast %0 : vector<1x16x128xf32> to vector<16x128xf32>
    %c0_2 = arith.constant 0 : index
    %c0_3 = arith.constant 0 : index
    %2 = vector.load %arg3[%c0_2, %c0_3] : memref<1x128xf32, #tpu.memory_space<vmem>>, vector<1x128xf32>
    %3 = vector.broadcast %2 : vector<1x128xf32> to vector<16x128xf32>
    %4 = arith.addf %1, %3 : vector<16x128xf32>
    %c0_4 = arith.constant 0 : index
    %c0_5 = arith.constant 0 : index
    %c0_6 = arith.constant 0 : index
    %5 = vector.load %arg5[%c0_4, %c0_5, %c0_6] : memref<1x16x128xf32, #tpu.memory_space<vmem>>, vector<1x16x128xf32>
    %6 = vector.shape_cast %5 : vector<1x16x128xf32> to vector<16x128xf32>
    %7 = vector.shape_cast %4 : vector<16x128xf32> to vector<1x16x128xf32>
    tpu.vector_store %arg5[%c0_4, %c0_5, %c0_6], %7 {strides = array<i32>} : memref<1x16x128xf32, #tpu.memory_space<vmem>>, vector<1x16x128xf32>,
    %c0_7 = arith.constant 0 : index
    %c0_8 = arith.constant 0 : index
    %c0_9 = arith.constant 0 : index
    %8 = vector.load %arg1[%c0_7, %c0_8, %c0_9] : memref<1x16x384xbf16, #tpu.memory_space<vmem>>, vector<1x16x64xbf16>
    %9 = vector.shape_cast %8 : vector<1x16x64xbf16> to vector<16x64xbf16>
    %c0_10 = arith.constant 0 : index
    %c0_11 = arith.constant 0 : index
    %c128 = arith.constant 128 : index
    %10 = vector.load %arg1[%c0_10, %c0_11, %c128] : memref<1x16x384xbf16, #tpu.memory_space<vmem>>, vector<1x16x64xbf16>
    %11 = vector.shape_cast %10 : vector<1x16x64xbf16> to vector<16x64xbf16>
    %c0_12 = arith.constant 0 : index
    %c0_13 = arith.constant 0 : index
    %c256 = arith.constant 256 : index
    %12 = vector.load %arg1[%c0_12, %c0_13, %c256] : memref<1x16x384xbf16, #tpu.memory_space<vmem>>, vector<1x16x64xbf16>
    %13 = vector.shape_cast %12 : vector<1x16x64xbf16> to vector<16x64xbf16>
    %cst = arith.constant dense<0.000000e+00> : vector<16x16xf32>
    %14 = tpu.matmul %9, %11, %cst {dimension_numbers = #tpu.dot_dimension_numbers<[1], [1], [0], [0], [0, 0, 1, 0], [], []>} : vector<16x64xbf16>, vector<16x64xbf16>, vector<16x16xf32> -> vector<16x16xf32>
    %cst_14 = arith.constant dense<0xFF800000> : vector<16xf32>
    %15 = vector.multi_reduction <maximumf>, %14, %cst_14 [1] : vector<16x16xf32> to vector<16xf32>
    %16 = vector.shape_cast %15 : vector<16xf32> to vector<16x1xf32>
    %17 = vector.broadcast %16 : vector<16x1xf32> to vector<16x16xf32>
    %18 = arith.subf %14, %17 : vector<16x16xf32>
    %19 = math.exp %18 : vector<16x16xf32>
    %cst_15 = arith.constant dense<0.000000e+00> : vector<16xf32>
    %20 = vector.multi_reduction <add>, %19, %cst_15 [1] : vector<16x16xf32> to vector<16xf32>
    %21 = vector.shape_cast %20 : vector<16xf32> to vector<16x1xf32>
    %22 = vector.broadcast %21 : vector<16x1xf32> to vector<16x16xf32>
    %23 = arith.divf %19, %22 : vector<16x16xf32>
    %24 = arith.truncf %23 : vector<16x16xf32> to vector<16x16xbf16>
    %cst_16 = arith.constant dense<0.000000e+00> : vector<16x64xf32>
    %25 = tpu.matmul %24, %13, %cst_16 {dimension_numbers = #tpu.dot_dimension_numbers<[1], [0], [0], [1], [0, 0, 1, 1], [], []>} : vector<16x16xbf16>, vector<16x64xbf16>, vector<16x64xf32> -> vector<16x64xf32>
    %c0_17 = arith.constant 0 : index
    %c0_18 = arith.constant 0 : index
    %26 = vector.load %arg2[%c0_17, %c0_18] : memref<128x128xbf16, #tpu.memory_space<vmem>>, vector<64x128xbf16>
    %c0_19 = arith.constant 0 : index
    %c0_20 = arith.constant 0 : index
    %c0_21 = arith.constant 0 : index
    %27 = vector.load %arg5[%c0_19, %c0_20, %c0_21] : memref<1x16x128xf32, #tpu.memory_space<vmem>>, vector<1x16x128xf32>
    %28 = vector.shape_cast %27 : vector<1x16x128xf32> to vector<16x128xf32>
    %29 = arith.truncf %25 : vector<16x64xf32> to vector<16x64xbf16>
    %cst_22 = arith.constant dense<0.000000e+00> : vector<16x128xf32>
    %30 = tpu.matmul %29, %26, %cst_22 {dimension_numbers = #tpu.dot_dimension_numbers<[1], [0], [0], [1], [0, 0, 1, 1], [], []>} : vector<16x64xbf16>, vector<64x128xbf16>, vector<16x128xf32> -> vector<16x128xf32>
    %31 = arith.addf %28, %30 : vector<16x128xf32>
    %c0_23 = arith.constant 0 : index
    %c0_24 = arith.constant 0 : index
    %c0_25 = arith.constant 0 : index
    %32 = vector.load %arg5[%c0_23, %c0_24, %c0_25] : memref<1x16x128xf32, #tpu.memory_space<vmem>>, vector<1x16x128xf32>
    %33 = vector.shape_cast %32 : vector<1x16x128xf32> to vector<16x128xf32>
    %34 = vector.shape_cast %31 : vector<16x128xf32> to vector<1x16x128xf32>
    tpu.vector_store %arg5[%c0_23, %c0_24, %c0_25], %34 {strides = array<i32>} : memref<1x16x128xf32, #tpu.memory_space<vmem>>, vector<1x16x128xf32>,
    %35 = tpu.iota {dimensions = array<i32: 0>} : vector<16x1xi32>
    %c14_i32 = arith.constant 14 : i32
    %36 = vector.broadcast %c14_i32 : i32 to vector<16x1xi32>
    %37 = arith.cmpi sge, %35, %36 : vector<16x1xi32>
    %38 = arith.extui %37 : vector<16x1xi1> to vector<16x1xi32>
    %39 = arith.sitofp %38 : vector<16x1xi32> to vector<16x1xf32>
    %40 = vector.broadcast %39 : vector<16x1xf32> to vector<16x16xf32>
    %41 = arith.mulf %23, %40 : vector<16x16xf32>
    %cst_26 = arith.constant dense<0.000000e+00> : vector<16xf32>
    %42 = vector.multi_reduction <add>, %41, %cst_26 [0] : vector<16x16xf32> to vector<16xf32>
    %43 = vector.shape_cast %42 : vector<16xf32> to vector<1x16xf32>
    %c0_27 = arith.constant 0 : index
    %c0_28 = arith.constant 0 : index
    %c64 = arith.constant 64 : index
    %44 = vector.load %arg1[%c0_27, %c0_28, %c64] : memref<1x16x384xbf16, #tpu.memory_space<vmem>>, vector<1x16x64xbf16>
    %45 = vector.shape_cast %44 : vector<1x16x64xbf16> to vector<16x64xbf16>
    %c0_29 = arith.constant 0 : index
    %c0_30 = arith.constant 0 : index
    %c192 = arith.constant 192 : index
    %46 = vector.load %arg1[%c0_29, %c0_30, %c192] : memref<1x16x384xbf16, #tpu.memory_space<vmem>>, vector<1x16x64xbf16>
    %47 = vector.shape_cast %46 : vector<1x16x64xbf16> to vector<16x64xbf16>
    %c0_31 = arith.constant 0 : index
    %c0_32 = arith.constant 0 : index
    %c320 = arith.constant 320 : index
    %48 = vector.load %arg1[%c0_31, %c0_32, %c320] : memref<1x16x384xbf16, #tpu.memory_space<vmem>>, vector<1x16x64xbf16>
    %49 = vector.shape_cast %48 : vector<1x16x64xbf16> to vector<16x64xbf16>
    %cst_33 = arith.constant dense<0.000000e+00> : vector<16x16xf32>
    %50 = tpu.matmul %45, %47, %cst_33 {dimension_numbers = #tpu.dot_dimension_numbers<[1], [1], [0], [0], [0, 0, 1, 0], [], []>} : vector<16x64xbf16>, vector<16x64xbf16>, vector<16x16xf32> -> vector<16x16xf32>
    %cst_34 = arith.constant dense<0xFF800000> : vector<16xf32>
    %51 = vector.multi_reduction <maximumf>, %50, %cst_34 [1] : vector<16x16xf32> to vector<16xf32>
    %52 = vector.shape_cast %51 : vector<16xf32> to vector<16x1xf32>
    %53 = vector.broadcast %52 : vector<16x1xf32> to vector<16x16xf32>
    %54 = arith.subf %50, %53 : vector<16x16xf32>
    %55 = math.exp %54 : vector<16x16xf32>
    %cst_35 = arith.constant dense<0.000000e+00> : vector<16xf32>
    %56 = vector.multi_reduction <add>, %55, %cst_35 [1] : vector<16x16xf32> to vector<16xf32>
    %57 = vector.shape_cast %56 : vector<16xf32> to vector<16x1xf32>
    %58 = vector.broadcast %57 : vector<16x1xf32> to vector<16x16xf32>
    %59 = arith.divf %55, %58 : vector<16x16xf32>
    %60 = arith.truncf %59 : vector<16x16xf32> to vector<16x16xbf16>
    %cst_36 = arith.constant dense<0.000000e+00> : vector<16x64xf32>
    %61 = tpu.matmul %60, %49, %cst_36 {dimension_numbers = #tpu.dot_dimension_numbers<[1], [0], [0], [1], [0, 0, 1, 1], [], []>} : vector<16x16xbf16>, vector<16x64xbf16>, vector<16x64xf32> -> vector<16x64xf32>
    %c64_37 = arith.constant 64 : index
    %c0_38 = arith.constant 0 : index
    %62 = vector.load %arg2[%c64_37, %c0_38] : memref<128x128xbf16, #tpu.memory_space<vmem>>, vector<64x128xbf16>
    %c0_39 = arith.constant 0 : index
    %c0_40 = arith.constant 0 : index
    %c0_41 = arith.constant 0 : index
    %63 = vector.load %arg5[%c0_39, %c0_40, %c0_41] : memref<1x16x128xf32, #tpu.memory_space<vmem>>, vector<1x16x128xf32>
    %64 = vector.shape_cast %63 : vector<1x16x128xf32> to vector<16x128xf32>
    %65 = arith.truncf %61 : vector<16x64xf32> to vector<16x64xbf16>
    %cst_42 = arith.constant dense<0.000000e+00> : vector<16x128xf32>
    %66 = tpu.matmul %65, %62, %cst_42 {dimension_numbers = #tpu.dot_dimension_numbers<[1], [0], [0], [1], [0, 0, 1, 1], [], []>} : vector<16x64xbf16>, vector<64x128xbf16>, vector<16x128xf32> -> vector<16x128xf32>
    %67 = arith.addf %64, %66 : vector<16x128xf32>
    %c0_43 = arith.constant 0 : index
    %c0_44 = arith.constant 0 : index
    %c0_45 = arith.constant 0 : index
    %68 = vector.load %arg5[%c0_43, %c0_44, %c0_45] : memref<1x16x128xf32, #tpu.memory_space<vmem>>, vector<1x16x128xf32>
    %69 = vector.shape_cast %68 : vector<1x16x128xf32> to vector<16x128xf32>
    %70 = vector.shape_cast %67 : vector<16x128xf32> to vector<1x16x128xf32>
    tpu.vector_store %arg5[%c0_43, %c0_44, %c0_45], %70 {strides = array<i32>} : memref<1x16x128xf32, #tpu.memory_space<vmem>>, vector<1x16x128xf32>,
    %71 = tpu.iota {dimensions = array<i32: 0>} : vector<16x1xi32>
    %c14_i32_46 = arith.constant 14 : i32
    %72 = vector.broadcast %c14_i32_46 : i32 to vector<16x1xi32>
    %73 = arith.cmpi sge, %71, %72 : vector<16x1xi32>
    %74 = arith.extui %73 : vector<16x1xi1> to vector<16x1xi32>
    %75 = arith.sitofp %74 : vector<16x1xi32> to vector<16x1xf32>
    %76 = vector.broadcast %75 : vector<16x1xf32> to vector<16x16xf32>
    %77 = arith.mulf %59, %76 : vector<16x16xf32>
    %cst_47 = arith.constant dense<0.000000e+00> : vector<16xf32>
    %78 = vector.multi_reduction <add>, %77, %cst_47 [0] : vector<16x16xf32> to vector<16xf32>
    %79 = vector.shape_cast %78 : vector<16xf32> to vector<1x16xf32>
    %80 = arith.addf %43, %79 : vector<1x16xf32>
    %cst_48 = arith.constant 2.500000e-01 : f32
    %81 = vector.broadcast %cst_48 : f32 to vector<1x16xf32>
    %82 = arith.mulf %80, %81 : vector<1x16xf32>
    %c0_49 = arith.constant 0 : index
    %c0_50 = arith.constant 0 : index
    %c0_51 = arith.constant 0 : index
    %83 = vector.load %arg6[%c0_49, %c0_50, %c0_51] : memref<1x1x16xf32, #tpu.memory_space<vmem>>, vector<1x1x16xf32>
    %84 = vector.shape_cast %83 : vector<1x1x16xf32> to vector<1x16xf32>
    %85 = vector.shape_cast %82 : vector<1x16xf32> to vector<1x1x16xf32>
    tpu.vector_store %arg6[%c0_49, %c0_50, %c0_51], %85 {strides = array<i32>} : memref<1x1x16xf32, #tpu.memory_space<vmem>>, vector<1x1x16xf32>,
    return
  }
  func.func @transform_0(%arg0: i32) -> (i32, i32, i32) {
    %c0_i32 = arith.constant 0 : i32
    %c0_i32_0 = arith.constant 0 : i32
    %c0_i32_1 = arith.constant 0 : i32
    return %arg0, %c0_i32, %c0_i32_0 : i32, i32, i32
  }
  func.func @transform_1(%arg0: i32) -> (i32, i32) {
    %c0_i32 = arith.constant 0 : i32
    %c0_i32_0 = arith.constant 0 : i32
    %c0_i32_1 = arith.constant 0 : i32
    return %c0_i32, %c0_i32_0 : i32, i32
  }
  func.func @transform_2(%arg0: i32) -> (i32, i32) {
    %c0_i32 = arith.constant 0 : i32
    %c0_i32_0 = arith.constant 0 : i32
    %c0_i32_1 = arith.constant 0 : i32
    return %c0_i32, %c0_i32_0 : i32, i32
  }
  func.func @transform_3(%arg0: i32) -> (i32, i32, i32) {
    %c0_i32 = arith.constant 0 : i32
    %c0_i32_0 = arith.constant 0 : i32
    %c0_i32_1 = arith.constant 0 : i32
    return %arg0, %c0_i32, %c0_i32_0 : i32, i32, i32
  }
  func.func @transform_4(%arg0: i32) -> (i32, i32, i32) {
    %c0_i32 = arith.constant 0 : i32
    %c0_i32_0 = arith.constant 0 : i32
    %c0_i32_1 = arith.constant 0 : i32
    return %arg0, %c0_i32, %c0_i32_0 : i32, i32, i32
  }
  func.func @transform_5(%arg0: i32) -> (i32, i32, i32) {
    %c0_i32 = arith.constant 0 : i32
    %c0_i32_0 = arith.constant 0 : i32
    %c0_i32_1 = arith.constant 0 : i32
    return %arg0, %c0_i32, %c0_i32_0 : i32, i32, i32
  }
}

module attributes {stable_mosaic.version = 11 : i64} {
  func.func @_matmul_residual_kernel(%arg0: i32, %arg1: i32, %arg2: memref<26x512xbf16, #tpu.memory_space<vmem>>, %arg3: memref<512x128xbf16, #tpu.memory_space<vmem>>, %arg4: memref<1x128xf32, #tpu.memory_space<vmem>>, %arg5: memref<26x128xf32, #tpu.memory_space<vmem>>, %arg6: memref<26x128xf32, #tpu.memory_space<vmem>>) attributes {dimension_semantics = [#tpu.dimension_semantics<parallel>, #tpu.dimension_semantics<parallel>], iteration_bounds = array<i64: 1, 1>, scalar_prefetch = 0 : i64, scratch_operands = 0 : i64, tpu.core_type = #tpu.core_type<tc>, window_params = [{transform_indices = @transform_0, window_bounds = array<i64: 26, 512>}, {transform_indices = @transform_1, window_bounds = array<i64: 512, 128>}, {transform_indices = @transform_2, window_bounds = array<i64: 1, 128>}, {transform_indices = @transform_3, window_bounds = array<i64: 26, 128>}, {transform_indices = @transform_4, window_bounds = array<i64: 26, 128>}]} {
    %c0 = arith.constant 0 : index
    %c0_0 = arith.constant 0 : index
    %0 = vector.load %arg2[%c0, %c0_0] : memref<26x512xbf16, #tpu.memory_space<vmem>>, vector<26x512xbf16>
    %c0_1 = arith.constant 0 : index
    %c0_2 = arith.constant 0 : index
    %1 = vector.load %arg3[%c0_1, %c0_2] : memref<512x128xbf16, #tpu.memory_space<vmem>>, vector<512x128xbf16>
    %cst = arith.constant dense<0.000000e+00> : vector<26x128xf32>
    %2 = tpu.matmul %0, %1, %cst {dimension_numbers = #tpu.dot_dimension_numbers<[1], [0], [0], [1], [0, 0, 1, 1], [], []>} : vector<26x512xbf16>, vector<512x128xbf16>, vector<26x128xf32> -> vector<26x128xf32>
    %c0_3 = arith.constant 0 : index
    %c0_4 = arith.constant 0 : index
    %3 = vector.load %arg4[%c0_3, %c0_4] : memref<1x128xf32, #tpu.memory_space<vmem>>, vector<1x128xf32>
    %4 = vector.broadcast %3 : vector<1x128xf32> to vector<26x128xf32>
    %5 = arith.addf %2, %4 : vector<26x128xf32>
    %c0_5 = arith.constant 0 : index
    %c0_6 = arith.constant 0 : index
    %6 = vector.load %arg5[%c0_5, %c0_6] : memref<26x128xf32, #tpu.memory_space<vmem>>, vector<26x128xf32>
    %7 = arith.addf %5, %6 : vector<26x128xf32>
    %c0_7 = arith.constant 0 : index
    %c0_8 = arith.constant 0 : index
    %8 = vector.load %arg6[%c0_7, %c0_8] : memref<26x128xf32, #tpu.memory_space<vmem>>, vector<26x128xf32>
    tpu.vector_store %arg6[%c0_7, %c0_8], %7 {strides = array<i32>} : memref<26x128xf32, #tpu.memory_space<vmem>>, vector<26x128xf32>,
    return
  }
  func.func @transform_0(%arg0: i32, %arg1: i32) -> (i32, i32) {
    %c0_i32 = arith.constant 0 : i32
    %c0_i32_0 = arith.constant 0 : i32
    return %arg0, %c0_i32 : i32, i32
  }
  func.func @transform_1(%arg0: i32, %arg1: i32) -> (i32, i32) {
    %c0_i32 = arith.constant 0 : i32
    %c0_i32_0 = arith.constant 0 : i32
    return %c0_i32, %arg1 : i32, i32
  }
  func.func @transform_2(%arg0: i32, %arg1: i32) -> (i32, i32) {
    %c0_i32 = arith.constant 0 : i32
    %c0_i32_0 = arith.constant 0 : i32
    return %c0_i32, %arg1 : i32, i32
  }
  func.func @transform_3(%arg0: i32, %arg1: i32) -> (i32, i32) {
    %c0_i32 = arith.constant 0 : i32
    return %arg0, %arg1 : i32, i32
  }
  func.func @transform_4(%arg0: i32, %arg1: i32) -> (i32, i32) {
    %c0_i32 = arith.constant 0 : i32
    return %arg0, %arg1 : i32, i32
  }
}

module attributes {stable_mosaic.version = 11 : i64} {
  func.func @_ln_matmul_kernel(%arg0: i32, %arg1: i32, %arg2: memref<26x128xf32, #tpu.memory_space<vmem>>, %arg3: memref<1x128xf32, #tpu.memory_space<vmem>>, %arg4: memref<1x128xf32, #tpu.memory_space<vmem>>, %arg5: memref<128x384xbf16, #tpu.memory_space<vmem>>, %arg6: memref<1x384xf32, #tpu.memory_space<vmem>>, %arg7: memref<26x384xbf16, #tpu.memory_space<vmem>>, %arg8: memref<26x128xbf16, #tpu.memory_space<vmem>>) attributes {dimension_semantics = [#tpu.dimension_semantics<parallel>, #tpu.dimension_semantics<arbitrary>], iteration_bounds = array<i64: 1, 1>, scalar_prefetch = 0 : i64, scratch_operands = 1 : i64, tpu.core_type = #tpu.core_type<tc>, window_params = [{transform_indices = @transform_0, window_bounds = array<i64: 26, 128>}, {pipeline_mode = #tpu.pipeline_mode<synchronous>, transform_indices = @transform_1, window_bounds = array<i64: 1, 128>}, {pipeline_mode = #tpu.pipeline_mode<synchronous>, transform_indices = @transform_2, window_bounds = array<i64: 1, 128>}, {transform_indices = @transform_3, window_bounds = array<i64: 128, 384>}, {transform_indices = @transform_4, window_bounds = array<i64: 1, 384>}, {transform_indices = @transform_5, window_bounds = array<i64: 26, 384>}]} {
    %c0_i32 = arith.constant 0 : i32
    %0 = arith.cmpi eq, %arg1, %c0_i32 : i32
    %1 = arith.extui %0 : i1 to i32
    %c0_i32_0 = arith.constant 0 : i32
    %2 = arith.cmpi ne, %1, %c0_i32_0 : i32
    scf.if %2 {
      %c0_8 = arith.constant 0 : index
      %c0_9 = arith.constant 0 : index
      %11 = vector.load %arg2[%c0_8, %c0_9] : memref<26x128xf32, #tpu.memory_space<vmem>>, vector<26x128xf32>
      %cst_10 = arith.constant dense<0.000000e+00> : vector<26xf32>
      %12 = vector.multi_reduction <add>, %11, %cst_10 [1] : vector<26x128xf32> to vector<26xf32>
      %13 = vector.shape_cast %12 : vector<26xf32> to vector<26x1xf32>
      %cst_11 = arith.constant 1.280000e+02 : f32
      %14 = vector.broadcast %cst_11 : f32 to vector<26x1xf32>
      %15 = arith.divf %13, %14 : vector<26x1xf32>
      %16 = vector.broadcast %15 : vector<26x1xf32> to vector<26x128xf32>
      %17 = arith.subf %11, %16 : vector<26x128xf32>
      %18 = arith.mulf %17, %17 : vector<26x128xf32>
      %cst_12 = arith.constant dense<0.000000e+00> : vector<26xf32>
      %19 = vector.multi_reduction <add>, %18, %cst_12 [1] : vector<26x128xf32> to vector<26xf32>
      %20 = vector.shape_cast %19 : vector<26xf32> to vector<26x1xf32>
      %cst_13 = arith.constant 1.280000e+02 : f32
      %21 = vector.broadcast %cst_13 : f32 to vector<26x1xf32>
      %22 = arith.divf %20, %21 : vector<26x1xf32>
      %23 = vector.broadcast %15 : vector<26x1xf32> to vector<26x128xf32>
      %24 = arith.subf %11, %23 : vector<26x128xf32>
      %cst_14 = arith.constant 9.99999974E-6 : f32
      %25 = vector.broadcast %cst_14 : f32 to vector<26x1xf32>
      %26 = arith.addf %22, %25 : vector<26x1xf32>
      %27 = math.rsqrt %26 : vector<26x1xf32>
      %28 = vector.broadcast %27 : vector<26x1xf32> to vector<26x128xf32>
      %29 = arith.mulf %24, %28 : vector<26x128xf32>
      %c0_15 = arith.constant 0 : index
      %c0_16 = arith.constant 0 : index
      %30 = vector.load %arg3[%c0_15, %c0_16] : memref<1x128xf32, #tpu.memory_space<vmem>>, vector<1x128xf32>
      %31 = vector.broadcast %30 : vector<1x128xf32> to vector<26x128xf32>
      %32 = arith.mulf %29, %31 : vector<26x128xf32>
      %c0_17 = arith.constant 0 : index
      %c0_18 = arith.constant 0 : index
      %33 = vector.load %arg4[%c0_17, %c0_18] : memref<1x128xf32, #tpu.memory_space<vmem>>, vector<1x128xf32>
      %34 = vector.broadcast %33 : vector<1x128xf32> to vector<26x128xf32>
      %35 = arith.addf %32, %34 : vector<26x128xf32>
      %36 = arith.truncf %35 : vector<26x128xf32> to vector<26x128xbf16>
      %c0_19 = arith.constant 0 : index
      %c0_20 = arith.constant 0 : index
      %37 = vector.load %arg8[%c0_19, %c0_20] : memref<26x128xbf16, #tpu.memory_space<vmem>>, vector<26x128xbf16>
      tpu.vector_store %arg8[%c0_19, %c0_20], %36 {strides = array<i32>} : memref<26x128xbf16, #tpu.memory_space<vmem>>, vector<26x128xbf16>,
    } else {
    }
    %c0 = arith.constant 0 : index
    %c0_1 = arith.constant 0 : index
    %3 = vector.load %arg8[%c0, %c0_1] : memref<26x128xbf16, #tpu.memory_space<vmem>>, vector<26x128xbf16>
    %c0_2 = arith.constant 0 : index
    %c0_3 = arith.constant 0 : index
    %4 = vector.load %arg5[%c0_2, %c0_3] : memref<128x384xbf16, #tpu.memory_space<vmem>>, vector<128x384xbf16>
    %cst = arith.constant dense<0.000000e+00> : vector<26x384xf32>
    %5 = tpu.matmul %3, %4, %cst {dimension_numbers = #tpu.dot_dimension_numbers<[1], [0], [0], [1], [0, 0, 1, 1], [], []>} : vector<26x128xbf16>, vector<128x384xbf16>, vector<26x384xf32> -> vector<26x384xf32>
    %c0_4 = arith.constant 0 : index
    %c0_5 = arith.constant 0 : index
    %6 = vector.load %arg6[%c0_4, %c0_5] : memref<1x384xf32, #tpu.memory_space<vmem>>, vector<1x384xf32>
    %7 = vector.broadcast %6 : vector<1x384xf32> to vector<26x384xf32>
    %8 = arith.addf %5, %7 : vector<26x384xf32>
    %9 = arith.truncf %8 : vector<26x384xf32> to vector<26x384xbf16>
    %c0_6 = arith.constant 0 : index
    %c0_7 = arith.constant 0 : index
    %10 = vector.load %arg7[%c0_6, %c0_7] : memref<26x384xbf16, #tpu.memory_space<vmem>>, vector<26x384xbf16>
    tpu.vector_store %arg7[%c0_6, %c0_7], %9 {strides = array<i32>} : memref<26x384xbf16, #tpu.memory_space<vmem>>, vector<26x384xbf16>,
    return
  }
  func.func @transform_0(%arg0: i32, %arg1: i32) -> (i32, i32) {
    %c0_i32 = arith.constant 0 : i32
    %c0_i32_0 = arith.constant 0 : i32
    return %arg0, %c0_i32 : i32, i32
  }
  func.func @transform_1(%arg0: i32, %arg1: i32) -> (i32, i32) {
    %c0_i32 = arith.constant 0 : i32
    %c0_i32_0 = arith.constant 0 : i32
    %c0_i32_1 = arith.constant 0 : i32
    return %c0_i32, %c0_i32_0 : i32, i32
  }
  func.func @transform_2(%arg0: i32, %arg1: i32) -> (i32, i32) {
    %c0_i32 = arith.constant 0 : i32
    %c0_i32_0 = arith.constant 0 : i32
    %c0_i32_1 = arith.constant 0 : i32
    return %c0_i32, %c0_i32_0 : i32, i32
  }
  func.func @transform_3(%arg0: i32, %arg1: i32) -> (i32, i32) {
    %c0_i32 = arith.constant 0 : i32
    %c0_i32_0 = arith.constant 0 : i32
    return %c0_i32, %arg1 : i32, i32
  }
  func.func @transform_4(%arg0: i32, %arg1: i32) -> (i32, i32) {
    %c0_i32 = arith.constant 0 : i32
    %c0_i32_0 = arith.constant 0 : i32
    return %c0_i32, %arg1 : i32, i32
  }
  func.func @transform_5(%arg0: i32, %arg1: i32) -> (i32, i32) {
    %c0_i32 = arith.constant 0 : i32
    return %arg0, %arg1 : i32, i32
  }
}

module attributes {stable_mosaic.version = 11 : i64} {
  func.func @_ln_matmul_kernel(%arg0: i32, %arg1: i32, %arg2: memref<26x128xf32, #tpu.memory_space<vmem>>, %arg3: memref<1x128xf32, #tpu.memory_space<vmem>>, %arg4: memref<1x128xf32, #tpu.memory_space<vmem>>, %arg5: memref<128x512xbf16, #tpu.memory_space<vmem>>, %arg6: memref<1x512xf32, #tpu.memory_space<vmem>>, %arg7: memref<26x512xbf16, #tpu.memory_space<vmem>>, %arg8: memref<26x128xbf16, #tpu.memory_space<vmem>>) attributes {dimension_semantics = [#tpu.dimension_semantics<parallel>, #tpu.dimension_semantics<arbitrary>], iteration_bounds = array<i64: 1, 1>, scalar_prefetch = 0 : i64, scratch_operands = 1 : i64, tpu.core_type = #tpu.core_type<tc>, window_params = [{transform_indices = @transform_0, window_bounds = array<i64: 26, 128>}, {pipeline_mode = #tpu.pipeline_mode<synchronous>, transform_indices = @transform_1, window_bounds = array<i64: 1, 128>}, {pipeline_mode = #tpu.pipeline_mode<synchronous>, transform_indices = @transform_2, window_bounds = array<i64: 1, 128>}, {transform_indices = @transform_3, window_bounds = array<i64: 128, 512>}, {transform_indices = @transform_4, window_bounds = array<i64: 1, 512>}, {transform_indices = @transform_5, window_bounds = array<i64: 26, 512>}]} {
    %c0_i32 = arith.constant 0 : i32
    %0 = arith.cmpi eq, %arg1, %c0_i32 : i32
    %1 = arith.extui %0 : i1 to i32
    %c0_i32_0 = arith.constant 0 : i32
    %2 = arith.cmpi ne, %1, %c0_i32_0 : i32
    scf.if %2 {
      %c0_10 = arith.constant 0 : index
      %c0_11 = arith.constant 0 : index
      %19 = vector.load %arg2[%c0_10, %c0_11] : memref<26x128xf32, #tpu.memory_space<vmem>>, vector<26x128xf32>
      %cst_12 = arith.constant dense<0.000000e+00> : vector<26xf32>
      %20 = vector.multi_reduction <add>, %19, %cst_12 [1] : vector<26x128xf32> to vector<26xf32>
      %21 = vector.shape_cast %20 : vector<26xf32> to vector<26x1xf32>
      %cst_13 = arith.constant 1.280000e+02 : f32
      %22 = vector.broadcast %cst_13 : f32 to vector<26x1xf32>
      %23 = arith.divf %21, %22 : vector<26x1xf32>
      %24 = vector.broadcast %23 : vector<26x1xf32> to vector<26x128xf32>
      %25 = arith.subf %19, %24 : vector<26x128xf32>
      %26 = arith.mulf %25, %25 : vector<26x128xf32>
      %cst_14 = arith.constant dense<0.000000e+00> : vector<26xf32>
      %27 = vector.multi_reduction <add>, %26, %cst_14 [1] : vector<26x128xf32> to vector<26xf32>
      %28 = vector.shape_cast %27 : vector<26xf32> to vector<26x1xf32>
      %cst_15 = arith.constant 1.280000e+02 : f32
      %29 = vector.broadcast %cst_15 : f32 to vector<26x1xf32>
      %30 = arith.divf %28, %29 : vector<26x1xf32>
      %31 = vector.broadcast %23 : vector<26x1xf32> to vector<26x128xf32>
      %32 = arith.subf %19, %31 : vector<26x128xf32>
      %cst_16 = arith.constant 9.99999974E-6 : f32
      %33 = vector.broadcast %cst_16 : f32 to vector<26x1xf32>
      %34 = arith.addf %30, %33 : vector<26x1xf32>
      %35 = math.rsqrt %34 : vector<26x1xf32>
      %36 = vector.broadcast %35 : vector<26x1xf32> to vector<26x128xf32>
      %37 = arith.mulf %32, %36 : vector<26x128xf32>
      %c0_17 = arith.constant 0 : index
      %c0_18 = arith.constant 0 : index
      %38 = vector.load %arg3[%c0_17, %c0_18] : memref<1x128xf32, #tpu.memory_space<vmem>>, vector<1x128xf32>
      %39 = vector.broadcast %38 : vector<1x128xf32> to vector<26x128xf32>
      %40 = arith.mulf %37, %39 : vector<26x128xf32>
      %c0_19 = arith.constant 0 : index
      %c0_20 = arith.constant 0 : index
      %41 = vector.load %arg4[%c0_19, %c0_20] : memref<1x128xf32, #tpu.memory_space<vmem>>, vector<1x128xf32>
      %42 = vector.broadcast %41 : vector<1x128xf32> to vector<26x128xf32>
      %43 = arith.addf %40, %42 : vector<26x128xf32>
      %44 = arith.truncf %43 : vector<26x128xf32> to vector<26x128xbf16>
      %c0_21 = arith.constant 0 : index
      %c0_22 = arith.constant 0 : index
      %45 = vector.load %arg8[%c0_21, %c0_22] : memref<26x128xbf16, #tpu.memory_space<vmem>>, vector<26x128xbf16>
      tpu.vector_store %arg8[%c0_21, %c0_22], %44 {strides = array<i32>} : memref<26x128xbf16, #tpu.memory_space<vmem>>, vector<26x128xbf16>,
    } else {
    }
    %c0 = arith.constant 0 : index
    %c0_1 = arith.constant 0 : index
    %3 = vector.load %arg8[%c0, %c0_1] : memref<26x128xbf16, #tpu.memory_space<vmem>>, vector<26x128xbf16>
    %c0_2 = arith.constant 0 : index
    %c0_3 = arith.constant 0 : index
    %4 = vector.load %arg5[%c0_2, %c0_3] : memref<128x512xbf16, #tpu.memory_space<vmem>>, vector<128x512xbf16>
    %cst = arith.constant dense<0.000000e+00> : vector<26x512xf32>
    %5 = tpu.matmul %3, %4, %cst {dimension_numbers = #tpu.dot_dimension_numbers<[1], [0], [0], [1], [0, 0, 1, 1], [], []>} : vector<26x128xbf16>, vector<128x512xbf16>, vector<26x512xf32> -> vector<26x512xf32>
    %c0_4 = arith.constant 0 : index
    %c0_5 = arith.constant 0 : index
    %6 = vector.load %arg6[%c0_4, %c0_5] : memref<1x512xf32, #tpu.memory_space<vmem>>, vector<1x512xf32>
    %7 = vector.broadcast %6 : vector<1x512xf32> to vector<26x512xf32>
    %8 = arith.addf %5, %7 : vector<26x512xf32>
    %cst_6 = arith.constant 1.702000e+00 : f32
    %9 = vector.broadcast %cst_6 : f32 to vector<26x512xf32>
    %10 = arith.mulf %9, %8 : vector<26x512xf32>
    %11 = arith.negf %10 : vector<26x512xf32>
    %12 = math.exp %11 : vector<26x512xf32>
    %cst_7 = arith.constant 1.000000e+00 : f32
    %13 = vector.broadcast %cst_7 : f32 to vector<26x512xf32>
    %14 = arith.addf %13, %12 : vector<26x512xf32>
    %15 = arith.divf %13, %14 : vector<26x512xf32>
    %16 = arith.mulf %8, %15 : vector<26x512xf32>
    %17 = arith.truncf %16 : vector<26x512xf32> to vector<26x512xbf16>
    %c0_8 = arith.constant 0 : index
    %c0_9 = arith.constant 0 : index
    %18 = vector.load %arg7[%c0_8, %c0_9] : memref<26x512xbf16, #tpu.memory_space<vmem>>, vector<26x512xbf16>
    tpu.vector_store %arg7[%c0_8, %c0_9], %17 {strides = array<i32>} : memref<26x512xbf16, #tpu.memory_space<vmem>>, vector<26x512xbf16>,
    return
  }
  func.func @transform_0(%arg0: i32, %arg1: i32) -> (i32, i32) {
    %c0_i32 = arith.constant 0 : i32
    %c0_i32_0 = arith.constant 0 : i32
    return %arg0, %c0_i32 : i32, i32
  }
  func.func @transform_1(%arg0: i32, %arg1: i32) -> (i32, i32) {
    %c0_i32 = arith.constant 0 : i32
    %c0_i32_0 = arith.constant 0 : i32
    %c0_i32_1 = arith.constant 0 : i32
    return %c0_i32, %c0_i32_0 : i32, i32
  }
  func.func @transform_2(%arg0: i32, %arg1: i32) -> (i32, i32) {
    %c0_i32 = arith.constant 0 : i32
    %c0_i32_0 = arith.constant 0 : i32
    %c0_i32_1 = arith.constant 0 : i32
    return %c0_i32, %c0_i32_0 : i32, i32
  }
  func.func @transform_3(%arg0: i32, %arg1: i32) -> (i32, i32) {
    %c0_i32 = arith.constant 0 : i32
    %c0_i32_0 = arith.constant 0 : i32
    return %c0_i32, %arg1 : i32, i32
  }
  func.func @transform_4(%arg0: i32, %arg1: i32) -> (i32, i32) {
    %c0_i32 = arith.constant 0 : i32
    %c0_i32_0 = arith.constant 0 : i32
    return %c0_i32, %arg1 : i32, i32
  }
  func.func @transform_5(%arg0: i32, %arg1: i32) -> (i32, i32) {
    %c0_i32 = arith.constant 0 : i32
    return %arg0, %arg1 : i32, i32
  }
}

module attributes {stable_mosaic.version = 11 : i64} {
  func.func @kernel(%arg0: i32, %arg1: memref<1x13x384xbf16, #tpu.memory_space<vmem>>, %arg2: memref<128x128xbf16, #tpu.memory_space<vmem>>, %arg3: memref<1x128xf32, #tpu.memory_space<vmem>>, %arg4: memref<1x13x128xf32, #tpu.memory_space<vmem>>, %arg5: memref<1x13x128xf32, #tpu.memory_space<vmem>>) attributes {dimension_semantics = [#tpu.dimension_semantics<parallel>], iteration_bounds = array<i64: 2>, scalar_prefetch = 0 : i64, scratch_operands = 0 : i64, tpu.core_type = #tpu.core_type<tc>, window_params = [{transform_indices = @transform_0, window_bounds = array<i64: 1, 13, 384>}, {pipeline_mode = #tpu.pipeline_mode<synchronous>, transform_indices = @transform_1, window_bounds = array<i64: 128, 128>}, {pipeline_mode = #tpu.pipeline_mode<synchronous>, transform_indices = @transform_2, window_bounds = array<i64: 1, 128>}, {transform_indices = @transform_3, window_bounds = array<i64: 1, 13, 128>}, {transform_indices = @transform_4, window_bounds = array<i64: 1, 13, 128>}]} {
    %c0 = arith.constant 0 : index
    %c0_0 = arith.constant 0 : index
    %c0_1 = arith.constant 0 : index
    %0 = vector.load %arg4[%c0, %c0_0, %c0_1] : memref<1x13x128xf32, #tpu.memory_space<vmem>>, vector<1x13x128xf32>
    %1 = vector.shape_cast %0 : vector<1x13x128xf32> to vector<13x128xf32>
    %c0_2 = arith.constant 0 : index
    %c0_3 = arith.constant 0 : index
    %2 = vector.load %arg3[%c0_2, %c0_3] : memref<1x128xf32, #tpu.memory_space<vmem>>, vector<1x128xf32>
    %3 = vector.broadcast %2 : vector<1x128xf32> to vector<13x128xf32>
    %4 = arith.addf %1, %3 : vector<13x128xf32>
    %c0_4 = arith.constant 0 : index
    %c0_5 = arith.constant 0 : index
    %c0_6 = arith.constant 0 : index
    %5 = vector.load %arg5[%c0_4, %c0_5, %c0_6] : memref<1x13x128xf32, #tpu.memory_space<vmem>>, vector<1x13x128xf32>
    %6 = vector.shape_cast %5 : vector<1x13x128xf32> to vector<13x128xf32>
    %7 = vector.shape_cast %4 : vector<13x128xf32> to vector<1x13x128xf32>
    tpu.vector_store %arg5[%c0_4, %c0_5, %c0_6], %7 {strides = array<i32>} : memref<1x13x128xf32, #tpu.memory_space<vmem>>, vector<1x13x128xf32>,
    %c0_7 = arith.constant 0 : index
    %c0_8 = arith.constant 0 : index
    %c0_9 = arith.constant 0 : index
    %8 = vector.load %arg1[%c0_7, %c0_8, %c0_9] : memref<1x13x384xbf16, #tpu.memory_space<vmem>>, vector<1x13x64xbf16>
    %9 = vector.shape_cast %8 : vector<1x13x64xbf16> to vector<13x64xbf16>
    %c0_10 = arith.constant 0 : index
    %c0_11 = arith.constant 0 : index
    %c128 = arith.constant 128 : index
    %10 = vector.load %arg1[%c0_10, %c0_11, %c128] : memref<1x13x384xbf16, #tpu.memory_space<vmem>>, vector<1x13x64xbf16>
    %11 = vector.shape_cast %10 : vector<1x13x64xbf16> to vector<13x64xbf16>
    %c0_12 = arith.constant 0 : index
    %c0_13 = arith.constant 0 : index
    %c256 = arith.constant 256 : index
    %12 = vector.load %arg1[%c0_12, %c0_13, %c256] : memref<1x13x384xbf16, #tpu.memory_space<vmem>>, vector<1x13x64xbf16>
    %13 = vector.shape_cast %12 : vector<1x13x64xbf16> to vector<13x64xbf16>
    %cst = arith.constant dense<0.000000e+00> : vector<13x13xf32>
    %14 = tpu.matmul %9, %11, %cst {dimension_numbers = #tpu.dot_dimension_numbers<[1], [1], [0], [0], [0, 0, 1, 0], [], []>} : vector<13x64xbf16>, vector<13x64xbf16>, vector<13x13xf32> -> vector<13x13xf32>
    %cst_14 = arith.constant dense<0xFF800000> : vector<13xf32>
    %15 = vector.multi_reduction <maximumf>, %14, %cst_14 [1] : vector<13x13xf32> to vector<13xf32>
    %16 = vector.shape_cast %15 : vector<13xf32> to vector<13x1xf32>
    %17 = vector.broadcast %16 : vector<13x1xf32> to vector<13x13xf32>
    %18 = arith.subf %14, %17 : vector<13x13xf32>
    %19 = math.exp %18 : vector<13x13xf32>
    %cst_15 = arith.constant dense<0.000000e+00> : vector<13xf32>
    %20 = vector.multi_reduction <add>, %19, %cst_15 [1] : vector<13x13xf32> to vector<13xf32>
    %21 = vector.shape_cast %20 : vector<13xf32> to vector<13x1xf32>
    %22 = vector.broadcast %21 : vector<13x1xf32> to vector<13x13xf32>
    %23 = arith.divf %19, %22 : vector<13x13xf32>
    %24 = arith.truncf %23 : vector<13x13xf32> to vector<13x13xbf16>
    %cst_16 = arith.constant dense<0.000000e+00> : vector<13x64xf32>
    %25 = tpu.matmul %24, %13, %cst_16 {dimension_numbers = #tpu.dot_dimension_numbers<[1], [0], [0], [1], [0, 0, 1, 1], [], []>} : vector<13x13xbf16>, vector<13x64xbf16>, vector<13x64xf32> -> vector<13x64xf32>
    %c0_17 = arith.constant 0 : index
    %c0_18 = arith.constant 0 : index
    %26 = vector.load %arg2[%c0_17, %c0_18] : memref<128x128xbf16, #tpu.memory_space<vmem>>, vector<64x128xbf16>
    %c0_19 = arith.constant 0 : index
    %c0_20 = arith.constant 0 : index
    %c0_21 = arith.constant 0 : index
    %27 = vector.load %arg5[%c0_19, %c0_20, %c0_21] : memref<1x13x128xf32, #tpu.memory_space<vmem>>, vector<1x13x128xf32>
    %28 = vector.shape_cast %27 : vector<1x13x128xf32> to vector<13x128xf32>
    %29 = arith.truncf %25 : vector<13x64xf32> to vector<13x64xbf16>
    %cst_22 = arith.constant dense<0.000000e+00> : vector<13x128xf32>
    %30 = tpu.matmul %29, %26, %cst_22 {dimension_numbers = #tpu.dot_dimension_numbers<[1], [0], [0], [1], [0, 0, 1, 1], [], []>} : vector<13x64xbf16>, vector<64x128xbf16>, vector<13x128xf32> -> vector<13x128xf32>
    %31 = arith.addf %28, %30 : vector<13x128xf32>
    %c0_23 = arith.constant 0 : index
    %c0_24 = arith.constant 0 : index
    %c0_25 = arith.constant 0 : index
    %32 = vector.load %arg5[%c0_23, %c0_24, %c0_25] : memref<1x13x128xf32, #tpu.memory_space<vmem>>, vector<1x13x128xf32>
    %33 = vector.shape_cast %32 : vector<1x13x128xf32> to vector<13x128xf32>
    %34 = vector.shape_cast %31 : vector<13x128xf32> to vector<1x13x128xf32>
    tpu.vector_store %arg5[%c0_23, %c0_24, %c0_25], %34 {strides = array<i32>} : memref<1x13x128xf32, #tpu.memory_space<vmem>>, vector<1x13x128xf32>,
    %c0_26 = arith.constant 0 : index
    %c0_27 = arith.constant 0 : index
    %c64 = arith.constant 64 : index
    %35 = vector.load %arg1[%c0_26, %c0_27, %c64] : memref<1x13x384xbf16, #tpu.memory_space<vmem>>, vector<1x13x64xbf16>
    %36 = vector.shape_cast %35 : vector<1x13x64xbf16> to vector<13x64xbf16>
    %c0_28 = arith.constant 0 : index
    %c0_29 = arith.constant 0 : index
    %c192 = arith.constant 192 : index
    %37 = vector.load %arg1[%c0_28, %c0_29, %c192] : memref<1x13x384xbf16, #tpu.memory_space<vmem>>, vector<1x13x64xbf16>
    %38 = vector.shape_cast %37 : vector<1x13x64xbf16> to vector<13x64xbf16>
    %c0_30 = arith.constant 0 : index
    %c0_31 = arith.constant 0 : index
    %c320 = arith.constant 320 : index
    %39 = vector.load %arg1[%c0_30, %c0_31, %c320] : memref<1x13x384xbf16, #tpu.memory_space<vmem>>, vector<1x13x64xbf16>
    %40 = vector.shape_cast %39 : vector<1x13x64xbf16> to vector<13x64xbf16>
    %cst_32 = arith.constant dense<0.000000e+00> : vector<13x13xf32>
    %41 = tpu.matmul %36, %38, %cst_32 {dimension_numbers = #tpu.dot_dimension_numbers<[1], [1], [0], [0], [0, 0, 1, 0], [], []>} : vector<13x64xbf16>, vector<13x64xbf16>, vector<13x13xf32> -> vector<13x13xf32>
    %cst_33 = arith.constant dense<0xFF800000> : vector<13xf32>
    %42 = vector.multi_reduction <maximumf>, %41, %cst_33 [1] : vector<13x13xf32> to vector<13xf32>
    %43 = vector.shape_cast %42 : vector<13xf32> to vector<13x1xf32>
    %44 = vector.broadcast %43 : vector<13x1xf32> to vector<13x13xf32>
    %45 = arith.subf %41, %44 : vector<13x13xf32>
    %46 = math.exp %45 : vector<13x13xf32>
    %cst_34 = arith.constant dense<0.000000e+00> : vector<13xf32>
    %47 = vector.multi_reduction <add>, %46, %cst_34 [1] : vector<13x13xf32> to vector<13xf32>
    %48 = vector.shape_cast %47 : vector<13xf32> to vector<13x1xf32>
    %49 = vector.broadcast %48 : vector<13x1xf32> to vector<13x13xf32>
    %50 = arith.divf %46, %49 : vector<13x13xf32>
    %51 = arith.truncf %50 : vector<13x13xf32> to vector<13x13xbf16>
    %cst_35 = arith.constant dense<0.000000e+00> : vector<13x64xf32>
    %52 = tpu.matmul %51, %40, %cst_35 {dimension_numbers = #tpu.dot_dimension_numbers<[1], [0], [0], [1], [0, 0, 1, 1], [], []>} : vector<13x13xbf16>, vector<13x64xbf16>, vector<13x64xf32> -> vector<13x64xf32>
    %c64_36 = arith.constant 64 : index
    %c0_37 = arith.constant 0 : index
    %53 = vector.load %arg2[%c64_36, %c0_37] : memref<128x128xbf16, #tpu.memory_space<vmem>>, vector<64x128xbf16>
    %c0_38 = arith.constant 0 : index
    %c0_39 = arith.constant 0 : index
    %c0_40 = arith.constant 0 : index
    %54 = vector.load %arg5[%c0_38, %c0_39, %c0_40] : memref<1x13x128xf32, #tpu.memory_space<vmem>>, vector<1x13x128xf32>
    %55 = vector.shape_cast %54 : vector<1x13x128xf32> to vector<13x128xf32>
    %56 = arith.truncf %52 : vector<13x64xf32> to vector<13x64xbf16>
    %cst_41 = arith.constant dense<0.000000e+00> : vector<13x128xf32>
    %57 = tpu.matmul %56, %53, %cst_41 {dimension_numbers = #tpu.dot_dimension_numbers<[1], [0], [0], [1], [0, 0, 1, 1], [], []>} : vector<13x64xbf16>, vector<64x128xbf16>, vector<13x128xf32> -> vector<13x128xf32>
    %58 = arith.addf %55, %57 : vector<13x128xf32>
    %c0_42 = arith.constant 0 : index
    %c0_43 = arith.constant 0 : index
    %c0_44 = arith.constant 0 : index
    %59 = vector.load %arg5[%c0_42, %c0_43, %c0_44] : memref<1x13x128xf32, #tpu.memory_space<vmem>>, vector<1x13x128xf32>
    %60 = vector.shape_cast %59 : vector<1x13x128xf32> to vector<13x128xf32>
    %61 = vector.shape_cast %58 : vector<13x128xf32> to vector<1x13x128xf32>
    tpu.vector_store %arg5[%c0_42, %c0_43, %c0_44], %61 {strides = array<i32>} : memref<1x13x128xf32, #tpu.memory_space<vmem>>, vector<1x13x128xf32>,
    return
  }
  func.func @transform_0(%arg0: i32) -> (i32, i32, i32) {
    %c0_i32 = arith.constant 0 : i32
    %c0_i32_0 = arith.constant 0 : i32
    %c0_i32_1 = arith.constant 0 : i32
    return %arg0, %c0_i32, %c0_i32_0 : i32, i32, i32
  }
  func.func @transform_1(%arg0: i32) -> (i32, i32) {
    %c0_i32 = arith.constant 0 : i32
    %c0_i32_0 = arith.constant 0 : i32
    %c0_i32_1 = arith.constant 0 : i32
    return %c0_i32, %c0_i32_0 : i32, i32
  }
  func.func @transform_2(%arg0: i32) -> (i32, i32) {
    %c0_i32 = arith.constant 0 : i32
    %c0_i32_0 = arith.constant 0 : i32
    %c0_i32_1 = arith.constant 0 : i32
    return %c0_i32, %c0_i32_0 : i32, i32
  }
  func.func @transform_3(%arg0: i32) -> (i32, i32, i32) {
    %c0_i32 = arith.constant 0 : i32
    %c0_i32_0 = arith.constant 0 : i32
    %c0_i32_1 = arith.constant 0 : i32
    return %arg0, %c0_i32, %c0_i32_0 : i32, i32, i32
  }
  func.func @transform_4(%arg0: i32) -> (i32, i32, i32) {
    %c0_i32 = arith.constant 0 : i32
    %c0_i32_0 = arith.constant 0 : i32
    %c0_i32_1 = arith.constant 0 : i32
    return %arg0, %c0_i32, %c0_i32_0 : i32, i32, i32
  }
}

</mosaic_0001>

<llo_original>
// kernel: run.13
$region0: #{run.13}
  #allocation0 [shape = 'u32[]', space=smem, size = 0x4, offset = 0x4, fixed_abs, tag = 'smem constant byte address 0x4 - core index']
  #allocation1 [shape = 'u32[144,128]{1,0:T(1,128)}', space=vmem, size = 0x12000, scoped, tag = 'internal scratch']
  %s0 = inlined_call_operand.vmem [shape: bf16[2,16,384], index: 0, kind: input, shape index: {}]
  %s1 = inlined_call_operand.vmem [shape: bf16[128,128], index: 1, kind: input, shape index: {}]
  %s2 = inlined_call_operand.vmem [shape: f32[1,128], index: 2, kind: input, shape index: {}]
  %s3 = inlined_call_operand.vmem [shape: f32[2,16,128], index: 3, kind: input, shape index: {}]
  %s4 = inlined_call_operand.vmem [shape: f32[2,16,128], index: 4, kind: output, shape index: {}]
  %s5 = sld [smem:[#allocation0]]
  $region49: #{run.13} parent=0
    _
  %s7 = ssub.s32 1, %s5
  %s8 = scalar_select 0, %s7, %s5
  loop: start=0, step=1, limit=4
  $region2: #{run.13} parent=0 // loop_pre_header
    _
  $region3: #{run.13} parent=0 // loop_header
    %s10 = sphi 0, %s14
    %p11 = scmp.ge.s32.totalorder %s10, 4
    %s20 = sphi 0, %s22
    %s23 = sphi 0, %s20
    %s24 = sphi 0, %s23
    %s40 = sphi 0, %s24
    %s44 = sphi 0, %s44
    %s46 = sphi 0, %s44
    %s47 = sphi 0, %s46
    %s61 = sphi 0, %s47
    %s65 = sphi 0, %s65
    %s67 = sphi 0, %s65
    %s68 = sphi 0, %s67
    %s82 = sphi 0, %s68
    %s88 = sphi 0, %s90
    %s91 = sphi 0, %s88
    %s92 = sphi 0, %s91
    %s108 = sphi 0, %s92
    %s114 = sphi 0, %s116
    %s117 = sphi 0, %s114
    %s118 = sphi 0, %s117
    %s134 = sphi 0, %s118
  $region4: #{run.13} parent=0 // loop_header_branch
    %13 = sbr.rel (%p11) target = $region8
  $region5: #{run.13} parent=0 // loop_body
    %s15 = ssub.s32 %s10, 1
    %s16 = ssub.s32 %s10, 2
    %s17 = sadd.s32 %s10, 1
    %s18 = ssub.s32 %s10, %s17
    %p19 = scmp.eq.s32.totalorder %s18, 0
    %s21 = sadd.s32 %s20, 1
    %s22 = scalar_select %p19, %s20, %s21
    %p25 = pneg %p19
    %p26 = scmp.eq.s32.totalorder %s10, 1
    %p27 = por %p25, %p26
    %p28 = scmp.ne.s32.totalorder %s20, %s23
    %p29 = scmp.eq.s32.totalorder %s10, 0
    %p30 = por %p28, %p29
    %p31 = scmp.ne.s32.totalorder %s20, %s23
    %p32 = scmp.eq.s32.totalorder %s15, 1
    %p33 = por %p31, %p32
    %p34 = scmp.ne.s32.totalorder %s23, %s24
    %p35 = scmp.eq.s32.totalorder %s15, 0
    %p36 = por %p34, %p35
    %p37 = scmp.ne.s32.totalorder %s23, %s24
    %p38 = scmp.eq.s32.totalorder %s16, 1
    %p39 = por %p37, %p38
    %p41 = scmp.ne.s32.totalorder %s24, %s40
    %p42 = scmp.eq.s32.totalorder %s16, 0
    %p43 = por %p41, %p42
    %s45 = sadd.s32 %s44, 1
    %p48 = scmp.eq.s32.totalorder %s10, 1
    %p49 = scmp.ne.s32.totalorder %s44, %s46
    %p50 = scmp.eq.s32.totalorder %s10, 0
    %p51 = por %p49, %p50
    %p52 = scmp.ne.s32.totalorder %s44, %s46
    %p53 = scmp.eq.s32.totalorder %s15, 1
    %p54 = por %p52, %p53
    %p55 = scmp.ne.s32.totalorder %s46, %s47
    %p56 = scmp.eq.s32.totalorder %s15, 0
    %p57 = por %p55, %p56
    %p58 = scmp.ne.s32.totalorder %s46, %s47
    %p59 = scmp.eq.s32.totalorder %s16, 1
    %p60 = por %p58, %p59
    %p62 = scmp.ne.s32.totalorder %s47, %s61
    %p63 = scmp.eq.s32.totalorder %s16, 0
    %p64 = por %p62, %p63
    %s66 = sadd.s32 %s65, 1
    %p69 = scmp.eq.s32.totalorder %s10, 1
    %p70 = scmp.ne.s32.totalorder %s65, %s67
    %p71 = scmp.eq.s32.totalorder %s10, 0
    %p72 = por %p70, %p71
    %p73 = scmp.ne.s32.totalorder %s65, %s67
    %p74 = scmp.eq.s32.totalorder %s15, 1
    %p75 = por %p73, %p74
    %p76 = scmp.ne.s32.totalorder %s67, %s68
    %p77 = scmp.eq.s32.totalorder %s15, 0
    %p78 = por %p76, %p77
    %p79 = scmp.ne.s32.totalorder %s67, %s68
    %p80 = scmp.eq.s32.totalorder %s16, 1
    %p81 = por %p79, %p80
    %p83 = scmp.ne.s32.totalorder %s68, %s82
    %p84 = scmp.eq.s32.totalorder %s16, 0
    %p85 = por %p83, %p84
    %s86 = ssub.s32 %s10, %s17
    %p87 = scmp.eq.s32.totalorder %s86, 0
    %s89 = sadd.s32 %s88, 1
    %s90 = scalar_select %p87, %s88, %s89
    %p93 = pneg %p87
    %p94 = scmp.eq.s32.totalorder %s10, 1
    %p95 = por %p93, %p94
    %p96 = scmp.ne.s32.totalorder %s88, %s91
    %p97 = scmp.eq.s32.totalorder %s10, 0
    %p98 = por %p96, %p97
    %p99 = scmp.ne.s32.totalorder %s88, %s91
    %p100 = scmp.eq.s32.totalorder %s15, 1
    %p101 = por %p99, %p100
    %p102 = scmp.ne.s32.totalorder %s91, %s92
    %p103 = scmp.eq.s32.totalorder %s15, 0
    %p104 = por %p102, %p103
    %p105 = scmp.ne.s32.totalorder %s91, %s92
    %p106 = scmp.eq.s32.totalorder %s16, 1
    %p107 = por %p105, %p106
    %p109 = scmp.ne.s32.totalorder %s92, %s108
    %p110 = scmp.eq.s32.totalorder %s16, 0
    %p111 = por %p109, %p110
    %s112 = ssub.s32 %s10, %s17
    %p113 = scmp.eq.s32.totalorder %s112, 0
    %s115 = sadd.s32 %s114, 1
    %s116 = scalar_select %p113, %s114, %s115
    %p119 = pneg %p113
    %p120 = scmp.eq.s32.totalorder %s10, 1
    %p121 = por %p119, %p120
    %p122 = scmp.ne.s32.totalorder %s114, %s117
    %p123 = scmp.eq.s32.totalorder %s10, 0
    %p124 = por %p122, %p123
    %p125 = scmp.ne.s32.totalorder %s114, %s117
    %p126 = scmp.eq.s32.totalorder %s15, 1
    %p127 = por %p125, %p126
    %p128 = scmp.ne.s32.totalorder %s117, %s118
    %p129 = scmp.eq.s32.totalorder %s15, 0
    %p130 = por %p128, %p129
    %p131 = scmp.ne.s32.totalorder %s117, %s118
    %p132 = scmp.eq.s32.totalorder %s16, 1
    %p133 = por %p131, %p132
    %p135 = scmp.ne.s32.totalorder %s118, %s134
    %p136 = scmp.eq.s32.totalorder %s16, 0
    %p137 = por %p135, %p136
    %p138 = scmp.le.s32.totalorder 1, %s10
    %p139 = scmp.lt.s32.totalorder %s10, 3
    %p140 = pnand %p138, %p139
    %p141 = pneg %p140
    // Predicated region
    $region9: #{run.13} parent=5 // pred_check
      _
    $region10: #{run.13} parent=5 // pred_check_branch
      %143 = sbr.rel (%p140) target = $region12
    $region11: #{run.13} parent=5 // pred_region
      %s144 = ssub.s32 %s10, 1
      // Predicated region
      $region13: #{run.13} parent=11 // pred_check
        %p145 = pneg %p57
      $region14: #{run.13} parent=11 // pred_check_branch
        %147 = sbr.rel (%p145) target = $region16
      $region15: #{run.13} parent=11 // pred_region
        _
      $region16: #{run.13} parent=11 // pred_fallthru
        _
      // Predicated region
      $region17: #{run.13} parent=11 // pred_check
        %p148 = pneg %p78
      $region18: #{run.13} parent=11 // pred_check_branch
        %150 = sbr.rel (%p148) target = $region20
      $region19: #{run.13} parent=11 // pred_region
        _
      $region20: #{run.13} parent=11 // pred_fallthru
        _
    $region12: #{run.13} parent=5 // pred_fallthru
      _
    %p151 = scmp.lt.s32.totalorder %s10, 2
    // Predicated region
    $region21: #{run.13} parent=5 // pred_check
      %p152 = pneg %p151
    $region22: #{run.13} parent=5 // pred_check_branch
      %154 = sbr.rel (%p152) target = $region24
    $region23: #{run.13} parent=5 // pred_region
      // Predicated region
      $region25: #{run.13} parent=23 // pred_check
        %p155 = pneg %p30
      $region26: #{run.13} parent=23 // pred_check_branch
        %157 = sbr.rel (%p155) target = $region28
      $region27: #{run.13} parent=23 // pred_region
        %p158 = scmp.lt.s32.totalorder %s10, 1
        %s159 = scalar_select %p158, %s10, 1
        %s160 = smul.addr %s159, 6
        %s161 = smul.addr %s160, 4
        %s162 = scalar_lea.vmem %s0, %s161
      $region28: #{run.13} parent=23 // pred_fallthru
        _
      // Predicated region
      $region29: #{run.13} parent=23 // pred_check
        %p163 = pneg %p98
      $region30: #{run.13} parent=23 // pred_check_branch
        %165 = sbr.rel (%p163) target = $region32
      $region31: #{run.13} parent=23 // pred_region
        %p166 = scmp.lt.s32.totalorder %s10, 1
        %s167 = scalar_select %p166, %s10, 1
        %s168 = smul.addr %s167, 2
        %s169 = smul.addr %s168, 8
        %s170 = scalar_lea.vmem %s3, %s169
      $region32: #{run.13} parent=23 // pred_fallthru
        _
    $region24: #{run.13} parent=5 // pred_fallthru
      _
    %p171 = scmp.le.s32.totalorder 1, %s10
    %p172 = scmp.lt.s32.totalorder %s10, 3
    %p173 = pnand %p171, %p172
    %p174 = pneg %p173
    // Predicated region
    $region33: #{run.13} parent=5 // pred_check
      _
    $region34: #{run.13} parent=5 // pred_check_branch
      %176 = sbr.rel (%p173) target = $region36
    $region35: #{run.13} parent=5 // pred_region
      %s177 = ssub.s32 %s10, 1
      %p178 = scmp.lt.s32.totalorder %s15, 1
      %s179 = scalar_select %p178, %s15, 1
      %s180 = smul.addr %s179, 6
      %s181 = smul.addr %s180, 4
      %s182 = scalar_lea.vmem %s0, %s181
      %p183 = pneg %p36
      %p184 = pneg %p33
      %p185 = pneg %p57
      %p186 = pneg %p54
      %p187 = pneg %p78
      %p188 = pneg %p75
      %p189 = scmp.lt.s32.totalorder %s15, 1
      %s190 = scalar_select %p189, %s15, 1
      %s191 = smul.addr %s190, 2
      %s192 = smul.addr %s191, 8
      %s193 = scalar_lea.vmem %s3, %s192
      %p194 = pneg %p104
      %p195 = pneg %p101
      %p196 = pneg %p130
      %p197 = pneg %p127
      %p198 = scmp.lt.s32.totalorder %s15, 1
      %s199 = scalar_select %p198, %s15, 1
      %s200 = smul.addr %s199, 2
      %s201 = smul.addr %s200, 8
      %s202 = scalar_lea.vmem %s4, %s201
      %p203 = scmp.lt.s32.totalorder %s15, 1
      %s204 = scalar_select %p203, %s15, 1
      %s205 = smul.addr %s204, 6
      %s206 = smul.addr %s205, 4
      %s207 = scalar_lea.vmem %s0, %s206
      %p208 = scmp.lt.s32.totalorder %s15, 1
      %s209 = scalar_select %p208, %s15, 1
      %s210 = smul.addr %s209, 2
      %s211 = smul.addr %s210, 8
      %s212 = scalar_lea.vmem %s3, %s211
      %p213 = scmp.lt.s32.totalorder %s15, 1
      %s214 = scalar_select %p213, %s15, 1
      %s215 = smul.addr %s214, 2
      %s216 = smul.addr %s215, 8
      %s217 = scalar_lea.vmem %s4, %s216
      %v219 = vld [vmem:[%s212] sm:$0xff]
      %v220 = vld [vmem:[%s212 + $0x8] sm:$0xff]
      %v221 = vld [vmem:[%s2] sm:$0x1]
      %v223 = vlaneseq
      %v224 = vshrl.u32 %v223, 7
      %v225 = vsub.s32 0, %v224
      %v226 = vrot.slane %v221, %v225
      %v228 = vadd.f32 %v219, %v226
      %v229 = vadd.f32 %v220, %v226
      %230 = vst [vmem:[%s217] sm:$0xff] %v228
      %231 = vst [vmem:[%s217 + $0x8] sm:$0xff] %v229
      %v232 = vld [vmem:[%s207] sm:$0xf]
      %v233 = vld [vmem:[%s207 + $0xc] sm:$0xf]
      %v234 = vld [vmem:[%s207 + $0x4] sm:$0xf]
      %v235 = vld [vmem:[%s207 + $0x10] sm:$0xf]
      %v236 = vld [vmem:[%s207 + $0x8] sm:$0xf]
      %v237 = vld [vmem:[%s207 + $0x14] sm:$0xf]
      %v240 = vunpack.c.l.b16 %v232
      %v241 = vunpack.c.l.b16 %v233
      %v242 = vpack.c.b16 %v241, %v240
      %v245 = vunpack.c.l.b16 %v234
      %v246 = vunpack.c.l.b16 %v235
      %v247 = vpack.c.b16 %v246, %v245
      %vm248 = vcmask 523264
      %v250 = vsel %vm248, %v242, 0
      %v253 = vsel %vm248, %v247, 0
      %255 = vmatprep.subr.bf16.mxu0 0
      %256 = vmatpush1.bf16.xpose.msra.mxu0 0
      %257 = vmatprep.subr.bf16.mxu0 0
      %258 = vmatpush1.bf16.xpose.msra.mxu0 0
      %259 = vmatprep.subr.bf16.mxu0 0
      %260 = vmatpush1.bf16.xpose.msra.mxu0 0
      %261 = vmatprep.subr.bf16.mxu0 0
      %262 = vmatpush1.bf16.xpose.msra.mxu0 0
      %263 = vmatprep.subr.bf16.mxu0 0
      %264 = vmatpush1.bf16.xpose.msra.mxu0 0
      %265 = vmatprep.subr.bf16.mxu0 0
      %266 = vmatpush1.bf16.xpose.msra.mxu0 0
      %267 = vmatprep.subr.bf16.mxu0 0
      %268 = vmatpush1.bf16.xpose.msra.mxu0 0
      %269 = vmatprep.subr.bf16.mxu0 0
      %270 = vmatpush1.bf16.xpose.msra.mxu0 %v253
      %271 = vmatprep.subr.bf16.mxu0 0
      %272 = vmatpush2.bf16.xpose.msra.mxu0 0
      %273 = vmatprep.subr.bf16.mxu0 0
      %274 = vmatpush2.bf16.xpose.msra.mxu0 0
      %275 = vmatprep.subr.bf16.mxu0 0
      %276 = vmatpush2.bf16.xpose.msra.mxu0 0
      %277 = vmatprep.subr.bf16.mxu0 0
      %278 = vmatpush2.bf16.xpose.msra.mxu0 0
      %279 = vmatprep.subr.bf16.mxu0 0
      %280 = vmatpush2.bf16.xpose.msra.mxu0 0
      %281 = vmatprep.subr.bf16.mxu0 0
      %282 = vmatpush2.bf16.xpose.msra.mxu0 0
      %283 = vmatprep.subr.bf16.mxu0 0
      %284 = vmatpush2.bf16.xpose.msra.mxu0 0
      %285 = vmatprep.subr.bf16.mxu0 0
      %286 = vmatpush2.bf16.xpose.msra.mxu0 0
      %287 = vmatprep.mubr.bf16.mxu0 0
      %288 = vmatmul.mubr.bf16.gmra.mxu0 %v250
      %v289 = vpop.f32.mrf.mxu0
      %v290 = vadd.f32 0.0, %v289
      %v291 = vpop.f32.mrf.mxu0
      %v292 = vpop.f32.mrf.mxu0
      %v293 = vadd.f32 0.0, %v292
      %v294 = vpop.f32.mrf.mxu0
      %295 = vdwg.mxu0
      %vm296 = vcmask 130048
      %v297 = vsel %vm296, %v290, -inf
      %298 = vmax.xlane.f32.xlu0 %v297
      %v299 = vpop.xlane.xlu0 %298
      %v300 = vsel %vm296, %v293, -inf
      %301 = vmax.xlane.f32.xlu0 %v300
      %v302 = vpop.xlane.xlu0 %301
      %v303 = vsub.f32 %v290, %v299
      %v304 = vsub.f32 %v293, %v302
      %v305 = vmul.f32 %v303, 1.442695
      %v306 = vpow.pop %v305
      %v307 = vmul.f32 %v304, 1.442695
      %v308 = vpow.pop %v307
      %v309 = vsel %vm296, %v306, 0.0
      %310 = vadd.xlane.f32.xlu0 %v309
      %v311 = vpop.xlane.xlu0 %310
      %v312 = vsel %vm296, %v308, 0.0
      %313 = vadd.xlane.f32.xlu0 %v312
      %v314 = vpop.xlane.xlu0 %313
      %v315 = vrcp.pop %v311
      %v316 = vmul.f32 %v306, %v315
      %v317 = vrcp.pop %v314
      %v318 = vmul.f32 %v308, %v317
      %v319 = vpack.c.bf16 %v318, %v316
      %v322 = vunpack.c.l.b16 %v236
      %v323 = vunpack.c.l.b16 %v237
      %v324 = vpack.c.b16 %v323, %v322
      %v327 = vsel %vm296, %v319, 0
      %329 = vmatprep.subr.bf16.mxu0 0
      %330 = vmatpush1.bf16.msra.mxu0 0
      %331 = vmatprep.subr.bf16.mxu0 0
      %332 = vmatpush1.bf16.msra.mxu0 0
      %333 = vmatprep.subr.bf16.mxu0 0
      %334 = vmatpush1.bf16.msra.mxu0 0
      %335 = vmatprep.subr.bf16.mxu0 0
      %336 = vmatpush1.bf16.msra.mxu0 0
      %337 = vmatprep.subr.bf16.mxu0 0
      %338 = vmatpush1.bf16.msra.mxu0 0
      %339 = vmatprep.subr.bf16.mxu0 0
      %340 = vmatpush1.bf16.msra.mxu0 0
      %341 = vmatprep.subr.bf16.mxu0 0
      %342 = vmatpush1.bf16.msra.mxu0 0
      %343 = vmatprep.subr.bf16.mxu0 0
      %344 = vmatpush1.bf16.msra.mxu0 %v324
      %345 = vmatprep.subr.bf16.mxu0 0
      %346 = vmatpush2.bf16.msra.mxu0 0
      %347 = vmatprep.subr.bf16.mxu0 0
      %348 = vmatpush2.bf16.msra.mxu0 0
      %349 = vmatprep.subr.bf16.mxu0 0
      %350 = vmatpush2.bf16.msra.mxu0 0
      %351 = vmatprep.subr.bf16.mxu0 0
      %352 = vmatpush2.bf16.msra.mxu0 0
      %353 = vmatprep.subr.bf16.mxu0 0
      %354 = vmatpush2.bf16.msra.mxu0 0
      %355 = vmatprep.subr.bf16.mxu0 0
      %356 = vmatpush2.bf16.msra.mxu0 0
      %357 = vmatprep.subr.bf16.mxu0 0
      %358 = vmatpush2.bf16.msra.mxu0 0
      %359 = vmatprep.subr.bf16.mxu0 0
      %360 = vmatpush2.bf16.msra.mxu0 0
      %361 = vmatprep.mubr.bf16.mxu0 0
      %362 = vmatmul.mubr.bf16.gmra.mxu0 %v327
      %v363 = vpop.f32.mrf.mxu0
      %v364 = vadd.f32 0.0, %v363
      %v365 = vpop.f32.mrf.mxu0
      %v366 = vpop.f32.mrf.mxu0
      %v367 = vadd.f32 0.0, %v366
      %v368 = vpop.f32.mrf.mxu0
      %369 = vdwg.mxu0
      %v370 = vld [vmem:[%s1] sm:$0xf]
      %v371 = vld [vmem:[%s1 + $0x4] sm:$0xf]
      %v372 = vld [vmem:[%s1 + $0x8] sm:$0xf]
      %v373 = vld [vmem:[%s1 + $0xc] sm:$0xf]
      %v374 = vld [vmem:[%s1 + $0x10] sm:$0xf]
      %v375 = vld [vmem:[%s1 + $0x14] sm:$0xf]
      %v376 = vld [vmem:[%s1 + $0x18] sm:$0xf]
      %v377 = vld [vmem:[%s1 + $0x1c] sm:$0xf]
      %v378 = vld [vmem:[%s217] sm:$0xff]
      %v379 = vld [vmem:[%s217 + $0x8] sm:$0xff]
      %v380 = vpack.c.bf16 %v367, %v364
      %v389 = vunpack.c.l.b16 %v370
      %v390 = vunpack.c.l.b16 %v371
      %v391 = vunpack.c.l.b16 %v372
      %v392 = vunpack.c.l.b16 %v373
      %v393 = vunpack.c.l.b16 %v374
      %v394 = vunpack.c.l.b16 %v375
      %v395 = vunpack.c.l.b16 %v376
      %v396 = vunpack.c.l.b16 %v377
      %v397 = vpack.c.b16 %v390, %v389
      %v398 = vpack.c.b16 %v392, %v391
      %v399 = vpack.c.b16 %v394, %v393
      %v400 = vpack.c.b16 %v396, %v395
      %v406 = vsel %vm248, %v380, 0
      %408 = vmatprep.subr.bf16.mxu0 0
      %409 = vmatpush1.bf16.msra.mxu0 0
      %410 = vmatprep.subr.bf16.mxu0 0
      %411 = vmatpush1.bf16.msra.mxu0 0
      %412 = vmatprep.subr.bf16.mxu0 0
      %413 = vmatpush1.bf16.msra.mxu0 0
      %414 = vmatprep.subr.bf16.mxu0 0
      %415 = vmatpush1.bf16.msra.mxu0 0
      %416 = vmatprep.subr.bf16.mxu0 0
      %417 = vmatpush1.bf16.msra.mxu0 %v400
      %418 = vmatprep.subr.bf16.mxu0 0
      %419 = vmatpush1.bf16.msra.mxu0 %v399
      %420 = vmatprep.subr.bf16.mxu0 0
      %421 = vmatpush1.bf16.msra.mxu0 %v398
      %422 = vmatprep.subr.bf16.mxu0 0
      %423 = vmatpush1.bf16.msra.mxu0 %v397
      %424 = vmatprep.subr.bf16.mxu0 0
      %425 = vmatpush2.bf16.msra.mxu0 0
      %426 = vmatprep.subr.bf16.mxu0 0
      %427 = vmatpush2.bf16.msra.mxu0 0
      %428 = vmatprep.subr.bf16.mxu0 0
      %429 = vmatpush2.bf16.msra.mxu0 0
      %430 = vmatprep.subr.bf16.mxu0 0
      %431 = vmatpush2.bf16.msra.mxu0 0
      %432 = vmatprep.subr.bf16.mxu0 0
      %433 = vmatpush2.bf16.msra.mxu0 0
      %434 = vmatprep.subr.bf16.mxu0 0
      %435 = vmatpush2.bf16.msra.mxu0 0
      %436 = vmatprep.subr.bf16.mxu0 0
      %437 = vmatpush2.bf16.msra.mxu0 0
      %438 = vmatprep.subr.bf16.mxu0 0
      %439 = vmatpush2.bf16.msra.mxu0 0
      %440 = vmatprep.mubr.bf16.mxu0 0
      %441 = vmatmul.mubr.bf16.gmra.mxu0 %v406
      %v442 = vpop.f32.mrf.mxu0
      %v443 = vadd.f32 0.0, %v442
      %v444 = vpop.f32.mrf.mxu0
      %v445 = vpop.f32.mrf.mxu0
      %v446 = vadd.f32 0.0, %v445
      %v447 = vpop.f32.mrf.mxu0
      %448 = vdwg.mxu0
      %v449 = vadd.f32 %v378, %v443
      %v450 = vadd.f32 %v379, %v446
      %451 = vst [vmem:[%s217] sm:$0xff] %v449
      %452 = vst [vmem:[%s217 + $0x8] sm:$0xff] %v450
      %v453 = vld [vmem:[%s207] sm:$0xf]
      %v454 = vld [vmem:[%s207 + $0xc] sm:$0xf]
      %v455 = vld [vmem:[%s207 + $0x4] sm:$0xf]
      %v456 = vld [vmem:[%s207 + $0x10] sm:$0xf]
      %v457 = vld [vmem:[%s207 + $0x8] sm:$0xf]
      %v458 = vld [vmem:[%s207 + $0x14] sm:$0xf]
      %v461 = vunpack.c.l.b16 %v453
      %v462 = vunpack.c.l.b16 %v454
      %v463 = vpack.c.b16 %v462, %v461
      %464 = vrot.lane.b32.xlu0 %v463, 64
      %v465 = vpop.permute.xlu0 %464
      %v468 = vunpack.c.l.b16 %v455
      %v469 = vunpack.c.l.b16 %v456
      %v470 = vpack.c.b16 %v469, %v468
      %471 = vrot.lane.b32.xlu0 %v470, 64
      %v472 = vpop.permute.xlu0 %471
      %v474 = vsel %vm248, %v465, 0
      %v477 = vsel %vm248, %v472, 0
      %479 = vmatprep.subr.bf16.mxu0 0
      %480 = vmatpush1.bf16.xpose.msra.mxu0 0
      %481 = vmatprep.subr.bf16.mxu0 0
      %482 = vmatpush1.bf16.xpose.msra.mxu0 0
      %483 = vmatprep.subr.bf16.mxu0 0
      %484 = vmatpush1.bf16.xpose.msra.mxu0 0
      %485 = vmatprep.subr.bf16.mxu0 0
      %486 = vmatpush1.bf16.xpose.msra.mxu0 0
      %487 = vmatprep.subr.bf16.mxu0 0
      %488 = vmatpush1.bf16.xpose.msra.mxu0 0
      %489 = vmatprep.subr.bf16.mxu0 0
      %490 = vmatpush1.bf16.xpose.msra.mxu0 0
      %491 = vmatprep.subr.bf16.mxu0 0
      %492 = vmatpush1.bf16.xpose.msra.mxu0 0
      %493 = vmatprep.subr.bf16.mxu0 0
      %494 = vmatpush1.bf16.xpose.msra.mxu0 %v477
      %495 = vmatprep.subr.bf16.mxu0 0
      %496 = vmatpush2.bf16.xpose.msra.mxu0 0
      %497 = vmatprep.subr.bf16.mxu0 0
      %498 = vmatpush2.bf16.xpose.msra.mxu0 0
      %499 = vmatprep.subr.bf16.mxu0 0
      %500 = vmatpush2.bf16.xpose.msra.mxu0 0
      %501 = vmatprep.subr.bf16.mxu0 0
      %502 = vmatpush2.bf16.xpose.msra.mxu0 0
      %503 = vmatprep.subr.bf16.mxu0 0
      %504 = vmatpush2.bf16.xpose.msra.mxu0 0
      %505 = vmatprep.subr.bf16.mxu0 0
      %506 = vmatpush2.bf16.xpose.msra.mxu0 0
      %507 = vmatprep.subr.bf16.mxu0 0
      %508 = vmatpush2.bf16.xpose.msra.mxu0 0
      %509 = vmatprep.subr.bf16.mxu0 0
      %510 = vmatpush2.bf16.xpose.msra.mxu0 0
      %511 = vmatprep.mubr.bf16.mxu0 0
      %512 = vmatmul.mubr.bf16.gmra.mxu0 %v474
      %v513 = vpop.f32.mrf.mxu0
      %v514 = vadd.f32 0.0, %v513
      %v515 = vpop.f32.mrf.mxu0
      %v516 = vpop.f32.mrf.mxu0
      %v517 = vadd.f32 0.0, %v516
      %v518 = vpop.f32.mrf.mxu0
      %519 = vdwg.mxu0
      %v520 = vsel %vm296, %v514, -inf
      %521 = vmax.xlane.f32.xlu0 %v520
      %v522 = vpop.xlane.xlu0 %521
      %v523 = vsel %vm296, %v517, -inf
      %524 = vmax.xlane.f32.xlu0 %v523
      %v525 = vpop.xlane.xlu0 %524
      %v526 = vsub.f32 %v514, %v522
      %v527 = vsub.f32 %v517, %v525
      %v528 = vmul.f32 %v526, 1.442695
      %v529 = vpow.pop %v528
      %v530 = vmul.f32 %v527, 1.442695
      %v531 = vpow.pop %v530
      %v532 = vsel %vm296, %v529, 0.0
      %533 = vadd.xlane.f32.xlu0 %v532
      %v534 = vpop.xlane.xlu0 %533
      %v535 = vsel %vm296, %v531, 0.0
      %536 = vadd.xlane.f32.xlu0 %v535
      %v537 = vpop.xlane.xlu0 %536
      %v538 = vrcp.pop %v534
      %v539 = vmul.f32 %v529, %v538
      %v540 = vrcp.pop %v537
      %v541 = vmul.f32 %v531, %v540
      %v542 = vpack.c.bf16 %v541, %v539
      %v545 = vunpack.c.l.b16 %v457
      %v546 = vunpack.c.l.b16 %v458
      %v547 = vpack.c.b16 %v546, %v545
      %548 = vrot.lane.b32.xlu0 %v547, 64
      %v549 = vpop.permute.xlu0 %548
      %v552 = vsel %vm296, %v542, 0
      %554 = vmatprep.subr.bf16.mxu0 0
      %555 = vmatpush1.bf16.msra.mxu0 0
      %556 = vmatprep.subr.bf16.mxu0 0
      %557 = vmatpush1.bf16.msra.mxu0 0
      %558 = vmatprep.subr.bf16.mxu0 0
      %559 = vmatpush1.bf16.msra.mxu0 0
      %560 = vmatprep.subr.bf16.mxu0 0
      %561 = vmatpush1.bf16.msra.mxu0 0
      %562 = vmatprep.subr.bf16.mxu0 0
      %563 = vmatpush1.bf16.msra.mxu0 0
      %564 = vmatprep.subr.bf16.mxu0 0
      %565 = vmatpush1.bf16.msra.mxu0 0
      %566 = vmatprep.subr.bf16.mxu0 0
      %567 = vmatpush1.bf16.msra.mxu0 0
      %568 = vmatprep.subr.bf16.mxu0 0
      %569 = vmatpush1.bf16.msra.mxu0 %v549
      %570 = vmatprep.subr.bf16.mxu0 0
      %571 = vmatpush2.bf16.msra.mxu0 0
      %572 = vmatprep.subr.bf16.mxu0 0
      %573 = vmatpush2.bf16.msra.mxu0 0
      %574 = vmatprep.subr.bf16.mxu0 0
      %575 = vmatpush2.bf16.msra.mxu0 0
      %576 = vmatprep.subr.bf16.mxu0 0
      %577 = vmatpush2.bf16.msra.mxu0 0
      %578 = vmatprep.subr.bf16.mxu0 0
      %579 = vmatpush2.bf16.msra.mxu0 0
      %580 = vmatprep.subr.bf16.mxu0 0
      %581 = vmatpush2.bf16.msra.mxu0 0
      %582 = vmatprep.subr.bf16.mxu0 0
      %583 = vmatpush2.bf16.msra.mxu0 0
      %584 = vmatprep.subr.bf16.mxu0 0
      %585 = vmatpush2.bf16.msra.mxu0 0
      %586 = vmatprep.mubr.bf16.mxu0 0
      %587 = vmatmul.mubr.bf16.gmra.mxu0 %v552
      %v588 = vpop.f32.mrf.mxu0
      %v589 = vadd.f32 0.0, %v588
      %v590 = vpop.f32.mrf.mxu0
      %v591 = vpop.f32.mrf.mxu0
      %v592 = vadd.f32 0.0, %v591
      %v593 = vpop.f32.mrf.mxu0
      %594 = vdwg.mxu0
      %v595 = vld [vmem:[%s1 + $0x20] sm:$0xf]
      %v596 = vld [vmem:[%s1 + $0x24] sm:$0xf]
      %v597 = vld [vmem:[%s1 + $0x28] sm:$0xf]
      %v598 = vld [vmem:[%s1 + $0x2c] sm:$0xf]
      %v599 = vld [vmem:[%s1 + $0x30] sm:$0xf]
      %v600 = vld [vmem:[%s1 + $0x34] sm:$0xf]
      %v601 = vld [vmem:[%s1 + $0x38] sm:$0xf]
      %v602 = vld [vmem:[%s1 + $0x3c] sm:$0xf]
      %v603 = vld [vmem:[%s217] sm:$0xff]
      %v604 = vld [vmem:[%s217 + $0x8] sm:$0xff]
      %v605 = vpack.c.bf16 %v592, %v589
      %v614 = vunpack.c.l.b16 %v595
      %v615 = vunpack.c.l.b16 %v596
      %v616 = vunpack.c.l.b16 %v597
      %v617 = vunpack.c.l.b16 %v598
      %v618 = vunpack.c.l.b16 %v599
      %v619 = vunpack.c.l.b16 %v600
      %v620 = vunpack.c.l.b16 %v601
      %v621 = vunpack.c.l.b16 %v602
      %v622 = vpack.c.b16 %v615, %v614
      %v623 = vpack.c.b16 %v617, %v616
      %v624 = vpack.c.b16 %v619, %v618
      %v625 = vpack.c.b16 %v621, %v620
      %v631 = vsel %vm248, %v605, 0
      %633 = vmatprep.subr.bf16.mxu0 0
      %634 = vmatpush1.bf16.msra.mxu0 0
      %635 = vmatprep.subr.bf16.mxu0 0
      %636 = vmatpush1.bf16.msra.mxu0 0
      %637 = vmatprep.subr.bf16.mxu0 0
      %638 = vmatpush1.bf16.msra.mxu0 0
      %639 = vmatprep.subr.bf16.mxu0 0
      %640 = vmatpush1.bf16.msra.mxu0 0
      %641 = vmatprep.subr.bf16.mxu0 0
      %642 = vmatpush1.bf16.msra.mxu0 %v625
      %643 = vmatprep.subr.bf16.mxu0 0
      %644 = vmatpush1.bf16.msra.mxu0 %v624
      %645 = vmatprep.subr.bf16.mxu0 0
      %646 = vmatpush1.bf16.msra.mxu0 %v623
      %647 = vmatprep.subr.bf16.mxu0 0
      %648 = vmatpush1.bf16.msra.mxu0 %v622
      %649 = vmatprep.subr.bf16.mxu0 0
      %650 = vmatpush2.bf16.msra.mxu0 0
      %651 = vmatprep.subr.bf16.mxu0 0
      %652 = vmatpush2.bf16.msra.mxu0 0
      %653 = vmatprep.subr.bf16.mxu0 0
      %654 = vmatpush2.bf16.msra.mxu0 0
      %655 = vmatprep.subr.bf16.mxu0 0
      %656 = vmatpush2.bf16.msra.mxu0 0
      %657 = vmatprep.subr.bf16.mxu0 0
      %658 = vmatpush2.bf16.msra.mxu0 0
      %659 = vmatprep.subr.bf16.mxu0 0
      %660 = vmatpush2.bf16.msra.mxu0 0
      %661 = vmatprep.subr.bf16.mxu0 0
      %662 = vmatpush2.bf16.msra.mxu0 0
      %663 = vmatprep.subr.bf16.mxu0 0
      %664 = vmatpush2.bf16.msra.mxu0 0
      %665 = vmatprep.mubr.bf16.mxu0 0
      %666 = vmatmul.mubr.bf16.gmra.mxu0 %v631
      %v667 = vpop.f32.mrf.mxu0
      %v668 = vadd.f32 0.0, %v667
      %v669 = vpop.f32.mrf.mxu0
      %v670 = vpop.f32.mrf.mxu0
      %v671 = vadd.f32 0.0, %v670
      %v672 = vpop.f32.mrf.mxu0
      %673 = vdwg.mxu0
      %v674 = vadd.f32 %v603, %v668
      %v675 = vadd.f32 %v604, %v671
      %676 = vst [vmem:[%s217] sm:$0xff] %v674
      %677 = vst [vmem:[%s217 + $0x8] sm:$0xff] %v675
      %p678 = scmp.lt.s32.totalorder %s15, 1
      %s679 = scalar_select %p678, %s15, 1
      %s680 = smul.addr %s679, 2
      %s681 = smul.addr %s680, 8
      %s682 = scalar_lea.vmem %s4, %s681
      // Predicated region
      $region37: #{run.13} parent=35 // pred_check
        %p683 = pneg %p127
      $region38: #{run.13} parent=35 // pred_check_branch
        %685 = sbr.rel (%p683) target = $region40
      $region39: #{run.13} parent=35 // pred_region
        _
      $region40: #{run.13} parent=35 // pred_fallthru
        _
    $region36: #{run.13} parent=5 // pred_fallthru
      _
    %p686 = scmp.le.s32.totalorder 2, %s10
    // Predicated region
    $region41: #{run.13} parent=5 // pred_check
      %p687 = pneg %p686
    $region42: #{run.13} parent=5 // pred_check_branch
      %689 = sbr.rel (%p687) target = $region44
    $region43: #{run.13} parent=5 // pred_region
      %s690 = ssub.s32 %s10, 2
      // Predicated region
      $region45: #{run.13} parent=43 // pred_check
        %p691 = pneg %p133
      $region46: #{run.13} parent=43 // pred_check_branch
        %693 = sbr.rel (%p691) target = $region48
      $region47: #{run.13} parent=43 // pred_region
        %p694 = scmp.lt.s32.totalorder %s16, 1
        %s695 = scalar_select %p694, %s16, 1
        %s696 = smul.addr %s695, 2
        %s697 = smul.addr %s696, 8
        %s698 = scalar_lea.vmem %s4, %s697
      $region48: #{run.13} parent=43 // pred_fallthru
        _
    $region44: #{run.13} parent=5 // pred_fallthru
      _
  $region6: #{run.13} parent=0 // loop_footer
    %s14 = sadd.s32 1, %s10
  $region7: #{run.13} parent=0 // loop_footer_branch
    %9 = sbr.rel target = $region3
  $region8: #{run.13} parent=0 // loop_exit
    _

// kernel: run.12
$region0: #{run.12}
  #allocation0 [shape = 'u32[]', space=smem, size = 0x4, offset = 0x4, fixed_abs, tag = 'smem constant byte address 0x4 - core index']
  #allocation1 [shape = 'u32[144,128]{1,0:T(1,128)}', space=vmem, size = 0x12000, scoped, tag = 'internal scratch']
  #allocation2 [shape = 'bf16[32,128]{1,0:T(8,128)(2,1)}', space=vmem, size = 0x2000, scoped, tag = 'scratch operand']
  %s0 = inlined_call_operand.vmem [shape: f32[32,128], index: 0, kind: input, shape index: {}]
  %s1 = inlined_call_operand.vmem [shape: f32[1,128], index: 1, kind: input, shape index: {}]
  %s2 = inlined_call_operand.vmem [shape: f32[1,128], index: 2, kind: input, shape index: {}]
  %s3 = inlined_call_operand.hbm [shape: bf16[128,384], index: 3, kind: input, shape index: {}]
  %s4 = inlined_call_operand.vmem [shape: f32[1,384], index: 4, kind: input, shape index: {}]
  %s5 = inlined_call_operand.vmem [shape: bf16[32,384], index: 5, kind: output, shape index: {}]
  %s6 = sld [smem:[#allocation0]]
  $region38: #{run.12} parent=0
    _
  %s8 = ssub.s32 1, %s6
  %s9 = scalar_select 0, %s8, %s6
  $region1: #{run.12} parent=0
    #allocation3 [shape = 'u8[98304]{0}', space=vmem, size = 0x18000, scoped, tag = 'input window, operand 3, single buffered']
    #allocation4 [shape = 's32[1]{0}', space=sflag, size = 0x4, scoped, tag = 'scoped memory for run.12']
    %10 = vsyncpa [#allocation4], 0
    // Predicated region
    $region2: #{run.12} parent=1 // pred_check
      _
    $region3: #{run.12} parent=1 // pred_check_branch
      %12 = sbr.rel (0) target = $region5
    $region4: #{run.12} parent=1 // pred_region
      _
    $region5: #{run.12} parent=1 // pred_fallthru
      _
    // Predicated region
    $region6: #{run.12} parent=1 // pred_check
      _
    $region7: #{run.12} parent=1 // pred_check_branch
      %14 = sbr.rel (0) target = $region9
    $region8: #{run.12} parent=1 // pred_region
      _
    $region9: #{run.12} parent=1 // pred_fallthru
      _
    // Predicated region
    $region10: #{run.12} parent=1 // pred_check
      _
    $region11: #{run.12} parent=1 // pred_check_branch
      %16 = sbr.rel (0) target = $region13
    $region12: #{run.12} parent=1 // pred_region
      _
    $region13: #{run.12} parent=1 // pred_fallthru
      _
    // Predicated region
    $region14: #{run.12} parent=1 // pred_check
      _
    $region15: #{run.12} parent=1 // pred_check_branch
      %18 = sbr.rel (0) target = $region17
    $region16: #{run.12} parent=1 // pred_region
      %s20 = ssub.s32 3072, 3072
      %21 = vsyncadd [#allocation4], %s20
      %s22 = sshll.u32 [#allocation3], 4
      %s23 = int_to_ptr.vmem [resolvable:$true] %s22
      %28 = dma.hbm_to_vmem [thread:$0]  %s3, 3072, %s23, [#allocation4], 192, 192, 12
    $region17: #{run.12} parent=1 // pred_fallthru
      _
    // Predicated region
    $region18: #{run.12} parent=1 // pred_check
      _
    $region19: #{run.12} parent=1 // pred_check_branch
      %30 = sbr.rel (0) target = $region21
    $region20: #{run.12} parent=1 // pred_region
      _
    $region21: #{run.12} parent=1 // pred_fallthru
      _
    // Predicated region
    $region22: #{run.12} parent=1 // pred_check
      _
    $region23: #{run.12} parent=1 // pred_check_branch
      %32 = sbr.rel (0) target = $region25
    $region24: #{run.12} parent=1 // pred_region
      %33 = dma.done [#allocation4], 3072
    $region25: #{run.12} parent=1 // pred_fallthru
      _
    %p35 = scmp.eq.s32.totalorder 0, 0
    // Predicated region
    $region26: #{run.12} parent=1 // pred_check
      %p36 = pneg %p35
    $region27: #{run.12} parent=1 // pred_check_branch
      %38 = sbr.rel (%p36) target = $region29
    $region28: #{run.12} parent=1 // pred_region
      %v39 = vld [vmem:[%s0] sm:$0xff]
      %v40 = vld [vmem:[%s0 + $0x8] sm:$0xff]
      %v41 = vld [vmem:[%s0 + $0x10] sm:$0xff]
      %v42 = vld [vmem:[%s0 + $0x18] sm:$0xff]
      %43 = vadd.xlane.f32.xlu0 %v39
      %v44 = vpop.xlane.xlu0 %43
      %45 = vadd.xlane.f32.xlu0 %v40
      %v46 = vpop.xlane.xlu0 %45
      %47 = vadd.xlane.f32.xlu0 %v41
      %v48 = vpop.xlane.xlu0 %47
      %49 = vadd.xlane.f32.xlu0 %v42
      %v50 = vpop.xlane.xlu0 %49
      %v51 = vrcp.pop 128.0
      %v52 = vmul.f32 %v44, %v51
      %v53 = vmul.f32 %v46, %v51
      %v54 = vmul.f32 %v48, %v51
      %v55 = vmul.f32 %v50, %v51
      %v56 = vsub.f32 %v39, %v52
      %v57 = vsub.f32 %v40, %v53
      %v58 = vsub.f32 %v41, %v54
      %v59 = vsub.f32 %v42, %v55
      %v60 = vmul.f32 %v56, %v56
      %v61 = vmul.f32 %v57, %v57
      %v62 = vmul.f32 %v58, %v58
      %v63 = vmul.f32 %v59, %v59
      %64 = vadd.xlane.f32.xlu0 %v60
      %v65 = vpop.xlane.xlu0 %64
      %66 = vadd.xlane.f32.xlu0 %v61
      %v67 = vpop.xlane.xlu0 %66
      %68 = vadd.xlane.f32.xlu0 %v62
      %v69 = vpop.xlane.xlu0 %68
      %70 = vadd.xlane.f32.xlu0 %v63
      %v71 = vpop.xlane.xlu0 %70
      %v72 = vmul.f32 %v65, %v51
      %v73 = vmul.f32 %v67, %v51
      %v74 = vmul.f32 %v69, %v51
      %v75 = vmul.f32 %v71, %v51
      %v76 = vadd.f32 %v72, 1e-05
      %v77 = vadd.f32 %v73, 1e-05
      %v78 = vadd.f32 %v74, 1e-05
      %v79 = vadd.f32 %v75, 1e-05
      %v80 = vrsqrt.pop %v76
      %v81 = vrsqrt.pop %v77
      %v82 = vrsqrt.pop %v78
      %v83 = vrsqrt.pop %v79
      %v84 = vmul.f32 %v56, %v80
      %v85 = vmul.f32 %v57, %v81
      %v86 = vmul.f32 %v58, %v82
      %v87 = vmul.f32 %v59, %v83
      %v88 = vld [vmem:[%s1] sm:$0x1]
      %v90 = vlaneseq
      %v91 = vshrl.u32 %v90, 7
      %v92 = vsub.s32 0, %v91
      %v93 = vrot.slane %v88, %v92
      %v95 = vmul.f32 %v84, %v93
      %v96 = vmul.f32 %v85, %v93
      %v97 = vmul.f32 %v86, %v93
      %v98 = vmul.f32 %v87, %v93
      %v99 = vld [vmem:[%s2] sm:$0x1]
      %v101 = vlaneseq
      %v102 = vshrl.u32 %v101, 7
      %v103 = vsub.s32 0, %v102
      %v104 = vrot.slane %v99, %v103
      %v106 = vadd.f32 %v95, %v104
      %v107 = vadd.f32 %v96, %v104
      %v108 = vadd.f32 %v97, %v104
      %v109 = vadd.f32 %v98, %v104
      %v110 = vpack.c.bf16 %v107, %v106
      %v111 = vpack.c.bf16 %v109, %v108
      %v114 = vunpack.c.l.b16 %v110
      %v115 = vunpack.c.h.b16 %v110
      %v116 = vunpack.c.l.b16 %v111
      %v117 = vunpack.c.h.b16 %v111
      %v118 = vpack.c.b16 %v114, %v114
      %v119 = vpack.c.b16 %v115, %v115
      %v120 = vpack.c.b16 %v116, %v116
      %v121 = vpack.c.b16 %v117, %v117
      %126 = vst [vmem:[#allocation2] sm:$0xf] %v118
      %127 = vst [vmem:[#allocation2 + $0x4] sm:$0xf] %v119
      %128 = vst [vmem:[#allocation2 + $0x8] sm:$0xf] %v120
      %129 = vst [vmem:[#allocation2 + $0xc] sm:$0xf] %v121
    $region29: #{run.12} parent=1 // pred_fallthru
      _
    %v130 = vld [vmem:[#allocation2] sm:$0xf]
    %v131 = vld [vmem:[#allocation2 + $0x4] sm:$0xf]
    %v132 = vld [vmem:[#allocation2 + $0x8] sm:$0xf]
    %v133 = vld [vmem:[#allocation2 + $0xc] sm:$0xf]
    %v134 = vld [vmem:[#allocation3] sm:$0xff]
    %v135 = vld [vmem:[#allocation3 + $0x8] sm:$0xf]
    %v136 = vld [vmem:[#allocation3 + $0xc] sm:$0xff]
    %v137 = vld [vmem:[#allocation3 + $0x14] sm:$0xf]
    %v138 = vld [vmem:[#allocation3 + $0x18] sm:$0xff]
    %v139 = vld [vmem:[#allocation3 + $0x20] sm:$0xf]
    %v140 = vld [vmem:[#allocation3 + $0x24] sm:$0xff]
    %v141 = vld [vmem:[#allocation3 + $0x2c] sm:$0xf]
    %v142 = vld [vmem:[#allocation3 + $0x30] sm:$0xff]
    %v143 = vld [vmem:[#allocation3 + $0x38] sm:$0xf]
    %v144 = vld [vmem:[#allocation3 + $0x3c] sm:$0xff]
    %v145 = vld [vmem:[#allocation3 + $0x44] sm:$0xf]
    %v146 = vld [vmem:[#allocation3 + $0x48] sm:$0xff]
    %v147 = vld [vmem:[#allocation3 + $0x50] sm:$0xf]
    %v148 = vld [vmem:[#allocation3 + $0x54] sm:$0xff]
    %v149 = vld [vmem:[#allocation3 + $0x5c] sm:$0xf]
    %v150 = vld [vmem:[#allocation3 + $0x60] sm:$0xff]
    %v151 = vld [vmem:[#allocation3 + $0x68] sm:$0xf]
    %v152 = vld [vmem:[#allocation3 + $0x6c] sm:$0xff]
    %v153 = vld [vmem:[#allocation3 + $0x74] sm:$0xf]
    %v154 = vld [vmem:[#allocation3 + $0x78] sm:$0xff]
    %v155 = vld [vmem:[#allocation3 + $0x80] sm:$0xf]
    %v156 = vld [vmem:[#allocation3 + $0x84] sm:$0xff]
    %v157 = vld [vmem:[#allocation3 + $0x8c] sm:$0xf]
    %v158 = vld [vmem:[#allocation3 + $0x90] sm:$0xff]
    %v159 = vld [vmem:[#allocation3 + $0x98] sm:$0xf]
    %v160 = vld [vmem:[#allocation3 + $0x9c] sm:$0xff]
    %v161 = vld [vmem:[#allocation3 + $0xa4] sm:$0xf]
    %v162 = vld [vmem:[#allocation3 + $0xa8] sm:$0xff]
    %v163 = vld [vmem:[#allocation3 + $0xb0] sm:$0xf]
    %v164 = vld [vmem:[#allocation3 + $0xb4] sm:$0xff]
    %v165 = vld [vmem:[#allocation3 + $0xbc] sm:$0xf]
    %v166 = vld [vmem:[%s4] sm:$0x7]
    %v168 = vlaneseq
    %v169 = vshrl.u32 %v168, 7
    %v170 = vsub.s32 0, %v169
    %v171 = vrot.slane %v166, %v170
    %v172 = vlaneseq
    %v173 = vshrl.u32 %v172, 7
    %v174 = vsub.s32 1, %v173
    %v175 = vrot.slane %v166, %v174
    %v176 = vlaneseq
    %v177 = vshrl.u32 %v176, 7
    %v178 = vsub.s32 2, %v177
    %v179 = vrot.slane %v166, %v178
    %v187 = vunpack.c.l.b16 %v130
    %v188 = vunpack.c.l.b16 %v131
    %v189 = vunpack.c.l.b16 %v132
    %v190 = vunpack.c.l.b16 %v133
    %v191 = vpack.c.b16 %v188, %v187
    %v192 = vpack.c.b16 %v190, %v189
    %v227 = vunpack.c.l.b16 %v134
    %v228 = vunpack.c.h.b16 %v134
    %v229 = vunpack.c.l.b16 %v135
    %v230 = vunpack.c.l.b16 %v136
    %v231 = vunpack.c.h.b16 %v136
    %v232 = vunpack.c.l.b16 %v137
    %v233 = vunpack.c.l.b16 %v138
    %v234 = vunpack.c.h.b16 %v138
    %v235 = vunpack.c.l.b16 %v139
    %v236 = vunpack.c.l.b16 %v140
    %v237 = vunpack.c.h.b16 %v140
    %v238 = vunpack.c.l.b16 %v141
    %v239 = vunpack.c.l.b16 %v142
    %v240 = vunpack.c.h.b16 %v142
    %v241 = vunpack.c.l.b16 %v143
    %v242 = vunpack.c.l.b16 %v144
    %v243 = vunpack.c.h.b16 %v144
    %v244 = vunpack.c.l.b16 %v145
    %v245 = vunpack.c.l.b16 %v146
    %v246 = vunpack.c.h.b16 %v146
    %v247 = vunpack.c.l.b16 %v147
    %v248 = vunpack.c.l.b16 %v148
    %v249 = vunpack.c.h.b16 %v148
    %v250 = vunpack.c.l.b16 %v149
    %v251 = vunpack.c.l.b16 %v150
    %v252 = vunpack.c.h.b16 %v150
    %v253 = vunpack.c.l.b16 %v151
    %v254 = vunpack.c.l.b16 %v152
    %v255 = vunpack.c.h.b16 %v152
    %v256 = vunpack.c.l.b16 %v153
    %v257 = vunpack.c.l.b16 %v154
    %v258 = vunpack.c.h.b16 %v154
    %v259 = vunpack.c.l.b16 %v155
    %v260 = vunpack.c.l.b16 %v156
    %v261 = vunpack.c.h.b16 %v156
    %v262 = vunpack.c.l.b16 %v157
    %v263 = vunpack.c.l.b16 %v158
    %v264 = vunpack.c.h.b16 %v158
    %v265 = vunpack.c.l.b16 %v159
    %v266 = vunpack.c.l.b16 %v160
    %v267 = vunpack.c.h.b16 %v160
    %v268 = vunpack.c.l.b16 %v161
    %v269 = vunpack.c.l.b16 %v162
    %v270 = vunpack.c.h.b16 %v162
    %v271 = vunpack.c.l.b16 %v163
    %v272 = vunpack.c.l.b16 %v164
    %v273 = vunpack.c.h.b16 %v164
    %v274 = vunpack.c.l.b16 %v165
    %v275 = vpack.c.b16 %v230, %v227
    %v276 = vpack.c.b16 %v231, %v228
    %v277 = vpack.c.b16 %v232, %v229
    %v278 = vpack.c.b16 %v236, %v233
    %v279 = vpack.c.b16 %v237, %v234
    %v280 = vpack.c.b16 %v238, %v235
    %v281 = vpack.c.b16 %v242, %v239
    %v282 = vpack.c.b16 %v243, %v240
    %v283 = vpack.c.b16 %v244, %v241
    %v284 = vpack.c.b16 %v248, %v245
    %v285 = vpack.c.b16 %v249, %v246
    %v286 = vpack.c.b16 %v250, %v247
    %v287 = vpack.c.b16 %v254, %v251
    %v288 = vpack.c.b16 %v255, %v252
    %v289 = vpack.c.b16 %v256, %v253
    %v290 = vpack.c.b16 %v260, %v257
    %v291 = vpack.c.b16 %v261, %v258
    %v292 = vpack.c.b16 %v262, %v259
    %v293 = vpack.c.b16 %v266, %v263
    %v294 = vpack.c.b16 %v267, %v264
    %v295 = vpack.c.b16 %v268, %v265
    %v296 = vpack.c.b16 %v272, %v269
    %v297 = vpack.c.b16 %v273, %v270
    %v298 = vpack.c.b16 %v274, %v271
    %323 = vmatprep.subr.bf16.mxu0 %v297
    %324 = vmatpush1.bf16.msra.mxu0 %v296
    %325 = vmatprep.subr.bf16.mxu0 %v294
    %326 = vmatpush1.bf16.msra.mxu0 %v293
    %327 = vmatprep.subr.bf16.mxu0 %v291
    %328 = vmatpush1.bf16.msra.mxu0 %v290
    %329 = vmatprep.subr.bf16.mxu0 %v288
    %330 = vmatpush1.bf16.msra.mxu0 %v287
    %331 = vmatprep.subr.bf16.mxu0 %v285
    %332 = vmatpush1.bf16.msra.mxu0 %v284
    %333 = vmatprep.subr.bf16.mxu0 %v282
    %334 = vmatpush1.bf16.msra.mxu0 %v281
    %335 = vmatprep.subr.bf16.mxu0 %v279
    %336 = vmatpush1.bf16.msra.mxu0 %v278
    %337 = vmatprep.subr.bf16.mxu0 %v276
    %338 = vmatpush1.bf16.msra.mxu0 %v275
    %339 = vmatprep.subr.bf16.mxu0 0
    %340 = vmatpush2.bf16.msra.mxu0 0
    %341 = vmatprep.subr.bf16.mxu0 0
    %342 = vmatpush2.bf16.msra.mxu0 0
    %343 = vmatprep.subr.bf16.mxu0 0
    %344 = vmatpush2.bf16.msra.mxu0 0
    %345 = vmatprep.subr.bf16.mxu0 0
    %346 = vmatpush2.bf16.msra.mxu0 0
    %347 = vmatprep.subr.bf16.mxu0 0
    %348 = vmatpush2.bf16.msra.mxu0 0
    %349 = vmatprep.subr.bf16.mxu0 0
    %350 = vmatpush2.bf16.msra.mxu0 0
    %351 = vmatprep.subr.bf16.mxu0 0
    %352 = vmatpush2.bf16.msra.mxu0 0
    %353 = vmatprep.subr.bf16.mxu0 0
    %354 = vmatpush2.bf16.msra.mxu0 0
    %355 = vmatprep.mubr.bf16.mxu0 0
    %356 = vmatmul.mubr.bf16.gmra.mxu0 %v191
    %v357 = vpop.f32.mrf.mxu0
    %v358 = vadd.f32 %v171, %v357
    %v359 = vpop.f32.mrf.mxu0
    %v360 = vadd.f32 %v175, %v359
    %v361 = vpop.f32.mrf.mxu0
    %v362 = vadd.f32 %v171, %v361
    %v363 = vpop.f32.mrf.mxu0
    %v364 = vadd.f32 %v175, %v363
    %365 = vmatprep.mubr.bf16.mxu0 0
    %366 = vmatmul.mubr.bf16.gmra.mxu0 %v192
    %v367 = vpop.f32.mrf.mxu0
    %v368 = vadd.f32 %v171, %v367
    %v369 = vpop.f32.mrf.mxu0
    %v370 = vadd.f32 %v175, %v369
    %v371 = vpop.f32.mrf.mxu0
    %v372 = vadd.f32 %v171, %v371
    %v373 = vpop.f32.mrf.mxu0
    %v374 = vadd.f32 %v175, %v373
    %375 = vdwg.mxu0
    %376 = vmatprep.subr.bf16.mxu0 0
    %377 = vmatpush1.bf16.msra.mxu0 %v298
    %378 = vmatprep.subr.bf16.mxu0 0
    %379 = vmatpush1.bf16.msra.mxu0 %v295
    %380 = vmatprep.subr.bf16.mxu0 0
    %381 = vmatpush1.bf16.msra.mxu0 %v292
    %382 = vmatprep.subr.bf16.mxu0 0
    %383 = vmatpush1.bf16.msra.mxu0 %v289
    %384 = vmatprep.subr.bf16.mxu0 0
    %385 = vmatpush1.bf16.msra.mxu0 %v286
    %386 = vmatprep.subr.bf16.mxu0 0
    %387 = vmatpush1.bf16.msra.mxu0 %v283
    %388 = vmatprep.subr.bf16.mxu0 0
    %389 = vmatpush1.bf16.msra.mxu0 %v280
    %390 = vmatprep.subr.bf16.mxu0 0
    %391 = vmatpush1.bf16.msra.mxu0 %v277
    %392 = vmatprep.subr.bf16.mxu0 0
    %393 = vmatpush2.bf16.msra.mxu0 0
    %394 = vmatprep.subr.bf16.mxu0 0
    %395 = vmatpush2.bf16.msra.mxu0 0
    %396 = vmatprep.subr.bf16.mxu0 0
    %397 = vmatpush2.bf16.msra.mxu0 0
    %398 = vmatprep.subr.bf16.mxu0 0
    %399 = vmatpush2.bf16.msra.mxu0 0
    %400 = vmatprep.subr.bf16.mxu0 0
    %401 = vmatpush2.bf16.msra.mxu0 0
    %402 = vmatprep.subr.bf16.mxu0 0
    %403 = vmatpush2.bf16.msra.mxu0 0
    %404 = vmatprep.subr.bf16.mxu0 0
    %405 = vmatpush2.bf16.msra.mxu0 0
    %406 = vmatprep.subr.bf16.mxu0 0
    %407 = vmatpush2.bf16.msra.mxu0 0
    %408 = vmatprep.mubr.bf16.mxu0 0
    %409 = vmatmul.mubr.bf16.gmra.mxu0 %v191
    %v410 = vpop.f32.mrf.mxu0
    %v411 = vadd.f32 %v179, %v410
    %v412 = vpop.f32.mrf.mxu0
    %v413 = vpop.f32.mrf.mxu0
    %v414 = vadd.f32 %v179, %v413
    %v415 = vpop.f32.mrf.mxu0
    %416 = vmatprep.mubr.bf16.mxu0 0
    %417 = vmatmul.mubr.bf16.gmra.mxu0 %v192
    %v418 = vpop.f32.mrf.mxu0
    %v419 = vadd.f32 %v179, %v418
    %v420 = vpop.f32.mrf.mxu0
    %v421 = vpop.f32.mrf.mxu0
    %v422 = vadd.f32 %v179, %v421
    %v423 = vpop.f32.mrf.mxu0
    %424 = vdwg.mxu0
    %v425 = vpack.c.bf16 %v362, %v358
    %v426 = vpack.c.bf16 %v364, %v360
    %v427 = vpack.c.bf16 %v414, %v411
    %v428 = vpack.c.bf16 %v372, %v368
    %v429 = vpack.c.bf16 %v374, %v370
    %v430 = vpack.c.bf16 %v422, %v419
    %v437 = vunpack.c.l.b16 %v425
    %v438 = vunpack.c.l.b16 %v426
    %v439 = vunpack.c.l.b16 %v427
    %v440 = vunpack.c.h.b16 %v425
    %v441 = vunpack.c.h.b16 %v426
    %v442 = vunpack.c.h.b16 %v427
    %v443 = vunpack.c.l.b16 %v428
    %v444 = vunpack.c.l.b16 %v429
    %v445 = vunpack.c.l.b16 %v430
    %v446 = vunpack.c.h.b16 %v428
    %v447 = vunpack.c.h.b16 %v429
    %v448 = vunpack.c.h.b16 %v430
    %v449 = vpack.c.b16 %v438, %v437
    %v450 = vpack.c.b16 %v439, %v439
    %v451 = vpack.c.b16 %v441, %v440
    %v452 = vpack.c.b16 %v442, %v442
    %v453 = vpack.c.b16 %v444, %v443
    %v454 = vpack.c.b16 %v445, %v445
    %v455 = vpack.c.b16 %v447, %v446
    %v456 = vpack.c.b16 %v448, %v448
    %465 = vst [vmem:[%s5] sm:$0xff] %v449
    %466 = vst [vmem:[%s5 + $0x8] sm:$0xf] %v450
    %467 = vst [vmem:[%s5 + $0xc] sm:$0xff] %v451
    %468 = vst [vmem:[%s5 + $0x14] sm:$0xf] %v452
    %469 = vst [vmem:[%s5 + $0x18] sm:$0xff] %v453
    %470 = vst [vmem:[%s5 + $0x20] sm:$0xf] %v454
    %471 = vst [vmem:[%s5 + $0x24] sm:$0xff] %v455
    %472 = vst [vmem:[%s5 + $0x2c] sm:$0xf] %v456
    // Predicated region
    $region30: #{run.12} parent=1 // pred_check
      _
    $region31: #{run.12} parent=1 // pred_check_branch
      %474 = sbr.rel (0) target = $region33
    $region32: #{run.12} parent=1 // pred_region
      _
    $region33: #{run.12} parent=1 // pred_fallthru
      _
    // Predicated region
    $region34: #{run.12} parent=1 // pred_check
      _
    $region35: #{run.12} parent=1 // pred_check_branch
      %476 = sbr.rel (0) target = $region37
    $region36: #{run.12} parent=1 // pred_region
      _
    $region37: #{run.12} parent=1 // pred_fallthru
      _
    %477 = vsyncpa [#allocation4], 1

// kernel: run.14
$region0: #{run.14}
  #allocation0 [shape = 'u32[]', space=smem, size = 0x4, offset = 0x4, fixed_abs, tag = 'smem constant byte address 0x4 - core index']
  #allocation1 [shape = 'u32[144,128]{1,0:T(1,128)}', space=vmem, size = 0x12000, scoped, tag = 'internal scratch']
  #allocation2 [shape = 'bf16[32,128]{1,0:T(8,128)(2,1)}', space=vmem, size = 0x2000, scoped, tag = 'scratch operand']
  %s0 = inlined_call_operand.vmem [shape: f32[32,128], index: 0, kind: input, shape index: {}]
  %s1 = inlined_call_operand.vmem [shape: f32[1,128], index: 1, kind: input, shape index: {}]
  %s2 = inlined_call_operand.vmem [shape: f32[1,128], index: 2, kind: input, shape index: {}]
  %s3 = inlined_call_operand.vmem [shape: bf16[128,512], index: 3, kind: input, shape index: {}]
  %s4 = inlined_call_operand.vmem [shape: f32[1,512], index: 4, kind: input, shape index: {}]
  %s5 = inlined_call_operand.vmem [shape: bf16[32,512], index: 5, kind: output, shape index: {}]
  %s6 = sld [smem:[#allocation0]]
  $region34: #{run.14} parent=0
    _
  %s8 = ssub.s32 1, %s6
  %s9 = scalar_select 0, %s8, %s6
  // Predicated region
  $region2: #{run.14} parent=0 // pred_check
    _
  $region3: #{run.14} parent=0 // pred_check_branch
    %11 = sbr.rel (0) target = $region5
  $region4: #{run.14} parent=0 // pred_region
    _
  $region5: #{run.14} parent=0 // pred_fallthru
    _
  // Predicated region
  $region6: #{run.14} parent=0 // pred_check
    _
  $region7: #{run.14} parent=0 // pred_check_branch
    %13 = sbr.rel (0) target = $region9
  $region8: #{run.14} parent=0 // pred_region
    _
  $region9: #{run.14} parent=0 // pred_fallthru
    _
  // Predicated region
  $region10: #{run.14} parent=0 // pred_check
    _
  $region11: #{run.14} parent=0 // pred_check_branch
    %15 = sbr.rel (0) target = $region13
  $region12: #{run.14} parent=0 // pred_region
    _
  $region13: #{run.14} parent=0 // pred_fallthru
    _
  // Predicated region
  $region14: #{run.14} parent=0 // pred_check
    _
  $region15: #{run.14} parent=0 // pred_check_branch
    %17 = sbr.rel (0) target = $region17
  $region16: #{run.14} parent=0 // pred_region
    _
  $region17: #{run.14} parent=0 // pred_fallthru
    _
  // Predicated region
  $region18: #{run.14} parent=0 // pred_check
    _
  $region19: #{run.14} parent=0 // pred_check_branch
    %19 = sbr.rel (0) target = $region21
  $region20: #{run.14} parent=0 // pred_region
    _
  $region21: #{run.14} parent=0 // pred_fallthru
    _
  %p21 = scmp.eq.s32.totalorder 0, 0
  // Predicated region
  $region22: #{run.14} parent=0 // pred_check
    %p22 = pneg %p21
  $region23: #{run.14} parent=0 // pred_check_branch
    %24 = sbr.rel (%p22) target = $region25
  $region24: #{run.14} parent=0 // pred_region
    %v25 = vld [vmem:[%s0] sm:$0xff]
    %v26 = vld [vmem:[%s0 + $0x8] sm:$0xff]
    %v27 = vld [vmem:[%s0 + $0x10] sm:$0xff]
    %v28 = vld [vmem:[%s0 + $0x18] sm:$0xff]
    %29 = vadd.xlane.f32.xlu0 %v25
    %v30 = vpop.xlane.xlu0 %29
    %31 = vadd.xlane.f32.xlu0 %v26
    %v32 = vpop.xlane.xlu0 %31
    %33 = vadd.xlane.f32.xlu0 %v27
    %v34 = vpop.xlane.xlu0 %33
    %35 = vadd.xlane.f32.xlu0 %v28
    %v36 = vpop.xlane.xlu0 %35
    %v37 = vrcp.pop 128.0
    %v38 = vmul.f32 %v30, %v37
    %v39 = vmul.f32 %v32, %v37
    %v40 = vmul.f32 %v34, %v37
    %v41 = vmul.f32 %v36, %v37
    %v42 = vsub.f32 %v25, %v38
    %v43 = vsub.f32 %v26, %v39
    %v44 = vsub.f32 %v27, %v40
    %v45 = vsub.f32 %v28, %v41
    %v46 = vmul.f32 %v42, %v42
    %v47 = vmul.f32 %v43, %v43
    %v48 = vmul.f32 %v44, %v44
    %v49 = vmul.f32 %v45, %v45
    %50 = vadd.xlane.f32.xlu0 %v46
    %v51 = vpop.xlane.xlu0 %50
    %52 = vadd.xlane.f32.xlu0 %v47
    %v53 = vpop.xlane.xlu0 %52
    %54 = vadd.xlane.f32.xlu0 %v48
    %v55 = vpop.xlane.xlu0 %54
    %56 = vadd.xlane.f32.xlu0 %v49
    %v57 = vpop.xlane.xlu0 %56
    %v58 = vmul.f32 %v51, %v37
    %v59 = vmul.f32 %v53, %v37
    %v60 = vmul.f32 %v55, %v37
    %v61 = vmul.f32 %v57, %v37
    %v62 = vadd.f32 %v58, 1e-05
    %v63 = vadd.f32 %v59, 1e-05
    %v64 = vadd.f32 %v60, 1e-05
    %v65 = vadd.f32 %v61, 1e-05
    %v66 = vrsqrt.pop %v62
    %v67 = vrsqrt.pop %v63
    %v68 = vrsqrt.pop %v64
    %v69 = vrsqrt.pop %v65
    %v70 = vmul.f32 %v42, %v66
    %v71 = vmul.f32 %v43, %v67
    %v72 = vmul.f32 %v44, %v68
    %v73 = vmul.f32 %v45, %v69
    %v74 = vld [vmem:[%s1] sm:$0x1]
    %v76 = vlaneseq
    %v77 = vshrl.u32 %v76, 7
    %v78 = vsub.s32 0, %v77
    %v79 = vrot.slane %v74, %v78
    %v81 = vmul.f32 %v70, %v79
    %v82 = vmul.f32 %v71, %v79
    %v83 = vmul.f32 %v72, %v79
    %v84 = vmul.f32 %v73, %v79
    %v85 = vld [vmem:[%s2] sm:$0x1]
    %v87 = vlaneseq
    %v88 = vshrl.u32 %v87, 7
    %v89 = vsub.s32 0, %v88
    %v90 = vrot.slane %v85, %v89
    %v92 = vadd.f32 %v81, %v90
    %v93 = vadd.f32 %v82, %v90
    %v94 = vadd.f32 %v83, %v90
    %v95 = vadd.f32 %v84, %v90
    %v96 = vpack.c.bf16 %v93, %v92
    %v97 = vpack.c.bf16 %v95, %v94
    %v100 = vunpack.c.l.b16 %v96
    %v101 = vunpack.c.h.b16 %v96
    %v102 = vunpack.c.l.b16 %v97
    %v103 = vunpack.c.h.b16 %v97
    %v104 = vpack.c.b16 %v100, %v100
    %v105 = vpack.c.b16 %v101, %v101
    %v106 = vpack.c.b16 %v102, %v102
    %v107 = vpack.c.b16 %v103, %v103
    %112 = vst [vmem:[#allocation2] sm:$0xf] %v104
    %113 = vst [vmem:[#allocation2 + $0x4] sm:$0xf] %v105
    %114 = vst [vmem:[#allocation2 + $0x8] sm:$0xf] %v106
    %115 = vst [vmem:[#allocation2 + $0xc] sm:$0xf] %v107
  $region25: #{run.14} parent=0 // pred_fallthru
    _
  %v116 = vld [vmem:[#allocation2] sm:$0xf]
  %v117 = vld [vmem:[#allocation2 + $0x4] sm:$0xf]
  %v118 = vld [vmem:[#allocation2 + $0x8] sm:$0xf]
  %v119 = vld [vmem:[#allocation2 + $0xc] sm:$0xf]
  %v120 = vld [vmem:[%s3] sm:$0xff]
  %v121 = vld [vmem:[%s3 + $0x8] sm:$0xff]
  %v122 = vld [vmem:[%s3 + $0x10] sm:$0xff]
  %v123 = vld [vmem:[%s3 + $0x18] sm:$0xff]
  %v124 = vld [vmem:[%s3 + $0x20] sm:$0xff]
  %v125 = vld [vmem:[%s3 + $0x28] sm:$0xff]
  %v126 = vld [vmem:[%s3 + $0x30] sm:$0xff]
  %v127 = vld [vmem:[%s3 + $0x38] sm:$0xff]
  %v128 = vld [vmem:[%s3 + $0x40] sm:$0xff]
  %v129 = vld [vmem:[%s3 + $0x48] sm:$0xff]
  %v130 = vld [vmem:[%s3 + $0x50] sm:$0xff]
  %v131 = vld [vmem:[%s3 + $0x58] sm:$0xff]
  %v132 = vld [vmem:[%s3 + $0x60] sm:$0xff]
  %v133 = vld [vmem:[%s3 + $0x68] sm:$0xff]
  %v134 = vld [vmem:[%s3 + $0x70] sm:$0xff]
  %v135 = vld [vmem:[%s3 + $0x78] sm:$0xff]
  %v136 = vld [vmem:[%s3 + $0x80] sm:$0xff]
  %v137 = vld [vmem:[%s3 + $0x88] sm:$0xff]
  %v138 = vld [vmem:[%s3 + $0x90] sm:$0xff]
  %v139 = vld [vmem:[%s3 + $0x98] sm:$0xff]
  %v140 = vld [vmem:[%s3 + $0xa0] sm:$0xff]
  %v141 = vld [vmem:[%s3 + $0xa8] sm:$0xff]
  %v142 = vld [vmem:[%s3 + $0xb0] sm:$0xff]
  %v143 = vld [vmem:[%s3 + $0xb8] sm:$0xff]
  %v144 = vld [vmem:[%s3 + $0xc0] sm:$0xff]
  %v145 = vld [vmem:[%s3 + $0xc8] sm:$0xff]
  %v146 = vld [vmem:[%s3 + $0xd0] sm:$0xff]
  %v147 = vld [vmem:[%s3 + $0xd8] sm:$0xff]
  %v148 = vld [vmem:[%s3 + $0xe0] sm:$0xff]
  %v149 = vld [vmem:[%s3 + $0xe8] sm:$0xff]
  %v150 = vld [vmem:[%s3 + $0xf0] sm:$0xff]
  %v151 = vld [vmem:[%s3 + $0xf8] sm:$0xff]
  %v152 = vld [vmem:[%s4] sm:$0xf]
  %v154 = vlaneseq
  %v155 = vshrl.u32 %v154, 7
  %v156 = vsub.s32 0, %v155
  %v157 = vrot.slane %v152, %v156
  %v158 = vlaneseq
  %v159 = vshrl.u32 %v158, 7
  %v160 = vsub.s32 1, %v159
  %v161 = vrot.slane %v152, %v160
  %v162 = vlaneseq
  %v163 = vshrl.u32 %v162, 7
  %v164 = vsub.s32 2, %v163
  %v165 = vrot.slane %v152, %v164
  %v166 = vlaneseq
  %v167 = vshrl.u32 %v166, 7
  %v168 = vsub.s32 3, %v167
  %v169 = vrot.slane %v152, %v168
  %v178 = vunpack.c.l.b16 %v116
  %v179 = vunpack.c.l.b16 %v117
  %v180 = vunpack.c.l.b16 %v118
  %v181 = vunpack.c.l.b16 %v119
  %v182 = vpack.c.b16 %v179, %v178
  %v183 = vpack.c.b16 %v181, %v180
  %v218 = vunpack.c.l.b16 %v120
  %v219 = vunpack.c.h.b16 %v120
  %v220 = vunpack.c.l.b16 %v121
  %v221 = vunpack.c.h.b16 %v121
  %v222 = vunpack.c.l.b16 %v122
  %v223 = vunpack.c.h.b16 %v122
  %v224 = vunpack.c.l.b16 %v123
  %v225 = vunpack.c.h.b16 %v123
  %v226 = vunpack.c.l.b16 %v124
  %v227 = vunpack.c.h.b16 %v124
  %v228 = vunpack.c.l.b16 %v125
  %v229 = vunpack.c.h.b16 %v125
  %v230 = vunpack.c.l.b16 %v126
  %v231 = vunpack.c.h.b16 %v126
  %v232 = vunpack.c.l.b16 %v127
  %v233 = vunpack.c.h.b16 %v127
  %v234 = vunpack.c.l.b16 %v128
  %v235 = vunpack.c.h.b16 %v128
  %v236 = vunpack.c.l.b16 %v129
  %v237 = vunpack.c.h.b16 %v129
  %v238 = vunpack.c.l.b16 %v130
  %v239 = vunpack.c.h.b16 %v130
  %v240 = vunpack.c.l.b16 %v131
  %v241 = vunpack.c.h.b16 %v131
  %v242 = vunpack.c.l.b16 %v132
  %v243 = vunpack.c.h.b16 %v132
  %v244 = vunpack.c.l.b16 %v133
  %v245 = vunpack.c.h.b16 %v133
  %v246 = vunpack.c.l.b16 %v134
  %v247 = vunpack.c.h.b16 %v134
  %v248 = vunpack.c.l.b16 %v135
  %v249 = vunpack.c.h.b16 %v135
  %v250 = vunpack.c.l.b16 %v136
  %v251 = vunpack.c.h.b16 %v136
  %v252 = vunpack.c.l.b16 %v137
  %v253 = vunpack.c.h.b16 %v137
  %v254 = vunpack.c.l.b16 %v138
  %v255 = vunpack.c.h.b16 %v138
  %v256 = vunpack.c.l.b16 %v139
  %v257 = vunpack.c.h.b16 %v139
  %v258 = vunpack.c.l.b16 %v140
  %v259 = vunpack.c.h.b16 %v140
  %v260 = vunpack.c.l.b16 %v141
  %v261 = vunpack.c.h.b16 %v141
  %v262 = vunpack.c.l.b16 %v142
  %v263 = vunpack.c.h.b16 %v142
  %v264 = vunpack.c.l.b16 %v143
  %v265 = vunpack.c.h.b16 %v143
  %v266 = vunpack.c.l.b16 %v144
  %v267 = vunpack.c.h.b16 %v144
  %v268 = vunpack.c.l.b16 %v145
  %v269 = vunpack.c.h.b16 %v145
  %v270 = vunpack.c.l.b16 %v146
  %v271 = vunpack.c.h.b16 %v146
  %v272 = vunpack.c.l.b16 %v147
  %v273 = vunpack.c.h.b16 %v147
  %v274 = vunpack.c.l.b16 %v148
  %v275 = vunpack.c.h.b16 %v148
  %v276 = vunpack.c.l.b16 %v149
  %v277 = vunpack.c.h.b16 %v149
  %v278 = vunpack.c.l.b16 %v150
  %v279 = vunpack.c.h.b16 %v150
  %v280 = vunpack.c.l.b16 %v151
  %v281 = vunpack.c.h.b16 %v151
  %v282 = vpack.c.b16 %v222, %v218
  %v283 = vpack.c.b16 %v223, %v219
  %v284 = vpack.c.b16 %v224, %v220
  %v285 = vpack.c.b16 %v225, %v221
  %v286 = vpack.c.b16 %v230, %v226
  %v287 = vpack.c.b16 %v231, %v227
  %v288 = vpack.c.b16 %v232, %v228
  %v289 = vpack.c.b16 %v233, %v229
  %v290 = vpack.c.b16 %v238, %v234
  %v291 = vpack.c.b16 %v239, %v235
  %v292 = vpack.c.b16 %v240, %v236
  %v293 = vpack.c.b16 %v241, %v237
  %v294 = vpack.c.b16 %v246, %v242
  %v295 = vpack.c.b16 %v247, %v243
  %v296 = vpack.c.b16 %v248, %v244
  %v297 = vpack.c.b16 %v249, %v245
  %v298 = vpack.c.b16 %v254, %v250
  %v299 = vpack.c.b16 %v255, %v251
  %v300 = vpack.c.b16 %v256, %v252
  %v301 = vpack.c.b16 %v257, %v253
  %v302 = vpack.c.b16 %v262, %v258
  %v303 = vpack.c.b16 %v263, %v259
  %v304 = vpack.c.b16 %v264, %v260
  %v305 = vpack.c.b16 %v265, %v261
  %v306 = vpack.c.b16 %v270, %v266
  %v307 = vpack.c.b16 %v271, %v267
  %v308 = vpack.c.b16 %v272, %v268
  %v309 = vpack.c.b16 %v273, %v269
  %v310 = vpack.c.b16 %v278, %v274
  %v311 = vpack.c.b16 %v279, %v275
  %v312 = vpack.c.b16 %v280, %v276
  %v313 = vpack.c.b16 %v281, %v277
  %346 = vmatprep.subr.bf16.mxu0 %v311
  %347 = vmatpush1.bf16.msra.mxu0 %v310
  %348 = vmatprep.subr.bf16.mxu0 %v307
  %349 = vmatpush1.bf16.msra.mxu0 %v306
  %350 = vmatprep.subr.bf16.mxu0 %v303
  %351 = vmatpush1.bf16.msra.mxu0 %v302
  %352 = vmatprep.subr.bf16.mxu0 %v299
  %353 = vmatpush1.bf16.msra.mxu0 %v298
  %354 = vmatprep.subr.bf16.mxu0 %v295
  %355 = vmatpush1.bf16.msra.mxu0 %v294
  %356 = vmatprep.subr.bf16.mxu0 %v291
  %357 = vmatpush1.bf16.msra.mxu0 %v290
  %358 = vmatprep.subr.bf16.mxu0 %v287
  %359 = vmatpush1.bf16.msra.mxu0 %v286
  %360 = vmatprep.subr.bf16.mxu0 %v283
  %361 = vmatpush1.bf16.msra.mxu0 %v282
  %362 = vmatprep.subr.bf16.mxu0 0
  %363 = vmatpush2.bf16.msra.mxu0 0
  %364 = vmatprep.subr.bf16.mxu0 0
  %365 = vmatpush2.bf16.msra.mxu0 0
  %366 = vmatprep.subr.bf16.mxu0 0
  %367 = vmatpush2.bf16.msra.mxu0 0
  %368 = vmatprep.subr.bf16.mxu0 0
  %369 = vmatpush2.bf16.msra.mxu0 0
  %370 = vmatprep.subr.bf16.mxu0 0
  %371 = vmatpush2.bf16.msra.mxu0 0
  %372 = vmatprep.subr.bf16.mxu0 0
  %373 = vmatpush2.bf16.msra.mxu0 0
  %374 = vmatprep.subr.bf16.mxu0 0
  %375 = vmatpush2.bf16.msra.mxu0 0
  %376 = vmatprep.subr.bf16.mxu0 0
  %377 = vmatpush2.bf16.msra.mxu0 0
  %378 = vmatprep.mubr.bf16.mxu0 0
  %379 = vmatmul.mubr.bf16.gmra.mxu0 %v182
  %v380 = vpop.f32.mrf.mxu0
  %v381 = vadd.f32 %v157, %v380
  %v382 = vpop.f32.mrf.mxu0
  %v383 = vadd.f32 %v161, %v382
  %v384 = vpop.f32.mrf.mxu0
  %v385 = vadd.f32 %v157, %v384
  %v386 = vpop.f32.mrf.mxu0
  %v387 = vadd.f32 %v161, %v386
  %388 = vmatprep.mubr.bf16.mxu0 0
  %389 = vmatmul.mubr.bf16.gmra.mxu0 %v183
  %v390 = vpop.f32.mrf.mxu0
  %v391 = vadd.f32 %v157, %v390
  %v392 = vpop.f32.mrf.mxu0
  %v393 = vadd.f32 %v161, %v392
  %v394 = vpop.f32.mrf.mxu0
  %v395 = vadd.f32 %v157, %v394
  %v396 = vpop.f32.mrf.mxu0
  %v397 = vadd.f32 %v161, %v396
  %398 = vdwg.mxu0
  %399 = vmatprep.subr.bf16.mxu0 %v313
  %400 = vmatpush1.bf16.msra.mxu0 %v312
  %401 = vmatprep.subr.bf16.mxu0 %v309
  %402 = vmatpush1.bf16.msra.mxu0 %v308
  %403 = vmatprep.subr.bf16.mxu0 %v305
  %404 = vmatpush1.bf16.msra.mxu0 %v304
  %405 = vmatprep.subr.bf16.mxu0 %v301
  %406 = vmatpush1.bf16.msra.mxu0 %v300
  %407 = vmatprep.subr.bf16.mxu0 %v297
  %408 = vmatpush1.bf16.msra.mxu0 %v296
  %409 = vmatprep.subr.bf16.mxu0 %v293
  %410 = vmatpush1.bf16.msra.mxu0 %v292
  %411 = vmatprep.subr.bf16.mxu0 %v289
  %412 = vmatpush1.bf16.msra.mxu0 %v288
  %413 = vmatprep.subr.bf16.mxu0 %v285
  %414 = vmatpush1.bf16.msra.mxu0 %v284
  %415 = vmatprep.subr.bf16.mxu0 0
  %416 = vmatpush2.bf16.msra.mxu0 0
  %417 = vmatprep.subr.bf16.mxu0 0
  %418 = vmatpush2.bf16.msra.mxu0 0
  %419 = vmatprep.subr.bf16.mxu0 0
  %420 = vmatpush2.bf16.msra.mxu0 0
  %421 = vmatprep.subr.bf16.mxu0 0
  %422 = vmatpush2.bf16.msra.mxu0 0
  %423 = vmatprep.subr.bf16.mxu0 0
  %424 = vmatpush2.bf16.msra.mxu0 0
  %425 = vmatprep.subr.bf16.mxu0 0
  %426 = vmatpush2.bf16.msra.mxu0 0
  %427 = vmatprep.subr.bf16.mxu0 0
  %428 = vmatpush2.bf16.msra.mxu0 0
  %429 = vmatprep.subr.bf16.mxu0 0
  %430 = vmatpush2.bf16.msra.mxu0 0
  %431 = vmatprep.mubr.bf16.mxu0 0
  %432 = vmatmul.mubr.bf16.gmra.mxu0 %v182
  %v433 = vpop.f32.mrf.mxu0
  %v434 = vadd.f32 %v165, %v433
  %v435 = vpop.f32.mrf.mxu0
  %v436 = vadd.f32 %v169, %v435
  %v437 = vpop.f32.mrf.mxu0
  %v438 = vadd.f32 %v165, %v437
  %v439 = vpop.f32.mrf.mxu0
  %v440 = vadd.f32 %v169, %v439
  %441 = vmatprep.mubr.bf16.mxu0 0
  %442 = vmatmul.mubr.bf16.gmra.mxu0 %v183
  %v443 = vpop.f32.mrf.mxu0
  %v444 = vadd.f32 %v165, %v443
  %v445 = vpop.f32.mrf.mxu0
  %v446 = vadd.f32 %v169, %v445
  %v447 = vpop.f32.mrf.mxu0
  %v448 = vadd.f32 %v165, %v447
  %v449 = vpop.f32.mrf.mxu0
  %v450 = vadd.f32 %v169, %v449
  %451 = vdwg.mxu0
  %v452 = vmul.f32 %v381, 1.702
  %v453 = vmul.f32 %v383, 1.702
  %v454 = vmul.f32 %v434, 1.702
  %v455 = vmul.f32 %v436, 1.702
  %v456 = vmul.f32 %v385, 1.702
  %v457 = vmul.f32 %v387, 1.702
  %v458 = vmul.f32 %v438, 1.702
  %v459 = vmul.f32 %v440, 1.702
  %v460 = vmul.f32 %v391, 1.702
  %v461 = vmul.f32 %v393, 1.702
  %v462 = vmul.f32 %v444, 1.702
  %v463 = vmul.f32 %v446, 1.702
  %v464 = vmul.f32 %v395, 1.702
  %v465 = vmul.f32 %v397, 1.702
  %v466 = vmul.f32 %v448, 1.702
  %v467 = vmul.f32 %v450, 1.702
  %v468 = vxor.u32 %v452, 2147483648
  %v469 = vxor.u32 %v453, 2147483648
  %v470 = vxor.u32 %v454, 2147483648
  %v471 = vxor.u32 %v455, 2147483648
  %v472 = vxor.u32 %v456, 2147483648
  %v473 = vxor.u32 %v457, 2147483648
  %v474 = vxor.u32 %v458, 2147483648
  %v475 = vxor.u32 %v459, 2147483648
  %v476 = vxor.u32 %v460, 2147483648
  %v477 = vxor.u32 %v461, 2147483648
  %v478 = vxor.u32 %v462, 2147483648
  %v479 = vxor.u32 %v463, 2147483648
  %v480 = vxor.u32 %v464, 2147483648
  %v481 = vxor.u32 %v465, 2147483648
  %v482 = vxor.u32 %v466, 2147483648
  %v483 = vxor.u32 %v467, 2147483648
  %v484 = vmul.f32 %v468, 1.442695
  %v485 = vpow.pop %v484
  %v486 = vmul.f32 %v469, 1.442695
  %v487 = vpow.pop %v486
  %v488 = vmul.f32 %v470, 1.442695
  %v489 = vpow.pop %v488
  %v490 = vmul.f32 %v471, 1.442695
  %v491 = vpow.pop %v490
  %v492 = vmul.f32 %v472, 1.442695
  %v493 = vpow.pop %v492
  %v494 = vmul.f32 %v473, 1.442695
  %v495 = vpow.pop %v494
  %v496 = vmul.f32 %v474, 1.442695
  %v497 = vpow.pop %v496
  %v498 = vmul.f32 %v475, 1.442695
  %v499 = vpow.pop %v498
  %v500 = vmul.f32 %v476, 1.442695
  %v501 = vpow.pop %v500
  %v502 = vmul.f32 %v477, 1.442695
  %v503 = vpow.pop %v502
  %v504 = vmul.f32 %v478, 1.442695
  %v505 = vpow.pop %v504
  %v506 = vmul.f32 %v479, 1.442695
  %v507 = vpow.pop %v506
  %v508 = vmul.f32 %v480, 1.442695
  %v509 = vpow.pop %v508
  %v510 = vmul.f32 %v481, 1.442695
  %v511 = vpow.pop %v510
  %v512 = vmul.f32 %v482, 1.442695
  %v513 = vpow.pop %v512
  %v514 = vmul.f32 %v483, 1.442695
  %v515 = vpow.pop %v514
  %v516 = vadd.f32 %v485, 1.0
  %v517 = vadd.f32 %v487, 1.0
  %v518 = vadd.f32 %v489, 1.0
  %v519 = vadd.f32 %v491, 1.0
  %v520 = vadd.f32 %v493, 1.0
  %v521 = vadd.f32 %v495, 1.0
  %v522 = vadd.f32 %v497, 1.0
  %v523 = vadd.f32 %v499, 1.0
  %v524 = vadd.f32 %v501, 1.0
  %v525 = vadd.f32 %v503, 1.0
  %v526 = vadd.f32 %v505, 1.0
  %v527 = vadd.f32 %v507, 1.0
  %v528 = vadd.f32 %v509, 1.0
  %v529 = vadd.f32 %v511, 1.0
  %v530 = vadd.f32 %v513, 1.0
  %v531 = vadd.f32 %v515, 1.0
  %v532 = vrcp.pop %v516
  %v533 = vmul.f32 1.0, %v532
  %v534 = vrcp.pop %v517
  %v535 = vmul.f32 1.0, %v534
  %v536 = vrcp.pop %v518
  %v537 = vmul.f32 1.0, %v536
  %v538 = vrcp.pop %v519
  %v539 = vmul.f32 1.0, %v538
  %v540 = vrcp.pop %v520
  %v541 = vmul.f32 1.0, %v540
  %v542 = vrcp.pop %v521
  %v543 = vmul.f32 1.0, %v542
  %v544 = vrcp.pop %v522
  %v545 = vmul.f32 1.0, %v544
  %v546 = vrcp.pop %v523
  %v547 = vmul.f32 1.0, %v546
  %v548 = vrcp.pop %v524
  %v549 = vmul.f32 1.0, %v548
  %v550 = vrcp.pop %v525
  %v551 = vmul.f32 1.0, %v550
  %v552 = vrcp.pop %v526
  %v553 = vmul.f32 1.0, %v552
  %v554 = vrcp.pop %v527
  %v555 = vmul.f32 1.0, %v554
  %v556 = vrcp.pop %v528
  %v557 = vmul.f32 1.0, %v556
  %v558 = vrcp.pop %v529
  %v559 = vmul.f32 1.0, %v558
  %v560 = vrcp.pop %v530
  %v561 = vmul.f32 1.0, %v560
  %v562 = vrcp.pop %v531
  %v563 = vmul.f32 1.0, %v562
  %v564 = vmul.f32 %v381, %v533
  %v565 = vmul.f32 %v383, %v535
  %v566 = vmul.f32 %v434, %v537
  %v567 = vmul.f32 %v436, %v539
  %v568 = vmul.f32 %v385, %v541
  %v569 = vmul.f32 %v387, %v543
  %v570 = vmul.f32 %v438, %v545
  %v571 = vmul.f32 %v440, %v547
  %v572 = vmul.f32 %v391, %v549
  %v573 = vmul.f32 %v393, %v551
  %v574 = vmul.f32 %v444, %v553
  %v575 = vmul.f32 %v446, %v555
  %v576 = vmul.f32 %v395, %v557
  %v577 = vmul.f32 %v397, %v559
  %v578 = vmul.f32 %v448, %v561
  %v579 = vmul.f32 %v450, %v563
  %v580 = vpack.c.bf16 %v568, %v564
  %v581 = vpack.c.bf16 %v569, %v565
  %v582 = vpack.c.bf16 %v570, %v566
  %v583 = vpack.c.bf16 %v571, %v567
  %v584 = vpack.c.bf16 %v576, %v572
  %v585 = vpack.c.bf16 %v577, %v573
  %v586 = vpack.c.bf16 %v578, %v574
  %v587 = vpack.c.bf16 %v579, %v575
  %v596 = vunpack.c.l.b16 %v580
  %v597 = vunpack.c.l.b16 %v581
  %v598 = vunpack.c.l.b16 %v582
  %v599 = vunpack.c.l.b16 %v583
  %v600 = vunpack.c.h.b16 %v580
  %v601 = vunpack.c.h.b16 %v581
  %v602 = vunpack.c.h.b16 %v582
  %v603 = vunpack.c.h.b16 %v583
  %v604 = vunpack.c.l.b16 %v584
  %v605 = vunpack.c.l.b16 %v585
  %v606 = vunpack.c.l.b16 %v586
  %v607 = vunpack.c.l.b16 %v587
  %v608 = vunpack.c.h.b16 %v584
  %v609 = vunpack.c.h.b16 %v585
  %v610 = vunpack.c.h.b16 %v586
  %v611 = vunpack.c.h.b16 %v587
  %v612 = vpack.c.b16 %v597, %v596
  %v613 = vpack.c.b16 %v599, %v598
  %v614 = vpack.c.b16 %v601, %v600
  %v615 = vpack.c.b16 %v603, %v602
  %v616 = vpack.c.b16 %v605, %v604
  %v617 = vpack.c.b16 %v607, %v606
  %v618 = vpack.c.b16 %v609, %v608
  %v619 = vpack.c.b16 %v611, %v610
  %628 = vst [vmem:[%s5] sm:$0xff] %v612
  %629 = vst [vmem:[%s5 + $0x8] sm:$0xff] %v613
  %630 = vst [vmem:[%s5 + $0x10] sm:$0xff] %v614
  %631 = vst [vmem:[%s5 + $0x18] sm:$0xff] %v615
  %632 = vst [vmem:[%s5 + $0x20] sm:$0xff] %v616
  %633 = vst [vmem:[%s5 + $0x28] sm:$0xff] %v617
  %634 = vst [vmem:[%s5 + $0x30] sm:$0xff] %v618
  %635 = vst [vmem:[%s5 + $0x38] sm:$0xff] %v619
  // Predicated region
  $region26: #{run.14} parent=0 // pred_check
    _
  $region27: #{run.14} parent=0 // pred_check_branch
    %637 = sbr.rel (0) target = $region29
  $region28: #{run.14} parent=0 // pred_region
    _
  $region29: #{run.14} parent=0 // pred_fallthru
    _
  // Predicated region
  $region30: #{run.14} parent=0 // pred_check
    _
  $region31: #{run.14} parent=0 // pred_check_branch
    %639 = sbr.rel (0) target = $region33
  $region32: #{run.14} parent=0 // pred_region
    _
  $region33: #{run.14} parent=0 // pred_fallthru
    _

// kernel: run.15
$region0: #{run.15}
  #allocation0 [shape = 'u32[]', space=smem, size = 0x4, offset = 0x4, fixed_abs, tag = 'smem constant byte address 0x4 - core index']
  #allocation1 [shape = 'u32[144,128]{1,0:T(1,128)}', space=vmem, size = 0x12000, scoped, tag = 'internal scratch']
  %s0 = inlined_call_operand.vmem [shape: bf16[32,512], index: 0, kind: input, shape index: {}]
  %s1 = inlined_call_operand.vmem [shape: bf16[512,128], index: 1, kind: input, shape index: {}]
  %s2 = inlined_call_operand.vmem [shape: f32[1,128], index: 2, kind: input, shape index: {}]
  %s3 = inlined_call_operand.vmem [shape: f32[32,128], index: 3, kind: input, shape index: {}]
  %s4 = inlined_call_operand.vmem [shape: f32[32,128], index: 4, kind: output, shape index: {}]
  %s5 = sld [smem:[#allocation0]]
  $region26: #{run.15} parent=0
    _
  %s7 = ssub.s32 1, %s5
  %s8 = scalar_select 0, %s7, %s5
  // Predicated region
  $region2: #{run.15} parent=0 // pred_check
    _
  $region3: #{run.15} parent=0 // pred_check_branch
    %10 = sbr.rel (0) target = $region5
  $region4: #{run.15} parent=0 // pred_region
    _
  $region5: #{run.15} parent=0 // pred_fallthru
    _
  // Predicated region
  $region6: #{run.15} parent=0 // pred_check
    _
  $region7: #{run.15} parent=0 // pred_check_branch
    %12 = sbr.rel (0) target = $region9
  $region8: #{run.15} parent=0 // pred_region
    _
  $region9: #{run.15} parent=0 // pred_fallthru
    _
  // Predicated region
  $region10: #{run.15} parent=0 // pred_check
    _
  $region11: #{run.15} parent=0 // pred_check_branch
    %14 = sbr.rel (0) target = $region13
  $region12: #{run.15} parent=0 // pred_region
    _
  $region13: #{run.15} parent=0 // pred_fallthru
    _
  // Predicated region
  $region14: #{run.15} parent=0 // pred_check
    _
  $region15: #{run.15} parent=0 // pred_check_branch
    %16 = sbr.rel (0) target = $region17
  $region16: #{run.15} parent=0 // pred_region
    _
  $region17: #{run.15} parent=0 // pred_fallthru
    _
  %v18 = vld [vmem:[%s0] sm:$0xff]
  %v19 = vld [vmem:[%s0 + $0x8] sm:$0xff]
  %v20 = vld [vmem:[%s0 + $0x10] sm:$0xff]
  %v21 = vld [vmem:[%s0 + $0x18] sm:$0xff]
  %v22 = vld [vmem:[%s0 + $0x20] sm:$0xff]
  %v23 = vld [vmem:[%s0 + $0x28] sm:$0xff]
  %v24 = vld [vmem:[%s0 + $0x30] sm:$0xff]
  %v25 = vld [vmem:[%s0 + $0x38] sm:$0xff]
  %v26 = vld [vmem:[%s1] sm:$0xf]
  %v27 = vld [vmem:[%s1 + $0x4] sm:$0xf]
  %v28 = vld [vmem:[%s1 + $0x8] sm:$0xf]
  %v29 = vld [vmem:[%s1 + $0xc] sm:$0xf]
  %v30 = vld [vmem:[%s1 + $0x10] sm:$0xf]
  %v31 = vld [vmem:[%s1 + $0x14] sm:$0xf]
  %v32 = vld [vmem:[%s1 + $0x18] sm:$0xf]
  %v33 = vld [vmem:[%s1 + $0x1c] sm:$0xf]
  %v34 = vld [vmem:[%s1 + $0x20] sm:$0xf]
  %v35 = vld [vmem:[%s1 + $0x24] sm:$0xf]
  %v36 = vld [vmem:[%s1 + $0x28] sm:$0xf]
  %v37 = vld [vmem:[%s1 + $0x2c] sm:$0xf]
  %v38 = vld [vmem:[%s1 + $0x30] sm:$0xf]
  %v39 = vld [vmem:[%s1 + $0x34] sm:$0xf]
  %v40 = vld [vmem:[%s1 + $0x38] sm:$0xf]
  %v41 = vld [vmem:[%s1 + $0x3c] sm:$0xf]
  %v42 = vld [vmem:[%s1 + $0x40] sm:$0xf]
  %v43 = vld [vmem:[%s1 + $0x44] sm:$0xf]
  %v44 = vld [vmem:[%s1 + $0x48] sm:$0xf]
  %v45 = vld [vmem:[%s1 + $0x4c] sm:$0xf]
  %v46 = vld [vmem:[%s1 + $0x50] sm:$0xf]
  %v47 = vld [vmem:[%s1 + $0x54] sm:$0xf]
  %v48 = vld [vmem:[%s1 + $0x58] sm:$0xf]
  %v49 = vld [vmem:[%s1 + $0x5c] sm:$0xf]
  %v50 = vld [vmem:[%s1 + $0x60] sm:$0xf]
  %v51 = vld [vmem:[%s1 + $0x64] sm:$0xf]
  %v52 = vld [vmem:[%s1 + $0x68] sm:$0xf]
  %v53 = vld [vmem:[%s1 + $0x6c] sm:$0xf]
  %v54 = vld [vmem:[%s1 + $0x70] sm:$0xf]
  %v55 = vld [vmem:[%s1 + $0x74] sm:$0xf]
  %v56 = vld [vmem:[%s1 + $0x78] sm:$0xf]
  %v57 = vld [vmem:[%s1 + $0x7c] sm:$0xf]
  %v58 = vld [vmem:[%s1 + $0x80] sm:$0xf]
  %v59 = vld [vmem:[%s1 + $0x84] sm:$0xf]
  %v60 = vld [vmem:[%s1 + $0x88] sm:$0xf]
  %v61 = vld [vmem:[%s1 + $0x8c] sm:$0xf]
  %v62 = vld [vmem:[%s1 + $0x90] sm:$0xf]
  %v63 = vld [vmem:[%s1 + $0x94] sm:$0xf]
  %v64 = vld [vmem:[%s1 + $0x98] sm:$0xf]
  %v65 = vld [vmem:[%s1 + $0x9c] sm:$0xf]
  %v66 = vld [vmem:[%s1 + $0xa0] sm:$0xf]
  %v67 = vld [vmem:[%s1 + $0xa4] sm:$0xf]
  %v68 = vld [vmem:[%s1 + $0xa8] sm:$0xf]
  %v69 = vld [vmem:[%s1 + $0xac] sm:$0xf]
  %v70 = vld [vmem:[%s1 + $0xb0] sm:$0xf]
  %v71 = vld [vmem:[%s1 + $0xb4] sm:$0xf]
  %v72 = vld [vmem:[%s1 + $0xb8] sm:$0xf]
  %v73 = vld [vmem:[%s1 + $0xbc] sm:$0xf]
  %v74 = vld [vmem:[%s1 + $0xc0] sm:$0xf]
  %v75 = vld [vmem:[%s1 + $0xc4] sm:$0xf]
  %v76 = vld [vmem:[%s1 + $0xc8] sm:$0xf]
  %v77 = vld [vmem:[%s1 + $0xcc] sm:$0xf]
  %v78 = vld [vmem:[%s1 + $0xd0] sm:$0xf]
  %v79 = vld [vmem:[%s1 + $0xd4] sm:$0xf]
  %v80 = vld [vmem:[%s1 + $0xd8] sm:$0xf]
  %v81 = vld [vmem:[%s1 + $0xdc] sm:$0xf]
  %v82 = vld [vmem:[%s1 + $0xe0] sm:$0xf]
  %v83 = vld [vmem:[%s1 + $0xe4] sm:$0xf]
  %v84 = vld [vmem:[%s1 + $0xe8] sm:$0xf]
  %v85 = vld [vmem:[%s1 + $0xec] sm:$0xf]
  %v86 = vld [vmem:[%s1 + $0xf0] sm:$0xf]
  %v87 = vld [vmem:[%s1 + $0xf4] sm:$0xf]
  %v88 = vld [vmem:[%s1 + $0xf8] sm:$0xf]
  %v89 = vld [vmem:[%s1 + $0xfc] sm:$0xf]
  %v90 = vld [vmem:[%s2] sm:$0x1]
  %v92 = vlaneseq
  %v93 = vshrl.u32 %v92, 7
  %v94 = vsub.s32 0, %v93
  %v95 = vrot.slane %v90, %v94
  %v105 = vunpack.c.l.b16 %v18
  %v106 = vunpack.c.h.b16 %v18
  %v107 = vunpack.c.l.b16 %v19
  %v108 = vunpack.c.h.b16 %v19
  %v109 = vunpack.c.l.b16 %v20
  %v110 = vunpack.c.h.b16 %v20
  %v111 = vunpack.c.l.b16 %v21
  %v112 = vunpack.c.h.b16 %v21
  %v113 = vunpack.c.l.b16 %v22
  %v114 = vunpack.c.h.b16 %v22
  %v115 = vunpack.c.l.b16 %v23
  %v116 = vunpack.c.h.b16 %v23
  %v117 = vunpack.c.l.b16 %v24
  %v118 = vunpack.c.h.b16 %v24
  %v119 = vunpack.c.l.b16 %v25
  %v120 = vunpack.c.h.b16 %v25
  %v121 = vpack.c.b16 %v109, %v105
  %v122 = vpack.c.b16 %v110, %v106
  %v123 = vpack.c.b16 %v111, %v107
  %v124 = vpack.c.b16 %v112, %v108
  %v125 = vpack.c.b16 %v117, %v113
  %v126 = vpack.c.b16 %v118, %v114
  %v127 = vpack.c.b16 %v119, %v115
  %v128 = vpack.c.b16 %v120, %v116
  %v201 = vunpack.c.l.b16 %v26
  %v202 = vunpack.c.l.b16 %v27
  %v203 = vunpack.c.l.b16 %v28
  %v204 = vunpack.c.l.b16 %v29
  %v205 = vunpack.c.l.b16 %v30
  %v206 = vunpack.c.l.b16 %v31
  %v207 = vunpack.c.l.b16 %v32
  %v208 = vunpack.c.l.b16 %v33
  %v209 = vunpack.c.l.b16 %v34
  %v210 = vunpack.c.l.b16 %v35
  %v211 = vunpack.c.l.b16 %v36
  %v212 = vunpack.c.l.b16 %v37
  %v213 = vunpack.c.l.b16 %v38
  %v214 = vunpack.c.l.b16 %v39
  %v215 = vunpack.c.l.b16 %v40
  %v216 = vunpack.c.l.b16 %v41
  %v217 = vunpack.c.l.b16 %v42
  %v218 = vunpack.c.l.b16 %v43
  %v219 = vunpack.c.l.b16 %v44
  %v220 = vunpack.c.l.b16 %v45
  %v221 = vunpack.c.l.b16 %v46
  %v222 = vunpack.c.l.b16 %v47
  %v223 = vunpack.c.l.b16 %v48
  %v224 = vunpack.c.l.b16 %v49
  %v225 = vunpack.c.l.b16 %v50
  %v226 = vunpack.c.l.b16 %v51
  %v227 = vunpack.c.l.b16 %v52
  %v228 = vunpack.c.l.b16 %v53
  %v229 = vunpack.c.l.b16 %v54
  %v230 = vunpack.c.l.b16 %v55
  %v231 = vunpack.c.l.b16 %v56
  %v232 = vunpack.c.l.b16 %v57
  %v233 = vunpack.c.l.b16 %v58
  %v234 = vunpack.c.l.b16 %v59
  %v235 = vunpack.c.l.b16 %v60
  %v236 = vunpack.c.l.b16 %v61
  %v237 = vunpack.c.l.b16 %v62
  %v238 = vunpack.c.l.b16 %v63
  %v239 = vunpack.c.l.b16 %v64
  %v240 = vunpack.c.l.b16 %v65
  %v241 = vunpack.c.l.b16 %v66
  %v242 = vunpack.c.l.b16 %v67
  %v243 = vunpack.c.l.b16 %v68
  %v244 = vunpack.c.l.b16 %v69
  %v245 = vunpack.c.l.b16 %v70
  %v246 = vunpack.c.l.b16 %v71
  %v247 = vunpack.c.l.b16 %v72
  %v248 = vunpack.c.l.b16 %v73
  %v249 = vunpack.c.l.b16 %v74
  %v250 = vunpack.c.l.b16 %v75
  %v251 = vunpack.c.l.b16 %v76
  %v252 = vunpack.c.l.b16 %v77
  %v253 = vunpack.c.l.b16 %v78
  %v254 = vunpack.c.l.b16 %v79
  %v255 = vunpack.c.l.b16 %v80
  %v256 = vunpack.c.l.b16 %v81
  %v257 = vunpack.c.l.b16 %v82
  %v258 = vunpack.c.l.b16 %v83
  %v259 = vunpack.c.l.b16 %v84
  %v260 = vunpack.c.l.b16 %v85
  %v261 = vunpack.c.l.b16 %v86
  %v262 = vunpack.c.l.b16 %v87
  %v263 = vunpack.c.l.b16 %v88
  %v264 = vunpack.c.l.b16 %v89
  %v265 = vpack.c.b16 %v202, %v201
  %v266 = vpack.c.b16 %v204, %v203
  %v267 = vpack.c.b16 %v206, %v205
  %v268 = vpack.c.b16 %v208, %v207
  %v269 = vpack.c.b16 %v210, %v209
  %v270 = vpack.c.b16 %v212, %v211
  %v271 = vpack.c.b16 %v214, %v213
  %v272 = vpack.c.b16 %v216, %v215
  %v273 = vpack.c.b16 %v218, %v217
  %v274 = vpack.c.b16 %v220, %v219
  %v275 = vpack.c.b16 %v222, %v221
  %v276 = vpack.c.b16 %v224, %v223
  %v277 = vpack.c.b16 %v226, %v225
  %v278 = vpack.c.b16 %v228, %v227
  %v279 = vpack.c.b16 %v230, %v229
  %v280 = vpack.c.b16 %v232, %v231
  %v281 = vpack.c.b16 %v234, %v233
  %v282 = vpack.c.b16 %v236, %v235
  %v283 = vpack.c.b16 %v238, %v237
  %v284 = vpack.c.b16 %v240, %v239
  %v285 = vpack.c.b16 %v242, %v241
  %v286 = vpack.c.b16 %v244, %v243
  %v287 = vpack.c.b16 %v246, %v245
  %v288 = vpack.c.b16 %v248, %v247
  %v289 = vpack.c.b16 %v250, %v249
  %v290 = vpack.c.b16 %v252, %v251
  %v291 = vpack.c.b16 %v254, %v253
  %v292 = vpack.c.b16 %v256, %v255
  %v293 = vpack.c.b16 %v258, %v257
  %v294 = vpack.c.b16 %v260, %v259
  %v295 = vpack.c.b16 %v262, %v261
  %v296 = vpack.c.b16 %v264, %v263
  %329 = vmatprep.subr.bf16.mxu0 0
  %330 = vmatpush1.bf16.msra.mxu0 %v272
  %331 = vmatprep.subr.bf16.mxu0 0
  %332 = vmatpush1.bf16.msra.mxu0 %v271
  %333 = vmatprep.subr.bf16.mxu0 0
  %334 = vmatpush1.bf16.msra.mxu0 %v270
  %335 = vmatprep.subr.bf16.mxu0 0
  %336 = vmatpush1.bf16.msra.mxu0 %v269
  %337 = vmatprep.subr.bf16.mxu0 0
  %338 = vmatpush1.bf16.msra.mxu0 %v268
  %339 = vmatprep.subr.bf16.mxu0 0
  %340 = vmatpush1.bf16.msra.mxu0 %v267
  %341 = vmatprep.subr.bf16.mxu0 0
  %342 = vmatpush1.bf16.msra.mxu0 %v266
  %343 = vmatprep.subr.bf16.mxu0 0
  %344 = vmatpush1.bf16.msra.mxu0 %v265
  %345 = vmatprep.subr.bf16.mxu0 0
  %346 = vmatpush2.bf16.msra.mxu0 %v280
  %347 = vmatprep.subr.bf16.mxu0 0
  %348 = vmatpush2.bf16.msra.mxu0 %v279
  %349 = vmatprep.subr.bf16.mxu0 0
  %350 = vmatpush2.bf16.msra.mxu0 %v278
  %351 = vmatprep.subr.bf16.mxu0 0
  %352 = vmatpush2.bf16.msra.mxu0 %v277
  %353 = vmatprep.subr.bf16.mxu0 0
  %354 = vmatpush2.bf16.msra.mxu0 %v276
  %355 = vmatprep.subr.bf16.mxu0 0
  %356 = vmatpush2.bf16.msra.mxu0 %v275
  %357 = vmatprep.subr.bf16.mxu0 0
  %358 = vmatpush2.bf16.msra.mxu0 %v274
  %359 = vmatprep.subr.bf16.mxu0 0
  %360 = vmatpush2.bf16.msra.mxu0 %v273
  %361 = vmatprep.mubr.bf16.mxu0 %v122
  %362 = vmatmul.mubr.bf16.gmra.mxu0 %v121
  %v363 = vpop.f32.mrf.mxu0
  %v364 = vadd.f32 %v95, %v363
  %v365 = vpop.f32.mrf.mxu0
  %v366 = vpop.f32.mrf.mxu0
  %v367 = vadd.f32 %v95, %v366
  %v368 = vpop.f32.mrf.mxu0
  %369 = vmatprep.mubr.bf16.mxu0 %v126
  %370 = vmatmul.mubr.bf16.gmra.mxu0 %v125
  %v371 = vpop.f32.mrf.mxu0
  %v372 = vadd.f32 %v95, %v371
  %v373 = vpop.f32.mrf.mxu0
  %v374 = vpop.f32.mrf.mxu0
  %v375 = vadd.f32 %v95, %v374
  %v376 = vpop.f32.mrf.mxu0
  %377 = vdwg.mxu0
  %378 = vmatprep.subr.bf16.mxu0 0
  %379 = vmatpush1.bf16.msra.mxu0 %v288
  %380 = vmatprep.subr.bf16.mxu0 0
  %381 = vmatpush1.bf16.msra.mxu0 %v287
  %382 = vmatprep.subr.bf16.mxu0 0
  %383 = vmatpush1.bf16.msra.mxu0 %v286
  %384 = vmatprep.subr.bf16.mxu0 0
  %385 = vmatpush1.bf16.msra.mxu0 %v285
  %386 = vmatprep.subr.bf16.mxu0 0
  %387 = vmatpush1.bf16.msra.mxu0 %v284
  %388 = vmatprep.subr.bf16.mxu0 0
  %389 = vmatpush1.bf16.msra.mxu0 %v283
  %390 = vmatprep.subr.bf16.mxu0 0
  %391 = vmatpush1.bf16.msra.mxu0 %v282
  %392 = vmatprep.subr.bf16.mxu0 0
  %393 = vmatpush1.bf16.msra.mxu0 %v281
  %394 = vmatprep.subr.bf16.mxu0 0
  %395 = vmatpush2.bf16.msra.mxu0 %v296
  %396 = vmatprep.subr.bf16.mxu0 0
  %397 = vmatpush2.bf16.msra.mxu0 %v295
  %398 = vmatprep.subr.bf16.mxu0 0
  %399 = vmatpush2.bf16.msra.mxu0 %v294
  %400 = vmatprep.subr.bf16.mxu0 0
  %401 = vmatpush2.bf16.msra.mxu0 %v293
  %402 = vmatprep.subr.bf16.mxu0 0
  %403 = vmatpush2.bf16.msra.mxu0 %v292
  %404 = vmatprep.subr.bf16.mxu0 0
  %405 = vmatpush2.bf16.msra.mxu0 %v291
  %406 = vmatprep.subr.bf16.mxu0 0
  %407 = vmatpush2.bf16.msra.mxu0 %v290
  %408 = vmatprep.subr.bf16.mxu0 0
  %409 = vmatpush2.bf16.msra.mxu0 %v289
  %410 = vmatprep.mubr.bf16.mxu0 %v124
  %411 = vmatmul.mubr.bf16.gmra.mxu0 %v123
  %v412 = vpop.f32.mrf.mxu0
  %v413 = vadd.f32 %v364, %v412
  %v414 = vpop.f32.mrf.mxu0
  %v415 = vpop.f32.mrf.mxu0
  %v416 = vadd.f32 %v367, %v415
  %v417 = vpop.f32.mrf.mxu0
  %418 = vmatprep.mubr.bf16.mxu0 %v128
  %419 = vmatmul.mubr.bf16.gmra.mxu0 %v127
  %v420 = vpop.f32.mrf.mxu0
  %v421 = vadd.f32 %v372, %v420
  %v422 = vpop.f32.mrf.mxu0
  %v423 = vpop.f32.mrf.mxu0
  %v424 = vadd.f32 %v375, %v423
  %v425 = vpop.f32.mrf.mxu0
  %426 = vdwg.mxu0
  %v427 = vld [vmem:[%s3] sm:$0xff]
  %v428 = vld [vmem:[%s3 + $0x8] sm:$0xff]
  %v429 = vld [vmem:[%s3 + $0x10] sm:$0xff]
  %v430 = vld [vmem:[%s3 + $0x18] sm:$0xff]
  %v431 = vadd.f32 %v413, %v427
  %v432 = vadd.f32 %v416, %v428
  %v433 = vadd.f32 %v421, %v429
  %v434 = vadd.f32 %v424, %v430
  %435 = vst [vmem:[%s4] sm:$0xff] %v431
  %436 = vst [vmem:[%s4 + $0x8] sm:$0xff] %v432
  %437 = vst [vmem:[%s4 + $0x10] sm:$0xff] %v433
  %438 = vst [vmem:[%s4 + $0x18] sm:$0xff] %v434
  // Predicated region
  $region18: #{run.15} parent=0 // pred_check
    _
  $region19: #{run.15} parent=0 // pred_check_branch
    %440 = sbr.rel (0) target = $region21
  $region20: #{run.15} parent=0 // pred_region
    _
  $region21: #{run.15} parent=0 // pred_fallthru
    _
  // Predicated region
  $region22: #{run.15} parent=0 // pred_check
    _
  $region23: #{run.15} parent=0 // pred_check_branch
    %442 = sbr.rel (0) target = $region25
  $region24: #{run.15} parent=0 // pred_region
    _
  $region25: #{run.15} parent=0 // pred_fallthru
    _

// kernel: run.16
$region0: #{run.16}
  #allocation0 [shape = 'u32[]', space=smem, size = 0x4, offset = 0x4, fixed_abs, tag = 'smem constant byte address 0x4 - core index']
  #allocation1 [shape = 'u32[144,128]{1,0:T(1,128)}', space=vmem, size = 0x12000, scoped, tag = 'internal scratch']
  #allocation2 [shape = 'bf16[32,128]{1,0:T(8,128)(2,1)}', space=vmem, size = 0x2000, scoped, tag = 'scratch operand']
  %s0 = inlined_call_operand.vmem [shape: f32[32,128], index: 0, kind: input, shape index: {}]
  %s1 = inlined_call_operand.vmem [shape: f32[1,128], index: 1, kind: input, shape index: {}]
  %s2 = inlined_call_operand.vmem [shape: f32[1,128], index: 2, kind: input, shape index: {}]
  %s3 = inlined_call_operand.vmem [shape: bf16[128,384], index: 3, kind: input, shape index: {}]
  %s4 = inlined_call_operand.vmem [shape: f32[1,384], index: 4, kind: input, shape index: {}]
  %s5 = inlined_call_operand.vmem [shape: bf16[32,384], index: 5, kind: output, shape index: {}]
  %s6 = sld [smem:[#allocation0]]
  $region34: #{run.16} parent=0
    _
  %s8 = ssub.s32 1, %s6
  %s9 = scalar_select 0, %s8, %s6
  // Predicated region
  $region2: #{run.16} parent=0 // pred_check
    _
  $region3: #{run.16} parent=0 // pred_check_branch
    %11 = sbr.rel (0) target = $region5
  $region4: #{run.16} parent=0 // pred_region
    _
  $region5: #{run.16} parent=0 // pred_fallthru
    _
  // Predicated region
  $region6: #{run.16} parent=0 // pred_check
    _
  $region7: #{run.16} parent=0 // pred_check_branch
    %13 = sbr.rel (0) target = $region9
  $region8: #{run.16} parent=0 // pred_region
    _
  $region9: #{run.16} parent=0 // pred_fallthru
    _
  // Predicated region
  $region10: #{run.16} parent=0 // pred_check
    _
  $region11: #{run.16} parent=0 // pred_check_branch
    %15 = sbr.rel (0) target = $region13
  $region12: #{run.16} parent=0 // pred_region
    _
  $region13: #{run.16} parent=0 // pred_fallthru
    _
  // Predicated region
  $region14: #{run.16} parent=0 // pred_check
    _
  $region15: #{run.16} parent=0 // pred_check_branch
    %17 = sbr.rel (0) target = $region17
  $region16: #{run.16} parent=0 // pred_region
    _
  $region17: #{run.16} parent=0 // pred_fallthru
    _
  // Predicated region
  $region18: #{run.16} parent=0 // pred_check
    _
  $region19: #{run.16} parent=0 // pred_check_branch
    %19 = sbr.rel (0) target = $region21
  $region20: #{run.16} parent=0 // pred_region
    _
  $region21: #{run.16} parent=0 // pred_fallthru
    _
  %p21 = scmp.eq.s32.totalorder 0, 0
  // Predicated region
  $region22: #{run.16} parent=0 // pred_check
    %p22 = pneg %p21
  $region23: #{run.16} parent=0 // pred_check_branch
    %24 = sbr.rel (%p22) target = $region25
  $region24: #{run.16} parent=0 // pred_region
    %v25 = vld [vmem:[%s0] sm:$0xff]
    %v26 = vld [vmem:[%s0 + $0x8] sm:$0xff]
    %v27 = vld [vmem:[%s0 + $0x10] sm:$0xff]
    %v28 = vld [vmem:[%s0 + $0x18] sm:$0xff]
    %29 = vadd.xlane.f32.xlu0 %v25
    %v30 = vpop.xlane.xlu0 %29
    %31 = vadd.xlane.f32.xlu0 %v26
    %v32 = vpop.xlane.xlu0 %31
    %33 = vadd.xlane.f32.xlu0 %v27
    %v34 = vpop.xlane.xlu0 %33
    %35 = vadd.xlane.f32.xlu0 %v28
    %v36 = vpop.xlane.xlu0 %35
    %v37 = vrcp.pop 128.0
    %v38 = vmul.f32 %v30, %v37
    %v39 = vmul.f32 %v32, %v37
    %v40 = vmul.f32 %v34, %v37
    %v41 = vmul.f32 %v36, %v37
    %v42 = vsub.f32 %v25, %v38
    %v43 = vsub.f32 %v26, %v39
    %v44 = vsub.f32 %v27, %v40
    %v45 = vsub.f32 %v28, %v41
    %v46 = vmul.f32 %v42, %v42
    %v47 = vmul.f32 %v43, %v43
    %v48 = vmul.f32 %v44, %v44
    %v49 = vmul.f32 %v45, %v45
    %50 = vadd.xlane.f32.xlu0 %v46
    %v51 = vpop.xlane.xlu0 %50
    %52 = vadd.xlane.f32.xlu0 %v47
    %v53 = vpop.xlane.xlu0 %52
    %54 = vadd.xlane.f32.xlu0 %v48
    %v55 = vpop.xlane.xlu0 %54
    %56 = vadd.xlane.f32.xlu0 %v49
    %v57 = vpop.xlane.xlu0 %56
    %v58 = vmul.f32 %v51, %v37
    %v59 = vmul.f32 %v53, %v37
    %v60 = vmul.f32 %v55, %v37
    %v61 = vmul.f32 %v57, %v37
    %v62 = vadd.f32 %v58, 1e-05
    %v63 = vadd.f32 %v59, 1e-05
    %v64 = vadd.f32 %v60, 1e-05
    %v65 = vadd.f32 %v61, 1e-05
    %v66 = vrsqrt.pop %v62
    %v67 = vrsqrt.pop %v63
    %v68 = vrsqrt.pop %v64
    %v69 = vrsqrt.pop %v65
    %v70 = vmul.f32 %v42, %v66
    %v71 = vmul.f32 %v43, %v67
    %v72 = vmul.f32 %v44, %v68
    %v73 = vmul.f32 %v45, %v69
    %v74 = vld [vmem:[%s1] sm:$0x1]
    %v76 = vlaneseq
    %v77 = vshrl.u32 %v76, 7
    %v78 = vsub.s32 0, %v77
    %v79 = vrot.slane %v74, %v78
    %v81 = vmul.f32 %v70, %v79
    %v82 = vmul.f32 %v71, %v79
    %v83 = vmul.f32 %v72, %v79
    %v84 = vmul.f32 %v73, %v79
    %v85 = vld [vmem:[%s2] sm:$0x1]
    %v87 = vlaneseq
    %v88 = vshrl.u32 %v87, 7
    %v89 = vsub.s32 0, %v88
    %v90 = vrot.slane %v85, %v89
    %v92 = vadd.f32 %v81, %v90
    %v93 = vadd.f32 %v82, %v90
    %v94 = vadd.f32 %v83, %v90
    %v95 = vadd.f32 %v84, %v90
    %v96 = vpack.c.bf16 %v93, %v92
    %v97 = vpack.c.bf16 %v95, %v94
    %v100 = vunpack.c.l.b16 %v96
    %v101 = vunpack.c.h.b16 %v96
    %v102 = vunpack.c.l.b16 %v97
    %v103 = vunpack.c.h.b16 %v97
    %v104 = vpack.c.b16 %v100, %v100
    %v105 = vpack.c.b16 %v101, %v101
    %v106 = vpack.c.b16 %v102, %v102
    %v107 = vpack.c.b16 %v103, %v103
    %112 = vst [vmem:[#allocation2] sm:$0xf] %v104
    %113 = vst [vmem:[#allocation2 + $0x4] sm:$0xf] %v105
    %114 = vst [vmem:[#allocation2 + $0x8] sm:$0xf] %v106
    %115 = vst [vmem:[#allocation2 + $0xc] sm:$0xf] %v107
  $region25: #{run.16} parent=0 // pred_fallthru
    _
  %v116 = vld [vmem:[#allocation2] sm:$0xf]
  %v117 = vld [vmem:[#allocation2 + $0x4] sm:$0xf]
  %v118 = vld [vmem:[#allocation2 + $0x8] sm:$0xf]
  %v119 = vld [vmem:[#allocation2 + $0xc] sm:$0xf]
  %v120 = vld [vmem:[%s3] sm:$0xff]
  %v121 = vld [vmem:[%s3 + $0x8] sm:$0xf]
  %v122 = vld [vmem:[%s3 + $0xc] sm:$0xff]
  %v123 = vld [vmem:[%s3 + $0x14] sm:$0xf]
  %v124 = vld [vmem:[%s3 + $0x18] sm:$0xff]
  %v125 = vld [vmem:[%s3 + $0x20] sm:$0xf]
  %v126 = vld [vmem:[%s3 + $0x24] sm:$0xff]
  %v127 = vld [vmem:[%s3 + $0x2c] sm:$0xf]
  %v128 = vld [vmem:[%s3 + $0x30] sm:$0xff]
  %v129 = vld [vmem:[%s3 + $0x38] sm:$0xf]
  %v130 = vld [vmem:[%s3 + $0x3c] sm:$0xff]
  %v131 = vld [vmem:[%s3 + $0x44] sm:$0xf]
  %v132 = vld [vmem:[%s3 + $0x48] sm:$0xff]
  %v133 = vld [vmem:[%s3 + $0x50] sm:$0xf]
  %v134 = vld [vmem:[%s3 + $0x54] sm:$0xff]
  %v135 = vld [vmem:[%s3 + $0x5c] sm:$0xf]
  %v136 = vld [vmem:[%s3 + $0x60] sm:$0xff]
  %v137 = vld [vmem:[%s3 + $0x68] sm:$0xf]
  %v138 = vld [vmem:[%s3 + $0x6c] sm:$0xff]
  %v139 = vld [vmem:[%s3 + $0x74] sm:$0xf]
  %v140 = vld [vmem:[%s3 + $0x78] sm:$0xff]
  %v141 = vld [vmem:[%s3 + $0x80] sm:$0xf]
  %v142 = vld [vmem:[%s3 + $0x84] sm:$0xff]
  %v143 = vld [vmem:[%s3 + $0x8c] sm:$0xf]
  %v144 = vld [vmem:[%s3 + $0x90] sm:$0xff]
  %v145 = vld [vmem:[%s3 + $0x98] sm:$0xf]
  %v146 = vld [vmem:[%s3 + $0x9c] sm:$0xff]
  %v147 = vld [vmem:[%s3 + $0xa4] sm:$0xf]
  %v148 = vld [vmem:[%s3 + $0xa8] sm:$0xff]
  %v149 = vld [vmem:[%s3 + $0xb0] sm:$0xf]
  %v150 = vld [vmem:[%s3 + $0xb4] sm:$0xff]
  %v151 = vld [vmem:[%s3 + $0xbc] sm:$0xf]
  %v152 = vld [vmem:[%s4] sm:$0x7]
  %v154 = vlaneseq
  %v155 = vshrl.u32 %v154, 7
  %v156 = vsub.s32 0, %v155
  %v157 = vrot.slane %v152, %v156
  %v158 = vlaneseq
  %v159 = vshrl.u32 %v158, 7
  %v160 = vsub.s32 1, %v159
  %v161 = vrot.slane %v152, %v160
  %v162 = vlaneseq
  %v163 = vshrl.u32 %v162, 7
  %v164 = vsub.s32 2, %v163
  %v165 = vrot.slane %v152, %v164
  %v173 = vunpack.c.l.b16 %v116
  %v174 = vunpack.c.l.b16 %v117
  %v175 = vunpack.c.l.b16 %v118
  %v176 = vunpack.c.l.b16 %v119
  %v177 = vpack.c.b16 %v174, %v173
  %v178 = vpack.c.b16 %v176, %v175
  %v213 = vunpack.c.l.b16 %v120
  %v214 = vunpack.c.h.b16 %v120
  %v215 = vunpack.c.l.b16 %v121
  %v216 = vunpack.c.l.b16 %v122
  %v217 = vunpack.c.h.b16 %v122
  %v218 = vunpack.c.l.b16 %v123
  %v219 = vunpack.c.l.b16 %v124
  %v220 = vunpack.c.h.b16 %v124
  %v221 = vunpack.c.l.b16 %v125
  %v222 = vunpack.c.l.b16 %v126
  %v223 = vunpack.c.h.b16 %v126
  %v224 = vunpack.c.l.b16 %v127
  %v225 = vunpack.c.l.b16 %v128
  %v226 = vunpack.c.h.b16 %v128
  %v227 = vunpack.c.l.b16 %v129
  %v228 = vunpack.c.l.b16 %v130
  %v229 = vunpack.c.h.b16 %v130
  %v230 = vunpack.c.l.b16 %v131
  %v231 = vunpack.c.l.b16 %v132
  %v232 = vunpack.c.h.b16 %v132
  %v233 = vunpack.c.l.b16 %v133
  %v234 = vunpack.c.l.b16 %v134
  %v235 = vunpack.c.h.b16 %v134
  %v236 = vunpack.c.l.b16 %v135
  %v237 = vunpack.c.l.b16 %v136
  %v238 = vunpack.c.h.b16 %v136
  %v239 = vunpack.c.l.b16 %v137
  %v240 = vunpack.c.l.b16 %v138
  %v241 = vunpack.c.h.b16 %v138
  %v242 = vunpack.c.l.b16 %v139
  %v243 = vunpack.c.l.b16 %v140
  %v244 = vunpack.c.h.b16 %v140
  %v245 = vunpack.c.l.b16 %v141
  %v246 = vunpack.c.l.b16 %v142
  %v247 = vunpack.c.h.b16 %v142
  %v248 = vunpack.c.l.b16 %v143
  %v249 = vunpack.c.l.b16 %v144
  %v250 = vunpack.c.h.b16 %v144
  %v251 = vunpack.c.l.b16 %v145
  %v252 = vunpack.c.l.b16 %v146
  %v253 = vunpack.c.h.b16 %v146
  %v254 = vunpack.c.l.b16 %v147
  %v255 = vunpack.c.l.b16 %v148
  %v256 = vunpack.c.h.b16 %v148
  %v257 = vunpack.c.l.b16 %v149
  %v258 = vunpack.c.l.b16 %v150
  %v259 = vunpack.c.h.b16 %v150
  %v260 = vunpack.c.l.b16 %v151
  %v261 = vpack.c.b16 %v216, %v213
  %v262 = vpack.c.b16 %v217, %v214
  %v263 = vpack.c.b16 %v218, %v215
  %v264 = vpack.c.b16 %v222, %v219
  %v265 = vpack.c.b16 %v223, %v220
  %v266 = vpack.c.b16 %v224, %v221
  %v267 = vpack.c.b16 %v228, %v225
  %v268 = vpack.c.b16 %v229, %v226
  %v269 = vpack.c.b16 %v230, %v227
  %v270 = vpack.c.b16 %v234, %v231
  %v271 = vpack.c.b16 %v235, %v232
  %v272 = vpack.c.b16 %v236, %v233
  %v273 = vpack.c.b16 %v240, %v237
  %v274 = vpack.c.b16 %v241, %v238
  %v275 = vpack.c.b16 %v242, %v239
  %v276 = vpack.c.b16 %v246, %v243
  %v277 = vpack.c.b16 %v247, %v244
  %v278 = vpack.c.b16 %v248, %v245
  %v279 = vpack.c.b16 %v252, %v249
  %v280 = vpack.c.b16 %v253, %v250
  %v281 = vpack.c.b16 %v254, %v251
  %v282 = vpack.c.b16 %v258, %v255
  %v283 = vpack.c.b16 %v259, %v256
  %v284 = vpack.c.b16 %v260, %v257
  %309 = vmatprep.subr.bf16.mxu0 %v283
  %310 = vmatpush1.bf16.msra.mxu0 %v282
  %311 = vmatprep.subr.bf16.mxu0 %v280
  %312 = vmatpush1.bf16.msra.mxu0 %v279
  %313 = vmatprep.subr.bf16.mxu0 %v277
  %314 = vmatpush1.bf16.msra.mxu0 %v276
  %315 = vmatprep.subr.bf16.mxu0 %v274
  %316 = vmatpush1.bf16.msra.mxu0 %v273
  %317 = vmatprep.subr.bf16.mxu0 %v271
  %318 = vmatpush1.bf16.msra.mxu0 %v270
  %319 = vmatprep.subr.bf16.mxu0 %v268
  %320 = vmatpush1.bf16.msra.mxu0 %v267
  %321 = vmatprep.subr.bf16.mxu0 %v265
  %322 = vmatpush1.bf16.msra.mxu0 %v264
  %323 = vmatprep.subr.bf16.mxu0 %v262
  %324 = vmatpush1.bf16.msra.mxu0 %v261
  %325 = vmatprep.subr.bf16.mxu0 0
  %326 = vmatpush2.bf16.msra.mxu0 0
  %327 = vmatprep.subr.bf16.mxu0 0
  %328 = vmatpush2.bf16.msra.mxu0 0
  %329 = vmatprep.subr.bf16.mxu0 0
  %330 = vmatpush2.bf16.msra.mxu0 0
  %331 = vmatprep.subr.bf16.mxu0 0
  %332 = vmatpush2.bf16.msra.mxu0 0
  %333 = vmatprep.subr.bf16.mxu0 0
  %334 = vmatpush2.bf16.msra.mxu0 0
  %335 = vmatprep.subr.bf16.mxu0 0
  %336 = vmatpush2.bf16.msra.mxu0 0
  %337 = vmatprep.subr.bf16.mxu0 0
  %338 = vmatpush2.bf16.msra.mxu0 0
  %339 = vmatprep.subr.bf16.mxu0 0
  %340 = vmatpush2.bf16.msra.mxu0 0
  %341 = vmatprep.mubr.bf16.mxu0 0
  %342 = vmatmul.mubr.bf16.gmra.mxu0 %v177
  %v343 = vpop.f32.mrf.mxu0
  %v344 = vadd.f32 %v157, %v343
  %v345 = vpop.f32.mrf.mxu0
  %v346 = vadd.f32 %v161, %v345
  %v347 = vpop.f32.mrf.mxu0
  %v348 = vadd.f32 %v157, %v347
  %v349 = vpop.f32.mrf.mxu0
  %v350 = vadd.f32 %v161, %v349
  %351 = vmatprep.mubr.bf16.mxu0 0
  %352 = vmatmul.mubr.bf16.gmra.mxu0 %v178
  %v353 = vpop.f32.mrf.mxu0
  %v354 = vadd.f32 %v157, %v353
  %v355 = vpop.f32.mrf.mxu0
  %v356 = vadd.f32 %v161, %v355
  %v357 = vpop.f32.mrf.mxu0
  %v358 = vadd.f32 %v157, %v357
  %v359 = vpop.f32.mrf.mxu0
  %v360 = vadd.f32 %v161, %v359
  %361 = vdwg.mxu0
  %362 = vmatprep.subr.bf16.mxu0 0
  %363 = vmatpush1.bf16.msra.mxu0 %v284
  %364 = vmatprep.subr.bf16.mxu0 0
  %365 = vmatpush1.bf16.msra.mxu0 %v281
  %366 = vmatprep.subr.bf16.mxu0 0
  %367 = vmatpush1.bf16.msra.mxu0 %v278
  %368 = vmatprep.subr.bf16.mxu0 0
  %369 = vmatpush1.bf16.msra.mxu0 %v275
  %370 = vmatprep.subr.bf16.mxu0 0
  %371 = vmatpush1.bf16.msra.mxu0 %v272
  %372 = vmatprep.subr.bf16.mxu0 0
  %373 = vmatpush1.bf16.msra.mxu0 %v269
  %374 = vmatprep.subr.bf16.mxu0 0
  %375 = vmatpush1.bf16.msra.mxu0 %v266
  %376 = vmatprep.subr.bf16.mxu0 0
  %377 = vmatpush1.bf16.msra.mxu0 %v263
  %378 = vmatprep.subr.bf16.mxu0 0
  %379 = vmatpush2.bf16.msra.mxu0 0
  %380 = vmatprep.subr.bf16.mxu0 0
  %381 = vmatpush2.bf16.msra.mxu0 0
  %382 = vmatprep.subr.bf16.mxu0 0
  %383 = vmatpush2.bf16.msra.mxu0 0
  %384 = vmatprep.subr.bf16.mxu0 0
  %385 = vmatpush2.bf16.msra.mxu0 0
  %386 = vmatprep.subr.bf16.mxu0 0
  %387 = vmatpush2.bf16.msra.mxu0 0
  %388 = vmatprep.subr.bf16.mxu0 0
  %389 = vmatpush2.bf16.msra.mxu0 0
  %390 = vmatprep.subr.bf16.mxu0 0
  %391 = vmatpush2.bf16.msra.mxu0 0
  %392 = vmatprep.subr.bf16.mxu0 0
  %393 = vmatpush2.bf16.msra.mxu0 0
  %394 = vmatprep.mubr.bf16.mxu0 0
  %395 = vmatmul.mubr.bf16.gmra.mxu0 %v177
  %v396 = vpop.f32.mrf.mxu0
  %v397 = vadd.f32 %v165, %v396
  %v398 = vpop.f32.mrf.mxu0
  %v399 = vpop.f32.mrf.mxu0
  %v400 = vadd.f32 %v165, %v399
  %v401 = vpop.f32.mrf.mxu0
  %402 = vmatprep.mubr.bf16.mxu0 0
  %403 = vmatmul.mubr.bf16.gmra.mxu0 %v178
  %v404 = vpop.f32.mrf.mxu0
  %v405 = vadd.f32 %v165, %v404
  %v406 = vpop.f32.mrf.mxu0
  %v407 = vpop.f32.mrf.mxu0
  %v408 = vadd.f32 %v165, %v407
  %v409 = vpop.f32.mrf.mxu0
  %410 = vdwg.mxu0
  %v411 = vpack.c.bf16 %v348, %v344
  %v412 = vpack.c.bf16 %v350, %v346
  %v413 = vpack.c.bf16 %v400, %v397
  %v414 = vpack.c.bf16 %v358, %v354
  %v415 = vpack.c.bf16 %v360, %v356
  %v416 = vpack.c.bf16 %v408, %v405
  %v423 = vunpack.c.l.b16 %v411
  %v424 = vunpack.c.l.b16 %v412
  %v425 = vunpack.c.l.b16 %v413
  %v426 = vunpack.c.h.b16 %v411
  %v427 = vunpack.c.h.b16 %v412
  %v428 = vunpack.c.h.b16 %v413
  %v429 = vunpack.c.l.b16 %v414
  %v430 = vunpack.c.l.b16 %v415
  %v431 = vunpack.c.l.b16 %v416
  %v432 = vunpack.c.h.b16 %v414
  %v433 = vunpack.c.h.b16 %v415
  %v434 = vunpack.c.h.b16 %v416
  %v435 = vpack.c.b16 %v424, %v423
  %v436 = vpack.c.b16 %v425, %v425
  %v437 = vpack.c.b16 %v427, %v426
  %v438 = vpack.c.b16 %v428, %v428
  %v439 = vpack.c.b16 %v430, %v429
  %v440 = vpack.c.b16 %v431, %v431
  %v441 = vpack.c.b16 %v433, %v432
  %v442 = vpack.c.b16 %v434, %v434
  %451 = vst [vmem:[%s5] sm:$0xff] %v435
  %452 = vst [vmem:[%s5 + $0x8] sm:$0xf] %v436
  %453 = vst [vmem:[%s5 + $0xc] sm:$0xff] %v437
  %454 = vst [vmem:[%s5 + $0x14] sm:$0xf] %v438
  %455 = vst [vmem:[%s5 + $0x18] sm:$0xff] %v439
  %456 = vst [vmem:[%s5 + $0x20] sm:$0xf] %v440
  %457 = vst [vmem:[%s5 + $0x24] sm:$0xff] %v441
  %458 = vst [vmem:[%s5 + $0x2c] sm:$0xf] %v442
  // Predicated region
  $region26: #{run.16} parent=0 // pred_check
    _
  $region27: #{run.16} parent=0 // pred_check_branch
    %460 = sbr.rel (0) target = $region29
  $region28: #{run.16} parent=0 // pred_region
    _
  $region29: #{run.16} parent=0 // pred_fallthru
    _
  // Predicated region
  $region30: #{run.16} parent=0 // pred_check
    _
  $region31: #{run.16} parent=0 // pred_check_branch
    %462 = sbr.rel (0) target = $region33
  $region32: #{run.16} parent=0 // pred_region
    _
  $region33: #{run.16} parent=0 // pred_fallthru
    _

// kernel: run.17
$region0: #{run.17}
  #allocation0 [shape = 'u32[]', space=smem, size = 0x4, offset = 0x4, fixed_abs, tag = 'smem constant byte address 0x4 - core index']
  #allocation1 [shape = 'u32[144,128]{1,0:T(1,128)}', space=vmem, size = 0x12000, scoped, tag = 'internal scratch']
  %s0 = inlined_call_operand.vmem [shape: bf16[2,16,384], index: 0, kind: input, shape index: {}]
  %s1 = inlined_call_operand.vmem [shape: bf16[128,128], index: 1, kind: input, shape index: {}]
  %s2 = inlined_call_operand.vmem [shape: f32[1,128], index: 2, kind: input, shape index: {}]
  %s3 = inlined_call_operand.vmem [shape: f32[2,16,128], index: 3, kind: input, shape index: {}]
  %s4 = inlined_call_operand.vmem [shape: f32[2,16,128], index: 4, kind: output, shape index: {0}]
  %s5 = inlined_call_operand.vmem [shape: f32[2,1,16], index: 5, kind: output, shape index: {1}]
  %6 = xla_tuple %s4, %s5
  %s7 = sld [smem:[#allocation0]]
  $region57: #{run.17} parent=0
    _
  %s9 = ssub.s32 1, %s7
  %s10 = scalar_select 0, %s9, %s7
  loop: start=0, step=1, limit=4
  $region2: #{run.17} parent=0 // loop_pre_header
    _
  $region3: #{run.17} parent=0 // loop_header
    %s12 = sphi 0, %s16
    %p13 = scmp.ge.s32.totalorder %s12, 4
    %s22 = sphi 0, %s24
    %s25 = sphi 0, %s22
    %s26 = sphi 0, %s25
    %s42 = sphi 0, %s26
    %s46 = sphi 0, %s46
    %s48 = sphi 0, %s46
    %s49 = sphi 0, %s48
    %s63 = sphi 0, %s49
    %s67 = sphi 0, %s67
    %s69 = sphi 0, %s67
    %s70 = sphi 0, %s69
    %s84 = sphi 0, %s70
    %s90 = sphi 0, %s92
    %s93 = sphi 0, %s90
    %s94 = sphi 0, %s93
    %s110 = sphi 0, %s94
    %s116 = sphi 0, %s118
    %s119 = sphi 0, %s116
    %s120 = sphi 0, %s119
    %s136 = sphi 0, %s120
    %s142 = sphi 0, %s144
    %s145 = sphi 0, %s142
    %s146 = sphi 0, %s145
    %s162 = sphi 0, %s146
  $region4: #{run.17} parent=0 // loop_header_branch
    %15 = sbr.rel (%p13) target = $region8
  $region5: #{run.17} parent=0 // loop_body
    %s17 = ssub.s32 %s12, 1
    %s18 = ssub.s32 %s12, 2
    %s19 = sadd.s32 %s12, 1
    %s20 = ssub.s32 %s12, %s19
    %p21 = scmp.eq.s32.totalorder %s20, 0
    %s23 = sadd.s32 %s22, 1
    %s24 = scalar_select %p21, %s22, %s23
    %p27 = pneg %p21
    %p28 = scmp.eq.s32.totalorder %s12, 1
    %p29 = por %p27, %p28
    %p30 = scmp.ne.s32.totalorder %s22, %s25
    %p31 = scmp.eq.s32.totalorder %s12, 0
    %p32 = por %p30, %p31
    %p33 = scmp.ne.s32.totalorder %s22, %s25
    %p34 = scmp.eq.s32.totalorder %s17, 1
    %p35 = por %p33, %p34
    %p36 = scmp.ne.s32.totalorder %s25, %s26
    %p37 = scmp.eq.s32.totalorder %s17, 0
    %p38 = por %p36, %p37
    %p39 = scmp.ne.s32.totalorder %s25, %s26
    %p40 = scmp.eq.s32.totalorder %s18, 1
    %p41 = por %p39, %p40
    %p43 = scmp.ne.s32.totalorder %s26, %s42
    %p44 = scmp.eq.s32.totalorder %s18, 0
    %p45 = por %p43, %p44
    %s47 = sadd.s32 %s46, 1
    %p50 = scmp.eq.s32.totalorder %s12, 1
    %p51 = scmp.ne.s32.totalorder %s46, %s48
    %p52 = scmp.eq.s32.totalorder %s12, 0
    %p53 = por %p51, %p52
    %p54 = scmp.ne.s32.totalorder %s46, %s48
    %p55 = scmp.eq.s32.totalorder %s17, 1
    %p56 = por %p54, %p55
    %p57 = scmp.ne.s32.totalorder %s48, %s49
    %p58 = scmp.eq.s32.totalorder %s17, 0
    %p59 = por %p57, %p58
    %p60 = scmp.ne.s32.totalorder %s48, %s49
    %p61 = scmp.eq.s32.totalorder %s18, 1
    %p62 = por %p60, %p61
    %p64 = scmp.ne.s32.totalorder %s49, %s63
    %p65 = scmp.eq.s32.totalorder %s18, 0
    %p66 = por %p64, %p65
    %s68 = sadd.s32 %s67, 1
    %p71 = scmp.eq.s32.totalorder %s12, 1
    %p72 = scmp.ne.s32.totalorder %s67, %s69
    %p73 = scmp.eq.s32.totalorder %s12, 0
    %p74 = por %p72, %p73
    %p75 = scmp.ne.s32.totalorder %s67, %s69
    %p76 = scmp.eq.s32.totalorder %s17, 1
    %p77 = por %p75, %p76
    %p78 = scmp.ne.s32.totalorder %s69, %s70
    %p79 = scmp.eq.s32.totalorder %s17, 0
    %p80 = por %p78, %p79
    %p81 = scmp.ne.s32.totalorder %s69, %s70
    %p82 = scmp.eq.s32.totalorder %s18, 1
    %p83 = por %p81, %p82
    %p85 = scmp.ne.s32.totalorder %s70, %s84
    %p86 = scmp.eq.s32.totalorder %s18, 0
    %p87 = por %p85, %p86
    %s88 = ssub.s32 %s12, %s19
    %p89 = scmp.eq.s32.totalorder %s88, 0
    %s91 = sadd.s32 %s90, 1
    %s92 = scalar_select %p89, %s90, %s91
    %p95 = pneg %p89
    %p96 = scmp.eq.s32.totalorder %s12, 1
    %p97 = por %p95, %p96
    %p98 = scmp.ne.s32.totalorder %s90, %s93
    %p99 = scmp.eq.s32.totalorder %s12, 0
    %p100 = por %p98, %p99
    %p101 = scmp.ne.s32.totalorder %s90, %s93
    %p102 = scmp.eq.s32.totalorder %s17, 1
    %p103 = por %p101, %p102
    %p104 = scmp.ne.s32.totalorder %s93, %s94
    %p105 = scmp.eq.s32.totalorder %s17, 0
    %p106 = por %p104, %p105
    %p107 = scmp.ne.s32.totalorder %s93, %s94
    %p108 = scmp.eq.s32.totalorder %s18, 1
    %p109 = por %p107, %p108
    %p111 = scmp.ne.s32.totalorder %s94, %s110
    %p112 = scmp.eq.s32.totalorder %s18, 0
    %p113 = por %p111, %p112
    %s114 = ssub.s32 %s12, %s19
    %p115 = scmp.eq.s32.totalorder %s114, 0
    %s117 = sadd.s32 %s116, 1
    %s118 = scalar_select %p115, %s116, %s117
    %p121 = pneg %p115
    %p122 = scmp.eq.s32.totalorder %s12, 1
    %p123 = por %p121, %p122
    %p124 = scmp.ne.s32.totalorder %s116, %s119
    %p125 = scmp.eq.s32.totalorder %s12, 0
    %p126 = por %p124, %p125
    %p127 = scmp.ne.s32.totalorder %s116, %s119
    %p128 = scmp.eq.s32.totalorder %s17, 1
    %p129 = por %p127, %p128
    %p130 = scmp.ne.s32.totalorder %s119, %s120
    %p131 = scmp.eq.s32.totalorder %s17, 0
    %p132 = por %p130, %p131
    %p133 = scmp.ne.s32.totalorder %s119, %s120
    %p134 = scmp.eq.s32.totalorder %s18, 1
    %p135 = por %p133, %p134
    %p137 = scmp.ne.s32.totalorder %s120, %s136
    %p138 = scmp.eq.s32.totalorder %s18, 0
    %p139 = por %p137, %p138
    %s140 = ssub.s32 %s12, %s19
    %p141 = scmp.eq.s32.totalorder %s140, 0
    %s143 = sadd.s32 %s142, 1
    %s144 = scalar_select %p141, %s142, %s143
    %p147 = pneg %p141
    %p148 = scmp.eq.s32.totalorder %s12, 1
    %p149 = por %p147, %p148
    %p150 = scmp.ne.s32.totalorder %s142, %s145
    %p151 = scmp.eq.s32.totalorder %s12, 0
    %p152 = por %p150, %p151
    %p153 = scmp.ne.s32.totalorder %s142, %s145
    %p154 = scmp.eq.s32.totalorder %s17, 1
    %p155 = por %p153, %p154
    %p156 = scmp.ne.s32.totalorder %s145, %s146
    %p157 = scmp.eq.s32.totalorder %s17, 0
    %p158 = por %p156, %p157
    %p159 = scmp.ne.s32.totalorder %s145, %s146
    %p160 = scmp.eq.s32.totalorder %s18, 1
    %p161 = por %p159, %p160
    %p163 = scmp.ne.s32.totalorder %s146, %s162
    %p164 = scmp.eq.s32.totalorder %s18, 0
    %p165 = por %p163, %p164
    %p166 = scmp.le.s32.totalorder 1, %s12
    %p167 = scmp.lt.s32.totalorder %s12, 3
    %p168 = pnand %p166, %p167
    %p169 = pneg %p168
    // Predicated region
    $region9: #{run.17} parent=5 // pred_check
      _
    $region10: #{run.17} parent=5 // pred_check_branch
      %171 = sbr.rel (%p168) target = $region12
    $region11: #{run.17} parent=5 // pred_region
      %s172 = ssub.s32 %s12, 1
      // Predicated region
      $region13: #{run.17} parent=11 // pred_check
        %p173 = pneg %p59
      $region14: #{run.17} parent=11 // pred_check_branch
        %175 = sbr.rel (%p173) target = $region16
      $region15: #{run.17} parent=11 // pred_region
        _
      $region16: #{run.17} parent=11 // pred_fallthru
        _
      // Predicated region
      $region17: #{run.17} parent=11 // pred_check
        %p176 = pneg %p80
      $region18: #{run.17} parent=11 // pred_check_branch
        %178 = sbr.rel (%p176) target = $region20
      $region19: #{run.17} parent=11 // pred_region
        _
      $region20: #{run.17} parent=11 // pred_fallthru
        _
    $region12: #{run.17} parent=5 // pred_fallthru
      _
    %p179 = scmp.lt.s32.totalorder %s12, 2
    // Predicated region
    $region21: #{run.17} parent=5 // pred_check
      %p180 = pneg %p179
    $region22: #{run.17} parent=5 // pred_check_branch
      %182 = sbr.rel (%p180) target = $region24
    $region23: #{run.17} parent=5 // pred_region
      // Predicated region
      $region25: #{run.17} parent=23 // pred_check
        %p183 = pneg %p32
      $region26: #{run.17} parent=23 // pred_check_branch
        %185 = sbr.rel (%p183) target = $region28
      $region27: #{run.17} parent=23 // pred_region
        %p186 = scmp.lt.s32.totalorder %s12, 1
        %s187 = scalar_select %p186, %s12, 1
        %s188 = smul.addr %s187, 6
        %s189 = smul.addr %s188, 4
        %s190 = scalar_lea.vmem %s0, %s189
      $region28: #{run.17} parent=23 // pred_fallthru
        _
      // Predicated region
      $region29: #{run.17} parent=23 // pred_check
        %p191 = pneg %p100
      $region30: #{run.17} parent=23 // pred_check_branch
        %193 = sbr.rel (%p191) target = $region32
      $region31: #{run.17} parent=23 // pred_region
        %p194 = scmp.lt.s32.totalorder %s12, 1
        %s195 = scalar_select %p194, %s12, 1
        %s196 = smul.addr %s195, 2
        %s197 = smul.addr %s196, 8
        %s198 = scalar_lea.vmem %s3, %s197
      $region32: #{run.17} parent=23 // pred_fallthru
        _
    $region24: #{run.17} parent=5 // pred_fallthru
      _
    %p199 = scmp.le.s32.totalorder 1, %s12
    %p200 = scmp.lt.s32.totalorder %s12, 3
    %p201 = pnand %p199, %p200
    %p202 = pneg %p201
    // Predicated region
    $region33: #{run.17} parent=5 // pred_check
      _
    $region34: #{run.17} parent=5 // pred_check_branch
      %204 = sbr.rel (%p201) target = $region36
    $region35: #{run.17} parent=5 // pred_region
      %s205 = ssub.s32 %s12, 1
      %p206 = scmp.lt.s32.totalorder %s17, 1
      %s207 = scalar_select %p206, %s17, 1
      %s208 = smul.addr %s207, 6
      %s209 = smul.addr %s208, 4
      %s210 = scalar_lea.vmem %s0, %s209
      %p211 = pneg %p38
      %p212 = pneg %p35
      %p213 = pneg %p59
      %p214 = pneg %p56
      %p215 = pneg %p80
      %p216 = pneg %p77
      %p217 = scmp.lt.s32.totalorder %s17, 1
      %s218 = scalar_select %p217, %s17, 1
      %s219 = smul.addr %s218, 2
      %s220 = smul.addr %s219, 8
      %s221 = scalar_lea.vmem %s3, %s220
      %p222 = pneg %p106
      %p223 = pneg %p103
      %p224 = pneg %p132
      %p225 = pneg %p129
      %p226 = scmp.lt.s32.totalorder %s17, 1
      %s227 = scalar_select %p226, %s17, 1
      %s228 = smul.addr %s227, 2
      %s229 = smul.addr %s228, 8
      %s230 = scalar_lea.vmem %s4, %s229
      %p231 = pneg %p158
      %p232 = pneg %p155
      %p233 = scmp.lt.s32.totalorder %s17, 1
      %s234 = scalar_select %p233, %s17, 1
      %s235 = scalar_lea.vmem %s5, %s234
      %p236 = scmp.lt.s32.totalorder %s17, 1
      %s237 = scalar_select %p236, %s17, 1
      %s238 = smul.addr %s237, 6
      %s239 = smul.addr %s238, 4
      %s240 = scalar_lea.vmem %s0, %s239
      %p241 = scmp.lt.s32.totalorder %s17, 1
      %s242 = scalar_select %p241, %s17, 1
      %s243 = smul.addr %s242, 2
      %s244 = smul.addr %s243, 8
      %s245 = scalar_lea.vmem %s3, %s244
      %p246 = scmp.lt.s32.totalorder %s17, 1
      %s247 = scalar_select %p246, %s17, 1
      %s248 = smul.addr %s247, 2
      %s249 = smul.addr %s248, 8
      %s250 = scalar_lea.vmem %s4, %s249
      %p251 = scmp.lt.s32.totalorder %s17, 1
      %s252 = scalar_select %p251, %s17, 1
      %s253 = scalar_lea.vmem %s5, %s252
      %v255 = vld [vmem:[%s245] sm:$0xff]
      %v256 = vld [vmem:[%s245 + $0x8] sm:$0xff]
      %v257 = vld [vmem:[%s2] sm:$0x1]
      %v259 = vlaneseq
      %v260 = vshrl.u32 %v259, 7
      %v261 = vsub.s32 0, %v260
      %v262 = vrot.slane %v257, %v261
      %v264 = vadd.f32 %v255, %v262
      %v265 = vadd.f32 %v256, %v262
      %266 = vst [vmem:[%s250] sm:$0xff] %v264
      %267 = vst [vmem:[%s250 + $0x8] sm:$0xff] %v265
      %v268 = vld [vmem:[%s240] sm:$0xf]
      %v269 = vld [vmem:[%s240 + $0xc] sm:$0xf]
      %v270 = vld [vmem:[%s240 + $0x4] sm:$0xf]
      %v271 = vld [vmem:[%s240 + $0x10] sm:$0xf]
      %v272 = vld [vmem:[%s240 + $0x8] sm:$0xf]
      %v273 = vld [vmem:[%s240 + $0x14] sm:$0xf]
      %v276 = vunpack.c.l.b16 %v268
      %v277 = vunpack.c.l.b16 %v269
      %v278 = vpack.c.b16 %v277, %v276
      %v281 = vunpack.c.l.b16 %v270
      %v282 = vunpack.c.l.b16 %v271
      %v283 = vpack.c.b16 %v282, %v281
      %vm284 = vcmask 523264
      %v286 = vsel %vm284, %v278, 0
      %v289 = vsel %vm284, %v283, 0
      %291 = vmatprep.subr.bf16.mxu0 0
      %292 = vmatpush1.bf16.xpose.msra.mxu0 0
      %293 = vmatprep.subr.bf16.mxu0 0
      %294 = vmatpush1.bf16.xpose.msra.mxu0 0
      %295 = vmatprep.subr.bf16.mxu0 0
      %296 = vmatpush1.bf16.xpose.msra.mxu0 0
      %297 = vmatprep.subr.bf16.mxu0 0
      %298 = vmatpush1.bf16.xpose.msra.mxu0 0
      %299 = vmatprep.subr.bf16.mxu0 0
      %300 = vmatpush1.bf16.xpose.msra.mxu0 0
      %301 = vmatprep.subr.bf16.mxu0 0
      %302 = vmatpush1.bf16.xpose.msra.mxu0 0
      %303 = vmatprep.subr.bf16.mxu0 0
      %304 = vmatpush1.bf16.xpose.msra.mxu0 0
      %305 = vmatprep.subr.bf16.mxu0 0
      %306 = vmatpush1.bf16.xpose.msra.mxu0 %v289
      %307 = vmatprep.subr.bf16.mxu0 0
      %308 = vmatpush2.bf16.xpose.msra.mxu0 0
      %309 = vmatprep.subr.bf16.mxu0 0
      %310 = vmatpush2.bf16.xpose.msra.mxu0 0
      %311 = vmatprep.subr.bf16.mxu0 0
      %312 = vmatpush2.bf16.xpose.msra.mxu0 0
      %313 = vmatprep.subr.bf16.mxu0 0
      %314 = vmatpush2.bf16.xpose.msra.mxu0 0
      %315 = vmatprep.subr.bf16.mxu0 0
      %316 = vmatpush2.bf16.xpose.msra.mxu0 0
      %317 = vmatprep.subr.bf16.mxu0 0
      %318 = vmatpush2.bf16.xpose.msra.mxu0 0
      %319 = vmatprep.subr.bf16.mxu0 0
      %320 = vmatpush2.bf16.xpose.msra.mxu0 0
      %321 = vmatprep.subr.bf16.mxu0 0
      %322 = vmatpush2.bf16.xpose.msra.mxu0 0
      %323 = vmatprep.mubr.bf16.mxu0 0
      %324 = vmatmul.mubr.bf16.gmra.mxu0 %v286
      %v325 = vpop.f32.mrf.mxu0
      %v326 = vadd.f32 0.0, %v325
      %v327 = vpop.f32.mrf.mxu0
      %v328 = vpop.f32.mrf.mxu0
      %v329 = vadd.f32 0.0, %v328
      %v330 = vpop.f32.mrf.mxu0
      %331 = vdwg.mxu0
      %vm332 = vcmask 130048
      %v333 = vsel %vm332, %v326, -inf
      %334 = vmax.xlane.f32.xlu0 %v333
      %v335 = vpop.xlane.xlu0 %334
      %v336 = vsel %vm332, %v329, -inf
      %337 = vmax.xlane.f32.xlu0 %v336
      %v338 = vpop.xlane.xlu0 %337
      %v339 = vsub.f32 %v326, %v335
      %v340 = vsub.f32 %v329, %v338
      %v341 = vmul.f32 %v339, 1.442695
      %v342 = vpow.pop %v341
      %v343 = vmul.f32 %v340, 1.442695
      %v344 = vpow.pop %v343
      %v345 = vsel %vm332, %v342, 0.0
      %346 = vadd.xlane.f32.xlu0 %v345
      %v347 = vpop.xlane.xlu0 %346
      %v348 = vsel %vm332, %v344, 0.0
      %349 = vadd.xlane.f32.xlu0 %v348
      %v350 = vpop.xlane.xlu0 %349
      %v351 = vrcp.pop %v347
      %v352 = vmul.f32 %v342, %v351
      %v353 = vrcp.pop %v350
      %v354 = vmul.f32 %v344, %v353
      %v355 = vpack.c.bf16 %v354, %v352
      %v358 = vunpack.c.l.b16 %v272
      %v359 = vunpack.c.l.b16 %v273
      %v360 = vpack.c.b16 %v359, %v358
      %v363 = vsel %vm332, %v355, 0
      %365 = vmatprep.subr.bf16.mxu0 0
      %366 = vmatpush1.bf16.msra.mxu0 0
      %367 = vmatprep.subr.bf16.mxu0 0
      %368 = vmatpush1.bf16.msra.mxu0 0
      %369 = vmatprep.subr.bf16.mxu0 0
      %370 = vmatpush1.bf16.msra.mxu0 0
      %371 = vmatprep.subr.bf16.mxu0 0
      %372 = vmatpush1.bf16.msra.mxu0 0
      %373 = vmatprep.subr.bf16.mxu0 0
      %374 = vmatpush1.bf16.msra.mxu0 0
      %375 = vmatprep.subr.bf16.mxu0 0
      %376 = vmatpush1.bf16.msra.mxu0 0
      %377 = vmatprep.subr.bf16.mxu0 0
      %378 = vmatpush1.bf16.msra.mxu0 0
      %379 = vmatprep.subr.bf16.mxu0 0
      %380 = vmatpush1.bf16.msra.mxu0 %v360
      %381 = vmatprep.subr.bf16.mxu0 0
      %382 = vmatpush2.bf16.msra.mxu0 0
      %383 = vmatprep.subr.bf16.mxu0 0
      %384 = vmatpush2.bf16.msra.mxu0 0
      %385 = vmatprep.subr.bf16.mxu0 0
      %386 = vmatpush2.bf16.msra.mxu0 0
      %387 = vmatprep.subr.bf16.mxu0 0
      %388 = vmatpush2.bf16.msra.mxu0 0
      %389 = vmatprep.subr.bf16.mxu0 0
      %390 = vmatpush2.bf16.msra.mxu0 0
      %391 = vmatprep.subr.bf16.mxu0 0
      %392 = vmatpush2.bf16.msra.mxu0 0
      %393 = vmatprep.subr.bf16.mxu0 0
      %394 = vmatpush2.bf16.msra.mxu0 0
      %395 = vmatprep.subr.bf16.mxu0 0
      %396 = vmatpush2.bf16.msra.mxu0 0
      %397 = vmatprep.mubr.bf16.mxu0 0
      %398 = vmatmul.mubr.bf16.gmra.mxu0 %v363
      %v399 = vpop.f32.mrf.mxu0
      %v400 = vadd.f32 0.0, %v399
      %v401 = vpop.f32.mrf.mxu0
      %v402 = vpop.f32.mrf.mxu0
      %v403 = vadd.f32 0.0, %v402
      %v404 = vpop.f32.mrf.mxu0
      %405 = vdwg.mxu0
      %v406 = vld [vmem:[%s1] sm:$0xf]
      %v407 = vld [vmem:[%s1 + $0x4] sm:$0xf]
      %v408 = vld [vmem:[%s1 + $0x8] sm:$0xf]
      %v409 = vld [vmem:[%s1 + $0xc] sm:$0xf]
      %v410 = vld [vmem:[%s1 + $0x10] sm:$0xf]
      %v411 = vld [vmem:[%s1 + $0x14] sm:$0xf]
      %v412 = vld [vmem:[%s1 + $0x18] sm:$0xf]
      %v413 = vld [vmem:[%s1 + $0x1c] sm:$0xf]
      %v414 = vld [vmem:[%s250] sm:$0xff]
      %v415 = vld [vmem:[%s250 + $0x8] sm:$0xff]
      %v416 = vpack.c.bf16 %v403, %v400
      %v425 = vunpack.c.l.b16 %v406
      %v426 = vunpack.c.l.b16 %v407
      %v427 = vunpack.c.l.b16 %v408
      %v428 = vunpack.c.l.b16 %v409
      %v429 = vunpack.c.l.b16 %v410
      %v430 = vunpack.c.l.b16 %v411
      %v431 = vunpack.c.l.b16 %v412
      %v432 = vunpack.c.l.b16 %v413
      %v433 = vpack.c.b16 %v426, %v425
      %v434 = vpack.c.b16 %v428, %v427
      %v435 = vpack.c.b16 %v430, %v429
      %v436 = vpack.c.b16 %v432, %v431
      %v442 = vsel %vm284, %v416, 0
      %444 = vmatprep.subr.bf16.mxu0 0
      %445 = vmatpush1.bf16.msra.mxu0 0
      %446 = vmatprep.subr.bf16.mxu0 0
      %447 = vmatpush1.bf16.msra.mxu0 0
      %448 = vmatprep.subr.bf16.mxu0 0
      %449 = vmatpush1.bf16.msra.mxu0 0
      %450 = vmatprep.subr.bf16.mxu0 0
      %451 = vmatpush1.bf16.msra.mxu0 0
      %452 = vmatprep.subr.bf16.mxu0 0
      %453 = vmatpush1.bf16.msra.mxu0 %v436
      %454 = vmatprep.subr.bf16.mxu0 0
      %455 = vmatpush1.bf16.msra.mxu0 %v435
      %456 = vmatprep.subr.bf16.mxu0 0
      %457 = vmatpush1.bf16.msra.mxu0 %v434
      %458 = vmatprep.subr.bf16.mxu0 0
      %459 = vmatpush1.bf16.msra.mxu0 %v433
      %460 = vmatprep.subr.bf16.mxu0 0
      %461 = vmatpush2.bf16.msra.mxu0 0
      %462 = vmatprep.subr.bf16.mxu0 0
      %463 = vmatpush2.bf16.msra.mxu0 0
      %464 = vmatprep.subr.bf16.mxu0 0
      %465 = vmatpush2.bf16.msra.mxu0 0
      %466 = vmatprep.subr.bf16.mxu0 0
      %467 = vmatpush2.bf16.msra.mxu0 0
      %468 = vmatprep.subr.bf16.mxu0 0
      %469 = vmatpush2.bf16.msra.mxu0 0
      %470 = vmatprep.subr.bf16.mxu0 0
      %471 = vmatpush2.bf16.msra.mxu0 0
      %472 = vmatprep.subr.bf16.mxu0 0
      %473 = vmatpush2.bf16.msra.mxu0 0
      %474 = vmatprep.subr.bf16.mxu0 0
      %475 = vmatpush2.bf16.msra.mxu0 0
      %476 = vmatprep.mubr.bf16.mxu0 0
      %477 = vmatmul.mubr.bf16.gmra.mxu0 %v442
      %v478 = vpop.f32.mrf.mxu0
      %v479 = vadd.f32 0.0, %v478
      %v480 = vpop.f32.mrf.mxu0
      %v481 = vpop.f32.mrf.mxu0
      %v482 = vadd.f32 0.0, %v481
      %v483 = vpop.f32.mrf.mxu0
      %484 = vdwg.mxu0
      %v485 = vadd.f32 %v414, %v479
      %v486 = vadd.f32 %v415, %v482
      %487 = vst [vmem:[%s250] sm:$0xff] %v485
      %488 = vst [vmem:[%s250 + $0x8] sm:$0xff] %v486
      %v489 = vlaneseq
      %v490 = vshrl.u32 %v489, 7
      %v491 = vadd.s32 %v490, 8
      %vm492 = vcmp.ge.s32.totalorder %v490, 14
      %vm493 = vcmp.ge.s32.totalorder %v491, 14
      %v494 = vsel %vm492, 1, 0
      %v495 = vsel %vm493, 1, 0
      %v496 = vcvt.s32.f32 %v494
      %v497 = vcvt.s32.f32 %v495
      %v498 = vmul.f32 %v352, %v496
      %v499 = vmul.f32 %v354, %v497
      %v500 = vsel %vm332, %v498, 0.0
      %v501 = vsel %vm332, %v499, 0.0
      %v502 = vadd.f32 %v500, %v501
      %v503 = vrot.slane %v502, 4
      %v504 = vadd.f32 %v502, %v503
      %v505 = vrot.slane %v504, 2
      %v506 = vadd.f32 %v504, %v505
      %v507 = vrot.slane %v506, 1
      %v508 = vadd.f32 %v506, %v507
      %v509 = vld [vmem:[%s240] sm:$0xf]
      %v510 = vld [vmem:[%s240 + $0xc] sm:$0xf]
      %v511 = vld [vmem:[%s240 + $0x4] sm:$0xf]
      %v512 = vld [vmem:[%s240 + $0x10] sm:$0xf]
      %v513 = vld [vmem:[%s240 + $0x8] sm:$0xf]
      %v514 = vld [vmem:[%s240 + $0x14] sm:$0xf]
      %v517 = vunpack.c.l.b16 %v509
      %v518 = vunpack.c.l.b16 %v510
      %v519 = vpack.c.b16 %v518, %v517
      %520 = vrot.lane.b32.xlu0 %v519, 64
      %v521 = vpop.permute.xlu0 %520
      %v524 = vunpack.c.l.b16 %v511
      %v525 = vunpack.c.l.b16 %v512
      %v526 = vpack.c.b16 %v525, %v524
      %527 = vrot.lane.b32.xlu0 %v526, 64
      %v528 = vpop.permute.xlu0 %527
      %v530 = vsel %vm284, %v521, 0
      %v533 = vsel %vm284, %v528, 0
      %535 = vmatprep.subr.bf16.mxu0 0
      %536 = vmatpush1.bf16.xpose.msra.mxu0 0
      %537 = vmatprep.subr.bf16.mxu0 0
      %538 = vmatpush1.bf16.xpose.msra.mxu0 0
      %539 = vmatprep.subr.bf16.mxu0 0
      %540 = vmatpush1.bf16.xpose.msra.mxu0 0
      %541 = vmatprep.subr.bf16.mxu0 0
      %542 = vmatpush1.bf16.xpose.msra.mxu0 0
      %543 = vmatprep.subr.bf16.mxu0 0
      %544 = vmatpush1.bf16.xpose.msra.mxu0 0
      %545 = vmatprep.subr.bf16.mxu0 0
      %546 = vmatpush1.bf16.xpose.msra.mxu0 0
      %547 = vmatprep.subr.bf16.mxu0 0
      %548 = vmatpush1.bf16.xpose.msra.mxu0 0
      %549 = vmatprep.subr.bf16.mxu0 0
      %550 = vmatpush1.bf16.xpose.msra.mxu0 %v533
      %551 = vmatprep.subr.bf16.mxu0 0
      %552 = vmatpush2.bf16.xpose.msra.mxu0 0
      %553 = vmatprep.subr.bf16.mxu0 0
      %554 = vmatpush2.bf16.xpose.msra.mxu0 0
      %555 = vmatprep.subr.bf16.mxu0 0
      %556 = vmatpush2.bf16.xpose.msra.mxu0 0
      %557 = vmatprep.subr.bf16.mxu0 0
      %558 = vmatpush2.bf16.xpose.msra.mxu0 0
      %559 = vmatprep.subr.bf16.mxu0 0
      %560 = vmatpush2.bf16.xpose.msra.mxu0 0
      %561 = vmatprep.subr.bf16.mxu0 0
      %562 = vmatpush2.bf16.xpose.msra.mxu0 0
      %563 = vmatprep.subr.bf16.mxu0 0
      %564 = vmatpush2.bf16.xpose.msra.mxu0 0
      %565 = vmatprep.subr.bf16.mxu0 0
      %566 = vmatpush2.bf16.xpose.msra.mxu0 0
      %567 = vmatprep.mubr.bf16.mxu0 0
      %568 = vmatmul.mubr.bf16.gmra.mxu0 %v530
      %v569 = vpop.f32.mrf.mxu0
      %v570 = vadd.f32 0.0, %v569
      %v571 = vpop.f32.mrf.mxu0
      %v572 = vpop.f32.mrf.mxu0
      %v573 = vadd.f32 0.0, %v572
      %v574 = vpop.f32.mrf.mxu0
      %575 = vdwg.mxu0
      %v576 = vsel %vm332, %v570, -inf
      %577 = vmax.xlane.f32.xlu0 %v576
      %v578 = vpop.xlane.xlu0 %577
      %v579 = vsel %vm332, %v573, -inf
      %580 = vmax.xlane.f32.xlu0 %v579
      %v581 = vpop.xlane.xlu0 %580
      %v582 = vsub.f32 %v570, %v578
      %v583 = vsub.f32 %v573, %v581
      %v584 = vmul.f32 %v582, 1.442695
      %v585 = vpow.pop %v584
      %v586 = vmul.f32 %v583, 1.442695
      %v587 = vpow.pop %v586
      %v588 = vsel %vm332, %v585, 0.0
      %589 = vadd.xlane.f32.xlu0 %v588
      %v590 = vpop.xlane.xlu0 %589
      %v591 = vsel %vm332, %v587, 0.0
      %592 = vadd.xlane.f32.xlu0 %v591
      %v593 = vpop.xlane.xlu0 %592
      %v594 = vrcp.pop %v590
      %v595 = vmul.f32 %v585, %v594
      %v596 = vrcp.pop %v593
      %v597 = vmul.f32 %v587, %v596
      %v598 = vpack.c.bf16 %v597, %v595
      %v601 = vunpack.c.l.b16 %v513
      %v602 = vunpack.c.l.b16 %v514
      %v603 = vpack.c.b16 %v602, %v601
      %604 = vrot.lane.b32.xlu0 %v603, 64
      %v605 = vpop.permute.xlu0 %604
      %v608 = vsel %vm332, %v598, 0
      %610 = vmatprep.subr.bf16.mxu0 0
      %611 = vmatpush1.bf16.msra.mxu0 0
      %612 = vmatprep.subr.bf16.mxu0 0
      %613 = vmatpush1.bf16.msra.mxu0 0
      %614 = vmatprep.subr.bf16.mxu0 0
      %615 = vmatpush1.bf16.msra.mxu0 0
      %616 = vmatprep.subr.bf16.mxu0 0
      %617 = vmatpush1.bf16.msra.mxu0 0
      %618 = vmatprep.subr.bf16.mxu0 0
      %619 = vmatpush1.bf16.msra.mxu0 0
      %620 = vmatprep.subr.bf16.mxu0 0
      %621 = vmatpush1.bf16.msra.mxu0 0
      %622 = vmatprep.subr.bf16.mxu0 0
      %623 = vmatpush1.bf16.msra.mxu0 0
      %624 = vmatprep.subr.bf16.mxu0 0
      %625 = vmatpush1.bf16.msra.mxu0 %v605
      %626 = vmatprep.subr.bf16.mxu0 0
      %627 = vmatpush2.bf16.msra.mxu0 0
      %628 = vmatprep.subr.bf16.mxu0 0
      %629 = vmatpush2.bf16.msra.mxu0 0
      %630 = vmatprep.subr.bf16.mxu0 0
      %631 = vmatpush2.bf16.msra.mxu0 0
      %632 = vmatprep.subr.bf16.mxu0 0
      %633 = vmatpush2.bf16.msra.mxu0 0
      %634 = vmatprep.subr.bf16.mxu0 0
      %635 = vmatpush2.bf16.msra.mxu0 0
      %636 = vmatprep.subr.bf16.mxu0 0
      %637 = vmatpush2.bf16.msra.mxu0 0
      %638 = vmatprep.subr.bf16.mxu0 0
      %639 = vmatpush2.bf16.msra.mxu0 0
      %640 = vmatprep.subr.bf16.mxu0 0
      %641 = vmatpush2.bf16.msra.mxu0 0
      %642 = vmatprep.mubr.bf16.mxu0 0
      %643 = vmatmul.mubr.bf16.gmra.mxu0 %v608
      %v644 = vpop.f32.mrf.mxu0
      %v645 = vadd.f32 0.0, %v644
      %v646 = vpop.f32.mrf.mxu0
      %v647 = vpop.f32.mrf.mxu0
      %v648 = vadd.f32 0.0, %v647
      %v649 = vpop.f32.mrf.mxu0
      %650 = vdwg.mxu0
      %v651 = vld [vmem:[%s1 + $0x20] sm:$0xf]
      %v652 = vld [vmem:[%s1 + $0x24] sm:$0xf]
      %v653 = vld [vmem:[%s1 + $0x28] sm:$0xf]
      %v654 = vld [vmem:[%s1 + $0x2c] sm:$0xf]
      %v655 = vld [vmem:[%s1 + $0x30] sm:$0xf]
      %v656 = vld [vmem:[%s1 + $0x34] sm:$0xf]
      %v657 = vld [vmem:[%s1 + $0x38] sm:$0xf]
      %v658 = vld [vmem:[%s1 + $0x3c] sm:$0xf]
      %v659 = vld [vmem:[%s250] sm:$0xff]
      %v660 = vld [vmem:[%s250 + $0x8] sm:$0xff]
      %v661 = vpack.c.bf16 %v648, %v645
      %v670 = vunpack.c.l.b16 %v651
      %v671 = vunpack.c.l.b16 %v652
      %v672 = vunpack.c.l.b16 %v653
      %v673 = vunpack.c.l.b16 %v654
      %v674 = vunpack.c.l.b16 %v655
      %v675 = vunpack.c.l.b16 %v656
      %v676 = vunpack.c.l.b16 %v657
      %v677 = vunpack.c.l.b16 %v658
      %v678 = vpack.c.b16 %v671, %v670
      %v679 = vpack.c.b16 %v673, %v672
      %v680 = vpack.c.b16 %v675, %v674
      %v681 = vpack.c.b16 %v677, %v676
      %v687 = vsel %vm284, %v661, 0
      %689 = vmatprep.subr.bf16.mxu0 0
      %690 = vmatpush1.bf16.msra.mxu0 0
      %691 = vmatprep.subr.bf16.mxu0 0
      %692 = vmatpush1.bf16.msra.mxu0 0
      %693 = vmatprep.subr.bf16.mxu0 0
      %694 = vmatpush1.bf16.msra.mxu0 0
      %695 = vmatprep.subr.bf16.mxu0 0
      %696 = vmatpush1.bf16.msra.mxu0 0
      %697 = vmatprep.subr.bf16.mxu0 0
      %698 = vmatpush1.bf16.msra.mxu0 %v681
      %699 = vmatprep.subr.bf16.mxu0 0
      %700 = vmatpush1.bf16.msra.mxu0 %v680
      %701 = vmatprep.subr.bf16.mxu0 0
      %702 = vmatpush1.bf16.msra.mxu0 %v679
      %703 = vmatprep.subr.bf16.mxu0 0
      %704 = vmatpush1.bf16.msra.mxu0 %v678
      %705 = vmatprep.subr.bf16.mxu0 0
      %706 = vmatpush2.bf16.msra.mxu0 0
      %707 = vmatprep.subr.bf16.mxu0 0
      %708 = vmatpush2.bf16.msra.mxu0 0
      %709 = vmatprep.subr.bf16.mxu0 0
      %710 = vmatpush2.bf16.msra.mxu0 0
      %711 = vmatprep.subr.bf16.mxu0 0
      %712 = vmatpush2.bf16.msra.mxu0 0
      %713 = vmatprep.subr.bf16.mxu0 0
      %714 = vmatpush2.bf16.msra.mxu0 0
      %715 = vmatprep.subr.bf16.mxu0 0
      %716 = vmatpush2.bf16.msra.mxu0 0
      %717 = vmatprep.subr.bf16.mxu0 0
      %718 = vmatpush2.bf16.msra.mxu0 0
      %719 = vmatprep.subr.bf16.mxu0 0
      %720 = vmatpush2.bf16.msra.mxu0 0
      %721 = vmatprep.mubr.bf16.mxu0 0
      %722 = vmatmul.mubr.bf16.gmra.mxu0 %v687
      %v723 = vpop.f32.mrf.mxu0
      %v724 = vadd.f32 0.0, %v723
      %v725 = vpop.f32.mrf.mxu0
      %v726 = vpop.f32.mrf.mxu0
      %v727 = vadd.f32 0.0, %v726
      %v728 = vpop.f32.mrf.mxu0
      %729 = vdwg.mxu0
      %v730 = vadd.f32 %v659, %v724
      %v731 = vadd.f32 %v660, %v727
      %732 = vst [vmem:[%s250] sm:$0xff] %v730
      %733 = vst [vmem:[%s250 + $0x8] sm:$0xff] %v731
      %v734 = vmul.f32 %v595, %v496
      %v735 = vmul.f32 %v597, %v497
      %v736 = vsel %vm332, %v734, 0.0
      %v737 = vsel %vm332, %v735, 0.0
      %v738 = vadd.f32 %v736, %v737
      %v739 = vrot.slane %v738, 4
      %v740 = vadd.f32 %v738, %v739
      %v741 = vrot.slane %v740, 2
      %v742 = vadd.f32 %v740, %v741
      %v743 = vrot.slane %v742, 1
      %v744 = vadd.f32 %v742, %v743
      %v745 = vadd.f32 %v508, %v744
      %v746 = vmul.f32 %v745, 0.25
      %vm747 = vcmask 122880
      %748 = vst.msk [vmem:[%s253] sm:$0x1] %vm747, %v746
      %p749 = scmp.lt.s32.totalorder %s17, 1
      %s750 = scalar_select %p749, %s17, 1
      %s751 = smul.addr %s750, 2
      %s752 = smul.addr %s751, 8
      %s753 = scalar_lea.vmem %s4, %s752
      %p754 = scmp.lt.s32.totalorder %s17, 1
      %s755 = scalar_select %p754, %s17, 1
      %s756 = scalar_lea.vmem %s5, %s755
      // Predicated region
      $region37: #{run.17} parent=35 // pred_check
        %p757 = pneg %p129
      $region38: #{run.17} parent=35 // pred_check_branch
        %759 = sbr.rel (%p757) target = $region40
      $region39: #{run.17} parent=35 // pred_region
        _
      $region40: #{run.17} parent=35 // pred_fallthru
        _
      // Predicated region
      $region41: #{run.17} parent=35 // pred_check
        %p760 = pneg %p155
      $region42: #{run.17} parent=35 // pred_check_branch
        %762 = sbr.rel (%p760) target = $region44
      $region43: #{run.17} parent=35 // pred_region
        _
      $region44: #{run.17} parent=35 // pred_fallthru
        _
    $region36: #{run.17} parent=5 // pred_fallthru
      _
    %p763 = scmp.le.s32.totalorder 2, %s12
    // Predicated region
    $region45: #{run.17} parent=5 // pred_check
      %p764 = pneg %p763
    $region46: #{run.17} parent=5 // pred_check_branch
      %766 = sbr.rel (%p764) target = $region48
    $region47: #{run.17} parent=5 // pred_region
      %s767 = ssub.s32 %s12, 2
      // Predicated region
      $region49: #{run.17} parent=47 // pred_check
        %p768 = pneg %p135
      $region50: #{run.17} parent=47 // pred_check_branch
        %770 = sbr.rel (%p768) target = $region52
      $region51: #{run.17} parent=47 // pred_region
        %p771 = scmp.lt.s32.totalorder %s18, 1
        %s772 = scalar_select %p771, %s18, 1
        %s773 = smul.addr %s772, 2
        %s774 = smul.addr %s773, 8
        %s775 = scalar_lea.vmem %s4, %s774
      $region52: #{run.17} parent=47 // pred_fallthru
        _
      // Predicated region
      $region53: #{run.17} parent=47 // pred_check
        %p776 = pneg %p161
      $region54: #{run.17} parent=47 // pred_check_branch
        %778 = sbr.rel (%p776) target = $region56
      $region55: #{run.17} parent=47 // pred_region
        %p779 = scmp.lt.s32.totalorder %s18, 1
        %s780 = scalar_select %p779, %s18, 1
        %s781 = scalar_lea.vmem %s5, %s780
      $region56: #{run.17} parent=47 // pred_fallthru
        _
    $region48: #{run.17} parent=5 // pred_fallthru
      _
  $region6: #{run.17} parent=0 // loop_footer
    %s16 = sadd.s32 1, %s12
  $region7: #{run.17} parent=0 // loop_footer_branch
    %11 = sbr.rel target = $region3
  $region8: #{run.17} parent=0 // loop_exit
    _

// kernel: run.19
$region0: #{run.19}
  #allocation0 [shape = 'u32[]', space=smem, size = 0x4, offset = 0x4, fixed_abs, tag = 'smem constant byte address 0x4 - core index']
  #allocation1 [shape = 'u32[144,128]{1,0:T(1,128)}', space=vmem, size = 0x12000, scoped, tag = 'internal scratch']
  %s0 = inlined_call_operand.vmem [shape: bf16[26,512], index: 0, kind: input, shape index: {}]
  %s1 = inlined_call_operand.vmem [shape: bf16[512,128], index: 1, kind: input, shape index: {}]
  %s2 = inlined_call_operand.vmem [shape: f32[1,128], index: 2, kind: input, shape index: {}]
  %s3 = inlined_call_operand.vmem [shape: f32[26,128], index: 3, kind: input, shape index: {}]
  %s4 = inlined_call_operand.vmem [shape: f32[26,128], index: 4, kind: output, shape index: {}]
  %s5 = sld [smem:[#allocation0]]
  $region26: #{run.19} parent=0
    _
  %s7 = ssub.s32 1, %s5
  %s8 = scalar_select 0, %s7, %s5
  // Predicated region
  $region2: #{run.19} parent=0 // pred_check
    _
  $region3: #{run.19} parent=0 // pred_check_branch
    %10 = sbr.rel (0) target = $region5
  $region4: #{run.19} parent=0 // pred_region
    _
  $region5: #{run.19} parent=0 // pred_fallthru
    _
  // Predicated region
  $region6: #{run.19} parent=0 // pred_check
    _
  $region7: #{run.19} parent=0 // pred_check_branch
    %12 = sbr.rel (0) target = $region9
  $region8: #{run.19} parent=0 // pred_region
    _
  $region9: #{run.19} parent=0 // pred_fallthru
    _
  // Predicated region
  $region10: #{run.19} parent=0 // pred_check
    _
  $region11: #{run.19} parent=0 // pred_check_branch
    %14 = sbr.rel (0) target = $region13
  $region12: #{run.19} parent=0 // pred_region
    _
  $region13: #{run.19} parent=0 // pred_fallthru
    _
  // Predicated region
  $region14: #{run.19} parent=0 // pred_check
    _
  $region15: #{run.19} parent=0 // pred_check_branch
    %16 = sbr.rel (0) target = $region17
  $region16: #{run.19} parent=0 // pred_region
    _
  $region17: #{run.19} parent=0 // pred_fallthru
    _
  %v18 = vld [vmem:[%s0] sm:$0xff]
  %v19 = vld [vmem:[%s0 + $0x8] sm:$0xff]
  %v20 = vld [vmem:[%s0 + $0x10] sm:$0xff]
  %v21 = vld [vmem:[%s0 + $0x18] sm:$0xff]
  %v22 = vld [vmem:[%s0 + $0x20] sm:$0xff]
  %v23 = vld [vmem:[%s0 + $0x28] sm:$0xff]
  %v24 = vld [vmem:[%s0 + $0x30] sm:$0x11]
  %v25 = vld [vmem:[%s0 + $0x38] sm:$0x11]
  %v26 = vld [vmem:[%s1] sm:$0xf]
  %v27 = vld [vmem:[%s1 + $0x4] sm:$0xf]
  %v28 = vld [vmem:[%s1 + $0x8] sm:$0xf]
  %v29 = vld [vmem:[%s1 + $0xc] sm:$0xf]
  %v30 = vld [vmem:[%s1 + $0x10] sm:$0xf]
  %v31 = vld [vmem:[%s1 + $0x14] sm:$0xf]
  %v32 = vld [vmem:[%s1 + $0x18] sm:$0xf]
  %v33 = vld [vmem:[%s1 + $0x1c] sm:$0xf]
  %v34 = vld [vmem:[%s1 + $0x20] sm:$0xf]
  %v35 = vld [vmem:[%s1 + $0x24] sm:$0xf]
  %v36 = vld [vmem:[%s1 + $0x28] sm:$0xf]
  %v37 = vld [vmem:[%s1 + $0x2c] sm:$0xf]
  %v38 = vld [vmem:[%s1 + $0x30] sm:$0xf]
  %v39 = vld [vmem:[%s1 + $0x34] sm:$0xf]
  %v40 = vld [vmem:[%s1 + $0x38] sm:$0xf]
  %v41 = vld [vmem:[%s1 + $0x3c] sm:$0xf]
  %v42 = vld [vmem:[%s1 + $0x40] sm:$0xf]
  %v43 = vld [vmem:[%s1 + $0x44] sm:$0xf]
  %v44 = vld [vmem:[%s1 + $0x48] sm:$0xf]
  %v45 = vld [vmem:[%s1 + $0x4c] sm:$0xf]
  %v46 = vld [vmem:[%s1 + $0x50] sm:$0xf]
  %v47 = vld [vmem:[%s1 + $0x54] sm:$0xf]
  %v48 = vld [vmem:[%s1 + $0x58] sm:$0xf]
  %v49 = vld [vmem:[%s1 + $0x5c] sm:$0xf]
  %v50 = vld [vmem:[%s1 + $0x60] sm:$0xf]
  %v51 = vld [vmem:[%s1 + $0x64] sm:$0xf]
  %v52 = vld [vmem:[%s1 + $0x68] sm:$0xf]
  %v53 = vld [vmem:[%s1 + $0x6c] sm:$0xf]
  %v54 = vld [vmem:[%s1 + $0x70] sm:$0xf]
  %v55 = vld [vmem:[%s1 + $0x74] sm:$0xf]
  %v56 = vld [vmem:[%s1 + $0x78] sm:$0xf]
  %v57 = vld [vmem:[%s1 + $0x7c] sm:$0xf]
  %v58 = vld [vmem:[%s1 + $0x80] sm:$0xf]
  %v59 = vld [vmem:[%s1 + $0x84] sm:$0xf]
  %v60 = vld [vmem:[%s1 + $0x88] sm:$0xf]
  %v61 = vld [vmem:[%s1 + $0x8c] sm:$0xf]
  %v62 = vld [vmem:[%s1 + $0x90] sm:$0xf]
  %v63 = vld [vmem:[%s1 + $0x94] sm:$0xf]
  %v64 = vld [vmem:[%s1 + $0x98] sm:$0xf]
  %v65 = vld [vmem:[%s1 + $0x9c] sm:$0xf]
  %v66 = vld [vmem:[%s1 + $0xa0] sm:$0xf]
  %v67 = vld [vmem:[%s1 + $0xa4] sm:$0xf]
  %v68 = vld [vmem:[%s1 + $0xa8] sm:$0xf]
  %v69 = vld [vmem:[%s1 + $0xac] sm:$0xf]
  %v70 = vld [vmem:[%s1 + $0xb0] sm:$0xf]
  %v71 = vld [vmem:[%s1 + $0xb4] sm:$0xf]
  %v72 = vld [vmem:[%s1 + $0xb8] sm:$0xf]
  %v73 = vld [vmem:[%s1 + $0xbc] sm:$0xf]
  %v74 = vld [vmem:[%s1 + $0xc0] sm:$0xf]
  %v75 = vld [vmem:[%s1 + $0xc4] sm:$0xf]
  %v76 = vld [vmem:[%s1 + $0xc8] sm:$0xf]
  %v77 = vld [vmem:[%s1 + $0xcc] sm:$0xf]
  %v78 = vld [vmem:[%s1 + $0xd0] sm:$0xf]
  %v79 = vld [vmem:[%s1 + $0xd4] sm:$0xf]
  %v80 = vld [vmem:[%s1 + $0xd8] sm:$0xf]
  %v81 = vld [vmem:[%s1 + $0xdc] sm:$0xf]
  %v82 = vld [vmem:[%s1 + $0xe0] sm:$0xf]
  %v83 = vld [vmem:[%s1 + $0xe4] sm:$0xf]
  %v84 = vld [vmem:[%s1 + $0xe8] sm:$0xf]
  %v85 = vld [vmem:[%s1 + $0xec] sm:$0xf]
  %v86 = vld [vmem:[%s1 + $0xf0] sm:$0xf]
  %v87 = vld [vmem:[%s1 + $0xf4] sm:$0xf]
  %v88 = vld [vmem:[%s1 + $0xf8] sm:$0xf]
  %v89 = vld [vmem:[%s1 + $0xfc] sm:$0xf]
  %v90 = vld [vmem:[%s2] sm:$0x1]
  %v92 = vlaneseq
  %v93 = vshrl.u32 %v92, 7
  %v94 = vsub.s32 0, %v93
  %v95 = vrot.slane %v90, %v94
  %v105 = vunpack.c.l.b16 %v18
  %v106 = vunpack.c.h.b16 %v18
  %v107 = vunpack.c.l.b16 %v19
  %v108 = vunpack.c.h.b16 %v19
  %v109 = vunpack.c.l.b16 %v20
  %v110 = vunpack.c.h.b16 %v20
  %v111 = vunpack.c.l.b16 %v21
  %v112 = vunpack.c.h.b16 %v21
  %v113 = vunpack.c.l.b16 %v22
  %v114 = vunpack.c.h.b16 %v22
  %v115 = vunpack.c.l.b16 %v23
  %v116 = vunpack.c.h.b16 %v23
  %v117 = vunpack.c.l.b16 %v24
  %v118 = vunpack.c.h.b16 %v24
  %v119 = vunpack.c.l.b16 %v25
  %v120 = vunpack.c.h.b16 %v25
  %v121 = vpack.c.b16 %v109, %v105
  %v122 = vpack.c.b16 %v110, %v106
  %v123 = vpack.c.b16 %v111, %v107
  %v124 = vpack.c.b16 %v112, %v108
  %v125 = vpack.c.b16 %v117, %v113
  %v126 = vpack.c.b16 %v118, %v114
  %v127 = vpack.c.b16 %v119, %v115
  %v128 = vpack.c.b16 %v120, %v116
  %v201 = vunpack.c.l.b16 %v26
  %v202 = vunpack.c.l.b16 %v27
  %v203 = vunpack.c.l.b16 %v28
  %v204 = vunpack.c.l.b16 %v29
  %v205 = vunpack.c.l.b16 %v30
  %v206 = vunpack.c.l.b16 %v31
  %v207 = vunpack.c.l.b16 %v32
  %v208 = vunpack.c.l.b16 %v33
  %v209 = vunpack.c.l.b16 %v34
  %v210 = vunpack.c.l.b16 %v35
  %v211 = vunpack.c.l.b16 %v36
  %v212 = vunpack.c.l.b16 %v37
  %v213 = vunpack.c.l.b16 %v38
  %v214 = vunpack.c.l.b16 %v39
  %v215 = vunpack.c.l.b16 %v40
  %v216 = vunpack.c.l.b16 %v41
  %v217 = vunpack.c.l.b16 %v42
  %v218 = vunpack.c.l.b16 %v43
  %v219 = vunpack.c.l.b16 %v44
  %v220 = vunpack.c.l.b16 %v45
  %v221 = vunpack.c.l.b16 %v46
  %v222 = vunpack.c.l.b16 %v47
  %v223 = vunpack.c.l.b16 %v48
  %v224 = vunpack.c.l.b16 %v49
  %v225 = vunpack.c.l.b16 %v50
  %v226 = vunpack.c.l.b16 %v51
  %v227 = vunpack.c.l.b16 %v52
  %v228 = vunpack.c.l.b16 %v53
  %v229 = vunpack.c.l.b16 %v54
  %v230 = vunpack.c.l.b16 %v55
  %v231 = vunpack.c.l.b16 %v56
  %v232 = vunpack.c.l.b16 %v57
  %v233 = vunpack.c.l.b16 %v58
  %v234 = vunpack.c.l.b16 %v59
  %v235 = vunpack.c.l.b16 %v60
  %v236 = vunpack.c.l.b16 %v61
  %v237 = vunpack.c.l.b16 %v62
  %v238 = vunpack.c.l.b16 %v63
  %v239 = vunpack.c.l.b16 %v64
  %v240 = vunpack.c.l.b16 %v65
  %v241 = vunpack.c.l.b16 %v66
  %v242 = vunpack.c.l.b16 %v67
  %v243 = vunpack.c.l.b16 %v68
  %v244 = vunpack.c.l.b16 %v69
  %v245 = vunpack.c.l.b16 %v70
  %v246 = vunpack.c.l.b16 %v71
  %v247 = vunpack.c.l.b16 %v72
  %v248 = vunpack.c.l.b16 %v73
  %v249 = vunpack.c.l.b16 %v74
  %v250 = vunpack.c.l.b16 %v75
  %v251 = vunpack.c.l.b16 %v76
  %v252 = vunpack.c.l.b16 %v77
  %v253 = vunpack.c.l.b16 %v78
  %v254 = vunpack.c.l.b16 %v79
  %v255 = vunpack.c.l.b16 %v80
  %v256 = vunpack.c.l.b16 %v81
  %v257 = vunpack.c.l.b16 %v82
  %v258 = vunpack.c.l.b16 %v83
  %v259 = vunpack.c.l.b16 %v84
  %v260 = vunpack.c.l.b16 %v85
  %v261 = vunpack.c.l.b16 %v86
  %v262 = vunpack.c.l.b16 %v87
  %v263 = vunpack.c.l.b16 %v88
  %v264 = vunpack.c.l.b16 %v89
  %v265 = vpack.c.b16 %v202, %v201
  %v266 = vpack.c.b16 %v204, %v203
  %v267 = vpack.c.b16 %v206, %v205
  %v268 = vpack.c.b16 %v208, %v207
  %v269 = vpack.c.b16 %v210, %v209
  %v270 = vpack.c.b16 %v212, %v211
  %v271 = vpack.c.b16 %v214, %v213
  %v272 = vpack.c.b16 %v216, %v215
  %v273 = vpack.c.b16 %v218, %v217
  %v274 = vpack.c.b16 %v220, %v219
  %v275 = vpack.c.b16 %v222, %v221
  %v276 = vpack.c.b16 %v224, %v223
  %v277 = vpack.c.b16 %v226, %v225
  %v278 = vpack.c.b16 %v228, %v227
  %v279 = vpack.c.b16 %v230, %v229
  %v280 = vpack.c.b16 %v232, %v231
  %v281 = vpack.c.b16 %v234, %v233
  %v282 = vpack.c.b16 %v236, %v235
  %v283 = vpack.c.b16 %v238, %v237
  %v284 = vpack.c.b16 %v240, %v239
  %v285 = vpack.c.b16 %v242, %v241
  %v286 = vpack.c.b16 %v244, %v243
  %v287 = vpack.c.b16 %v246, %v245
  %v288 = vpack.c.b16 %v248, %v247
  %v289 = vpack.c.b16 %v250, %v249
  %v290 = vpack.c.b16 %v252, %v251
  %v291 = vpack.c.b16 %v254, %v253
  %v292 = vpack.c.b16 %v256, %v255
  %v293 = vpack.c.b16 %v258, %v257
  %v294 = vpack.c.b16 %v260, %v259
  %v295 = vpack.c.b16 %v262, %v261
  %v296 = vpack.c.b16 %v264, %v263
  %329 = vmatprep.subr.bf16.mxu0 0
  %330 = vmatpush1.bf16.msra.mxu0 %v272
  %331 = vmatprep.subr.bf16.mxu0 0
  %332 = vmatpush1.bf16.msra.mxu0 %v271
  %333 = vmatprep.subr.bf16.mxu0 0
  %334 = vmatpush1.bf16.msra.mxu0 %v270
  %335 = vmatprep.subr.bf16.mxu0 0
  %336 = vmatpush1.bf16.msra.mxu0 %v269
  %337 = vmatprep.subr.bf16.mxu0 0
  %338 = vmatpush1.bf16.msra.mxu0 %v268
  %339 = vmatprep.subr.bf16.mxu0 0
  %340 = vmatpush1.bf16.msra.mxu0 %v267
  %341 = vmatprep.subr.bf16.mxu0 0
  %342 = vmatpush1.bf16.msra.mxu0 %v266
  %343 = vmatprep.subr.bf16.mxu0 0
  %344 = vmatpush1.bf16.msra.mxu0 %v265
  %345 = vmatprep.subr.bf16.mxu0 0
  %346 = vmatpush2.bf16.msra.mxu0 %v280
  %347 = vmatprep.subr.bf16.mxu0 0
  %348 = vmatpush2.bf16.msra.mxu0 %v279
  %349 = vmatprep.subr.bf16.mxu0 0
  %350 = vmatpush2.bf16.msra.mxu0 %v278
  %351 = vmatprep.subr.bf16.mxu0 0
  %352 = vmatpush2.bf16.msra.mxu0 %v277
  %353 = vmatprep.subr.bf16.mxu0 0
  %354 = vmatpush2.bf16.msra.mxu0 %v276
  %355 = vmatprep.subr.bf16.mxu0 0
  %356 = vmatpush2.bf16.msra.mxu0 %v275
  %357 = vmatprep.subr.bf16.mxu0 0
  %358 = vmatpush2.bf16.msra.mxu0 %v274
  %359 = vmatprep.subr.bf16.mxu0 0
  %360 = vmatpush2.bf16.msra.mxu0 %v273
  %361 = vmatprep.mubr.bf16.mxu0 %v122
  %362 = vmatmul.mubr.bf16.gmra.mxu0 %v121
  %v363 = vpop.f32.mrf.mxu0
  %v364 = vadd.f32 %v95, %v363
  %v365 = vpop.f32.mrf.mxu0
  %v366 = vpop.f32.mrf.mxu0
  %v367 = vadd.f32 %v95, %v366
  %v368 = vpop.f32.mrf.mxu0
  %369 = vmatprep.mubr.bf16.mxu0 %v126
  %370 = vmatmul.mubr.bf16.gmra.mxu0 %v125
  %v371 = vpop.f32.mrf.mxu0
  %v372 = vadd.f32 %v95, %v371
  %v373 = vpop.f32.mrf.mxu0
  %v374 = vpop.f32.mrf.mxu0
  %v375 = vadd.f32 %v95, %v374
  %v376 = vpop.f32.mrf.mxu0
  %377 = vdwg.mxu0
  %378 = vmatprep.subr.bf16.mxu0 0
  %379 = vmatpush1.bf16.msra.mxu0 %v288
  %380 = vmatprep.subr.bf16.mxu0 0
  %381 = vmatpush1.bf16.msra.mxu0 %v287
  %382 = vmatprep.subr.bf16.mxu0 0
  %383 = vmatpush1.bf16.msra.mxu0 %v286
  %384 = vmatprep.subr.bf16.mxu0 0
  %385 = vmatpush1.bf16.msra.mxu0 %v285
  %386 = vmatprep.subr.bf16.mxu0 0
  %387 = vmatpush1.bf16.msra.mxu0 %v284
  %388 = vmatprep.subr.bf16.mxu0 0
  %389 = vmatpush1.bf16.msra.mxu0 %v283
  %390 = vmatprep.subr.bf16.mxu0 0
  %391 = vmatpush1.bf16.msra.mxu0 %v282
  %392 = vmatprep.subr.bf16.mxu0 0
  %393 = vmatpush1.bf16.msra.mxu0 %v281
  %394 = vmatprep.subr.bf16.mxu0 0
  %395 = vmatpush2.bf16.msra.mxu0 %v296
  %396 = vmatprep.subr.bf16.mxu0 0
  %397 = vmatpush2.bf16.msra.mxu0 %v295
  %398 = vmatprep.subr.bf16.mxu0 0
  %399 = vmatpush2.bf16.msra.mxu0 %v294
  %400 = vmatprep.subr.bf16.mxu0 0
  %401 = vmatpush2.bf16.msra.mxu0 %v293
  %402 = vmatprep.subr.bf16.mxu0 0
  %403 = vmatpush2.bf16.msra.mxu0 %v292
  %404 = vmatprep.subr.bf16.mxu0 0
  %405 = vmatpush2.bf16.msra.mxu0 %v291
  %406 = vmatprep.subr.bf16.mxu0 0
  %407 = vmatpush2.bf16.msra.mxu0 %v290
  %408 = vmatprep.subr.bf16.mxu0 0
  %409 = vmatpush2.bf16.msra.mxu0 %v289
  %410 = vmatprep.mubr.bf16.mxu0 %v124
  %411 = vmatmul.mubr.bf16.gmra.mxu0 %v123
  %v412 = vpop.f32.mrf.mxu0
  %v413 = vadd.f32 %v364, %v412
  %v414 = vpop.f32.mrf.mxu0
  %v415 = vpop.f32.mrf.mxu0
  %v416 = vadd.f32 %v367, %v415
  %v417 = vpop.f32.mrf.mxu0
  %418 = vmatprep.mubr.bf16.mxu0 %v128
  %419 = vmatmul.mubr.bf16.gmra.mxu0 %v127
  %v420 = vpop.f32.mrf.mxu0
  %v421 = vadd.f32 %v372, %v420
  %v422 = vpop.f32.mrf.mxu0
  %v423 = vpop.f32.mrf.mxu0
  %v424 = vadd.f32 %v375, %v423
  %v425 = vpop.f32.mrf.mxu0
  %426 = vdwg.mxu0
  %v427 = vld [vmem:[%s3] sm:$0xff]
  %v428 = vld [vmem:[%s3 + $0x8] sm:$0xff]
  %v429 = vld [vmem:[%s3 + $0x10] sm:$0xff]
  %v430 = vld [vmem:[%s3 + $0x18] sm:$0x3]
  %v431 = vadd.f32 %v413, %v427
  %v432 = vadd.f32 %v416, %v428
  %v433 = vadd.f32 %v421, %v429
  %v434 = vadd.f32 %v424, %v430
  %435 = vst [vmem:[%s4] sm:$0xff] %v431
  %436 = vst [vmem:[%s4 + $0x8] sm:$0xff] %v432
  %437 = vst [vmem:[%s4 + $0x10] sm:$0xff] %v433
  %438 = vst [vmem:[%s4 + $0x18] sm:$0x3] %v434
  // Predicated region
  $region18: #{run.19} parent=0 // pred_check
    _
  $region19: #{run.19} parent=0 // pred_check_branch
    %440 = sbr.rel (0) target = $region21
  $region20: #{run.19} parent=0 // pred_region
    _
  $region21: #{run.19} parent=0 // pred_fallthru
    _
  // Predicated region
  $region22: #{run.19} parent=0 // pred_check
    _
  $region23: #{run.19} parent=0 // pred_check_branch
    %442 = sbr.rel (0) target = $region25
  $region24: #{run.19} parent=0 // pred_region
    _
  $region25: #{run.19} parent=0 // pred_fallthru
    _

// kernel: run.20
$region0: #{run.20}
  #allocation0 [shape = 'u32[]', space=smem, size = 0x4, offset = 0x4, fixed_abs, tag = 'smem constant byte address 0x4 - core index']
  #allocation1 [shape = 'u32[144,128]{1,0:T(1,128)}', space=vmem, size = 0x12000, scoped, tag = 'internal scratch']
  #allocation2 [shape = 'bf16[26,128]{1,0:T(8,128)(2,1)}', space=vmem, size = 0x2000, scoped, tag = 'scratch operand']
  %s0 = inlined_call_operand.vmem [shape: f32[26,128], index: 0, kind: input, shape index: {}]
  %s1 = inlined_call_operand.vmem [shape: f32[1,128], index: 1, kind: input, shape index: {}]
  %s2 = inlined_call_operand.vmem [shape: f32[1,128], index: 2, kind: input, shape index: {}]
  %s3 = inlined_call_operand.vmem [shape: bf16[128,384], index: 3, kind: input, shape index: {}]
  %s4 = inlined_call_operand.vmem [shape: f32[1,384], index: 4, kind: input, shape index: {}]
  %s5 = inlined_call_operand.vmem [shape: bf16[26,384], index: 5, kind: output, shape index: {}]
  %s6 = sld [smem:[#allocation0]]
  $region34: #{run.20} parent=0
    _
  %s8 = ssub.s32 1, %s6
  %s9 = scalar_select 0, %s8, %s6
  // Predicated region
  $region2: #{run.20} parent=0 // pred_check
    _
  $region3: #{run.20} parent=0 // pred_check_branch
    %11 = sbr.rel (0) target = $region5
  $region4: #{run.20} parent=0 // pred_region
    _
  $region5: #{run.20} parent=0 // pred_fallthru
    _
  // Predicated region
  $region6: #{run.20} parent=0 // pred_check
    _
  $region7: #{run.20} parent=0 // pred_check_branch
    %13 = sbr.rel (0) target = $region9
  $region8: #{run.20} parent=0 // pred_region
    _
  $region9: #{run.20} parent=0 // pred_fallthru
    _
  // Predicated region
  $region10: #{run.20} parent=0 // pred_check
    _
  $region11: #{run.20} parent=0 // pred_check_branch
    %15 = sbr.rel (0) target = $region13
  $region12: #{run.20} parent=0 // pred_region
    _
  $region13: #{run.20} parent=0 // pred_fallthru
    _
  // Predicated region
  $region14: #{run.20} parent=0 // pred_check
    _
  $region15: #{run.20} parent=0 // pred_check_branch
    %17 = sbr.rel (0) target = $region17
  $region16: #{run.20} parent=0 // pred_region
    _
  $region17: #{run.20} parent=0 // pred_fallthru
    _
  // Predicated region
  $region18: #{run.20} parent=0 // pred_check
    _
  $region19: #{run.20} parent=0 // pred_check_branch
    %19 = sbr.rel (0) target = $region21
  $region20: #{run.20} parent=0 // pred_region
    _
  $region21: #{run.20} parent=0 // pred_fallthru
    _
  %p21 = scmp.eq.s32.totalorder 0, 0
  // Predicated region
  $region22: #{run.20} parent=0 // pred_check
    %p22 = pneg %p21
  $region23: #{run.20} parent=0 // pred_check_branch
    %24 = sbr.rel (%p22) target = $region25
  $region24: #{run.20} parent=0 // pred_region
    %v25 = vld [vmem:[%s0] sm:$0xff]
    %v26 = vld [vmem:[%s0 + $0x8] sm:$0xff]
    %v27 = vld [vmem:[%s0 + $0x10] sm:$0xff]
    %v28 = vld [vmem:[%s0 + $0x18] sm:$0x3]
    %29 = vadd.xlane.f32.xlu0 %v25
    %v30 = vpop.xlane.xlu0 %29
    %31 = vadd.xlane.f32.xlu0 %v26
    %v32 = vpop.xlane.xlu0 %31
    %33 = vadd.xlane.f32.xlu0 %v27
    %v34 = vpop.xlane.xlu0 %33
    %vm35 = vcmask 1041408
    %v36 = vsel %vm35, %v28, 0.0
    %37 = vadd.xlane.f32.xlu0 %v36
    %v38 = vpop.xlane.xlu0 %37
    %v39 = vrcp.pop 128.0
    %v40 = vmul.f32 %v30, %v39
    %v41 = vmul.f32 %v32, %v39
    %v42 = vmul.f32 %v34, %v39
    %v43 = vmul.f32 %v38, %v39
    %v44 = vsub.f32 %v25, %v40
    %v45 = vsub.f32 %v26, %v41
    %v46 = vsub.f32 %v27, %v42
    %v47 = vsub.f32 %v28, %v43
    %v48 = vmul.f32 %v44, %v44
    %v49 = vmul.f32 %v45, %v45
    %v50 = vmul.f32 %v46, %v46
    %v51 = vmul.f32 %v47, %v47
    %52 = vadd.xlane.f32.xlu0 %v48
    %v53 = vpop.xlane.xlu0 %52
    %54 = vadd.xlane.f32.xlu0 %v49
    %v55 = vpop.xlane.xlu0 %54
    %56 = vadd.xlane.f32.xlu0 %v50
    %v57 = vpop.xlane.xlu0 %56
    %v58 = vsel %vm35, %v51, 0.0
    %59 = vadd.xlane.f32.xlu0 %v58
    %v60 = vpop.xlane.xlu0 %59
    %v61 = vmul.f32 %v53, %v39
    %v62 = vmul.f32 %v55, %v39
    %v63 = vmul.f32 %v57, %v39
    %v64 = vmul.f32 %v60, %v39
    %v65 = vadd.f32 %v61, 1e-05
    %v66 = vadd.f32 %v62, 1e-05
    %v67 = vadd.f32 %v63, 1e-05
    %v68 = vadd.f32 %v64, 1e-05
    %v69 = vrsqrt.pop %v65
    %v70 = vrsqrt.pop %v66
    %v71 = vrsqrt.pop %v67
    %v72 = vrsqrt.pop %v68
    %v73 = vmul.f32 %v44, %v69
    %v74 = vmul.f32 %v45, %v70
    %v75 = vmul.f32 %v46, %v71
    %v76 = vmul.f32 %v47, %v72
    %v77 = vld [vmem:[%s1] sm:$0x1]
    %v79 = vlaneseq
    %v80 = vshrl.u32 %v79, 7
    %v81 = vsub.s32 0, %v80
    %v82 = vrot.slane %v77, %v81
    %v84 = vmul.f32 %v73, %v82
    %v85 = vmul.f32 %v74, %v82
    %v86 = vmul.f32 %v75, %v82
    %v87 = vmul.f32 %v76, %v82
    %v88 = vld [vmem:[%s2] sm:$0x1]
    %v90 = vlaneseq
    %v91 = vshrl.u32 %v90, 7
    %v92 = vsub.s32 0, %v91
    %v93 = vrot.slane %v88, %v92
    %v95 = vadd.f32 %v84, %v93
    %v96 = vadd.f32 %v85, %v93
    %v97 = vadd.f32 %v86, %v93
    %v98 = vadd.f32 %v87, %v93
    %v99 = vpack.c.bf16 %v96, %v95
    %v100 = vpack.c.bf16 %v98, %v97
    %v103 = vunpack.c.l.b16 %v99
    %v104 = vunpack.c.h.b16 %v99
    %v105 = vunpack.c.l.b16 %v100
    %v106 = vunpack.c.h.b16 %v100
    %v107 = vpack.c.b16 %v103, %v103
    %v108 = vpack.c.b16 %v104, %v104
    %v109 = vpack.c.b16 %v105, %v105
    %v110 = vpack.c.b16 %v106, %v106
    %115 = vst [vmem:[#allocation2] sm:$0xf] %v107
    %116 = vst [vmem:[#allocation2 + $0x4] sm:$0xf] %v108
    %117 = vst [vmem:[#allocation2 + $0x8] sm:$0xf] %v109
    %118 = vst [vmem:[#allocation2 + $0xc] sm:$0x1] %v110
  $region25: #{run.20} parent=0 // pred_fallthru
    _
  %v119 = vld [vmem:[#allocation2] sm:$0xf]
  %v120 = vld [vmem:[#allocation2 + $0x4] sm:$0xf]
  %v121 = vld [vmem:[#allocation2 + $0x8] sm:$0xf]
  %v122 = vld [vmem:[#allocation2 + $0xc] sm:$0x1]
  %v123 = vld [vmem:[%s3] sm:$0xff]
  %v124 = vld [vmem:[%s3 + $0x8] sm:$0xf]
  %v125 = vld [vmem:[%s3 + $0xc] sm:$0xff]
  %v126 = vld [vmem:[%s3 + $0x14] sm:$0xf]
  %v127 = vld [vmem:[%s3 + $0x18] sm:$0xff]
  %v128 = vld [vmem:[%s3 + $0x20] sm:$0xf]
  %v129 = vld [vmem:[%s3 + $0x24] sm:$0xff]
  %v130 = vld [vmem:[%s3 + $0x2c] sm:$0xf]
  %v131 = vld [vmem:[%s3 + $0x30] sm:$0xff]
  %v132 = vld [vmem:[%s3 + $0x38] sm:$0xf]
  %v133 = vld [vmem:[%s3 + $0x3c] sm:$0xff]
  %v134 = vld [vmem:[%s3 + $0x44] sm:$0xf]
  %v135 = vld [vmem:[%s3 + $0x48] sm:$0xff]
  %v136 = vld [vmem:[%s3 + $0x50] sm:$0xf]
  %v137 = vld [vmem:[%s3 + $0x54] sm:$0xff]
  %v138 = vld [vmem:[%s3 + $0x5c] sm:$0xf]
  %v139 = vld [vmem:[%s3 + $0x60] sm:$0xff]
  %v140 = vld [vmem:[%s3 + $0x68] sm:$0xf]
  %v141 = vld [vmem:[%s3 + $0x6c] sm:$0xff]
  %v142 = vld [vmem:[%s3 + $0x74] sm:$0xf]
  %v143 = vld [vmem:[%s3 + $0x78] sm:$0xff]
  %v144 = vld [vmem:[%s3 + $0x80] sm:$0xf]
  %v145 = vld [vmem:[%s3 + $0x84] sm:$0xff]
  %v146 = vld [vmem:[%s3 + $0x8c] sm:$0xf]
  %v147 = vld [vmem:[%s3 + $0x90] sm:$0xff]
  %v148 = vld [vmem:[%s3 + $0x98] sm:$0xf]
  %v149 = vld [vmem:[%s3 + $0x9c] sm:$0xff]
  %v150 = vld [vmem:[%s3 + $0xa4] sm:$0xf]
  %v151 = vld [vmem:[%s3 + $0xa8] sm:$0xff]
  %v152 = vld [vmem:[%s3 + $0xb0] sm:$0xf]
  %v153 = vld [vmem:[%s3 + $0xb4] sm:$0xff]
  %v154 = vld [vmem:[%s3 + $0xbc] sm:$0xf]
  %v155 = vld [vmem:[%s4] sm:$0x7]
  %v157 = vlaneseq
  %v158 = vshrl.u32 %v157, 7
  %v159 = vsub.s32 0, %v158
  %v160 = vrot.slane %v155, %v159
  %v161 = vlaneseq
  %v162 = vshrl.u32 %v161, 7
  %v163 = vsub.s32 1, %v162
  %v164 = vrot.slane %v155, %v163
  %v165 = vlaneseq
  %v166 = vshrl.u32 %v165, 7
  %v167 = vsub.s32 2, %v166
  %v168 = vrot.slane %v155, %v167
  %v176 = vunpack.c.l.b16 %v119
  %v177 = vunpack.c.l.b16 %v120
  %v178 = vunpack.c.l.b16 %v121
  %v179 = vunpack.c.l.b16 %v122
  %v180 = vpack.c.b16 %v177, %v176
  %v181 = vpack.c.b16 %v179, %v178
  %v216 = vunpack.c.l.b16 %v123
  %v217 = vunpack.c.h.b16 %v123
  %v218 = vunpack.c.l.b16 %v124
  %v219 = vunpack.c.l.b16 %v125
  %v220 = vunpack.c.h.b16 %v125
  %v221 = vunpack.c.l.b16 %v126
  %v222 = vunpack.c.l.b16 %v127
  %v223 = vunpack.c.h.b16 %v127
  %v224 = vunpack.c.l.b16 %v128
  %v225 = vunpack.c.l.b16 %v129
  %v226 = vunpack.c.h.b16 %v129
  %v227 = vunpack.c.l.b16 %v130
  %v228 = vunpack.c.l.b16 %v131
  %v229 = vunpack.c.h.b16 %v131
  %v230 = vunpack.c.l.b16 %v132
  %v231 = vunpack.c.l.b16 %v133
  %v232 = vunpack.c.h.b16 %v133
  %v233 = vunpack.c.l.b16 %v134
  %v234 = vunpack.c.l.b16 %v135
  %v235 = vunpack.c.h.b16 %v135
  %v236 = vunpack.c.l.b16 %v136
  %v237 = vunpack.c.l.b16 %v137
  %v238 = vunpack.c.h.b16 %v137
  %v239 = vunpack.c.l.b16 %v138
  %v240 = vunpack.c.l.b16 %v139
  %v241 = vunpack.c.h.b16 %v139
  %v242 = vunpack.c.l.b16 %v140
  %v243 = vunpack.c.l.b16 %v141
  %v244 = vunpack.c.h.b16 %v141
  %v245 = vunpack.c.l.b16 %v142
  %v246 = vunpack.c.l.b16 %v143
  %v247 = vunpack.c.h.b16 %v143
  %v248 = vunpack.c.l.b16 %v144
  %v249 = vunpack.c.l.b16 %v145
  %v250 = vunpack.c.h.b16 %v145
  %v251 = vunpack.c.l.b16 %v146
  %v252 = vunpack.c.l.b16 %v147
  %v253 = vunpack.c.h.b16 %v147
  %v254 = vunpack.c.l.b16 %v148
  %v255 = vunpack.c.l.b16 %v149
  %v256 = vunpack.c.h.b16 %v149
  %v257 = vunpack.c.l.b16 %v150
  %v258 = vunpack.c.l.b16 %v151
  %v259 = vunpack.c.h.b16 %v151
  %v260 = vunpack.c.l.b16 %v152
  %v261 = vunpack.c.l.b16 %v153
  %v262 = vunpack.c.h.b16 %v153
  %v263 = vunpack.c.l.b16 %v154
  %v264 = vpack.c.b16 %v219, %v216
  %v265 = vpack.c.b16 %v220, %v217
  %v266 = vpack.c.b16 %v221, %v218
  %v267 = vpack.c.b16 %v225, %v222
  %v268 = vpack.c.b16 %v226, %v223
  %v269 = vpack.c.b16 %v227, %v224
  %v270 = vpack.c.b16 %v231, %v228
  %v271 = vpack.c.b16 %v232, %v229
  %v272 = vpack.c.b16 %v233, %v230
  %v273 = vpack.c.b16 %v237, %v234
  %v274 = vpack.c.b16 %v238, %v235
  %v275 = vpack.c.b16 %v239, %v236
  %v276 = vpack.c.b16 %v243, %v240
  %v277 = vpack.c.b16 %v244, %v241
  %v278 = vpack.c.b16 %v245, %v242
  %v279 = vpack.c.b16 %v249, %v246
  %v280 = vpack.c.b16 %v250, %v247
  %v281 = vpack.c.b16 %v251, %v248
  %v282 = vpack.c.b16 %v255, %v252
  %v283 = vpack.c.b16 %v256, %v253
  %v284 = vpack.c.b16 %v257, %v254
  %v285 = vpack.c.b16 %v261, %v258
  %v286 = vpack.c.b16 %v262, %v259
  %v287 = vpack.c.b16 %v263, %v260
  %312 = vmatprep.subr.bf16.mxu0 %v286
  %313 = vmatpush1.bf16.msra.mxu0 %v285
  %314 = vmatprep.subr.bf16.mxu0 %v283
  %315 = vmatpush1.bf16.msra.mxu0 %v282
  %316 = vmatprep.subr.bf16.mxu0 %v280
  %317 = vmatpush1.bf16.msra.mxu0 %v279
  %318 = vmatprep.subr.bf16.mxu0 %v277
  %319 = vmatpush1.bf16.msra.mxu0 %v276
  %320 = vmatprep.subr.bf16.mxu0 %v274
  %321 = vmatpush1.bf16.msra.mxu0 %v273
  %322 = vmatprep.subr.bf16.mxu0 %v271
  %323 = vmatpush1.bf16.msra.mxu0 %v270
  %324 = vmatprep.subr.bf16.mxu0 %v268
  %325 = vmatpush1.bf16.msra.mxu0 %v267
  %326 = vmatprep.subr.bf16.mxu0 %v265
  %327 = vmatpush1.bf16.msra.mxu0 %v264
  %328 = vmatprep.subr.bf16.mxu0 0
  %329 = vmatpush2.bf16.msra.mxu0 0
  %330 = vmatprep.subr.bf16.mxu0 0
  %331 = vmatpush2.bf16.msra.mxu0 0
  %332 = vmatprep.subr.bf16.mxu0 0
  %333 = vmatpush2.bf16.msra.mxu0 0
  %334 = vmatprep.subr.bf16.mxu0 0
  %335 = vmatpush2.bf16.msra.mxu0 0
  %336 = vmatprep.subr.bf16.mxu0 0
  %337 = vmatpush2.bf16.msra.mxu0 0
  %338 = vmatprep.subr.bf16.mxu0 0
  %339 = vmatpush2.bf16.msra.mxu0 0
  %340 = vmatprep.subr.bf16.mxu0 0
  %341 = vmatpush2.bf16.msra.mxu0 0
  %342 = vmatprep.subr.bf16.mxu0 0
  %343 = vmatpush2.bf16.msra.mxu0 0
  %344 = vmatprep.mubr.bf16.mxu0 0
  %345 = vmatmul.mubr.bf16.gmra.mxu0 %v180
  %v346 = vpop.f32.mrf.mxu0
  %v347 = vadd.f32 %v160, %v346
  %v348 = vpop.f32.mrf.mxu0
  %v349 = vadd.f32 %v164, %v348
  %v350 = vpop.f32.mrf.mxu0
  %v351 = vadd.f32 %v160, %v350
  %v352 = vpop.f32.mrf.mxu0
  %v353 = vadd.f32 %v164, %v352
  %354 = vmatprep.mubr.bf16.mxu0 0
  %355 = vmatmul.mubr.bf16.gmra.mxu0 %v181
  %v356 = vpop.f32.mrf.mxu0
  %v357 = vadd.f32 %v160, %v356
  %v358 = vpop.f32.mrf.mxu0
  %v359 = vadd.f32 %v164, %v358
  %v360 = vpop.f32.mrf.mxu0
  %v361 = vadd.f32 %v160, %v360
  %v362 = vpop.f32.mrf.mxu0
  %v363 = vadd.f32 %v164, %v362
  %364 = vdwg.mxu0
  %365 = vmatprep.subr.bf16.mxu0 0
  %366 = vmatpush1.bf16.msra.mxu0 %v287
  %367 = vmatprep.subr.bf16.mxu0 0
  %368 = vmatpush1.bf16.msra.mxu0 %v284
  %369 = vmatprep.subr.bf16.mxu0 0
  %370 = vmatpush1.bf16.msra.mxu0 %v281
  %371 = vmatprep.subr.bf16.mxu0 0
  %372 = vmatpush1.bf16.msra.mxu0 %v278
  %373 = vmatprep.subr.bf16.mxu0 0
  %374 = vmatpush1.bf16.msra.mxu0 %v275
  %375 = vmatprep.subr.bf16.mxu0 0
  %376 = vmatpush1.bf16.msra.mxu0 %v272
  %377 = vmatprep.subr.bf16.mxu0 0
  %378 = vmatpush1.bf16.msra.mxu0 %v269
  %379 = vmatprep.subr.bf16.mxu0 0
  %380 = vmatpush1.bf16.msra.mxu0 %v266
  %381 = vmatprep.subr.bf16.mxu0 0
  %382 = vmatpush2.bf16.msra.mxu0 0
  %383 = vmatprep.subr.bf16.mxu0 0
  %384 = vmatpush2.bf16.msra.mxu0 0
  %385 = vmatprep.subr.bf16.mxu0 0
  %386 = vmatpush2.bf16.msra.mxu0 0
  %387 = vmatprep.subr.bf16.mxu0 0
  %388 = vmatpush2.bf16.msra.mxu0 0
  %389 = vmatprep.subr.bf16.mxu0 0
  %390 = vmatpush2.bf16.msra.mxu0 0
  %391 = vmatprep.subr.bf16.mxu0 0
  %392 = vmatpush2.bf16.msra.mxu0 0
  %393 = vmatprep.subr.bf16.mxu0 0
  %394 = vmatpush2.bf16.msra.mxu0 0
  %395 = vmatprep.subr.bf16.mxu0 0
  %396 = vmatpush2.bf16.msra.mxu0 0
  %397 = vmatprep.mubr.bf16.mxu0 0
  %398 = vmatmul.mubr.bf16.gmra.mxu0 %v180
  %v399 = vpop.f32.mrf.mxu0
  %v400 = vadd.f32 %v168, %v399
  %v401 = vpop.f32.mrf.mxu0
  %v402 = vpop.f32.mrf.mxu0
  %v403 = vadd.f32 %v168, %v402
  %v404 = vpop.f32.mrf.mxu0
  %405 = vmatprep.mubr.bf16.mxu0 0
  %406 = vmatmul.mubr.bf16.gmra.mxu0 %v181
  %v407 = vpop.f32.mrf.mxu0
  %v408 = vadd.f32 %v168, %v407
  %v409 = vpop.f32.mrf.mxu0
  %v410 = vpop.f32.mrf.mxu0
  %v411 = vadd.f32 %v168, %v410
  %v412 = vpop.f32.mrf.mxu0
  %413 = vdwg.mxu0
  %v414 = vpack.c.bf16 %v351, %v347
  %v415 = vpack.c.bf16 %v353, %v349
  %v416 = vpack.c.bf16 %v403, %v400
  %v417 = vpack.c.bf16 %v361, %v357
  %v418 = vpack.c.bf16 %v363, %v359
  %v419 = vpack.c.bf16 %v411, %v408
  %v426 = vunpack.c.l.b16 %v414
  %v427 = vunpack.c.l.b16 %v415
  %v428 = vunpack.c.l.b16 %v416
  %v429 = vunpack.c.h.b16 %v414
  %v430 = vunpack.c.h.b16 %v415
  %v431 = vunpack.c.h.b16 %v416
  %v432 = vunpack.c.l.b16 %v417
  %v433 = vunpack.c.l.b16 %v418
  %v434 = vunpack.c.l.b16 %v419
  %v435 = vunpack.c.h.b16 %v417
  %v436 = vunpack.c.h.b16 %v418
  %v437 = vunpack.c.h.b16 %v419
  %v438 = vpack.c.b16 %v427, %v426
  %v439 = vpack.c.b16 %v428, %v428
  %v440 = vpack.c.b16 %v430, %v429
  %v441 = vpack.c.b16 %v431, %v431
  %v442 = vpack.c.b16 %v433, %v432
  %v443 = vpack.c.b16 %v434, %v434
  %v444 = vpack.c.b16 %v436, %v435
  %v445 = vpack.c.b16 %v437, %v437
  %454 = vst [vmem:[%s5] sm:$0xff] %v438
  %455 = vst [vmem:[%s5 + $0x8] sm:$0xf] %v439
  %456 = vst [vmem:[%s5 + $0xc] sm:$0xff] %v440
  %457 = vst [vmem:[%s5 + $0x14] sm:$0xf] %v441
  %458 = vst [vmem:[%s5 + $0x18] sm:$0xff] %v442
  %459 = vst [vmem:[%s5 + $0x20] sm:$0xf] %v443
  %460 = vst [vmem:[%s5 + $0x24] sm:$0x11] %v444
  %461 = vst [vmem:[%s5 + $0x2c] sm:$0x1] %v445
  // Predicated region
  $region26: #{run.20} parent=0 // pred_check
    _
  $region27: #{run.20} parent=0 // pred_check_branch
    %463 = sbr.rel (0) target = $region29
  $region28: #{run.20} parent=0 // pred_region
    _
  $region29: #{run.20} parent=0 // pred_fallthru
    _
  // Predicated region
  $region30: #{run.20} parent=0 // pred_check
    _
  $region31: #{run.20} parent=0 // pred_check_branch
    %465 = sbr.rel (0) target = $region33
  $region32: #{run.20} parent=0 // pred_region
    _
  $region33: #{run.20} parent=0 // pred_fallthru
    _

// kernel: run.18
$region0: #{run.18}
  #allocation0 [shape = 'u32[]', space=smem, size = 0x4, offset = 0x4, fixed_abs, tag = 'smem constant byte address 0x4 - core index']
  #allocation1 [shape = 'u32[144,128]{1,0:T(1,128)}', space=vmem, size = 0x12000, scoped, tag = 'internal scratch']
  #allocation2 [shape = 'bf16[26,128]{1,0:T(8,128)(2,1)}', space=vmem, size = 0x2000, scoped, tag = 'scratch operand']
  %s0 = inlined_call_operand.vmem [shape: f32[26,128], index: 0, kind: input, shape index: {}]
  %s1 = inlined_call_operand.vmem [shape: f32[1,128], index: 1, kind: input, shape index: {}]
  %s2 = inlined_call_operand.vmem [shape: f32[1,128], index: 2, kind: input, shape index: {}]
  %s3 = inlined_call_operand.vmem [shape: bf16[128,512], index: 3, kind: input, shape index: {}]
  %s4 = inlined_call_operand.vmem [shape: f32[1,512], index: 4, kind: input, shape index: {}]
  %s5 = inlined_call_operand.vmem [shape: bf16[26,512], index: 5, kind: output, shape index: {}]
  %s6 = sld [smem:[#allocation0]]
  $region34: #{run.18} parent=0
    _
  %s8 = ssub.s32 1, %s6
  %s9 = scalar_select 0, %s8, %s6
  // Predicated region
  $region2: #{run.18} parent=0 // pred_check
    _
  $region3: #{run.18} parent=0 // pred_check_branch
    %11 = sbr.rel (0) target = $region5
  $region4: #{run.18} parent=0 // pred_region
    _
  $region5: #{run.18} parent=0 // pred_fallthru
    _
  // Predicated region
  $region6: #{run.18} parent=0 // pred_check
    _
  $region7: #{run.18} parent=0 // pred_check_branch
    %13 = sbr.rel (0) target = $region9
  $region8: #{run.18} parent=0 // pred_region
    _
  $region9: #{run.18} parent=0 // pred_fallthru
    _
  // Predicated region
  $region10: #{run.18} parent=0 // pred_check
    _
  $region11: #{run.18} parent=0 // pred_check_branch
    %15 = sbr.rel (0) target = $region13
  $region12: #{run.18} parent=0 // pred_region
    _
  $region13: #{run.18} parent=0 // pred_fallthru
    _
  // Predicated region
  $region14: #{run.18} parent=0 // pred_check
    _
  $region15: #{run.18} parent=0 // pred_check_branch
    %17 = sbr.rel (0) target = $region17
  $region16: #{run.18} parent=0 // pred_region
    _
  $region17: #{run.18} parent=0 // pred_fallthru
    _
  // Predicated region
  $region18: #{run.18} parent=0 // pred_check
    _
  $region19: #{run.18} parent=0 // pred_check_branch
    %19 = sbr.rel (0) target = $region21
  $region20: #{run.18} parent=0 // pred_region
    _
  $region21: #{run.18} parent=0 // pred_fallthru
    _
  %p21 = scmp.eq.s32.totalorder 0, 0
  // Predicated region
  $region22: #{run.18} parent=0 // pred_check
    %p22 = pneg %p21
  $region23: #{run.18} parent=0 // pred_check_branch
    %24 = sbr.rel (%p22) target = $region25
  $region24: #{run.18} parent=0 // pred_region
    %v25 = vld [vmem:[%s0] sm:$0xff]
    %v26 = vld [vmem:[%s0 + $0x8] sm:$0xff]
    %v27 = vld [vmem:[%s0 + $0x10] sm:$0xff]
    %v28 = vld [vmem:[%s0 + $0x18] sm:$0x3]
    %29 = vadd.xlane.f32.xlu0 %v25
    %v30 = vpop.xlane.xlu0 %29
    %31 = vadd.xlane.f32.xlu0 %v26
    %v32 = vpop.xlane.xlu0 %31
    %33 = vadd.xlane.f32.xlu0 %v27
    %v34 = vpop.xlane.xlu0 %33
    %vm35 = vcmask 1041408
    %v36 = vsel %vm35, %v28, 0.0
    %37 = vadd.xlane.f32.xlu0 %v36
    %v38 = vpop.xlane.xlu0 %37
    %v39 = vrcp.pop 128.0
    %v40 = vmul.f32 %v30, %v39
    %v41 = vmul.f32 %v32, %v39
    %v42 = vmul.f32 %v34, %v39
    %v43 = vmul.f32 %v38, %v39
    %v44 = vsub.f32 %v25, %v40
    %v45 = vsub.f32 %v26, %v41
    %v46 = vsub.f32 %v27, %v42
    %v47 = vsub.f32 %v28, %v43
    %v48 = vmul.f32 %v44, %v44
    %v49 = vmul.f32 %v45, %v45
    %v50 = vmul.f32 %v46, %v46
    %v51 = vmul.f32 %v47, %v47
    %52 = vadd.xlane.f32.xlu0 %v48
    %v53 = vpop.xlane.xlu0 %52
    %54 = vadd.xlane.f32.xlu0 %v49
    %v55 = vpop.xlane.xlu0 %54
    %56 = vadd.xlane.f32.xlu0 %v50
    %v57 = vpop.xlane.xlu0 %56
    %v58 = vsel %vm35, %v51, 0.0
    %59 = vadd.xlane.f32.xlu0 %v58
    %v60 = vpop.xlane.xlu0 %59
    %v61 = vmul.f32 %v53, %v39
    %v62 = vmul.f32 %v55, %v39
    %v63 = vmul.f32 %v57, %v39
    %v64 = vmul.f32 %v60, %v39
    %v65 = vadd.f32 %v61, 1e-05
    %v66 = vadd.f32 %v62, 1e-05
    %v67 = vadd.f32 %v63, 1e-05
    %v68 = vadd.f32 %v64, 1e-05
    %v69 = vrsqrt.pop %v65
    %v70 = vrsqrt.pop %v66
    %v71 = vrsqrt.pop %v67
    %v72 = vrsqrt.pop %v68
    %v73 = vmul.f32 %v44, %v69
    %v74 = vmul.f32 %v45, %v70
    %v75 = vmul.f32 %v46, %v71
    %v76 = vmul.f32 %v47, %v72
    %v77 = vld [vmem:[%s1] sm:$0x1]
    %v79 = vlaneseq
    %v80 = vshrl.u32 %v79, 7
    %v81 = vsub.s32 0, %v80
    %v82 = vrot.slane %v77, %v81
    %v84 = vmul.f32 %v73, %v82
    %v85 = vmul.f32 %v74, %v82
    %v86 = vmul.f32 %v75, %v82
    %v87 = vmul.f32 %v76, %v82
    %v88 = vld [vmem:[%s2] sm:$0x1]
    %v90 = vlaneseq
    %v91 = vshrl.u32 %v90, 7
    %v92 = vsub.s32 0, %v91
    %v93 = vrot.slane %v88, %v92
    %v95 = vadd.f32 %v84, %v93
    %v96 = vadd.f32 %v85, %v93
    %v97 = vadd.f32 %v86, %v93
    %v98 = vadd.f32 %v87, %v93
    %v99 = vpack.c.bf16 %v96, %v95
    %v100 = vpack.c.bf16 %v98, %v97
    %v103 = vunpack.c.l.b16 %v99
    %v104 = vunpack.c.h.b16 %v99
    %v105 = vunpack.c.l.b16 %v100
    %v106 = vunpack.c.h.b16 %v100
    %v107 = vpack.c.b16 %v103, %v103
    %v108 = vpack.c.b16 %v104, %v104
    %v109 = vpack.c.b16 %v105, %v105
    %v110 = vpack.c.b16 %v106, %v106
    %115 = vst [vmem:[#allocation2] sm:$0xf] %v107
    %116 = vst [vmem:[#allocation2 + $0x4] sm:$0xf] %v108
    %117 = vst [vmem:[#allocation2 + $0x8] sm:$0xf] %v109
    %118 = vst [vmem:[#allocation2 + $0xc] sm:$0x1] %v110
  $region25: #{run.18} parent=0 // pred_fallthru
    _
  %v119 = vld [vmem:[#allocation2] sm:$0xf]
  %v120 = vld [vmem:[#allocation2 + $0x4] sm:$0xf]
  %v121 = vld [vmem:[#allocation2 + $0x8] sm:$0xf]
  %v122 = vld [vmem:[#allocation2 + $0xc] sm:$0x1]
  %v123 = vld [vmem:[%s3] sm:$0xff]
  %v124 = vld [vmem:[%s3 + $0x8] sm:$0xff]
  %v125 = vld [vmem:[%s3 + $0x10] sm:$0xff]
  %v126 = vld [vmem:[%s3 + $0x18] sm:$0xff]
  %v127 = vld [vmem:[%s3 + $0x20] sm:$0xff]
  %v128 = vld [vmem:[%s3 + $0x28] sm:$0xff]
  %v129 = vld [vmem:[%s3 + $0x30] sm:$0xff]
  %v130 = vld [vmem:[%s3 + $0x38] sm:$0xff]
  %v131 = vld [vmem:[%s3 + $0x40] sm:$0xff]
  %v132 = vld [vmem:[%s3 + $0x48] sm:$0xff]
  %v133 = vld [vmem:[%s3 + $0x50] sm:$0xff]
  %v134 = vld [vmem:[%s3 + $0x58] sm:$0xff]
  %v135 = vld [vmem:[%s3 + $0x60] sm:$0xff]
  %v136 = vld [vmem:[%s3 + $0x68] sm:$0xff]
  %v137 = vld [vmem:[%s3 + $0x70] sm:$0xff]
  %v138 = vld [vmem:[%s3 + $0x78] sm:$0xff]
  %v139 = vld [vmem:[%s3 + $0x80] sm:$0xff]
  %v140 = vld [vmem:[%s3 + $0x88] sm:$0xff]
  %v141 = vld [vmem:[%s3 + $0x90] sm:$0xff]
  %v142 = vld [vmem:[%s3 + $0x98] sm:$0xff]
  %v143 = vld [vmem:[%s3 + $0xa0] sm:$0xff]
  %v144 = vld [vmem:[%s3 + $0xa8] sm:$0xff]
  %v145 = vld [vmem:[%s3 + $0xb0] sm:$0xff]
  %v146 = vld [vmem:[%s3 + $0xb8] sm:$0xff]
  %v147 = vld [vmem:[%s3 + $0xc0] sm:$0xff]
  %v148 = vld [vmem:[%s3 + $0xc8] sm:$0xff]
  %v149 = vld [vmem:[%s3 + $0xd0] sm:$0xff]
  %v150 = vld [vmem:[%s3 + $0xd8] sm:$0xff]
  %v151 = vld [vmem:[%s3 + $0xe0] sm:$0xff]
  %v152 = vld [vmem:[%s3 + $0xe8] sm:$0xff]
  %v153 = vld [vmem:[%s3 + $0xf0] sm:$0xff]
  %v154 = vld [vmem:[%s3 + $0xf8] sm:$0xff]
  %v155 = vld [vmem:[%s4] sm:$0xf]
  %v157 = vlaneseq
  %v158 = vshrl.u32 %v157, 7
  %v159 = vsub.s32 0, %v158
  %v160 = vrot.slane %v155, %v159
  %v161 = vlaneseq
  %v162 = vshrl.u32 %v161, 7
  %v163 = vsub.s32 1, %v162
  %v164 = vrot.slane %v155, %v163
  %v165 = vlaneseq
  %v166 = vshrl.u32 %v165, 7
  %v167 = vsub.s32 2, %v166
  %v168 = vrot.slane %v155, %v167
  %v169 = vlaneseq
  %v170 = vshrl.u32 %v169, 7
  %v171 = vsub.s32 3, %v170
  %v172 = vrot.slane %v155, %v171
  %v181 = vunpack.c.l.b16 %v119
  %v182 = vunpack.c.l.b16 %v120
  %v183 = vunpack.c.l.b16 %v121
  %v184 = vunpack.c.l.b16 %v122
  %v185 = vpack.c.b16 %v182, %v181
  %v186 = vpack.c.b16 %v184, %v183
  %v221 = vunpack.c.l.b16 %v123
  %v222 = vunpack.c.h.b16 %v123
  %v223 = vunpack.c.l.b16 %v124
  %v224 = vunpack.c.h.b16 %v124
  %v225 = vunpack.c.l.b16 %v125
  %v226 = vunpack.c.h.b16 %v125
  %v227 = vunpack.c.l.b16 %v126
  %v228 = vunpack.c.h.b16 %v126
  %v229 = vunpack.c.l.b16 %v127
  %v230 = vunpack.c.h.b16 %v127
  %v231 = vunpack.c.l.b16 %v128
  %v232 = vunpack.c.h.b16 %v128
  %v233 = vunpack.c.l.b16 %v129
  %v234 = vunpack.c.h.b16 %v129
  %v235 = vunpack.c.l.b16 %v130
  %v236 = vunpack.c.h.b16 %v130
  %v237 = vunpack.c.l.b16 %v131
  %v238 = vunpack.c.h.b16 %v131
  %v239 = vunpack.c.l.b16 %v132
  %v240 = vunpack.c.h.b16 %v132
  %v241 = vunpack.c.l.b16 %v133
  %v242 = vunpack.c.h.b16 %v133
  %v243 = vunpack.c.l.b16 %v134
  %v244 = vunpack.c.h.b16 %v134
  %v245 = vunpack.c.l.b16 %v135
  %v246 = vunpack.c.h.b16 %v135
  %v247 = vunpack.c.l.b16 %v136
  %v248 = vunpack.c.h.b16 %v136
  %v249 = vunpack.c.l.b16 %v137
  %v250 = vunpack.c.h.b16 %v137
  %v251 = vunpack.c.l.b16 %v138
  %v252 = vunpack.c.h.b16 %v138
  %v253 = vunpack.c.l.b16 %v139
  %v254 = vunpack.c.h.b16 %v139
  %v255 = vunpack.c.l.b16 %v140
  %v256 = vunpack.c.h.b16 %v140
  %v257 = vunpack.c.l.b16 %v141
  %v258 = vunpack.c.h.b16 %v141
  %v259 = vunpack.c.l.b16 %v142
  %v260 = vunpack.c.h.b16 %v142
  %v261 = vunpack.c.l.b16 %v143
  %v262 = vunpack.c.h.b16 %v143
  %v263 = vunpack.c.l.b16 %v144
  %v264 = vunpack.c.h.b16 %v144
  %v265 = vunpack.c.l.b16 %v145
  %v266 = vunpack.c.h.b16 %v145
  %v267 = vunpack.c.l.b16 %v146
  %v268 = vunpack.c.h.b16 %v146
  %v269 = vunpack.c.l.b16 %v147
  %v270 = vunpack.c.h.b16 %v147
  %v271 = vunpack.c.l.b16 %v148
  %v272 = vunpack.c.h.b16 %v148
  %v273 = vunpack.c.l.b16 %v149
  %v274 = vunpack.c.h.b16 %v149
  %v275 = vunpack.c.l.b16 %v150
  %v276 = vunpack.c.h.b16 %v150
  %v277 = vunpack.c.l.b16 %v151
  %v278 = vunpack.c.h.b16 %v151
  %v279 = vunpack.c.l.b16 %v152
  %v280 = vunpack.c.h.b16 %v152
  %v281 = vunpack.c.l.b16 %v153
  %v282 = vunpack.c.h.b16 %v153
  %v283 = vunpack.c.l.b16 %v154
  %v284 = vunpack.c.h.b16 %v154
  %v285 = vpack.c.b16 %v225, %v221
  %v286 = vpack.c.b16 %v226, %v222
  %v287 = vpack.c.b16 %v227, %v223
  %v288 = vpack.c.b16 %v228, %v224
  %v289 = vpack.c.b16 %v233, %v229
  %v290 = vpack.c.b16 %v234, %v230
  %v291 = vpack.c.b16 %v235, %v231
  %v292 = vpack.c.b16 %v236, %v232
  %v293 = vpack.c.b16 %v241, %v237
  %v294 = vpack.c.b16 %v242, %v238
  %v295 = vpack.c.b16 %v243, %v239
  %v296 = vpack.c.b16 %v244, %v240
  %v297 = vpack.c.b16 %v249, %v245
  %v298 = vpack.c.b16 %v250, %v246
  %v299 = vpack.c.b16 %v251, %v247
  %v300 = vpack.c.b16 %v252, %v248
  %v301 = vpack.c.b16 %v257, %v253
  %v302 = vpack.c.b16 %v258, %v254
  %v303 = vpack.c.b16 %v259, %v255
  %v304 = vpack.c.b16 %v260, %v256
  %v305 = vpack.c.b16 %v265, %v261
  %v306 = vpack.c.b16 %v266, %v262
  %v307 = vpack.c.b16 %v267, %v263
  %v308 = vpack.c.b16 %v268, %v264
  %v309 = vpack.c.b16 %v273, %v269
  %v310 = vpack.c.b16 %v274, %v270
  %v311 = vpack.c.b16 %v275, %v271
  %v312 = vpack.c.b16 %v276, %v272
  %v313 = vpack.c.b16 %v281, %v277
  %v314 = vpack.c.b16 %v282, %v278
  %v315 = vpack.c.b16 %v283, %v279
  %v316 = vpack.c.b16 %v284, %v280
  %349 = vmatprep.subr.bf16.mxu0 %v314
  %350 = vmatpush1.bf16.msra.mxu0 %v313
  %351 = vmatprep.subr.bf16.mxu0 %v310
  %352 = vmatpush1.bf16.msra.mxu0 %v309
  %353 = vmatprep.subr.bf16.mxu0 %v306
  %354 = vmatpush1.bf16.msra.mxu0 %v305
  %355 = vmatprep.subr.bf16.mxu0 %v302
  %356 = vmatpush1.bf16.msra.mxu0 %v301
  %357 = vmatprep.subr.bf16.mxu0 %v298
  %358 = vmatpush1.bf16.msra.mxu0 %v297
  %359 = vmatprep.subr.bf16.mxu0 %v294
  %360 = vmatpush1.bf16.msra.mxu0 %v293
  %361 = vmatprep.subr.bf16.mxu0 %v290
  %362 = vmatpush1.bf16.msra.mxu0 %v289
  %363 = vmatprep.subr.bf16.mxu0 %v286
  %364 = vmatpush1.bf16.msra.mxu0 %v285
  %365 = vmatprep.subr.bf16.mxu0 0
  %366 = vmatpush2.bf16.msra.mxu0 0
  %367 = vmatprep.subr.bf16.mxu0 0
  %368 = vmatpush2.bf16.msra.mxu0 0
  %369 = vmatprep.subr.bf16.mxu0 0
  %370 = vmatpush2.bf16.msra.mxu0 0
  %371 = vmatprep.subr.bf16.mxu0 0
  %372 = vmatpush2.bf16.msra.mxu0 0
  %373 = vmatprep.subr.bf16.mxu0 0
  %374 = vmatpush2.bf16.msra.mxu0 0
  %375 = vmatprep.subr.bf16.mxu0 0
  %376 = vmatpush2.bf16.msra.mxu0 0
  %377 = vmatprep.subr.bf16.mxu0 0
  %378 = vmatpush2.bf16.msra.mxu0 0
  %379 = vmatprep.subr.bf16.mxu0 0
  %380 = vmatpush2.bf16.msra.mxu0 0
  %381 = vmatprep.mubr.bf16.mxu0 0
  %382 = vmatmul.mubr.bf16.gmra.mxu0 %v185
  %v383 = vpop.f32.mrf.mxu0
  %v384 = vadd.f32 %v160, %v383
  %v385 = vpop.f32.mrf.mxu0
  %v386 = vadd.f32 %v164, %v385
  %v387 = vpop.f32.mrf.mxu0
  %v388 = vadd.f32 %v160, %v387
  %v389 = vpop.f32.mrf.mxu0
  %v390 = vadd.f32 %v164, %v389
  %391 = vmatprep.mubr.bf16.mxu0 0
  %392 = vmatmul.mubr.bf16.gmra.mxu0 %v186
  %v393 = vpop.f32.mrf.mxu0
  %v394 = vadd.f32 %v160, %v393
  %v395 = vpop.f32.mrf.mxu0
  %v396 = vadd.f32 %v164, %v395
  %v397 = vpop.f32.mrf.mxu0
  %v398 = vadd.f32 %v160, %v397
  %v399 = vpop.f32.mrf.mxu0
  %v400 = vadd.f32 %v164, %v399
  %401 = vdwg.mxu0
  %402 = vmatprep.subr.bf16.mxu0 %v316
  %403 = vmatpush1.bf16.msra.mxu0 %v315
  %404 = vmatprep.subr.bf16.mxu0 %v312
  %405 = vmatpush1.bf16.msra.mxu0 %v311
  %406 = vmatprep.subr.bf16.mxu0 %v308
  %407 = vmatpush1.bf16.msra.mxu0 %v307
  %408 = vmatprep.subr.bf16.mxu0 %v304
  %409 = vmatpush1.bf16.msra.mxu0 %v303
  %410 = vmatprep.subr.bf16.mxu0 %v300
  %411 = vmatpush1.bf16.msra.mxu0 %v299
  %412 = vmatprep.subr.bf16.mxu0 %v296
  %413 = vmatpush1.bf16.msra.mxu0 %v295
  %414 = vmatprep.subr.bf16.mxu0 %v292
  %415 = vmatpush1.bf16.msra.mxu0 %v291
  %416 = vmatprep.subr.bf16.mxu0 %v288
  %417 = vmatpush1.bf16.msra.mxu0 %v287
  %418 = vmatprep.subr.bf16.mxu0 0
  %419 = vmatpush2.bf16.msra.mxu0 0
  %420 = vmatprep.subr.bf16.mxu0 0
  %421 = vmatpush2.bf16.msra.mxu0 0
  %422 = vmatprep.subr.bf16.mxu0 0
  %423 = vmatpush2.bf16.msra.mxu0 0
  %424 = vmatprep.subr.bf16.mxu0 0
  %425 = vmatpush2.bf16.msra.mxu0 0
  %426 = vmatprep.subr.bf16.mxu0 0
  %427 = vmatpush2.bf16.msra.mxu0 0
  %428 = vmatprep.subr.bf16.mxu0 0
  %429 = vmatpush2.bf16.msra.mxu0 0
  %430 = vmatprep.subr.bf16.mxu0 0
  %431 = vmatpush2.bf16.msra.mxu0 0
  %432 = vmatprep.subr.bf16.mxu0 0
  %433 = vmatpush2.bf16.msra.mxu0 0
  %434 = vmatprep.mubr.bf16.mxu0 0
  %435 = vmatmul.mubr.bf16.gmra.mxu0 %v185
  %v436 = vpop.f32.mrf.mxu0
  %v437 = vadd.f32 %v168, %v436
  %v438 = vpop.f32.mrf.mxu0
  %v439 = vadd.f32 %v172, %v438
  %v440 = vpop.f32.mrf.mxu0
  %v441 = vadd.f32 %v168, %v440
  %v442 = vpop.f32.mrf.mxu0
  %v443 = vadd.f32 %v172, %v442
  %444 = vmatprep.mubr.bf16.mxu0 0
  %445 = vmatmul.mubr.bf16.gmra.mxu0 %v186
  %v446 = vpop.f32.mrf.mxu0
  %v447 = vadd.f32 %v168, %v446
  %v448 = vpop.f32.mrf.mxu0
  %v449 = vadd.f32 %v172, %v448
  %v450 = vpop.f32.mrf.mxu0
  %v451 = vadd.f32 %v168, %v450
  %v452 = vpop.f32.mrf.mxu0
  %v453 = vadd.f32 %v172, %v452
  %454 = vdwg.mxu0
  %v455 = vmul.f32 %v384, 1.702
  %v456 = vmul.f32 %v386, 1.702
  %v457 = vmul.f32 %v437, 1.702
  %v458 = vmul.f32 %v439, 1.702
  %v459 = vmul.f32 %v388, 1.702
  %v460 = vmul.f32 %v390, 1.702
  %v461 = vmul.f32 %v441, 1.702
  %v462 = vmul.f32 %v443, 1.702
  %v463 = vmul.f32 %v394, 1.702
  %v464 = vmul.f32 %v396, 1.702
  %v465 = vmul.f32 %v447, 1.702
  %v466 = vmul.f32 %v449, 1.702
  %v467 = vmul.f32 %v398, 1.702
  %v468 = vmul.f32 %v400, 1.702
  %v469 = vmul.f32 %v451, 1.702
  %v470 = vmul.f32 %v453, 1.702
  %v471 = vxor.u32 %v455, 2147483648
  %v472 = vxor.u32 %v456, 2147483648
  %v473 = vxor.u32 %v457, 2147483648
  %v474 = vxor.u32 %v458, 2147483648
  %v475 = vxor.u32 %v459, 2147483648
  %v476 = vxor.u32 %v460, 2147483648
  %v477 = vxor.u32 %v461, 2147483648
  %v478 = vxor.u32 %v462, 2147483648
  %v479 = vxor.u32 %v463, 2147483648
  %v480 = vxor.u32 %v464, 2147483648
  %v481 = vxor.u32 %v465, 2147483648
  %v482 = vxor.u32 %v466, 2147483648
  %v483 = vxor.u32 %v467, 2147483648
  %v484 = vxor.u32 %v468, 2147483648
  %v485 = vxor.u32 %v469, 2147483648
  %v486 = vxor.u32 %v470, 2147483648
  %v487 = vmul.f32 %v471, 1.442695
  %v488 = vpow.pop %v487
  %v489 = vmul.f32 %v472, 1.442695
  %v490 = vpow.pop %v489
  %v491 = vmul.f32 %v473, 1.442695
  %v492 = vpow.pop %v491
  %v493 = vmul.f32 %v474, 1.442695
  %v494 = vpow.pop %v493
  %v495 = vmul.f32 %v475, 1.442695
  %v496 = vpow.pop %v495
  %v497 = vmul.f32 %v476, 1.442695
  %v498 = vpow.pop %v497
  %v499 = vmul.f32 %v477, 1.442695
  %v500 = vpow.pop %v499
  %v501 = vmul.f32 %v478, 1.442695
  %v502 = vpow.pop %v501
  %v503 = vmul.f32 %v479, 1.442695
  %v504 = vpow.pop %v503
  %v505 = vmul.f32 %v480, 1.442695
  %v506 = vpow.pop %v505
  %v507 = vmul.f32 %v481, 1.442695
  %v508 = vpow.pop %v507
  %v509 = vmul.f32 %v482, 1.442695
  %v510 = vpow.pop %v509
  %v511 = vmul.f32 %v483, 1.442695
  %v512 = vpow.pop %v511
  %v513 = vmul.f32 %v484, 1.442695
  %v514 = vpow.pop %v513
  %v515 = vmul.f32 %v485, 1.442695
  %v516 = vpow.pop %v515
  %v517 = vmul.f32 %v486, 1.442695
  %v518 = vpow.pop %v517
  %v519 = vadd.f32 %v488, 1.0
  %v520 = vadd.f32 %v490, 1.0
  %v521 = vadd.f32 %v492, 1.0
  %v522 = vadd.f32 %v494, 1.0
  %v523 = vadd.f32 %v496, 1.0
  %v524 = vadd.f32 %v498, 1.0
  %v525 = vadd.f32 %v500, 1.0
  %v526 = vadd.f32 %v502, 1.0
  %v527 = vadd.f32 %v504, 1.0
  %v528 = vadd.f32 %v506, 1.0
  %v529 = vadd.f32 %v508, 1.0
  %v530 = vadd.f32 %v510, 1.0
  %v531 = vadd.f32 %v512, 1.0
  %v532 = vadd.f32 %v514, 1.0
  %v533 = vadd.f32 %v516, 1.0
  %v534 = vadd.f32 %v518, 1.0
  %v535 = vrcp.pop %v519
  %v536 = vmul.f32 1.0, %v535
  %v537 = vrcp.pop %v520
  %v538 = vmul.f32 1.0, %v537
  %v539 = vrcp.pop %v521
  %v540 = vmul.f32 1.0, %v539
  %v541 = vrcp.pop %v522
  %v542 = vmul.f32 1.0, %v541
  %v543 = vrcp.pop %v523
  %v544 = vmul.f32 1.0, %v543
  %v545 = vrcp.pop %v524
  %v546 = vmul.f32 1.0, %v545
  %v547 = vrcp.pop %v525
  %v548 = vmul.f32 1.0, %v547
  %v549 = vrcp.pop %v526
  %v550 = vmul.f32 1.0, %v549
  %v551 = vrcp.pop %v527
  %v552 = vmul.f32 1.0, %v551
  %v553 = vrcp.pop %v528
  %v554 = vmul.f32 1.0, %v553
  %v555 = vrcp.pop %v529
  %v556 = vmul.f32 1.0, %v555
  %v557 = vrcp.pop %v530
  %v558 = vmul.f32 1.0, %v557
  %v559 = vrcp.pop %v531
  %v560 = vmul.f32 1.0, %v559
  %v561 = vrcp.pop %v532
  %v562 = vmul.f32 1.0, %v561
  %v563 = vrcp.pop %v533
  %v564 = vmul.f32 1.0, %v563
  %v565 = vrcp.pop %v534
  %v566 = vmul.f32 1.0, %v565
  %v567 = vmul.f32 %v384, %v536
  %v568 = vmul.f32 %v386, %v538
  %v569 = vmul.f32 %v437, %v540
  %v570 = vmul.f32 %v439, %v542
  %v571 = vmul.f32 %v388, %v544
  %v572 = vmul.f32 %v390, %v546
  %v573 = vmul.f32 %v441, %v548
  %v574 = vmul.f32 %v443, %v550
  %v575 = vmul.f32 %v394, %v552
  %v576 = vmul.f32 %v396, %v554
  %v577 = vmul.f32 %v447, %v556
  %v578 = vmul.f32 %v449, %v558
  %v579 = vmul.f32 %v398, %v560
  %v580 = vmul.f32 %v400, %v562
  %v581 = vmul.f32 %v451, %v564
  %v582 = vmul.f32 %v453, %v566
  %v583 = vpack.c.bf16 %v571, %v567
  %v584 = vpack.c.bf16 %v572, %v568
  %v585 = vpack.c.bf16 %v573, %v569
  %v586 = vpack.c.bf16 %v574, %v570
  %v587 = vpack.c.bf16 %v579, %v575
  %v588 = vpack.c.bf16 %v580, %v576
  %v589 = vpack.c.bf16 %v581, %v577
  %v590 = vpack.c.bf16 %v582, %v578
  %v599 = vunpack.c.l.b16 %v583
  %v600 = vunpack.c.l.b16 %v584
  %v601 = vunpack.c.l.b16 %v585
  %v602 = vunpack.c.l.b16 %v586
  %v603 = vunpack.c.h.b16 %v583
  %v604 = vunpack.c.h.b16 %v584
  %v605 = vunpack.c.h.b16 %v585
  %v606 = vunpack.c.h.b16 %v586
  %v607 = vunpack.c.l.b16 %v587
  %v608 = vunpack.c.l.b16 %v588
  %v609 = vunpack.c.l.b16 %v589
  %v610 = vunpack.c.l.b16 %v590
  %v611 = vunpack.c.h.b16 %v587
  %v612 = vunpack.c.h.b16 %v588
  %v613 = vunpack.c.h.b16 %v589
  %v614 = vunpack.c.h.b16 %v590
  %v615 = vpack.c.b16 %v600, %v599
  %v616 = vpack.c.b16 %v602, %v601
  %v617 = vpack.c.b16 %v604, %v603
  %v618 = vpack.c.b16 %v606, %v605
  %v619 = vpack.c.b16 %v608, %v607
  %v620 = vpack.c.b16 %v610, %v609
  %v621 = vpack.c.b16 %v612, %v611
  %v622 = vpack.c.b16 %v614, %v613
  %631 = vst [vmem:[%s5] sm:$0xff] %v615
  %632 = vst [vmem:[%s5 + $0x8] sm:$0xff] %v616
  %633 = vst [vmem:[%s5 + $0x10] sm:$0xff] %v617
  %634 = vst [vmem:[%s5 + $0x18] sm:$0xff] %v618
  %635 = vst [vmem:[%s5 + $0x20] sm:$0xff] %v619
  %636 = vst [vmem:[%s5 + $0x28] sm:$0xff] %v620
  %637 = vst [vmem:[%s5 + $0x30] sm:$0x11] %v621
  %638 = vst [vmem:[%s5 + $0x38] sm:$0x11] %v622
  // Predicated region
  $region26: #{run.18} parent=0 // pred_check
    _
  $region27: #{run.18} parent=0 // pred_check_branch
    %640 = sbr.rel (0) target = $region29
  $region28: #{run.18} parent=0 // pred_region
    _
  $region29: #{run.18} parent=0 // pred_fallthru
    _
  // Predicated region
  $region30: #{run.18} parent=0 // pred_check
    _
  $region31: #{run.18} parent=0 // pred_check_branch
    %642 = sbr.rel (0) target = $region33
  $region32: #{run.18} parent=0 // pred_region
    _
  $region33: #{run.18} parent=0 // pred_fallthru
    _

// kernel: run.21
$region0: #{run.21}
  #allocation0 [shape = 'u32[]', space=smem, size = 0x4, offset = 0x4, fixed_abs, tag = 'smem constant byte address 0x4 - core index']
  #allocation1 [shape = 'u32[144,128]{1,0:T(1,128)}', space=vmem, size = 0x12000, scoped, tag = 'internal scratch']
  %s0 = inlined_call_operand.vmem [shape: bf16[2,13,384], index: 0, kind: input, shape index: {}]
  %s1 = inlined_call_operand.vmem [shape: bf16[128,128], index: 1, kind: input, shape index: {}]
  %s2 = inlined_call_operand.vmem [shape: f32[1,128], index: 2, kind: input, shape index: {}]
  %s3 = inlined_call_operand.vmem [shape: f32[2,13,128], index: 3, kind: input, shape index: {}]
  %s4 = inlined_call_operand.vmem [shape: f32[2,13,128], index: 4, kind: output, shape index: {}]
  %s5 = sld [smem:[#allocation0]]
  $region49: #{run.21} parent=0
    _
  %s7 = ssub.s32 1, %s5
  %s8 = scalar_select 0, %s7, %s5
  loop: start=0, step=1, limit=4
  $region2: #{run.21} parent=0 // loop_pre_header
    _
  $region3: #{run.21} parent=0 // loop_header
    %s10 = sphi 0, %s14
    %p11 = scmp.ge.s32.totalorder %s10, 4
    %s20 = sphi 0, %s22
    %s23 = sphi 0, %s20
    %s24 = sphi 0, %s23
    %s40 = sphi 0, %s24
    %s44 = sphi 0, %s44
    %s46 = sphi 0, %s44
    %s47 = sphi 0, %s46
    %s61 = sphi 0, %s47
    %s65 = sphi 0, %s65
    %s67 = sphi 0, %s65
    %s68 = sphi 0, %s67
    %s82 = sphi 0, %s68
    %s88 = sphi 0, %s90
    %s91 = sphi 0, %s88
    %s92 = sphi 0, %s91
    %s108 = sphi 0, %s92
    %s114 = sphi 0, %s116
    %s117 = sphi 0, %s114
    %s118 = sphi 0, %s117
    %s134 = sphi 0, %s118
  $region4: #{run.21} parent=0 // loop_header_branch
    %13 = sbr.rel (%p11) target = $region8
  $region5: #{run.21} parent=0 // loop_body
    %s15 = ssub.s32 %s10, 1
    %s16 = ssub.s32 %s10, 2
    %s17 = sadd.s32 %s10, 1
    %s18 = ssub.s32 %s10, %s17
    %p19 = scmp.eq.s32.totalorder %s18, 0
    %s21 = sadd.s32 %s20, 1
    %s22 = scalar_select %p19, %s20, %s21
    %p25 = pneg %p19
    %p26 = scmp.eq.s32.totalorder %s10, 1
    %p27 = por %p25, %p26
    %p28 = scmp.ne.s32.totalorder %s20, %s23
    %p29 = scmp.eq.s32.totalorder %s10, 0
    %p30 = por %p28, %p29
    %p31 = scmp.ne.s32.totalorder %s20, %s23
    %p32 = scmp.eq.s32.totalorder %s15, 1
    %p33 = por %p31, %p32
    %p34 = scmp.ne.s32.totalorder %s23, %s24
    %p35 = scmp.eq.s32.totalorder %s15, 0
    %p36 = por %p34, %p35
    %p37 = scmp.ne.s32.totalorder %s23, %s24
    %p38 = scmp.eq.s32.totalorder %s16, 1
    %p39 = por %p37, %p38
    %p41 = scmp.ne.s32.totalorder %s24, %s40
    %p42 = scmp.eq.s32.totalorder %s16, 0
    %p43 = por %p41, %p42
    %s45 = sadd.s32 %s44, 1
    %p48 = scmp.eq.s32.totalorder %s10, 1
    %p49 = scmp.ne.s32.totalorder %s44, %s46
    %p50 = scmp.eq.s32.totalorder %s10, 0
    %p51 = por %p49, %p50
    %p52 = scmp.ne.s32.totalorder %s44, %s46
    %p53 = scmp.eq.s32.totalorder %s15, 1
    %p54 = por %p52, %p53
    %p55 = scmp.ne.s32.totalorder %s46, %s47
    %p56 = scmp.eq.s32.totalorder %s15, 0
    %p57 = por %p55, %p56
    %p58 = scmp.ne.s32.totalorder %s46, %s47
    %p59 = scmp.eq.s32.totalorder %s16, 1
    %p60 = por %p58, %p59
    %p62 = scmp.ne.s32.totalorder %s47, %s61
    %p63 = scmp.eq.s32.totalorder %s16, 0
    %p64 = por %p62, %p63
    %s66 = sadd.s32 %s65, 1
    %p69 = scmp.eq.s32.totalorder %s10, 1
    %p70 = scmp.ne.s32.totalorder %s65, %s67
    %p71 = scmp.eq.s32.totalorder %s10, 0
    %p72 = por %p70, %p71
    %p73 = scmp.ne.s32.totalorder %s65, %s67
    %p74 = scmp.eq.s32.totalorder %s15, 1
    %p75 = por %p73, %p74
    %p76 = scmp.ne.s32.totalorder %s67, %s68
    %p77 = scmp.eq.s32.totalorder %s15, 0
    %p78 = por %p76, %p77
    %p79 = scmp.ne.s32.totalorder %s67, %s68
    %p80 = scmp.eq.s32.totalorder %s16, 1
    %p81 = por %p79, %p80
    %p83 = scmp.ne.s32.totalorder %s68, %s82
    %p84 = scmp.eq.s32.totalorder %s16, 0
    %p85 = por %p83, %p84
    %s86 = ssub.s32 %s10, %s17
    %p87 = scmp.eq.s32.totalorder %s86, 0
    %s89 = sadd.s32 %s88, 1
    %s90 = scalar_select %p87, %s88, %s89
    %p93 = pneg %p87
    %p94 = scmp.eq.s32.totalorder %s10, 1
    %p95 = por %p93, %p94
    %p96 = scmp.ne.s32.totalorder %s88, %s91
    %p97 = scmp.eq.s32.totalorder %s10, 0
    %p98 = por %p96, %p97
    %p99 = scmp.ne.s32.totalorder %s88, %s91
    %p100 = scmp.eq.s32.totalorder %s15, 1
    %p101 = por %p99, %p100
    %p102 = scmp.ne.s32.totalorder %s91, %s92
    %p103 = scmp.eq.s32.totalorder %s15, 0
    %p104 = por %p102, %p103
    %p105 = scmp.ne.s32.totalorder %s91, %s92
    %p106 = scmp.eq.s32.totalorder %s16, 1
    %p107 = por %p105, %p106
    %p109 = scmp.ne.s32.totalorder %s92, %s108
    %p110 = scmp.eq.s32.totalorder %s16, 0
    %p111 = por %p109, %p110
    %s112 = ssub.s32 %s10, %s17
    %p113 = scmp.eq.s32.totalorder %s112, 0
    %s115 = sadd.s32 %s114, 1
    %s116 = scalar_select %p113, %s114, %s115
    %p119 = pneg %p113
    %p120 = scmp.eq.s32.totalorder %s10, 1
    %p121 = por %p119, %p120
    %p122 = scmp.ne.s32.totalorder %s114, %s117
    %p123 = scmp.eq.s32.totalorder %s10, 0
    %p124 = por %p122, %p123
    %p125 = scmp.ne.s32.totalorder %s114, %s117
    %p126 = scmp.eq.s32.totalorder %s15, 1
    %p127 = por %p125, %p126
    %p128 = scmp.ne.s32.totalorder %s117, %s118
    %p129 = scmp.eq.s32.totalorder %s15, 0
    %p130 = por %p128, %p129
    %p131 = scmp.ne.s32.totalorder %s117, %s118
    %p132 = scmp.eq.s32.totalorder %s16, 1
    %p133 = por %p131, %p132
    %p135 = scmp.ne.s32.totalorder %s118, %s134
    %p136 = scmp.eq.s32.totalorder %s16, 0
    %p137 = por %p135, %p136
    %p138 = scmp.le.s32.totalorder 1, %s10
    %p139 = scmp.lt.s32.totalorder %s10, 3
    %p140 = pnand %p138, %p139
    %p141 = pneg %p140
    // Predicated region
    $region9: #{run.21} parent=5 // pred_check
      _
    $region10: #{run.21} parent=5 // pred_check_branch
      %143 = sbr.rel (%p140) target = $region12
    $region11: #{run.21} parent=5 // pred_region
      %s144 = ssub.s32 %s10, 1
      // Predicated region
      $region13: #{run.21} parent=11 // pred_check
        %p145 = pneg %p57
      $region14: #{run.21} parent=11 // pred_check_branch
        %147 = sbr.rel (%p145) target = $region16
      $region15: #{run.21} parent=11 // pred_region
        _
      $region16: #{run.21} parent=11 // pred_fallthru
        _
      // Predicated region
      $region17: #{run.21} parent=11 // pred_check
        %p148 = pneg %p78
      $region18: #{run.21} parent=11 // pred_check_branch
        %150 = sbr.rel (%p148) target = $region20
      $region19: #{run.21} parent=11 // pred_region
        _
      $region20: #{run.21} parent=11 // pred_fallthru
        _
    $region12: #{run.21} parent=5 // pred_fallthru
      _
    %p151 = scmp.lt.s32.totalorder %s10, 2
    // Predicated region
    $region21: #{run.21} parent=5 // pred_check
      %p152 = pneg %p151
    $region22: #{run.21} parent=5 // pred_check_branch
      %154 = sbr.rel (%p152) target = $region24
    $region23: #{run.21} parent=5 // pred_region
      // Predicated region
      $region25: #{run.21} parent=23 // pred_check
        %p155 = pneg %p30
      $region26: #{run.21} parent=23 // pred_check_branch
        %157 = sbr.rel (%p155) target = $region28
      $region27: #{run.21} parent=23 // pred_region
        %p158 = scmp.lt.s32.totalorder %s10, 1
        %s159 = scalar_select %p158, %s10, 1
        %s160 = smul.addr %s159, 6
        %s161 = smul.addr %s160, 4
        %s162 = scalar_lea.vmem %s0, %s161
      $region28: #{run.21} parent=23 // pred_fallthru
        _
      // Predicated region
      $region29: #{run.21} parent=23 // pred_check
        %p163 = pneg %p98
      $region30: #{run.21} parent=23 // pred_check_branch
        %165 = sbr.rel (%p163) target = $region32
      $region31: #{run.21} parent=23 // pred_region
        %p166 = scmp.lt.s32.totalorder %s10, 1
        %s167 = scalar_select %p166, %s10, 1
        %s168 = smul.addr %s167, 2
        %s169 = smul.addr %s168, 8
        %s170 = scalar_lea.vmem %s3, %s169
      $region32: #{run.21} parent=23 // pred_fallthru
        _
    $region24: #{run.21} parent=5 // pred_fallthru
      _
    %p171 = scmp.le.s32.totalorder 1, %s10
    %p172 = scmp.lt.s32.totalorder %s10, 3
    %p173 = pnand %p171, %p172
    %p174 = pneg %p173
    // Predicated region
    $region33: #{run.21} parent=5 // pred_check
      _
    $region34: #{run.21} parent=5 // pred_check_branch
      %176 = sbr.rel (%p173) target = $region36
    $region35: #{run.21} parent=5 // pred_region
      %s177 = ssub.s32 %s10, 1
      %p178 = scmp.lt.s32.totalorder %s15, 1
      %s179 = scalar_select %p178, %s15, 1
      %s180 = smul.addr %s179, 6
      %s181 = smul.addr %s180, 4
      %s182 = scalar_lea.vmem %s0, %s181
      %p183 = pneg %p36
      %p184 = pneg %p33
      %p185 = pneg %p57
      %p186 = pneg %p54
      %p187 = pneg %p78
      %p188 = pneg %p75
      %p189 = scmp.lt.s32.totalorder %s15, 1
      %s190 = scalar_select %p189, %s15, 1
      %s191 = smul.addr %s190, 2
      %s192 = smul.addr %s191, 8
      %s193 = scalar_lea.vmem %s3, %s192
      %p194 = pneg %p104
      %p195 = pneg %p101
      %p196 = pneg %p130
      %p197 = pneg %p127
      %p198 = scmp.lt.s32.totalorder %s15, 1
      %s199 = scalar_select %p198, %s15, 1
      %s200 = smul.addr %s199, 2
      %s201 = smul.addr %s200, 8
      %s202 = scalar_lea.vmem %s4, %s201
      %p203 = scmp.lt.s32.totalorder %s15, 1
      %s204 = scalar_select %p203, %s15, 1
      %s205 = smul.addr %s204, 6
      %s206 = smul.addr %s205, 4
      %s207 = scalar_lea.vmem %s0, %s206
      %p208 = scmp.lt.s32.totalorder %s15, 1
      %s209 = scalar_select %p208, %s15, 1
      %s210 = smul.addr %s209, 2
      %s211 = smul.addr %s210, 8
      %s212 = scalar_lea.vmem %s3, %s211
      %p213 = scmp.lt.s32.totalorder %s15, 1
      %s214 = scalar_select %p213, %s15, 1
      %s215 = smul.addr %s214, 2
      %s216 = smul.addr %s215, 8
      %s217 = scalar_lea.vmem %s4, %s216
      %v219 = vld [vmem:[%s212] sm:$0xff]
      %v220 = vld [vmem:[%s212 + $0x8] sm:$0x1f]
      %v221 = vld [vmem:[%s2] sm:$0x1]
      %v223 = vlaneseq
      %v224 = vshrl.u32 %v223, 7
      %v225 = vsub.s32 0, %v224
      %v226 = vrot.slane %v221, %v225
      %v228 = vadd.f32 %v219, %v226
      %v229 = vadd.f32 %v220, %v226
      %230 = vst [vmem:[%s217] sm:$0xff] %v228
      %231 = vst [vmem:[%s217 + $0x8] sm:$0x1f] %v229
      %v232 = vld [vmem:[%s207] sm:$0xf]
      %v233 = vld [vmem:[%s207 + $0xc] sm:$0x7]
      %v234 = vld [vmem:[%s207 + $0x4] sm:$0xf]
      %v235 = vld [vmem:[%s207 + $0x10] sm:$0x7]
      %v236 = vld [vmem:[%s207 + $0x8] sm:$0xf]
      %v237 = vld [vmem:[%s207 + $0x14] sm:$0x7]
      %v240 = vunpack.c.l.b16 %v232
      %v241 = vunpack.c.l.b16 %v233
      %v242 = vpack.c.b16 %v241, %v240
      %v245 = vunpack.c.l.b16 %v234
      %v246 = vunpack.c.l.b16 %v235
      %v247 = vpack.c.b16 %v246, %v245
      %vm248 = vcmask 523264
      %v250 = vsel %vm248, %v242, 0
      %v253 = vsel %vm248, %v247, 0
      %255 = vmatprep.subr.bf16.mxu0 0
      %256 = vmatpush1.bf16.xpose.msra.mxu0 0
      %257 = vmatprep.subr.bf16.mxu0 0
      %258 = vmatpush1.bf16.xpose.msra.mxu0 0
      %259 = vmatprep.subr.bf16.mxu0 0
      %260 = vmatpush1.bf16.xpose.msra.mxu0 0
      %261 = vmatprep.subr.bf16.mxu0 0
      %262 = vmatpush1.bf16.xpose.msra.mxu0 0
      %263 = vmatprep.subr.bf16.mxu0 0
      %264 = vmatpush1.bf16.xpose.msra.mxu0 0
      %265 = vmatprep.subr.bf16.mxu0 0
      %266 = vmatpush1.bf16.xpose.msra.mxu0 0
      %267 = vmatprep.subr.bf16.mxu0 0
      %268 = vmatpush1.bf16.xpose.msra.mxu0 0
      %269 = vmatprep.subr.bf16.mxu0 0
      %270 = vmatpush1.bf16.xpose.msra.mxu0 %v253
      %271 = vmatprep.subr.bf16.mxu0 0
      %272 = vmatpush2.bf16.xpose.msra.mxu0 0
      %273 = vmatprep.subr.bf16.mxu0 0
      %274 = vmatpush2.bf16.xpose.msra.mxu0 0
      %275 = vmatprep.subr.bf16.mxu0 0
      %276 = vmatpush2.bf16.xpose.msra.mxu0 0
      %277 = vmatprep.subr.bf16.mxu0 0
      %278 = vmatpush2.bf16.xpose.msra.mxu0 0
      %279 = vmatprep.subr.bf16.mxu0 0
      %280 = vmatpush2.bf16.xpose.msra.mxu0 0
      %281 = vmatprep.subr.bf16.mxu0 0
      %282 = vmatpush2.bf16.xpose.msra.mxu0 0
      %283 = vmatprep.subr.bf16.mxu0 0
      %284 = vmatpush2.bf16.xpose.msra.mxu0 0
      %285 = vmatprep.subr.bf16.mxu0 0
      %286 = vmatpush2.bf16.xpose.msra.mxu0 0
      %287 = vmatprep.mubr.bf16.mxu0 0
      %288 = vmatmul.mubr.bf16.gmra.mxu0 %v250
      %v289 = vpop.f32.mrf.mxu0
      %v290 = vadd.f32 0.0, %v289
      %v291 = vpop.f32.mrf.mxu0
      %v292 = vpop.f32.mrf.mxu0
      %v293 = vadd.f32 0.0, %v292
      %v294 = vpop.f32.mrf.mxu0
      %295 = vdwg.mxu0
      %vm296 = vcmask 105472
      %v297 = vsel %vm296, %v290, -inf
      %298 = vmax.xlane.f32.xlu0 %v297
      %v299 = vpop.xlane.xlu0 %298
      %vm300 = vcmask 102400
      %v301 = vsel %vm300, %v293, -inf
      %302 = vmax.xlane.f32.xlu0 %v301
      %v303 = vpop.xlane.xlu0 %302
      %v304 = vsub.f32 %v290, %v299
      %v305 = vsub.f32 %v293, %v303
      %v306 = vmul.f32 %v304, 1.442695
      %v307 = vpow.pop %v306
      %v308 = vmul.f32 %v305, 1.442695
      %v309 = vpow.pop %v308
      %v310 = vsel %vm296, %v307, 0.0
      %311 = vadd.xlane.f32.xlu0 %v310
      %v312 = vpop.xlane.xlu0 %311
      %v313 = vsel %vm300, %v309, 0.0
      %314 = vadd.xlane.f32.xlu0 %v313
      %v315 = vpop.xlane.xlu0 %314
      %v316 = vrcp.pop %v312
      %v317 = vmul.f32 %v307, %v316
      %v318 = vrcp.pop %v315
      %v319 = vmul.f32 %v309, %v318
      %v320 = vpack.c.bf16 %v319, %v317
      %v323 = vunpack.c.l.b16 %v236
      %v324 = vunpack.c.l.b16 %v237
      %v325 = vpack.c.b16 %v324, %v323
      %v327 = vsel %vm296, %v320, 0
      %vm329 = vcmask 1045504
      %vm330 = vcmask 1046528
      %v331 = vsel %vm329, 4294967295, 65535
      %v332 = vsel %vm330, %v331, 0
      %v334 = vand.u32 %v325, %v332
      %336 = vmatprep.subr.bf16.mxu0 0
      %337 = vmatpush1.bf16.msra.mxu0 0
      %338 = vmatprep.subr.bf16.mxu0 0
      %339 = vmatpush1.bf16.msra.mxu0 0
      %340 = vmatprep.subr.bf16.mxu0 0
      %341 = vmatpush1.bf16.msra.mxu0 0
      %342 = vmatprep.subr.bf16.mxu0 0
      %343 = vmatpush1.bf16.msra.mxu0 0
      %344 = vmatprep.subr.bf16.mxu0 0
      %345 = vmatpush1.bf16.msra.mxu0 0
      %346 = vmatprep.subr.bf16.mxu0 0
      %347 = vmatpush1.bf16.msra.mxu0 0
      %348 = vmatprep.subr.bf16.mxu0 0
      %349 = vmatpush1.bf16.msra.mxu0 0
      %350 = vmatprep.subr.bf16.mxu0 0
      %351 = vmatpush1.bf16.msra.mxu0 %v334
      %352 = vmatprep.subr.bf16.mxu0 0
      %353 = vmatpush2.bf16.msra.mxu0 0
      %354 = vmatprep.subr.bf16.mxu0 0
      %355 = vmatpush2.bf16.msra.mxu0 0
      %356 = vmatprep.subr.bf16.mxu0 0
      %357 = vmatpush2.bf16.msra.mxu0 0
      %358 = vmatprep.subr.bf16.mxu0 0
      %359 = vmatpush2.bf16.msra.mxu0 0
      %360 = vmatprep.subr.bf16.mxu0 0
      %361 = vmatpush2.bf16.msra.mxu0 0
      %362 = vmatprep.subr.bf16.mxu0 0
      %363 = vmatpush2.bf16.msra.mxu0 0
      %364 = vmatprep.subr.bf16.mxu0 0
      %365 = vmatpush2.bf16.msra.mxu0 0
      %366 = vmatprep.subr.bf16.mxu0 0
      %367 = vmatpush2.bf16.msra.mxu0 0
      %368 = vmatprep.mubr.bf16.mxu0 0
      %369 = vmatmul.mubr.bf16.gmra.mxu0 %v327
      %v370 = vpop.f32.mrf.mxu0
      %v371 = vadd.f32 0.0, %v370
      %v372 = vpop.f32.mrf.mxu0
      %v373 = vpop.f32.mrf.mxu0
      %v374 = vadd.f32 0.0, %v373
      %v375 = vpop.f32.mrf.mxu0
      %376 = vdwg.mxu0
      %v377 = vld [vmem:[%s1] sm:$0xf]
      %v378 = vld [vmem:[%s1 + $0x4] sm:$0xf]
      %v379 = vld [vmem:[%s1 + $0x8] sm:$0xf]
      %v380 = vld [vmem:[%s1 + $0xc] sm:$0xf]
      %v381 = vld [vmem:[%s1 + $0x10] sm:$0xf]
      %v382 = vld [vmem:[%s1 + $0x14] sm:$0xf]
      %v383 = vld [vmem:[%s1 + $0x18] sm:$0xf]
      %v384 = vld [vmem:[%s1 + $0x1c] sm:$0xf]
      %v385 = vld [vmem:[%s217] sm:$0xff]
      %v386 = vld [vmem:[%s217 + $0x8] sm:$0x1f]
      %v387 = vpack.c.bf16 %v374, %v371
      %v396 = vunpack.c.l.b16 %v377
      %v397 = vunpack.c.l.b16 %v378
      %v398 = vunpack.c.l.b16 %v379
      %v399 = vunpack.c.l.b16 %v380
      %v400 = vunpack.c.l.b16 %v381
      %v401 = vunpack.c.l.b16 %v382
      %v402 = vunpack.c.l.b16 %v383
      %v403 = vunpack.c.l.b16 %v384
      %v404 = vpack.c.b16 %v397, %v396
      %v405 = vpack.c.b16 %v399, %v398
      %v406 = vpack.c.b16 %v401, %v400
      %v407 = vpack.c.b16 %v403, %v402
      %v413 = vsel %vm248, %v387, 0
      %415 = vmatprep.subr.bf16.mxu0 0
      %416 = vmatpush1.bf16.msra.mxu0 0
      %417 = vmatprep.subr.bf16.mxu0 0
      %418 = vmatpush1.bf16.msra.mxu0 0
      %419 = vmatprep.subr.bf16.mxu0 0
      %420 = vmatpush1.bf16.msra.mxu0 0
      %421 = vmatprep.subr.bf16.mxu0 0
      %422 = vmatpush1.bf16.msra.mxu0 0
      %423 = vmatprep.subr.bf16.mxu0 0
      %424 = vmatpush1.bf16.msra.mxu0 %v407
      %425 = vmatprep.subr.bf16.mxu0 0
      %426 = vmatpush1.bf16.msra.mxu0 %v406
      %427 = vmatprep.subr.bf16.mxu0 0
      %428 = vmatpush1.bf16.msra.mxu0 %v405
      %429 = vmatprep.subr.bf16.mxu0 0
      %430 = vmatpush1.bf16.msra.mxu0 %v404
      %431 = vmatprep.subr.bf16.mxu0 0
      %432 = vmatpush2.bf16.msra.mxu0 0
      %433 = vmatprep.subr.bf16.mxu0 0
      %434 = vmatpush2.bf16.msra.mxu0 0
      %435 = vmatprep.subr.bf16.mxu0 0
      %436 = vmatpush2.bf16.msra.mxu0 0
      %437 = vmatprep.subr.bf16.mxu0 0
      %438 = vmatpush2.bf16.msra.mxu0 0
      %439 = vmatprep.subr.bf16.mxu0 0
      %440 = vmatpush2.bf16.msra.mxu0 0
      %441 = vmatprep.subr.bf16.mxu0 0
      %442 = vmatpush2.bf16.msra.mxu0 0
      %443 = vmatprep.subr.bf16.mxu0 0
      %444 = vmatpush2.bf16.msra.mxu0 0
      %445 = vmatprep.subr.bf16.mxu0 0
      %446 = vmatpush2.bf16.msra.mxu0 0
      %447 = vmatprep.mubr.bf16.mxu0 0
      %448 = vmatmul.mubr.bf16.gmra.mxu0 %v413
      %v449 = vpop.f32.mrf.mxu0
      %v450 = vadd.f32 0.0, %v449
      %v451 = vpop.f32.mrf.mxu0
      %v452 = vpop.f32.mrf.mxu0
      %v453 = vadd.f32 0.0, %v452
      %v454 = vpop.f32.mrf.mxu0
      %455 = vdwg.mxu0
      %v456 = vadd.f32 %v385, %v450
      %v457 = vadd.f32 %v386, %v453
      %458 = vst [vmem:[%s217] sm:$0xff] %v456
      %459 = vst [vmem:[%s217 + $0x8] sm:$0x1f] %v457
      %v460 = vld [vmem:[%s207] sm:$0xf]
      %v461 = vld [vmem:[%s207 + $0xc] sm:$0x7]
      %v462 = vld [vmem:[%s207 + $0x4] sm:$0xf]
      %v463 = vld [vmem:[%s207 + $0x10] sm:$0x7]
      %v464 = vld [vmem:[%s207 + $0x8] sm:$0xf]
      %v465 = vld [vmem:[%s207 + $0x14] sm:$0x7]
      %v468 = vunpack.c.l.b16 %v460
      %v469 = vunpack.c.l.b16 %v461
      %v470 = vpack.c.b16 %v469, %v468
      %471 = vrot.lane.b32.xlu0 %v470, 64
      %v472 = vpop.permute.xlu0 %471
      %v475 = vunpack.c.l.b16 %v462
      %v476 = vunpack.c.l.b16 %v463
      %v477 = vpack.c.b16 %v476, %v475
      %478 = vrot.lane.b32.xlu0 %v477, 64
      %v479 = vpop.permute.xlu0 %478
      %v481 = vsel %vm248, %v472, 0
      %v484 = vsel %vm248, %v479, 0
      %486 = vmatprep.subr.bf16.mxu0 0
      %487 = vmatpush1.bf16.xpose.msra.mxu0 0
      %488 = vmatprep.subr.bf16.mxu0 0
      %489 = vmatpush1.bf16.xpose.msra.mxu0 0
      %490 = vmatprep.subr.bf16.mxu0 0
      %491 = vmatpush1.bf16.xpose.msra.mxu0 0
      %492 = vmatprep.subr.bf16.mxu0 0
      %493 = vmatpush1.bf16.xpose.msra.mxu0 0
      %494 = vmatprep.subr.bf16.mxu0 0
      %495 = vmatpush1.bf16.xpose.msra.mxu0 0
      %496 = vmatprep.subr.bf16.mxu0 0
      %497 = vmatpush1.bf16.xpose.msra.mxu0 0
      %498 = vmatprep.subr.bf16.mxu0 0
      %499 = vmatpush1.bf16.xpose.msra.mxu0 0
      %500 = vmatprep.subr.bf16.mxu0 0
      %501 = vmatpush1.bf16.xpose.msra.mxu0 %v484
      %502 = vmatprep.subr.bf16.mxu0 0
      %503 = vmatpush2.bf16.xpose.msra.mxu0 0
      %504 = vmatprep.subr.bf16.mxu0 0
      %505 = vmatpush2.bf16.xpose.msra.mxu0 0
      %506 = vmatprep.subr.bf16.mxu0 0
      %507 = vmatpush2.bf16.xpose.msra.mxu0 0
      %508 = vmatprep.subr.bf16.mxu0 0
      %509 = vmatpush2.bf16.xpose.msra.mxu0 0
      %510 = vmatprep.subr.bf16.mxu0 0
      %511 = vmatpush2.bf16.xpose.msra.mxu0 0
      %512 = vmatprep.subr.bf16.mxu0 0
      %513 = vmatpush2.bf16.xpose.msra.mxu0 0
      %514 = vmatprep.subr.bf16.mxu0 0
      %515 = vmatpush2.bf16.xpose.msra.mxu0 0
      %516 = vmatprep.subr.bf16.mxu0 0
      %517 = vmatpush2.bf16.xpose.msra.mxu0 0
      %518 = vmatprep.mubr.bf16.mxu0 0
      %519 = vmatmul.mubr.bf16.gmra.mxu0 %v481
      %v520 = vpop.f32.mrf.mxu0
      %v521 = vadd.f32 0.0, %v520
      %v522 = vpop.f32.mrf.mxu0
      %v523 = vpop.f32.mrf.mxu0
      %v524 = vadd.f32 0.0, %v523
      %v525 = vpop.f32.mrf.mxu0
      %526 = vdwg.mxu0
      %v527 = vsel %vm296, %v521, -inf
      %528 = vmax.xlane.f32.xlu0 %v527
      %v529 = vpop.xlane.xlu0 %528
      %v530 = vsel %vm300, %v524, -inf
      %531 = vmax.xlane.f32.xlu0 %v530
      %v532 = vpop.xlane.xlu0 %531
      %v533 = vsub.f32 %v521, %v529
      %v534 = vsub.f32 %v524, %v532
      %v535 = vmul.f32 %v533, 1.442695
      %v536 = vpow.pop %v535
      %v537 = vmul.f32 %v534, 1.442695
      %v538 = vpow.pop %v537
      %v539 = vsel %vm296, %v536, 0.0
      %540 = vadd.xlane.f32.xlu0 %v539
      %v541 = vpop.xlane.xlu0 %540
      %v542 = vsel %vm300, %v538, 0.0
      %543 = vadd.xlane.f32.xlu0 %v542
      %v544 = vpop.xlane.xlu0 %543
      %v545 = vrcp.pop %v541
      %v546 = vmul.f32 %v536, %v545
      %v547 = vrcp.pop %v544
      %v548 = vmul.f32 %v538, %v547
      %v549 = vpack.c.bf16 %v548, %v546
      %v552 = vunpack.c.l.b16 %v464
      %v553 = vunpack.c.l.b16 %v465
      %v554 = vpack.c.b16 %v553, %v552
      %555 = vrot.lane.b32.xlu0 %v554, 64
      %v556 = vpop.permute.xlu0 %555
      %v558 = vsel %vm296, %v549, 0
      %v561 = vand.u32 %v556, %v332
      %563 = vmatprep.subr.bf16.mxu0 0
      %564 = vmatpush1.bf16.msra.mxu0 0
      %565 = vmatprep.subr.bf16.mxu0 0
      %566 = vmatpush1.bf16.msra.mxu0 0
      %567 = vmatprep.subr.bf16.mxu0 0
      %568 = vmatpush1.bf16.msra.mxu0 0
      %569 = vmatprep.subr.bf16.mxu0 0
      %570 = vmatpush1.bf16.msra.mxu0 0
      %571 = vmatprep.subr.bf16.mxu0 0
      %572 = vmatpush1.bf16.msra.mxu0 0
      %573 = vmatprep.subr.bf16.mxu0 0
      %574 = vmatpush1.bf16.msra.mxu0 0
      %575 = vmatprep.subr.bf16.mxu0 0
      %576 = vmatpush1.bf16.msra.mxu0 0
      %577 = vmatprep.subr.bf16.mxu0 0
      %578 = vmatpush1.bf16.msra.mxu0 %v561
      %579 = vmatprep.subr.bf16.mxu0 0
      %580 = vmatpush2.bf16.msra.mxu0 0
      %581 = vmatprep.subr.bf16.mxu0 0
      %582 = vmatpush2.bf16.msra.mxu0 0
      %583 = vmatprep.subr.bf16.mxu0 0
      %584 = vmatpush2.bf16.msra.mxu0 0
      %585 = vmatprep.subr.bf16.mxu0 0
      %586 = vmatpush2.bf16.msra.mxu0 0
      %587 = vmatprep.subr.bf16.mxu0 0
      %588 = vmatpush2.bf16.msra.mxu0 0
      %589 = vmatprep.subr.bf16.mxu0 0
      %590 = vmatpush2.bf16.msra.mxu0 0
      %591 = vmatprep.subr.bf16.mxu0 0
      %592 = vmatpush2.bf16.msra.mxu0 0
      %593 = vmatprep.subr.bf16.mxu0 0
      %594 = vmatpush2.bf16.msra.mxu0 0
      %595 = vmatprep.mubr.bf16.mxu0 0
      %596 = vmatmul.mubr.bf16.gmra.mxu0 %v558
      %v597 = vpop.f32.mrf.mxu0
      %v598 = vadd.f32 0.0, %v597
      %v599 = vpop.f32.mrf.mxu0
      %v600 = vpop.f32.mrf.mxu0
      %v601 = vadd.f32 0.0, %v600
      %v602 = vpop.f32.mrf.mxu0
      %603 = vdwg.mxu0
      %v604 = vld [vmem:[%s1 + $0x20] sm:$0xf]
      %v605 = vld [vmem:[%s1 + $0x24] sm:$0xf]
      %v606 = vld [vmem:[%s1 + $0x28] sm:$0xf]
      %v607 = vld [vmem:[%s1 + $0x2c] sm:$0xf]
      %v608 = vld [vmem:[%s1 + $0x30] sm:$0xf]
      %v609 = vld [vmem:[%s1 + $0x34] sm:$0xf]
      %v610 = vld [vmem:[%s1 + $0x38] sm:$0xf]
      %v611 = vld [vmem:[%s1 + $0x3c] sm:$0xf]
      %v612 = vld [vmem:[%s217] sm:$0xff]
      %v613 = vld [vmem:[%s217 + $0x8] sm:$0x1f]
      %v614 = vpack.c.bf16 %v601, %v598
      %v623 = vunpack.c.l.b16 %v604
      %v624 = vunpack.c.l.b16 %v605
      %v625 = vunpack.c.l.b16 %v606
      %v626 = vunpack.c.l.b16 %v607
      %v627 = vunpack.c.l.b16 %v608
      %v628 = vunpack.c.l.b16 %v609
      %v629 = vunpack.c.l.b16 %v610
      %v630 = vunpack.c.l.b16 %v611
      %v631 = vpack.c.b16 %v624, %v623
      %v632 = vpack.c.b16 %v626, %v625
      %v633 = vpack.c.b16 %v628, %v627
      %v634 = vpack.c.b16 %v630, %v629
      %v640 = vsel %vm248, %v614, 0
      %642 = vmatprep.subr.bf16.mxu0 0
      %643 = vmatpush1.bf16.msra.mxu0 0
      %644 = vmatprep.subr.bf16.mxu0 0
      %645 = vmatpush1.bf16.msra.mxu0 0
      %646 = vmatprep.subr.bf16.mxu0 0
      %647 = vmatpush1.bf16.msra.mxu0 0
      %648 = vmatprep.subr.bf16.mxu0 0
      %649 = vmatpush1.bf16.msra.mxu0 0
      %650 = vmatprep.subr.bf16.mxu0 0
      %651 = vmatpush1.bf16.msra.mxu0 %v634
      %652 = vmatprep.subr.bf16.mxu0 0
      %653 = vmatpush1.bf16.msra.mxu0 %v633
      %654 = vmatprep.subr.bf16.mxu0 0
      %655 = vmatpush1.bf16.msra.mxu0 %v632
      %656 = vmatprep.subr.bf16.mxu0 0
      %657 = vmatpush1.bf16.msra.mxu0 %v631
      %658 = vmatprep.subr.bf16.mxu0 0
      %659 = vmatpush2.bf16.msra.mxu0 0
      %660 = vmatprep.subr.bf16.mxu0 0
      %661 = vmatpush2.bf16.msra.mxu0 0
      %662 = vmatprep.subr.bf16.mxu0 0
      %663 = vmatpush2.bf16.msra.mxu0 0
      %664 = vmatprep.subr.bf16.mxu0 0
      %665 = vmatpush2.bf16.msra.mxu0 0
      %666 = vmatprep.subr.bf16.mxu0 0
      %667 = vmatpush2.bf16.msra.mxu0 0
      %668 = vmatprep.subr.bf16.mxu0 0
      %669 = vmatpush2.bf16.msra.mxu0 0
      %670 = vmatprep.subr.bf16.mxu0 0
      %671 = vmatpush2.bf16.msra.mxu0 0
      %672 = vmatprep.subr.bf16.mxu0 0
      %673 = vmatpush2.bf16.msra.mxu0 0
      %674 = vmatprep.mubr.bf16.mxu0 0
      %675 = vmatmul.mubr.bf16.gmra.mxu0 %v640
      %v676 = vpop.f32.mrf.mxu0
      %v677 = vadd.f32 0.0, %v676
      %v678 = vpop.f32.mrf.mxu0
      %v679 = vpop.f32.mrf.mxu0
      %v680 = vadd.f32 0.0, %v679
      %v681 = vpop.f32.mrf.mxu0
      %682 = vdwg.mxu0
      %v683 = vadd.f32 %v612, %v677
      %v684 = vadd.f32 %v613, %v680
      %685 = vst [vmem:[%s217] sm:$0xff] %v683
      %686 = vst [vmem:[%s217 + $0x8] sm:$0x1f] %v684
      %p687 = scmp.lt.s32.totalorder %s15, 1
      %s688 = scalar_select %p687, %s15, 1
      %s689 = smul.addr %s688, 2
      %s690 = smul.addr %s689, 8
      %s691 = scalar_lea.vmem %s4, %s690
      // Predicated region
      $region37: #{run.21} parent=35 // pred_check
        %p692 = pneg %p127
      $region38: #{run.21} parent=35 // pred_check_branch
        %694 = sbr.rel (%p692) target = $region40
      $region39: #{run.21} parent=35 // pred_region
        _
      $region40: #{run.21} parent=35 // pred_fallthru
        _
    $region36: #{run.21} parent=5 // pred_fallthru
      _
    %p695 = scmp.le.s32.totalorder 2, %s10
    // Predicated region
    $region41: #{run.21} parent=5 // pred_check
      %p696 = pneg %p695
    $region42: #{run.21} parent=5 // pred_check_branch
      %698 = sbr.rel (%p696) target = $region44
    $region43: #{run.21} parent=5 // pred_region
      %s699 = ssub.s32 %s10, 2
      // Predicated region
      $region45: #{run.21} parent=43 // pred_check
        %p700 = pneg %p133
      $region46: #{run.21} parent=43 // pred_check_branch
        %702 = sbr.rel (%p700) target = $region48
      $region47: #{run.21} parent=43 // pred_region
        %p703 = scmp.lt.s32.totalorder %s16, 1
        %s704 = scalar_select %p703, %s16, 1
        %s705 = smul.addr %s704, 2
        %s706 = smul.addr %s705, 8
        %s707 = scalar_lea.vmem %s4, %s706
      $region48: #{run.21} parent=43 // pred_fallthru
        _
    $region44: #{run.21} parent=5 // pred_fallthru
      _
  $region6: #{run.21} parent=0 // loop_footer
    %s14 = sadd.s32 1, %s10
  $region7: #{run.21} parent=0 // loop_footer_branch
    %9 = sbr.rel target = $region3
  $region8: #{run.21} parent=0 // loop_exit
    _

</llo_original>
